<compile_context>
chip_gen: v5e
topology: v5e:2x2
jax: 0.10.0
libtpu: 0.0.40
codegen_flags: <defaults>
</compile_context>

<pallas_src>
from functools import partial

import numpy as np

import jax
import jax.numpy as jnp
from jax.experimental import pallas as pl
from jax.experimental.pallas import tpu as pltpu


NEG_SLOPE = 0.15

# (cout, kernel, stride, padding); layer-0 cin = n_frames
_LAYER_CFGS = (
    (64, 7, 4, 3),
    (128, 3, 2, 1),
    (256, 3, 2, 1),
    (384, 3, 2, 1),
    (384, 3, 1, 1),
)


def _out_dim(d, k, s, p):
    return (d + 2 * p - k) // s + 1


# ----------------------------- fused Pallas kernel ---------------------------

def _fused_extractor_kernel(*refs):
    """refs = (a0, M0, R0, b0, ..., M4, R4, b4, out).

    Activation layout: A[(n*H + h), (w*C + c)]  (bf16, lane-dense).
    Layer:  act = LeakyReLU_0.15( sum_kh R_kh @ A @ M_kh + b ),  f32 accumulate.
    """
    a0_ref = refs[0]
    out_ref = refs[-1]
    layer_refs = refs[1:-1]
    n_layers = len(layer_refs) // 3

    a = a0_ref[...]                                    # bf16 (N*H0, W0*C0)
    act_f32 = None
    for li in range(n_layers):
        m_ref, r_ref, b_ref = layer_refs[3 * li: 3 * li + 3]
        k = m_ref.shape[0]
        rows_out = r_ref.shape[1]                      # N * H_out
        cols_out = m_ref.shape[2]                      # W_out * C_out
        acc = jnp.zeros((rows_out, cols_out), jnp.float32)
        for kh in range(k):
            # 0/1 row selection: stride + zero padding along H (exact).
            u = jnp.dot(r_ref[kh], a, preferred_element_type=jnp.float32)
            # banded weight matrix: stride/padding along W + channel reduction.
            acc = acc + jnp.dot(u.astype(jnp.bfloat16), m_ref[kh],
                                preferred_element_type=jnp.float32)
        acc = acc + b_ref[...]
        act_f32 = jnp.where(acc >= 0, acc, NEG_SLOPE * acc)   # LeakyReLU(0.15)
        a = act_f32.astype(jnp.bfloat16)
    out_ref[...] = act_f32                             # final layer stays f32


# --------------------------- one-time weight packing --------------------------

def pack_params(params, obs_shape, batch):
    """Pre-pack the conv stack into GEMM operands (ONCE, outside jit).

    Returns a flat tuple (M0, R0, b0, ..., M4, R4, b4):
      M_l : (k, W_in*C_in,  W_out*C_out)  bf16  banded conv-weight matrices
      R_l : (k, N*H_out,    N*H_in)       bf16  0/1 row-selection matrices
      b_l : (1, W_out*C_out)              f32   bias tiled across W_out
    """
    H, W = int(obs_shape[0]), int(obs_shape[1])
    N = int(batch)
    packed = []
    for (w_hwio, b), (cout, k, s, p) in zip(params, _LAYER_CFGS):
        w_np = np.asarray(w_hwio, np.float32)          # (k, k, C_in, C_out)
        b_np = np.asarray(b, np.float32)
        cin = w_np.shape[2]
        H_out, W_out = _out_dim(H, k, s, p), _out_dim(W, k, s, p)

        M = np.zeros((k, W * cin, W_out * cout), np.float32)
        for kh in range(k):
            for ow in range(W_out):
                for kw in range(k):
                    iw = s * ow + kw - p
                    if 0 <= iw < W:
                        M[kh, iw * cin:(iw + 1) * cin,
                          ow * cout:(ow + 1) * cout] = w_np[kh, kw]

        R = np.zeros((k, N * H_out, N * H), np.float32)
        for kh in range(k):
            for n in range(N):
                for oh in range(H_out):
                    ih = s * oh + kh - p
                    if 0 <= ih < H:
                        R[kh, n * H_out + oh, n * H + ih] = 1.0

        b_img = np.tile(b_np, W_out)[None, :]          # (1, W_out*cout)

        packed += [jnp.asarray(M, jnp.bfloat16),
                   jnp.asarray(R, jnp.bfloat16),
                   jnp.asarray(b_img, jnp.float32)]
        H, W = H_out, W_out
    return tuple(packed)


# -------------------------------- forward pass --------------------------------

def _full_spec(arr):
    if arr.ndim == 2:
        return pl.BlockSpec(arr.shape, lambda i: (0, 0))
    return pl.BlockSpec(arr.shape, lambda i: (0, 0, 0))


@jax.jit
def simple_extractor_forward(x_nchw, packed):
    """SimpleExtractor.forward: 5 x (Conv2d + LeakyReLU(0.15)); NCHW in / out."""
    N, C, H, W = x_nchw.shape
    # NCHW -> image-GEMM layout (N*H, W*C), bf16 for the MXU.
    a0 = jnp.transpose(x_nchw, (0, 2, 3, 1)).reshape(N * H, W * C)
    a0 = a0.astype(jnp.bfloat16)

    h, w = H, W
    for (_, k, s, p) in _LAYER_CFGS:
        h, w = _out_dim(h, k, s, p), _out_dim(w, k, s, p)
    c_out = _LAYER_CFGS[-1][0]

    operands = (a0,) + tuple(packed)
    out2d = pl.pallas_call(
        _fused_extractor_kernel,
        out_shape=jax.ShapeDtypeStruct((N * h, w * c_out), jnp.float32),
        grid=(1,),
        in_specs=[_full_spec(op) for op in operands],
        out_specs=pl.BlockSpec((N * h, w * c_out), lambda i: (0, 0)),
        compiler_params=pltpu.CompilerParams(
            dimension_semantics=("arbitrary",),
            vmem_limit_bytes=32 * 1024 * 1024,
        ),
    )(*operands)

    out = out2d.reshape(N, h, w, c_out)
    return jnp.transpose(out, (0, 3, 1, 2))            # NHWC -> NCHW, f32


# ------------------------------- parameter init --------------------------------

def init_params(key, n_frames, a=NEG_SLOPE):
    """Kaiming-normal(fan_out, leaky_relu, a) weights, zero biases (HWIO)."""
    gain = (2.0 / (1.0 + a * a)) ** 0.5
    params = []
    cin = n_frames
    for (cout, k, s, p) in _LAYER_CFGS:
        key, sub = jax.random.split(key)
        fan_out = cout * k * k
        std = gain / (fan_out ** 0.5)
        w = std * jax.random.normal(sub, (k, k, cin, cout), dtype=jnp.float32)
        b = jnp.zeros((cout,), dtype=jnp.float32)
        params.append((w, b))
        cin = cout
    return tuple(params)


# ------------------------ plain-XLA reference (f32) ----------------------------

@jax.jit
def _reference_forward(x_nchw, params):
    x = jnp.transpose(x_nchw, (0, 2, 3, 1))            # NHWC, f32
    for (w, b), (_, k, s, p) in zip(params, _LAYER_CFGS):
        x = jax.lax.conv_general_dilated(
            x, w, window_strides=(s, s), padding=[(p, p), (p, p)],
            dimension_numbers=("NHWC", "HWIO", "NHWC"))
        x = x + b
        x = jnp.where(x >= 0, x, NEG_SLOPE * x)
    return jnp.transpose(x, (0, 3, 1, 2))


if __name__ == "__main__":
    key = jax.random.PRNGKey(0)
    k_x, k_w = jax.random.split(key)

    # obs_shape = (32, 32), n_frames = 4, batch = 2  ->  output (2, 384, 1, 1)
    n_frames, obs_shape, batch = 4, (32, 32), 2
    x = jax.random.normal(k_x, (batch, n_frames) + obs_shape, dtype=jnp.float32)
    params = init_params(k_w, n_frames, a=NEG_SLOPE)

    packed = pack_params(params, obs_shape, batch)      # once, outside jit

    out = simple_extractor_forward(x, packed)
    out = jax.block_until_ready(out)

    assert out.shape == (batch, 384, 1, 1), out.shape
    assert out.dtype == jnp.float32

    # Numerical check vs plain-XLA reference (kernel uses bf16 weights /
    # activations with f32 accumulation -> small tolerance).
    ref = jax.block_until_ready(_reference_forward(x, params))
    max_err = float(jnp.max(jnp.abs(out - ref)))
    assert max_err < 5e-2, f"max abs err {max_err}"

    print("KERNEL_OK")
</pallas_src>

<mosaic_0001>
module attributes {stable_mosaic.version = 11 : i64} {
  func.func @_fused_extractor_kernel(%arg0: i32, %arg1: memref<64x128xbf16, #tpu.memory_space<vmem>>, %arg2: memref<7x128x512xbf16, #tpu.memory_space<vmem>>, %arg3: memref<7x16x64xbf16, #tpu.memory_space<vmem>>, %arg4: memref<1x512xf32, #tpu.memory_space<vmem>>, %arg5: memref<3x512x512xbf16, #tpu.memory_space<vmem>>, %arg6: memref<3x8x16xbf16, #tpu.memory_space<vmem>>, %arg7: memref<1x512xf32, #tpu.memory_space<vmem>>, %arg8: memref<3x512x512xbf16, #tpu.memory_space<vmem>>, %arg9: memref<3x4x8xbf16, #tpu.memory_space<vmem>>, %arg10: memref<1x512xf32, #tpu.memory_space<vmem>>, %arg11: memref<3x512x384xbf16, #tpu.memory_space<vmem>>, %arg12: memref<3x2x4xbf16, #tpu.memory_space<vmem>>, %arg13: memref<1x384xf32, #tpu.memory_space<vmem>>, %arg14: memref<3x384x384xbf16, #tpu.memory_space<vmem>>, %arg15: memref<3x2x2xbf16, #tpu.memory_space<vmem>>, %arg16: memref<1x384xf32, #tpu.memory_space<vmem>>, %arg17: memref<2x384xf32, #tpu.memory_space<vmem>>) attributes {dimension_semantics = [#tpu.dimension_semantics<arbitrary>], iteration_bounds = array<i64: 1>, scalar_prefetch = 0 : i64, scratch_operands = 0 : i64, tpu.core_type = #tpu.core_type<tc>, window_params = [{pipeline_mode = #tpu.pipeline_mode<synchronous>, transform_indices = @transform_0, window_bounds = array<i64: 64, 128>}, {pipeline_mode = #tpu.pipeline_mode<synchronous>, transform_indices = @transform_1, window_bounds = array<i64: 7, 128, 512>}, {pipeline_mode = #tpu.pipeline_mode<synchronous>, transform_indices = @transform_2, window_bounds = array<i64: 7, 16, 64>}, {pipeline_mode = #tpu.pipeline_mode<synchronous>, transform_indices = @transform_3, window_bounds = array<i64: 1, 512>}, {pipeline_mode = #tpu.pipeline_mode<synchronous>, transform_indices = @transform_4, window_bounds = array<i64: 3, 512, 512>}, {pipeline_mode = #tpu.pipeline_mode<synchronous>, transform_indices = @transform_5, window_bounds = array<i64: 3, 8, 16>}, {pipeline_mode = #tpu.pipeline_mode<synchronous>, transform_indices = @transform_6, window_bounds = array<i64: 1, 512>}, {pipeline_mode = #tpu.pipeline_mode<synchronous>, transform_indices = @transform_7, window_bounds = array<i64: 3, 512, 512>}, {pipeline_mode = #tpu.pipeline_mode<synchronous>, transform_indices = @transform_8, window_bounds = array<i64: 3, 4, 8>}, {pipeline_mode = #tpu.pipeline_mode<synchronous>, transform_indices = @transform_9, window_bounds = array<i64: 1, 512>}, {pipeline_mode = #tpu.pipeline_mode<synchronous>, transform_indices = @transform_10, window_bounds = array<i64: 3, 512, 384>}, {pipeline_mode = #tpu.pipeline_mode<synchronous>, transform_indices = @transform_11, window_bounds = array<i64: 3, 2, 4>}, {pipeline_mode = #tpu.pipeline_mode<synchronous>, transform_indices = @transform_12, window_bounds = array<i64: 1, 384>}, {pipeline_mode = #tpu.pipeline_mode<synchronous>, transform_indices = @transform_13, window_bounds = array<i64: 3, 384, 384>}, {pipeline_mode = #tpu.pipeline_mode<synchronous>, transform_indices = @transform_14, window_bounds = array<i64: 3, 2, 2>}, {pipeline_mode = #tpu.pipeline_mode<synchronous>, transform_indices = @transform_15, window_bounds = array<i64: 1, 384>}, {pipeline_mode = #tpu.pipeline_mode<synchronous>, transform_indices = @transform_16, window_bounds = array<i64: 2, 384>}]} {
    %c0 = arith.constant 0 : index
    %c0_0 = arith.constant 0 : index
    %0 = vector.load %arg1[%c0, %c0_0] : memref<64x128xbf16, #tpu.memory_space<vmem>>, vector<64x128xbf16>
    %cst = arith.constant 0.000000e+00 : f32
    %1 = vector.broadcast %cst : f32 to vector<16x512xf32>
    %c0_1 = arith.constant 0 : index
    %c0_2 = arith.constant 0 : index
    %c0_3 = arith.constant 0 : index
    %2 = vector.load %arg3[%c0_1, %c0_2, %c0_3] : memref<7x16x64xbf16, #tpu.memory_space<vmem>>, vector<1x16x64xbf16>
    %3 = vector.shape_cast %2 : vector<1x16x64xbf16> to vector<16x64xbf16>
    %cst_4 = arith.constant dense<0.000000e+00> : vector<16x128xf32>
    %4 = tpu.matmul %3, %0, %cst_4 {dimension_numbers = #tpu.dot_dimension_numbers<[1], [0], [0], [1], [0, 0, 1, 1], [], []>} : vector<16x64xbf16>, vector<64x128xbf16>, vector<16x128xf32> -> vector<16x128xf32>
    %5 = arith.truncf %4 : vector<16x128xf32> to vector<16x128xbf16>
    %c0_5 = arith.constant 0 : index
    %c0_6 = arith.constant 0 : index
    %c0_7 = arith.constant 0 : index
    %6 = vector.load %arg2[%c0_5, %c0_6, %c0_7] : memref<7x128x512xbf16, #tpu.memory_space<vmem>>, vector<1x128x512xbf16>
    %7 = vector.shape_cast %6 : vector<1x128x512xbf16> to vector<128x512xbf16>
    %cst_8 = arith.constant dense<0.000000e+00> : vector<16x512xf32>
    %8 = tpu.matmul %5, %7, %cst_8 {dimension_numbers = #tpu.dot_dimension_numbers<[1], [0], [0], [1], [0, 0, 1, 1], [], []>} : vector<16x128xbf16>, vector<128x512xbf16>, vector<16x512xf32> -> vector<16x512xf32>
    %9 = arith.addf %1, %8 : vector<16x512xf32>
    %c1 = arith.constant 1 : index
    %c0_9 = arith.constant 0 : index
    %c0_10 = arith.constant 0 : index
    %10 = vector.load %arg3[%c1, %c0_9, %c0_10] : memref<7x16x64xbf16, #tpu.memory_space<vmem>>, vector<1x16x64xbf16>
    %11 = vector.shape_cast %10 : vector<1x16x64xbf16> to vector<16x64xbf16>
    %cst_11 = arith.constant dense<0.000000e+00> : vector<16x128xf32>
    %12 = tpu.matmul %11, %0, %cst_11 {dimension_numbers = #tpu.dot_dimension_numbers<[1], [0], [0], [1], [0, 0, 1, 1], [], []>} : vector<16x64xbf16>, vector<64x128xbf16>, vector<16x128xf32> -> vector<16x128xf32>
    %13 = arith.truncf %12 : vector<16x128xf32> to vector<16x128xbf16>
    %c1_12 = arith.constant 1 : index
    %c0_13 = arith.constant 0 : index
    %c0_14 = arith.constant 0 : index
    %14 = vector.load %arg2[%c1_12, %c0_13, %c0_14] : memref<7x128x512xbf16, #tpu.memory_space<vmem>>, vector<1x128x512xbf16>
    %15 = vector.shape_cast %14 : vector<1x128x512xbf16> to vector<128x512xbf16>
    %cst_15 = arith.constant dense<0.000000e+00> : vector<16x512xf32>
    %16 = tpu.matmul %13, %15, %cst_15 {dimension_numbers = #tpu.dot_dimension_numbers<[1], [0], [0], [1], [0, 0, 1, 1], [], []>} : vector<16x128xbf16>, vector<128x512xbf16>, vector<16x512xf32> -> vector<16x512xf32>
    %17 = arith.addf %9, %16 : vector<16x512xf32>
    %c2 = arith.constant 2 : index
    %c0_16 = arith.constant 0 : index
    %c0_17 = arith.constant 0 : index
    %18 = vector.load %arg3[%c2, %c0_16, %c0_17] : memref<7x16x64xbf16, #tpu.memory_space<vmem>>, vector<1x16x64xbf16>
    %19 = vector.shape_cast %18 : vector<1x16x64xbf16> to vector<16x64xbf16>
    %cst_18 = arith.constant dense<0.000000e+00> : vector<16x128xf32>
    %20 = tpu.matmul %19, %0, %cst_18 {dimension_numbers = #tpu.dot_dimension_numbers<[1], [0], [0], [1], [0, 0, 1, 1], [], []>} : vector<16x64xbf16>, vector<64x128xbf16>, vector<16x128xf32> -> vector<16x128xf32>
    %21 = arith.truncf %20 : vector<16x128xf32> to vector<16x128xbf16>
    %c2_19 = arith.constant 2 : index
    %c0_20 = arith.constant 0 : index
    %c0_21 = arith.constant 0 : index
    %22 = vector.load %arg2[%c2_19, %c0_20, %c0_21] : memref<7x128x512xbf16, #tpu.memory_space<vmem>>, vector<1x128x512xbf16>
    %23 = vector.shape_cast %22 : vector<1x128x512xbf16> to vector<128x512xbf16>
    %cst_22 = arith.constant dense<0.000000e+00> : vector<16x512xf32>
    %24 = tpu.matmul %21, %23, %cst_22 {dimension_numbers = #tpu.dot_dimension_numbers<[1], [0], [0], [1], [0, 0, 1, 1], [], []>} : vector<16x128xbf16>, vector<128x512xbf16>, vector<16x512xf32> -> vector<16x512xf32>
    %25 = arith.addf %17, %24 : vector<16x512xf32>
    %c3 = arith.constant 3 : index
    %c0_23 = arith.constant 0 : index
    %c0_24 = arith.constant 0 : index
    %26 = vector.load %arg3[%c3, %c0_23, %c0_24] : memref<7x16x64xbf16, #tpu.memory_space<vmem>>, vector<1x16x64xbf16>
    %27 = vector.shape_cast %26 : vector<1x16x64xbf16> to vector<16x64xbf16>
    %cst_25 = arith.constant dense<0.000000e+00> : vector<16x128xf32>
    %28 = tpu.matmul %27, %0, %cst_25 {dimension_numbers = #tpu.dot_dimension_numbers<[1], [0], [0], [1], [0, 0, 1, 1], [], []>} : vector<16x64xbf16>, vector<64x128xbf16>, vector<16x128xf32> -> vector<16x128xf32>
    %29 = arith.truncf %28 : vector<16x128xf32> to vector<16x128xbf16>
    %c3_26 = arith.constant 3 : index
    %c0_27 = arith.constant 0 : index
    %c0_28 = arith.constant 0 : index
    %30 = vector.load %arg2[%c3_26, %c0_27, %c0_28] : memref<7x128x512xbf16, #tpu.memory_space<vmem>>, vector<1x128x512xbf16>
    %31 = vector.shape_cast %30 : vector<1x128x512xbf16> to vector<128x512xbf16>
    %cst_29 = arith.constant dense<0.000000e+00> : vector<16x512xf32>
    %32 = tpu.matmul %29, %31, %cst_29 {dimension_numbers = #tpu.dot_dimension_numbers<[1], [0], [0], [1], [0, 0, 1, 1], [], []>} : vector<16x128xbf16>, vector<128x512xbf16>, vector<16x512xf32> -> vector<16x512xf32>
    %33 = arith.addf %25, %32 : vector<16x512xf32>
    %c4 = arith.constant 4 : index
    %c0_30 = arith.constant 0 : index
    %c0_31 = arith.constant 0 : index
    %34 = vector.load %arg3[%c4, %c0_30, %c0_31] : memref<7x16x64xbf16, #tpu.memory_space<vmem>>, vector<1x16x64xbf16>
    %35 = vector.shape_cast %34 : vector<1x16x64xbf16> to vector<16x64xbf16>
    %cst_32 = arith.constant dense<0.000000e+00> : vector<16x128xf32>
    %36 = tpu.matmul %35, %0, %cst_32 {dimension_numbers = #tpu.dot_dimension_numbers<[1], [0], [0], [1], [0, 0, 1, 1], [], []>} : vector<16x64xbf16>, vector<64x128xbf16>, vector<16x128xf32> -> vector<16x128xf32>
    %37 = arith.truncf %36 : vector<16x128xf32> to vector<16x128xbf16>
    %c4_33 = arith.constant 4 : index
    %c0_34 = arith.constant 0 : index
    %c0_35 = arith.constant 0 : index
    %38 = vector.load %arg2[%c4_33, %c0_34, %c0_35] : memref<7x128x512xbf16, #tpu.memory_space<vmem>>, vector<1x128x512xbf16>
    %39 = vector.shape_cast %38 : vector<1x128x512xbf16> to vector<128x512xbf16>
    %cst_36 = arith.constant dense<0.000000e+00> : vector<16x512xf32>
    %40 = tpu.matmul %37, %39, %cst_36 {dimension_numbers = #tpu.dot_dimension_numbers<[1], [0], [0], [1], [0, 0, 1, 1], [], []>} : vector<16x128xbf16>, vector<128x512xbf16>, vector<16x512xf32> -> vector<16x512xf32>
    %41 = arith.addf %33, %40 : vector<16x512xf32>
    %c5 = arith.constant 5 : index
    %c0_37 = arith.constant 0 : index
    %c0_38 = arith.constant 0 : index
    %42 = vector.load %arg3[%c5, %c0_37, %c0_38] : memref<7x16x64xbf16, #tpu.memory_space<vmem>>, vector<1x16x64xbf16>
    %43 = vector.shape_cast %42 : vector<1x16x64xbf16> to vector<16x64xbf16>
    %cst_39 = arith.constant dense<0.000000e+00> : vector<16x128xf32>
    %44 = tpu.matmul %43, %0, %cst_39 {dimension_numbers = #tpu.dot_dimension_numbers<[1], [0], [0], [1], [0, 0, 1, 1], [], []>} : vector<16x64xbf16>, vector<64x128xbf16>, vector<16x128xf32> -> vector<16x128xf32>
    %45 = arith.truncf %44 : vector<16x128xf32> to vector<16x128xbf16>
    %c5_40 = arith.constant 5 : index
    %c0_41 = arith.constant 0 : index
    %c0_42 = arith.constant 0 : index
    %46 = vector.load %arg2[%c5_40, %c0_41, %c0_42] : memref<7x128x512xbf16, #tpu.memory_space<vmem>>, vector<1x128x512xbf16>
    %47 = vector.shape_cast %46 : vector<1x128x512xbf16> to vector<128x512xbf16>
    %cst_43 = arith.constant dense<0.000000e+00> : vector<16x512xf32>
    %48 = tpu.matmul %45, %47, %cst_43 {dimension_numbers = #tpu.dot_dimension_numbers<[1], [0], [0], [1], [0, 0, 1, 1], [], []>} : vector<16x128xbf16>, vector<128x512xbf16>, vector<16x512xf32> -> vector<16x512xf32>
    %49 = arith.addf %41, %48 : vector<16x512xf32>
    %c6 = arith.constant 6 : index
    %c0_44 = arith.constant 0 : index
    %c0_45 = arith.constant 0 : index
    %50 = vector.load %arg3[%c6, %c0_44, %c0_45] : memref<7x16x64xbf16, #tpu.memory_space<vmem>>, vector<1x16x64xbf16>
    %51 = vector.shape_cast %50 : vector<1x16x64xbf16> to vector<16x64xbf16>
    %cst_46 = arith.constant dense<0.000000e+00> : vector<16x128xf32>
    %52 = tpu.matmul %51, %0, %cst_46 {dimension_numbers = #tpu.dot_dimension_numbers<[1], [0], [0], [1], [0, 0, 1, 1], [], []>} : vector<16x64xbf16>, vector<64x128xbf16>, vector<16x128xf32> -> vector<16x128xf32>
    %53 = arith.truncf %52 : vector<16x128xf32> to vector<16x128xbf16>
    %c6_47 = arith.constant 6 : index
    %c0_48 = arith.constant 0 : index
    %c0_49 = arith.constant 0 : index
    %54 = vector.load %arg2[%c6_47, %c0_48, %c0_49] : memref<7x128x512xbf16, #tpu.memory_space<vmem>>, vector<1x128x512xbf16>
    %55 = vector.shape_cast %54 : vector<1x128x512xbf16> to vector<128x512xbf16>
    %cst_50 = arith.constant dense<0.000000e+00> : vector<16x512xf32>
    %56 = tpu.matmul %53, %55, %cst_50 {dimension_numbers = #tpu.dot_dimension_numbers<[1], [0], [0], [1], [0, 0, 1, 1], [], []>} : vector<16x128xbf16>, vector<128x512xbf16>, vector<16x512xf32> -> vector<16x512xf32>
    %57 = arith.addf %49, %56 : vector<16x512xf32>
    %c0_51 = arith.constant 0 : index
    %c0_52 = arith.constant 0 : index
    %58 = vector.load %arg4[%c0_51, %c0_52] : memref<1x512xf32, #tpu.memory_space<vmem>>, vector<1x512xf32>
    %59 = vector.broadcast %58 : vector<1x512xf32> to vector<16x512xf32>
    %60 = arith.addf %57, %59 : vector<16x512xf32>
    %cst_53 = arith.constant 0.000000e+00 : f32
    %61 = vector.broadcast %cst_53 : f32 to vector<16x512xf32>
    %62 = arith.cmpf oge, %60, %61 : vector<16x512xf32>
    %cst_54 = arith.constant 1.500000e-01 : f32
    %63 = vector.broadcast %cst_54 : f32 to vector<16x512xf32>
    %64 = arith.mulf %63, %60 : vector<16x512xf32>
    %65 = arith.select %62, %60, %64 : vector<16x512xi1>, vector<16x512xf32>
    %66 = arith.truncf %65 : vector<16x512xf32> to vector<16x512xbf16>
    %cst_55 = arith.constant 0.000000e+00 : f32
    %67 = vector.broadcast %cst_55 : f32 to vector<8x512xf32>
    %c0_56 = arith.constant 0 : index
    %c0_57 = arith.constant 0 : index
    %c0_58 = arith.constant 0 : index
    %68 = vector.load %arg6[%c0_56, %c0_57, %c0_58] : memref<3x8x16xbf16, #tpu.memory_space<vmem>>, vector<1x8x16xbf16>
    %69 = vector.shape_cast %68 : vector<1x8x16xbf16> to vector<8x16xbf16>
    %cst_59 = arith.constant dense<0.000000e+00> : vector<8x512xf32>
    %70 = tpu.matmul %69, %66, %cst_59 {dimension_numbers = #tpu.dot_dimension_numbers<[1], [0], [0], [1], [0, 0, 1, 1], [], []>} : vector<8x16xbf16>, vector<16x512xbf16>, vector<8x512xf32> -> vector<8x512xf32>
    %71 = arith.truncf %70 : vector<8x512xf32> to vector<8x512xbf16>
    %c0_60 = arith.constant 0 : index
    %c0_61 = arith.constant 0 : index
    %c0_62 = arith.constant 0 : index
    %72 = vector.load %arg5[%c0_60, %c0_61, %c0_62] : memref<3x512x512xbf16, #tpu.memory_space<vmem>>, vector<1x512x512xbf16>
    %73 = vector.shape_cast %72 : vector<1x512x512xbf16> to vector<512x512xbf16>
    %cst_63 = arith.constant dense<0.000000e+00> : vector<8x512xf32>
    %74 = tpu.matmul %71, %73, %cst_63 {dimension_numbers = #tpu.dot_dimension_numbers<[1], [0], [0], [1], [0, 0, 1, 1], [], []>} : vector<8x512xbf16>, vector<512x512xbf16>, vector<8x512xf32> -> vector<8x512xf32>
    %75 = arith.addf %67, %74 : vector<8x512xf32>
    %c1_64 = arith.constant 1 : index
    %c0_65 = arith.constant 0 : index
    %c0_66 = arith.constant 0 : index
    %76 = vector.load %arg6[%c1_64, %c0_65, %c0_66] : memref<3x8x16xbf16, #tpu.memory_space<vmem>>, vector<1x8x16xbf16>
    %77 = vector.shape_cast %76 : vector<1x8x16xbf16> to vector<8x16xbf16>
    %cst_67 = arith.constant dense<0.000000e+00> : vector<8x512xf32>
    %78 = tpu.matmul %77, %66, %cst_67 {dimension_numbers = #tpu.dot_dimension_numbers<[1], [0], [0], [1], [0, 0, 1, 1], [], []>} : vector<8x16xbf16>, vector<16x512xbf16>, vector<8x512xf32> -> vector<8x512xf32>
    %79 = arith.truncf %78 : vector<8x512xf32> to vector<8x512xbf16>
    %c1_68 = arith.constant 1 : index
    %c0_69 = arith.constant 0 : index
    %c0_70 = arith.constant 0 : index
    %80 = vector.load %arg5[%c1_68, %c0_69, %c0_70] : memref<3x512x512xbf16, #tpu.memory_space<vmem>>, vector<1x512x512xbf16>
    %81 = vector.shape_cast %80 : vector<1x512x512xbf16> to vector<512x512xbf16>
    %cst_71 = arith.constant dense<0.000000e+00> : vector<8x512xf32>
    %82 = tpu.matmul %79, %81, %cst_71 {dimension_numbers = #tpu.dot_dimension_numbers<[1], [0], [0], [1], [0, 0, 1, 1], [], []>} : vector<8x512xbf16>, vector<512x512xbf16>, vector<8x512xf32> -> vector<8x512xf32>
    %83 = arith.addf %75, %82 : vector<8x512xf32>
    %c2_72 = arith.constant 2 : index
    %c0_73 = arith.constant 0 : index
    %c0_74 = arith.constant 0 : index
    %84 = vector.load %arg6[%c2_72, %c0_73, %c0_74] : memref<3x8x16xbf16, #tpu.memory_space<vmem>>, vector<1x8x16xbf16>
    %85 = vector.shape_cast %84 : vector<1x8x16xbf16> to vector<8x16xbf16>
    %cst_75 = arith.constant dense<0.000000e+00> : vector<8x512xf32>
    %86 = tpu.matmul %85, %66, %cst_75 {dimension_numbers = #tpu.dot_dimension_numbers<[1], [0], [0], [1], [0, 0, 1, 1], [], []>} : vector<8x16xbf16>, vector<16x512xbf16>, vector<8x512xf32> -> vector<8x512xf32>
    %87 = arith.truncf %86 : vector<8x512xf32> to vector<8x512xbf16>
    %c2_76 = arith.constant 2 : index
    %c0_77 = arith.constant 0 : index
    %c0_78 = arith.constant 0 : index
    %88 = vector.load %arg5[%c2_76, %c0_77, %c0_78] : memref<3x512x512xbf16, #tpu.memory_space<vmem>>, vector<1x512x512xbf16>
    %89 = vector.shape_cast %88 : vector<1x512x512xbf16> to vector<512x512xbf16>
    %cst_79 = arith.constant dense<0.000000e+00> : vector<8x512xf32>
    %90 = tpu.matmul %87, %89, %cst_79 {dimension_numbers = #tpu.dot_dimension_numbers<[1], [0], [0], [1], [0, 0, 1, 1], [], []>} : vector<8x512xbf16>, vector<512x512xbf16>, vector<8x512xf32> -> vector<8x512xf32>
    %91 = arith.addf %83, %90 : vector<8x512xf32>
    %c0_80 = arith.constant 0 : index
    %c0_81 = arith.constant 0 : index
    %92 = vector.load %arg7[%c0_80, %c0_81] : memref<1x512xf32, #tpu.memory_space<vmem>>, vector<1x512xf32>
    %93 = vector.broadcast %92 : vector<1x512xf32> to vector<8x512xf32>
    %94 = arith.addf %91, %93 : vector<8x512xf32>
    %cst_82 = arith.constant 0.000000e+00 : f32
    %95 = vector.broadcast %cst_82 : f32 to vector<8x512xf32>
    %96 = arith.cmpf oge, %94, %95 : vector<8x512xf32>
    %cst_83 = arith.constant 1.500000e-01 : f32
    %97 = vector.broadcast %cst_83 : f32 to vector<8x512xf32>
    %98 = arith.mulf %97, %94 : vector<8x512xf32>
    %99 = arith.select %96, %94, %98 : vector<8x512xi1>, vector<8x512xf32>
    %100 = arith.truncf %99 : vector<8x512xf32> to vector<8x512xbf16>
    %cst_84 = arith.constant 0.000000e+00 : f32
    %101 = vector.broadcast %cst_84 : f32 to vector<4x512xf32>
    %c0_85 = arith.constant 0 : index
    %c0_86 = arith.constant 0 : index
    %c0_87 = arith.constant 0 : index
    %102 = vector.load %arg9[%c0_85, %c0_86, %c0_87] : memref<3x4x8xbf16, #tpu.memory_space<vmem>>, vector<1x4x8xbf16>
    %103 = vector.shape_cast %102 : vector<1x4x8xbf16> to vector<4x8xbf16>
    %cst_88 = arith.constant dense<0.000000e+00> : vector<4x512xf32>
    %104 = tpu.matmul %103, %100, %cst_88 {dimension_numbers = #tpu.dot_dimension_numbers<[1], [0], [0], [1], [0, 0, 1, 1], [], []>} : vector<4x8xbf16>, vector<8x512xbf16>, vector<4x512xf32> -> vector<4x512xf32>
    %105 = arith.truncf %104 : vector<4x512xf32> to vector<4x512xbf16>
    %c0_89 = arith.constant 0 : index
    %c0_90 = arith.constant 0 : index
    %c0_91 = arith.constant 0 : index
    %106 = vector.load %arg8[%c0_89, %c0_90, %c0_91] : memref<3x512x512xbf16, #tpu.memory_space<vmem>>, vector<1x512x512xbf16>
    %107 = vector.shape_cast %106 : vector<1x512x512xbf16> to vector<512x512xbf16>
    %cst_92 = arith.constant dense<0.000000e+00> : vector<4x512xf32>
    %108 = tpu.matmul %105, %107, %cst_92 {dimension_numbers = #tpu.dot_dimension_numbers<[1], [0], [0], [1], [0, 0, 1, 1], [], []>} : vector<4x512xbf16>, vector<512x512xbf16>, vector<4x512xf32> -> vector<4x512xf32>
    %109 = arith.addf %101, %108 : vector<4x512xf32>
    %c1_93 = arith.constant 1 : index
    %c0_94 = arith.constant 0 : index
    %c0_95 = arith.constant 0 : index
    %110 = vector.load %arg9[%c1_93, %c0_94, %c0_95] : memref<3x4x8xbf16, #tpu.memory_space<vmem>>, vector<1x4x8xbf16>
    %111 = vector.shape_cast %110 : vector<1x4x8xbf16> to vector<4x8xbf16>
    %cst_96 = arith.constant dense<0.000000e+00> : vector<4x512xf32>
    %112 = tpu.matmul %111, %100, %cst_96 {dimension_numbers = #tpu.dot_dimension_numbers<[1], [0], [0], [1], [0, 0, 1, 1], [], []>} : vector<4x8xbf16>, vector<8x512xbf16>, vector<4x512xf32> -> vector<4x512xf32>
    %113 = arith.truncf %112 : vector<4x512xf32> to vector<4x512xbf16>
    %c1_97 = arith.constant 1 : index
    %c0_98 = arith.constant 0 : index
    %c0_99 = arith.constant 0 : index
    %114 = vector.load %arg8[%c1_97, %c0_98, %c0_99] : memref<3x512x512xbf16, #tpu.memory_space<vmem>>, vector<1x512x512xbf16>
    %115 = vector.shape_cast %114 : vector<1x512x512xbf16> to vector<512x512xbf16>
    %cst_100 = arith.constant dense<0.000000e+00> : vector<4x512xf32>
    %116 = tpu.matmul %113, %115, %cst_100 {dimension_numbers = #tpu.dot_dimension_numbers<[1], [0], [0], [1], [0, 0, 1, 1], [], []>} : vector<4x512xbf16>, vector<512x512xbf16>, vector<4x512xf32> -> vector<4x512xf32>
    %117 = arith.addf %109, %116 : vector<4x512xf32>
    %c2_101 = arith.constant 2 : index
    %c0_102 = arith.constant 0 : index
    %c0_103 = arith.constant 0 : index
    %118 = vector.load %arg9[%c2_101, %c0_102, %c0_103] : memref<3x4x8xbf16, #tpu.memory_space<vmem>>, vector<1x4x8xbf16>
    %119 = vector.shape_cast %118 : vector<1x4x8xbf16> to vector<4x8xbf16>
    %cst_104 = arith.constant dense<0.000000e+00> : vector<4x512xf32>
    %120 = tpu.matmul %119, %100, %cst_104 {dimension_numbers = #tpu.dot_dimension_numbers<[1], [0], [0], [1], [0, 0, 1, 1], [], []>} : vector<4x8xbf16>, vector<8x512xbf16>, vector<4x512xf32> -> vector<4x512xf32>
    %121 = arith.truncf %120 : vector<4x512xf32> to vector<4x512xbf16>
    %c2_105 = arith.constant 2 : index
    %c0_106 = arith.constant 0 : index
    %c0_107 = arith.constant 0 : index
    %122 = vector.load %arg8[%c2_105, %c0_106, %c0_107] : memref<3x512x512xbf16, #tpu.memory_space<vmem>>, vector<1x512x512xbf16>
    %123 = vector.shape_cast %122 : vector<1x512x512xbf16> to vector<512x512xbf16>
    %cst_108 = arith.constant dense<0.000000e+00> : vector<4x512xf32>
    %124 = tpu.matmul %121, %123, %cst_108 {dimension_numbers = #tpu.dot_dimension_numbers<[1], [0], [0], [1], [0, 0, 1, 1], [], []>} : vector<4x512xbf16>, vector<512x512xbf16>, vector<4x512xf32> -> vector<4x512xf32>
    %125 = arith.addf %117, %124 : vector<4x512xf32>
    %c0_109 = arith.constant 0 : index
    %c0_110 = arith.constant 0 : index
    %126 = vector.load %arg10[%c0_109, %c0_110] : memref<1x512xf32, #tpu.memory_space<vmem>>, vector<1x512xf32>
    %127 = vector.broadcast %126 : vector<1x512xf32> to vector<4x512xf32>
    %128 = arith.addf %125, %127 : vector<4x512xf32>
    %cst_111 = arith.constant 0.000000e+00 : f32
    %129 = vector.broadcast %cst_111 : f32 to vector<4x512xf32>
    %130 = arith.cmpf oge, %128, %129 : vector<4x512xf32>
    %cst_112 = arith.constant 1.500000e-01 : f32
    %131 = vector.broadcast %cst_112 : f32 to vector<4x512xf32>
    %132 = arith.mulf %131, %128 : vector<4x512xf32>
    %133 = arith.select %130, %128, %132 : vector<4x512xi1>, vector<4x512xf32>
    %134 = arith.truncf %133 : vector<4x512xf32> to vector<4x512xbf16>
    %cst_113 = arith.constant 0.000000e+00 : f32
    %135 = vector.broadcast %cst_113 : f32 to vector<2x384xf32>
    %c0_114 = arith.constant 0 : index
    %c0_115 = arith.constant 0 : index
    %c0_116 = arith.constant 0 : index
    %136 = vector.load %arg12[%c0_114, %c0_115, %c0_116] : memref<3x2x4xbf16, #tpu.memory_space<vmem>>, vector<1x2x4xbf16>
    %137 = vector.shape_cast %136 : vector<1x2x4xbf16> to vector<2x4xbf16>
    %cst_117 = arith.constant dense<0.000000e+00> : vector<2x512xf32>
    %138 = tpu.matmul %137, %134, %cst_117 {dimension_numbers = #tpu.dot_dimension_numbers<[1], [0], [0], [1], [0, 0, 1, 1], [], []>} : vector<2x4xbf16>, vector<4x512xbf16>, vector<2x512xf32> -> vector<2x512xf32>
    %139 = arith.truncf %138 : vector<2x512xf32> to vector<2x512xbf16>
    %c0_118 = arith.constant 0 : index
    %c0_119 = arith.constant 0 : index
    %c0_120 = arith.constant 0 : index
    %140 = vector.load %arg11[%c0_118, %c0_119, %c0_120] : memref<3x512x384xbf16, #tpu.memory_space<vmem>>, vector<1x512x384xbf16>
    %141 = vector.shape_cast %140 : vector<1x512x384xbf16> to vector<512x384xbf16>
    %cst_121 = arith.constant dense<0.000000e+00> : vector<2x384xf32>
    %142 = tpu.matmul %139, %141, %cst_121 {dimension_numbers = #tpu.dot_dimension_numbers<[1], [0], [0], [1], [0, 0, 1, 1], [], []>} : vector<2x512xbf16>, vector<512x384xbf16>, vector<2x384xf32> -> vector<2x384xf32>
    %143 = arith.addf %135, %142 : vector<2x384xf32>
    %c1_122 = arith.constant 1 : index
    %c0_123 = arith.constant 0 : index
    %c0_124 = arith.constant 0 : index
    %144 = vector.load %arg12[%c1_122, %c0_123, %c0_124] : memref<3x2x4xbf16, #tpu.memory_space<vmem>>, vector<1x2x4xbf16>
    %145 = vector.shape_cast %144 : vector<1x2x4xbf16> to vector<2x4xbf16>
    %cst_125 = arith.constant dense<0.000000e+00> : vector<2x512xf32>
    %146 = tpu.matmul %145, %134, %cst_125 {dimension_numbers = #tpu.dot_dimension_numbers<[1], [0], [0], [1], [0, 0, 1, 1], [], []>} : vector<2x4xbf16>, vector<4x512xbf16>, vector<2x512xf32> -> vector<2x512xf32>
    %147 = arith.truncf %146 : vector<2x512xf32> to vector<2x512xbf16>
    %c1_126 = arith.constant 1 : index
    %c0_127 = arith.constant 0 : index
    %c0_128 = arith.constant 0 : index
    %148 = vector.load %arg11[%c1_126, %c0_127, %c0_128] : memref<3x512x384xbf16, #tpu.memory_space<vmem>>, vector<1x512x384xbf16>
    %149 = vector.shape_cast %148 : vector<1x512x384xbf16> to vector<512x384xbf16>
    %cst_129 = arith.constant dense<0.000000e+00> : vector<2x384xf32>
    %150 = tpu.matmul %147, %149, %cst_129 {dimension_numbers = #tpu.dot_dimension_numbers<[1], [0], [0], [1], [0, 0, 1, 1], [], []>} : vector<2x512xbf16>, vector<512x384xbf16>, vector<2x384xf32> -> vector<2x384xf32>
    %151 = arith.addf %143, %150 : vector<2x384xf32>
    %c2_130 = arith.constant 2 : index
    %c0_131 = arith.constant 0 : index
    %c0_132 = arith.constant 0 : index
    %152 = vector.load %arg12[%c2_130, %c0_131, %c0_132] : memref<3x2x4xbf16, #tpu.memory_space<vmem>>, vector<1x2x4xbf16>
    %153 = vector.shape_cast %152 : vector<1x2x4xbf16> to vector<2x4xbf16>
    %cst_133 = arith.constant dense<0.000000e+00> : vector<2x512xf32>
    %154 = tpu.matmul %153, %134, %cst_133 {dimension_numbers = #tpu.dot_dimension_numbers<[1], [0], [0], [1], [0, 0, 1, 1], [], []>} : vector<2x4xbf16>, vector<4x512xbf16>, vector<2x512xf32> -> vector<2x512xf32>
    %155 = arith.truncf %154 : vector<2x512xf32> to vector<2x512xbf16>
    %c2_134 = arith.constant 2 : index
    %c0_135 = arith.constant 0 : index
    %c0_136 = arith.constant 0 : index
    %156 = vector.load %arg11[%c2_134, %c0_135, %c0_136] : memref<3x512x384xbf16, #tpu.memory_space<vmem>>, vector<1x512x384xbf16>
    %157 = vector.shape_cast %156 : vector<1x512x384xbf16> to vector<512x384xbf16>
    %cst_137 = arith.constant dense<0.000000e+00> : vector<2x384xf32>
    %158 = tpu.matmul %155, %157, %cst_137 {dimension_numbers = #tpu.dot_dimension_numbers<[1], [0], [0], [1], [0, 0, 1, 1], [], []>} : vector<2x512xbf16>, vector<512x384xbf16>, vector<2x384xf32> -> vector<2x384xf32>
    %159 = arith.addf %151, %158 : vector<2x384xf32>
    %c0_138 = arith.constant 0 : index
    %c0_139 = arith.constant 0 : index
    %160 = vector.load %arg13[%c0_138, %c0_139] : memref<1x384xf32, #tpu.memory_space<vmem>>, vector<1x384xf32>
    %161 = vector.broadcast %160 : vector<1x384xf32> to vector<2x384xf32>
    %162 = arith.addf %159, %161 : vector<2x384xf32>
    %cst_140 = arith.constant 0.000000e+00 : f32
    %163 = vector.broadcast %cst_140 : f32 to vector<2x384xf32>
    %164 = arith.cmpf oge, %162, %163 : vector<2x384xf32>
    %cst_141 = arith.constant 1.500000e-01 : f32
    %165 = vector.broadcast %cst_141 : f32 to vector<2x384xf32>
    %166 = arith.mulf %165, %162 : vector<2x384xf32>
    %167 = arith.select %164, %162, %166 : vector<2x384xi1>, vector<2x384xf32>
    %168 = arith.truncf %167 : vector<2x384xf32> to vector<2x384xbf16>
    %cst_142 = arith.constant 0.000000e+00 : f32
    %169 = vector.broadcast %cst_142 : f32 to vector<2x384xf32>
    %c0_143 = arith.constant 0 : index
    %c0_144 = arith.constant 0 : index
    %c0_145 = arith.constant 0 : index
    %170 = vector.load %arg15[%c0_143, %c0_144, %c0_145] : memref<3x2x2xbf16, #tpu.memory_space<vmem>>, vector<1x2x2xbf16>
    %171 = vector.shape_cast %170 : vector<1x2x2xbf16> to vector<2x2xbf16>
    %cst_146 = arith.constant dense<0.000000e+00> : vector<2x384xf32>
    %172 = tpu.matmul %171, %168, %cst_146 {dimension_numbers = #tpu.dot_dimension_numbers<[1], [0], [0], [1], [0, 0, 1, 1], [], []>} : vector<2x2xbf16>, vector<2x384xbf16>, vector<2x384xf32> -> vector<2x384xf32>
    %173 = arith.truncf %172 : vector<2x384xf32> to vector<2x384xbf16>
    %c0_147 = arith.constant 0 : index
    %c0_148 = arith.constant 0 : index
    %c0_149 = arith.constant 0 : index
    %174 = vector.load %arg14[%c0_147, %c0_148, %c0_149] : memref<3x384x384xbf16, #tpu.memory_space<vmem>>, vector<1x384x384xbf16>
    %175 = vector.shape_cast %174 : vector<1x384x384xbf16> to vector<384x384xbf16>
    %cst_150 = arith.constant dense<0.000000e+00> : vector<2x384xf32>
    %176 = tpu.matmul %173, %175, %cst_150 {dimension_numbers = #tpu.dot_dimension_numbers<[1], [0], [0], [1], [0, 0, 1, 1], [], []>} : vector<2x384xbf16>, vector<384x384xbf16>, vector<2x384xf32> -> vector<2x384xf32>
    %177 = arith.addf %169, %176 : vector<2x384xf32>
    %c1_151 = arith.constant 1 : index
    %c0_152 = arith.constant 0 : index
    %c0_153 = arith.constant 0 : index
    %178 = vector.load %arg15[%c1_151, %c0_152, %c0_153] : memref<3x2x2xbf16, #tpu.memory_space<vmem>>, vector<1x2x2xbf16>
    %179 = vector.shape_cast %178 : vector<1x2x2xbf16> to vector<2x2xbf16>
    %cst_154 = arith.constant dense<0.000000e+00> : vector<2x384xf32>
    %180 = tpu.matmul %179, %168, %cst_154 {dimension_numbers = #tpu.dot_dimension_numbers<[1], [0], [0], [1], [0, 0, 1, 1], [], []>} : vector<2x2xbf16>, vector<2x384xbf16>, vector<2x384xf32> -> vector<2x384xf32>
    %181 = arith.truncf %180 : vector<2x384xf32> to vector<2x384xbf16>
    %c1_155 = arith.constant 1 : index
    %c0_156 = arith.constant 0 : index
    %c0_157 = arith.constant 0 : index
    %182 = vector.load %arg14[%c1_155, %c0_156, %c0_157] : memref<3x384x384xbf16, #tpu.memory_space<vmem>>, vector<1x384x384xbf16>
    %183 = vector.shape_cast %182 : vector<1x384x384xbf16> to vector<384x384xbf16>
    %cst_158 = arith.constant dense<0.000000e+00> : vector<2x384xf32>
    %184 = tpu.matmul %181, %183, %cst_158 {dimension_numbers = #tpu.dot_dimension_numbers<[1], [0], [0], [1], [0, 0, 1, 1], [], []>} : vector<2x384xbf16>, vector<384x384xbf16>, vector<2x384xf32> -> vector<2x384xf32>
    %185 = arith.addf %177, %184 : vector<2x384xf32>
    %c2_159 = arith.constant 2 : index
    %c0_160 = arith.constant 0 : index
    %c0_161 = arith.constant 0 : index
    %186 = vector.load %arg15[%c2_159, %c0_160, %c0_161] : memref<3x2x2xbf16, #tpu.memory_space<vmem>>, vector<1x2x2xbf16>
    %187 = vector.shape_cast %186 : vector<1x2x2xbf16> to vector<2x2xbf16>
    %cst_162 = arith.constant dense<0.000000e+00> : vector<2x384xf32>
    %188 = tpu.matmul %187, %168, %cst_162 {dimension_numbers = #tpu.dot_dimension_numbers<[1], [0], [0], [1], [0, 0, 1, 1], [], []>} : vector<2x2xbf16>, vector<2x384xbf16>, vector<2x384xf32> -> vector<2x384xf32>
    %189 = arith.truncf %188 : vector<2x384xf32> to vector<2x384xbf16>
    %c2_163 = arith.constant 2 : index
    %c0_164 = arith.constant 0 : index
    %c0_165 = arith.constant 0 : index
    %190 = vector.load %arg14[%c2_163, %c0_164, %c0_165] : memref<3x384x384xbf16, #tpu.memory_space<vmem>>, vector<1x384x384xbf16>
    %191 = vector.shape_cast %190 : vector<1x384x384xbf16> to vector<384x384xbf16>
    %cst_166 = arith.constant dense<0.000000e+00> : vector<2x384xf32>
    %192 = tpu.matmul %189, %191, %cst_166 {dimension_numbers = #tpu.dot_dimension_numbers<[1], [0], [0], [1], [0, 0, 1, 1], [], []>} : vector<2x384xbf16>, vector<384x384xbf16>, vector<2x384xf32> -> vector<2x384xf32>
    %193 = arith.addf %185, %192 : vector<2x384xf32>
    %c0_167 = arith.constant 0 : index
    %c0_168 = arith.constant 0 : index
    %194 = vector.load %arg16[%c0_167, %c0_168] : memref<1x384xf32, #tpu.memory_space<vmem>>, vector<1x384xf32>
    %195 = vector.broadcast %194 : vector<1x384xf32> to vector<2x384xf32>
    %196 = arith.addf %193, %195 : vector<2x384xf32>
    %cst_169 = arith.constant 0.000000e+00 : f32
    %197 = vector.broadcast %cst_169 : f32 to vector<2x384xf32>
    %198 = arith.cmpf oge, %196, %197 : vector<2x384xf32>
    %cst_170 = arith.constant 1.500000e-01 : f32
    %199 = vector.broadcast %cst_170 : f32 to vector<2x384xf32>
    %200 = arith.mulf %199, %196 : vector<2x384xf32>
    %201 = arith.select %198, %196, %200 : vector<2x384xi1>, vector<2x384xf32>
    %c0_171 = arith.constant 0 : index
    %c0_172 = arith.constant 0 : index
    %202 = vector.load %arg17[%c0_171, %c0_172] : memref<2x384xf32, #tpu.memory_space<vmem>>, vector<2x384xf32>
    tpu.vector_store %arg17[%c0_171, %c0_172], %201 {strides = array<i32>} : memref<2x384xf32, #tpu.memory_space<vmem>>, vector<2x384xf32>,
    return
  }
  func.func @transform_0(%arg0: i32) -> (i32, i32) {
    %c0_i32 = arith.constant 0 : i32
    %c0_i32_0 = arith.constant 0 : i32
    %c0_i32_1 = arith.constant 0 : i32
    return %c0_i32, %c0_i32_0 : i32, i32
  }
  func.func @transform_1(%arg0: i32) -> (i32, i32, i32) {
    %c0_i32 = arith.constant 0 : i32
    %c0_i32_0 = arith.constant 0 : i32
    %c0_i32_1 = arith.constant 0 : i32
    %c0_i32_2 = arith.constant 0 : i32
    return %c0_i32, %c0_i32_0, %c0_i32_1 : i32, i32, i32
  }
  func.func @transform_2(%arg0: i32) -> (i32, i32, i32) {
    %c0_i32 = arith.constant 0 : i32
    %c0_i32_0 = arith.constant 0 : i32
    %c0_i32_1 = arith.constant 0 : i32
    %c0_i32_2 = arith.constant 0 : i32
    return %c0_i32, %c0_i32_0, %c0_i32_1 : i32, i32, i32
  }
  func.func @transform_3(%arg0: i32) -> (i32, i32) {
    %c0_i32 = arith.constant 0 : i32
    %c0_i32_0 = arith.constant 0 : i32
    %c0_i32_1 = arith.constant 0 : i32
    return %c0_i32, %c0_i32_0 : i32, i32
  }
  func.func @transform_4(%arg0: i32) -> (i32, i32, i32) {
    %c0_i32 = arith.constant 0 : i32
    %c0_i32_0 = arith.constant 0 : i32
    %c0_i32_1 = arith.constant 0 : i32
    %c0_i32_2 = arith.constant 0 : i32
    return %c0_i32, %c0_i32_0, %c0_i32_1 : i32, i32, i32
  }
  func.func @transform_5(%arg0: i32) -> (i32, i32, i32) {
    %c0_i32 = arith.constant 0 : i32
    %c0_i32_0 = arith.constant 0 : i32
    %c0_i32_1 = arith.constant 0 : i32
    %c0_i32_2 = arith.constant 0 : i32
    return %c0_i32, %c0_i32_0, %c0_i32_1 : i32, i32, i32
  }
  func.func @transform_6(%arg0: i32) -> (i32, i32) {
    %c0_i32 = arith.constant 0 : i32
    %c0_i32_0 = arith.constant 0 : i32
    %c0_i32_1 = arith.constant 0 : i32
    return %c0_i32, %c0_i32_0 : i32, i32
  }
  func.func @transform_7(%arg0: i32) -> (i32, i32, i32) {
    %c0_i32 = arith.constant 0 : i32
    %c0_i32_0 = arith.constant 0 : i32
    %c0_i32_1 = arith.constant 0 : i32
    %c0_i32_2 = arith.constant 0 : i32
    return %c0_i32, %c0_i32_0, %c0_i32_1 : i32, i32, i32
  }
  func.func @transform_8(%arg0: i32) -> (i32, i32, i32) {
    %c0_i32 = arith.constant 0 : i32
    %c0_i32_0 = arith.constant 0 : i32
    %c0_i32_1 = arith.constant 0 : i32
    %c0_i32_2 = arith.constant 0 : i32
    return %c0_i32, %c0_i32_0, %c0_i32_1 : i32, i32, i32
  }
  func.func @transform_9(%arg0: i32) -> (i32, i32) {
    %c0_i32 = arith.constant 0 : i32
    %c0_i32_0 = arith.constant 0 : i32
    %c0_i32_1 = arith.constant 0 : i32
    return %c0_i32, %c0_i32_0 : i32, i32
  }
  func.func @transform_10(%arg0: i32) -> (i32, i32, i32) {
    %c0_i32 = arith.constant 0 : i32
    %c0_i32_0 = arith.constant 0 : i32
    %c0_i32_1 = arith.constant 0 : i32
    %c0_i32_2 = arith.constant 0 : i32
    return %c0_i32, %c0_i32_0, %c0_i32_1 : i32, i32, i32
  }
  func.func @transform_11(%arg0: i32) -> (i32, i32, i32) {
    %c0_i32 = arith.constant 0 : i32
    %c0_i32_0 = arith.constant 0 : i32
    %c0_i32_1 = arith.constant 0 : i32
    %c0_i32_2 = arith.constant 0 : i32
    return %c0_i32, %c0_i32_0, %c0_i32_1 : i32, i32, i32
  }
  func.func @transform_12(%arg0: i32) -> (i32, i32) {
    %c0_i32 = arith.constant 0 : i32
    %c0_i32_0 = arith.constant 0 : i32
    %c0_i32_1 = arith.constant 0 : i32
    return %c0_i32, %c0_i32_0 : i32, i32
  }
  func.func @transform_13(%arg0: i32) -> (i32, i32, i32) {
    %c0_i32 = arith.constant 0 : i32
    %c0_i32_0 = arith.constant 0 : i32
    %c0_i32_1 = arith.constant 0 : i32
    %c0_i32_2 = arith.constant 0 : i32
    return %c0_i32, %c0_i32_0, %c0_i32_1 : i32, i32, i32
  }
  func.func @transform_14(%arg0: i32) -> (i32, i32, i32) {
    %c0_i32 = arith.constant 0 : i32
    %c0_i32_0 = arith.constant 0 : i32
    %c0_i32_1 = arith.constant 0 : i32
    %c0_i32_2 = arith.constant 0 : i32
    return %c0_i32, %c0_i32_0, %c0_i32_1 : i32, i32, i32
  }
  func.func @transform_15(%arg0: i32) -> (i32, i32) {
    %c0_i32 = arith.constant 0 : i32
    %c0_i32_0 = arith.constant 0 : i32
    %c0_i32_1 = arith.constant 0 : i32
    return %c0_i32, %c0_i32_0 : i32, i32
  }
  func.func @transform_16(%arg0: i32) -> (i32, i32) {
    %c0_i32 = arith.constant 0 : i32
    %c0_i32_0 = arith.constant 0 : i32
    %c0_i32_1 = arith.constant 0 : i32
    return %c0_i32, %c0_i32_0 : i32, i32
  }
}

</mosaic_0001>

<llo_original>
// kernel: simple_extractor_forward.1
$region0: #{simple_extractor_forward.1}
  #allocation0 [shape = 'u32[]', space=smem, size = 0x4, offset = 0x4, fixed_abs, tag = 'smem constant byte address 0x4 - core index']
  #allocation1 [shape = 'u32[72,128]{1,0:T(1,128)}', space=vmem, size = 0x9000, scoped, tag = 'internal scratch']
  %s0 = inlined_call_operand.vmem [shape: bf16[64,128], index: 0, kind: input, shape index: {}]
  %s1 = inlined_call_operand.hbm [shape: bf16[7,128,512], index: 1, kind: input, shape index: {}]
  %s2 = inlined_call_operand.hbm [shape: bf16[7,16,64], index: 2, kind: input, shape index: {}]
  %s3 = inlined_call_operand.hbm [shape: f32[1,512], index: 3, kind: input, shape index: {}]
  %s4 = inlined_call_operand.hbm [shape: bf16[3,512,512], index: 4, kind: input, shape index: {}]
  %s5 = inlined_call_operand.hbm [shape: bf16[3,8,16], index: 5, kind: input, shape index: {}]
  %s6 = inlined_call_operand.hbm [shape: f32[1,512], index: 6, kind: input, shape index: {}]
  %s7 = inlined_call_operand.hbm [shape: bf16[3,512,512], index: 7, kind: input, shape index: {}]
  %s8 = inlined_call_operand.hbm [shape: bf16[3,4,8], index: 8, kind: input, shape index: {}]
  %s9 = inlined_call_operand.hbm [shape: f32[1,512], index: 9, kind: input, shape index: {}]
  %s10 = inlined_call_operand.hbm [shape: bf16[3,512,384], index: 10, kind: input, shape index: {}]
  %s11 = inlined_call_operand.hbm [shape: bf16[3,2,4], index: 11, kind: input, shape index: {}]
  %s12 = inlined_call_operand.hbm [shape: f32[1,384], index: 12, kind: input, shape index: {}]
  %s13 = inlined_call_operand.hbm [shape: bf16[3,384,384], index: 13, kind: input, shape index: {}]
  %s14 = inlined_call_operand.vmem [shape: bf16[3,2,2], index: 14, kind: input, shape index: {}]
  %s15 = inlined_call_operand.hbm [shape: f32[1,384], index: 15, kind: input, shape index: {}]
  %s16 = inlined_call_operand.vmem [shape: f32[2,384], index: 16, kind: output, shape index: {}]
  %s17 = sld [smem:[#allocation0]]
  $region130: #{simple_extractor_forward.1} parent=0
    _
  %s19 = ssub.s32 1, %s17
  %s20 = scalar_select 0, %s19, %s17
  $region1: #{simple_extractor_forward.1} parent=0
    #allocation2 [shape = 'u8[917504]{0}', space=vmem, size = 0xe0000, scoped, tag = 'input window, operand 1, single buffered']
    #allocation3 [shape = 's32[1]{0}', space=sflag, size = 0x4, scoped, tag = 'scoped memory for simple_extractor_forward.1']
    #allocation4 [shape = 'u8[28672]{0}', space=vmem, size = 0x7000, scoped, tag = 'input window, operand 2, single buffered']
    #allocation5 [shape = 's32[1]{0}', space=sflag, size = 0x4, scoped, tag = 'scoped memory for simple_extractor_forward.1']
    #allocation6 [shape = 'u8[2048]{0}', space=vmem, size = 0x800, scoped, tag = 'input window, operand 3, single buffered']
    #allocation7 [shape = 'u8[1572864]{0}', space=vmem, size = 0x180000, scoped, tag = 'input window, operand 4, single buffered']
    #allocation8 [shape = 's32[1]{0}', space=sflag, size = 0x4, scoped, tag = 'scoped memory for simple_extractor_forward.1']
    #allocation9 [shape = 'u8[6144]{0}', space=vmem, size = 0x1800, scoped, tag = 'input window, operand 5, single buffered']
    #allocation10 [shape = 'u8[2048]{0}', space=vmem, size = 0x800, scoped, tag = 'input window, operand 6, single buffered']
    #allocation11 [shape = 's32[1]{0}', space=sflag, size = 0x4, scoped, tag = 'scoped memory for simple_extractor_forward.1']
    #allocation12 [shape = 'u8[1572864]{0}', space=vmem, size = 0x180000, scoped, tag = 'input window, operand 7, single buffered']
    #allocation13 [shape = 'u8[3072]{0}', space=vmem, size = 0xc00, scoped, tag = 'input window, operand 8, single buffered']
    #allocation14 [shape = 's32[1]{0}', space=sflag, size = 0x4, scoped, tag = 'scoped memory for simple_extractor_forward.1']
    #allocation15 [shape = 'u8[2048]{0}', space=vmem, size = 0x800, scoped, tag = 'input window, operand 9, single buffered']
    #allocation16 [shape = 'u8[1179648]{0}', space=vmem, size = 0x120000, scoped, tag = 'input window, operand 10, single buffered']
    #allocation17 [shape = 's32[1]{0}', space=sflag, size = 0x4, scoped, tag = 'scoped memory for simple_extractor_forward.1']
    #allocation18 [shape = 'u8[1536]{0}', space=vmem, size = 0x800, scoped, tag = 'input window, operand 11, single buffered']
    #allocation19 [shape = 'u8[1536]{0}', space=vmem, size = 0x800, scoped, tag = 'input window, operand 12, single buffered']
    #allocation20 [shape = 's32[1]{0}', space=sflag, size = 0x4, scoped, tag = 'scoped memory for simple_extractor_forward.1']
    #allocation21 [shape = 'u8[884736]{0}', space=vmem, size = 0xd8000, scoped, tag = 'input window, operand 13, single buffered']
    #allocation22 [shape = 'u8[1536]{0}', space=vmem, size = 0x800, scoped, tag = 'input window, operand 15, single buffered']
    #allocation23 [shape = 's32[1]{0}', space=sflag, size = 0x4, scoped, tag = 'scoped memory for simple_extractor_forward.1']
    %21 = vsyncpa [#allocation3], 0
    %22 = vsyncpa [#allocation5], 0
    %23 = vsyncpa [#allocation8], 0
    %24 = vsyncpa [#allocation11], 0
    %25 = vsyncpa [#allocation14], 0
    %26 = vsyncpa [#allocation17], 0
    %27 = vsyncpa [#allocation20], 0
    %28 = vsyncpa [#allocation23], 0
    // Predicated region
    $region2: #{simple_extractor_forward.1} parent=1 // pred_check
      _
    $region3: #{simple_extractor_forward.1} parent=1 // pred_check_branch
      %30 = sbr.rel (0) target = $region5
    $region4: #{simple_extractor_forward.1} parent=1 // pred_region
      _
    $region5: #{simple_extractor_forward.1} parent=1 // pred_fallthru
      _
    // Predicated region
    $region6: #{simple_extractor_forward.1} parent=1 // pred_check
      _
    $region7: #{simple_extractor_forward.1} parent=1 // pred_check_branch
      %32 = sbr.rel (0) target = $region9
    $region8: #{simple_extractor_forward.1} parent=1 // pred_region
      %34 = vsyncadd [#allocation3], 0
      %s35 = sshll.u32 %s1, 4
      %s36 = int_to_ptr.hbm [resolvable:$true] %s35
      %s37 = sshll.u32 [#allocation2], 4
      %s38 = int_to_ptr.vmem [resolvable:$true] %s37
      %43 = dma.hbm_to_vmem [thread:$0]  %s36, 28672, %s38, [#allocation3], 256, 256, 16
    $region9: #{simple_extractor_forward.1} parent=1 // pred_fallthru
      _
    // Predicated region
    $region10: #{simple_extractor_forward.1} parent=1 // pred_check
      _
    $region11: #{simple_extractor_forward.1} parent=1 // pred_check_branch
      %45 = sbr.rel (0) target = $region13
    $region12: #{simple_extractor_forward.1} parent=1 // pred_region
      %47 = vsyncadd [#allocation5], 0
      %s48 = sshll.u32 %s2, 4
      %s49 = int_to_ptr.hbm [resolvable:$true] %s48
      %s50 = sshll.u32 [#allocation4], 4
      %s51 = int_to_ptr.vmem [resolvable:$true] %s50
      %56 = dma.hbm_to_vmem [thread:$0]  %s49, 896, %s51, [#allocation5], 64, 64, 4
    $region13: #{simple_extractor_forward.1} parent=1 // pred_fallthru
      _
    // Predicated region
    $region14: #{simple_extractor_forward.1} parent=1 // pred_check
      _
    $region15: #{simple_extractor_forward.1} parent=1 // pred_check_branch
      %58 = sbr.rel (0) target = $region17
    $region16: #{simple_extractor_forward.1} parent=1 // pred_region
      %60 = vsyncadd [#allocation5], 0
      %s62 = sshll.u32 %s3, 4
      %s63 = int_to_ptr.hbm [resolvable:$true] %s62
      %s64 = sshll.u32 [#allocation6], 4
      %s65 = int_to_ptr.vmem [resolvable:$true] %s64
      %67 = dma.hbm_to_vmem [thread:$0]  %s63, 64, %s65, [#allocation5]
    $region17: #{simple_extractor_forward.1} parent=1 // pred_fallthru
      _
    // Predicated region
    $region18: #{simple_extractor_forward.1} parent=1 // pred_check
      _
    $region19: #{simple_extractor_forward.1} parent=1 // pred_check_branch
      %69 = sbr.rel (0) target = $region21
    $region20: #{simple_extractor_forward.1} parent=1 // pred_region
      %71 = vsyncadd [#allocation8], 0
      %s72 = sshll.u32 %s4, 4
      %s73 = int_to_ptr.hbm [resolvable:$true] %s72
      %s74 = sshll.u32 [#allocation7], 4
      %s75 = int_to_ptr.vmem [resolvable:$true] %s74
      %80 = dma.hbm_to_vmem [thread:$0]  %s73, 49152, %s75, [#allocation8], 256, 256, 16
    $region21: #{simple_extractor_forward.1} parent=1 // pred_fallthru
      _
    // Predicated region
    $region22: #{simple_extractor_forward.1} parent=1 // pred_check
      _
    $region23: #{simple_extractor_forward.1} parent=1 // pred_check_branch
      %82 = sbr.rel (0) target = $region25
    $region24: #{simple_extractor_forward.1} parent=1 // pred_region
      %84 = vsyncadd [#allocation8], 0
      %s85 = sshll.u32 %s5, 4
      %s86 = int_to_ptr.hbm [resolvable:$true] %s85
      %s87 = sshll.u32 [#allocation9], 4
      %s88 = int_to_ptr.vmem [resolvable:$true] %s87
      %93 = dma.hbm_to_vmem [thread:$0]  %s86, 192, %s88, [#allocation8], 64, 64, 4
    $region25: #{simple_extractor_forward.1} parent=1 // pred_fallthru
      _
    // Predicated region
    $region26: #{simple_extractor_forward.1} parent=1 // pred_check
      _
    $region27: #{simple_extractor_forward.1} parent=1 // pred_check_branch
      %95 = sbr.rel (0) target = $region29
    $region28: #{simple_extractor_forward.1} parent=1 // pred_region
      %97 = vsyncadd [#allocation11], 0
      %s99 = sshll.u32 %s6, 4
      %s100 = int_to_ptr.hbm [resolvable:$true] %s99
      %s101 = sshll.u32 [#allocation10], 4
      %s102 = int_to_ptr.vmem [resolvable:$true] %s101
      %104 = dma.hbm_to_vmem [thread:$0]  %s100, 64, %s102, [#allocation11]
    $region29: #{simple_extractor_forward.1} parent=1 // pred_fallthru
      _
    // Predicated region
    $region30: #{simple_extractor_forward.1} parent=1 // pred_check
      _
    $region31: #{simple_extractor_forward.1} parent=1 // pred_check_branch
      %106 = sbr.rel (0) target = $region33
    $region32: #{simple_extractor_forward.1} parent=1 // pred_region
      %108 = vsyncadd [#allocation11], 0
      %s109 = sshll.u32 %s7, 4
      %s110 = int_to_ptr.hbm [resolvable:$true] %s109
      %s111 = sshll.u32 [#allocation12], 4
      %s112 = int_to_ptr.vmem [resolvable:$true] %s111
      %117 = dma.hbm_to_vmem [thread:$0]  %s110, 49152, %s112, [#allocation11], 256, 256, 16
    $region33: #{simple_extractor_forward.1} parent=1 // pred_fallthru
      _
    // Predicated region
    $region34: #{simple_extractor_forward.1} parent=1 // pred_check
      _
    $region35: #{simple_extractor_forward.1} parent=1 // pred_check_branch
      %119 = sbr.rel (0) target = $region37
    $region36: #{simple_extractor_forward.1} parent=1 // pred_region
      %121 = vsyncadd [#allocation14], 0
      %s122 = sshll.u32 %s8, 4
      %s123 = int_to_ptr.hbm [resolvable:$true] %s122
      %s124 = sshll.u32 [#allocation13], 4
      %s125 = int_to_ptr.vmem [resolvable:$true] %s124
      %130 = dma.hbm_to_vmem [thread:$0]  %s123, 96, %s125, [#allocation14], 32, 32, 2
    $region37: #{simple_extractor_forward.1} parent=1 // pred_fallthru
      _
    // Predicated region
    $region38: #{simple_extractor_forward.1} parent=1 // pred_check
      _
    $region39: #{simple_extractor_forward.1} parent=1 // pred_check_branch
      %132 = sbr.rel (0) target = $region41
    $region40: #{simple_extractor_forward.1} parent=1 // pred_region
      %134 = vsyncadd [#allocation14], 0
      %s136 = sshll.u32 %s9, 4
      %s137 = int_to_ptr.hbm [resolvable:$true] %s136
      %s138 = sshll.u32 [#allocation15], 4
      %s139 = int_to_ptr.vmem [resolvable:$true] %s138
      %141 = dma.hbm_to_vmem [thread:$0]  %s137, 64, %s139, [#allocation14]
    $region41: #{simple_extractor_forward.1} parent=1 // pred_fallthru
      _
    // Predicated region
    $region42: #{simple_extractor_forward.1} parent=1 // pred_check
      _
    $region43: #{simple_extractor_forward.1} parent=1 // pred_check_branch
      %143 = sbr.rel (0) target = $region45
    $region44: #{simple_extractor_forward.1} parent=1 // pred_region
      %145 = vsyncadd [#allocation17], 0
      %s146 = sshll.u32 %s10, 4
      %s147 = int_to_ptr.hbm [resolvable:$true] %s146
      %s148 = sshll.u32 [#allocation16], 4
      %s149 = int_to_ptr.vmem [resolvable:$true] %s148
      %154 = dma.hbm_to_vmem [thread:$0]  %s147, 36864, %s149, [#allocation17], 192, 192, 12
    $region45: #{simple_extractor_forward.1} parent=1 // pred_fallthru
      _
    // Predicated region
    $region46: #{simple_extractor_forward.1} parent=1 // pred_check
      _
    $region47: #{simple_extractor_forward.1} parent=1 // pred_check_branch
      %156 = sbr.rel (0) target = $region49
    $region48: #{simple_extractor_forward.1} parent=1 // pred_region
      %158 = vsyncadd [#allocation17], 0
      %s159 = sshll.u32 %s11, 4
      %s160 = int_to_ptr.hbm [resolvable:$true] %s159
      %s161 = sshll.u32 [#allocation18], 4
      %s162 = int_to_ptr.vmem [resolvable:$true] %s161
      %167 = dma.hbm_to_vmem [thread:$0]  %s160, 48, %s162, [#allocation17], 16, 16, 1
    $region49: #{simple_extractor_forward.1} parent=1 // pred_fallthru
      _
    // Predicated region
    $region50: #{simple_extractor_forward.1} parent=1 // pred_check
      _
    $region51: #{simple_extractor_forward.1} parent=1 // pred_check_branch
      %169 = sbr.rel (0) target = $region53
    $region52: #{simple_extractor_forward.1} parent=1 // pred_region
      %171 = vsyncadd [#allocation20], 0
      %s173 = sshll.u32 %s12, 4
      %s174 = int_to_ptr.hbm [resolvable:$true] %s173
      %s175 = sshll.u32 [#allocation19], 4
      %s176 = int_to_ptr.vmem [resolvable:$true] %s175
      %178 = dma.hbm_to_vmem [thread:$0]  %s174, 48, %s176, [#allocation20]
    $region53: #{simple_extractor_forward.1} parent=1 // pred_fallthru
      _
    // Predicated region
    $region54: #{simple_extractor_forward.1} parent=1 // pred_check
      _
    $region55: #{simple_extractor_forward.1} parent=1 // pred_check_branch
      %180 = sbr.rel (0) target = $region57
    $region56: #{simple_extractor_forward.1} parent=1 // pred_region
      %182 = vsyncadd [#allocation20], 0
      %s183 = sshll.u32 %s13, 4
      %s184 = int_to_ptr.hbm [resolvable:$true] %s183
      %s185 = sshll.u32 [#allocation21], 4
      %s186 = int_to_ptr.vmem [resolvable:$true] %s185
      %191 = dma.hbm_to_vmem [thread:$0]  %s184, 27648, %s186, [#allocation20], 192, 192, 12
    $region57: #{simple_extractor_forward.1} parent=1 // pred_fallthru
      _
    // Predicated region
    $region58: #{simple_extractor_forward.1} parent=1 // pred_check
      _
    $region59: #{simple_extractor_forward.1} parent=1 // pred_check_branch
      %193 = sbr.rel (0) target = $region61
    $region60: #{simple_extractor_forward.1} parent=1 // pred_region
      _
    $region61: #{simple_extractor_forward.1} parent=1 // pred_fallthru
      _
    // Predicated region
    $region62: #{simple_extractor_forward.1} parent=1 // pred_check
      _
    $region63: #{simple_extractor_forward.1} parent=1 // pred_check_branch
      %195 = sbr.rel (0) target = $region65
    $region64: #{simple_extractor_forward.1} parent=1 // pred_region
      %197 = vsyncadd [#allocation23], 0
      %s199 = sshll.u32 %s15, 4
      %s200 = int_to_ptr.hbm [resolvable:$true] %s199
      %s201 = sshll.u32 [#allocation22], 4
      %s202 = int_to_ptr.vmem [resolvable:$true] %s201
      %204 = dma.hbm_to_vmem [thread:$0]  %s200, 48, %s202, [#allocation23]
    $region65: #{simple_extractor_forward.1} parent=1 // pred_fallthru
      _
    // Predicated region
    $region66: #{simple_extractor_forward.1} parent=1 // pred_check
      _
    $region67: #{simple_extractor_forward.1} parent=1 // pred_check_branch
      %206 = sbr.rel (0) target = $region69
    $region68: #{simple_extractor_forward.1} parent=1 // pred_region
      %208 = dma.done [#allocation3], 28672
    $region69: #{simple_extractor_forward.1} parent=1 // pred_fallthru
      _
    // Predicated region
    $region70: #{simple_extractor_forward.1} parent=1 // pred_check
      _
    $region71: #{simple_extractor_forward.1} parent=1 // pred_check_branch
      %210 = sbr.rel (0) target = $region73
    $region72: #{simple_extractor_forward.1} parent=1 // pred_region
      %212 = dma.done [#allocation5], 896
    $region73: #{simple_extractor_forward.1} parent=1 // pred_fallthru
      _
    // Predicated region
    $region74: #{simple_extractor_forward.1} parent=1 // pred_check
      _
    $region75: #{simple_extractor_forward.1} parent=1 // pred_check_branch
      %214 = sbr.rel (0) target = $region77
    $region76: #{simple_extractor_forward.1} parent=1 // pred_region
      %216 = dma.done [#allocation5], 64
    $region77: #{simple_extractor_forward.1} parent=1 // pred_fallthru
      _
    // Predicated region
    $region78: #{simple_extractor_forward.1} parent=1 // pred_check
      _
    $region79: #{simple_extractor_forward.1} parent=1 // pred_check_branch
      %218 = sbr.rel (0) target = $region81
    $region80: #{simple_extractor_forward.1} parent=1 // pred_region
      %220 = dma.done [#allocation8], 49152
    $region81: #{simple_extractor_forward.1} parent=1 // pred_fallthru
      _
    // Predicated region
    $region82: #{simple_extractor_forward.1} parent=1 // pred_check
      _
    $region83: #{simple_extractor_forward.1} parent=1 // pred_check_branch
      %222 = sbr.rel (0) target = $region85
    $region84: #{simple_extractor_forward.1} parent=1 // pred_region
      %224 = dma.done [#allocation8], 192
    $region85: #{simple_extractor_forward.1} parent=1 // pred_fallthru
      _
    // Predicated region
    $region86: #{simple_extractor_forward.1} parent=1 // pred_check
      _
    $region87: #{simple_extractor_forward.1} parent=1 // pred_check_branch
      %226 = sbr.rel (0) target = $region89
    $region88: #{simple_extractor_forward.1} parent=1 // pred_region
      %228 = dma.done [#allocation11], 64
    $region89: #{simple_extractor_forward.1} parent=1 // pred_fallthru
      _
    // Predicated region
    $region90: #{simple_extractor_forward.1} parent=1 // pred_check
      _
    $region91: #{simple_extractor_forward.1} parent=1 // pred_check_branch
      %230 = sbr.rel (0) target = $region93
    $region92: #{simple_extractor_forward.1} parent=1 // pred_region
      %232 = dma.done [#allocation11], 49152
    $region93: #{simple_extractor_forward.1} parent=1 // pred_fallthru
      _
    // Predicated region
    $region94: #{simple_extractor_forward.1} parent=1 // pred_check
      _
    $region95: #{simple_extractor_forward.1} parent=1 // pred_check_branch
      %234 = sbr.rel (0) target = $region97
    $region96: #{simple_extractor_forward.1} parent=1 // pred_region
      %236 = dma.done [#allocation14], 96
    $region97: #{simple_extractor_forward.1} parent=1 // pred_fallthru
      _
    // Predicated region
    $region98: #{simple_extractor_forward.1} parent=1 // pred_check
      _
    $region99: #{simple_extractor_forward.1} parent=1 // pred_check_branch
      %238 = sbr.rel (0) target = $region101
    $region100: #{simple_extractor_forward.1} parent=1 // pred_region
      %240 = dma.done [#allocation14], 64
    $region101: #{simple_extractor_forward.1} parent=1 // pred_fallthru
      _
    // Predicated region
    $region102: #{simple_extractor_forward.1} parent=1 // pred_check
      _
    $region103: #{simple_extractor_forward.1} parent=1 // pred_check_branch
      %242 = sbr.rel (0) target = $region105
    $region104: #{simple_extractor_forward.1} parent=1 // pred_region
      %244 = dma.done [#allocation17], 36864
    $region105: #{simple_extractor_forward.1} parent=1 // pred_fallthru
      _
    // Predicated region
    $region106: #{simple_extractor_forward.1} parent=1 // pred_check
      _
    $region107: #{simple_extractor_forward.1} parent=1 // pred_check_branch
      %246 = sbr.rel (0) target = $region109
    $region108: #{simple_extractor_forward.1} parent=1 // pred_region
      %248 = dma.done [#allocation17], 48
    $region109: #{simple_extractor_forward.1} parent=1 // pred_fallthru
      _
    // Predicated region
    $region110: #{simple_extractor_forward.1} parent=1 // pred_check
      _
    $region111: #{simple_extractor_forward.1} parent=1 // pred_check_branch
      %250 = sbr.rel (0) target = $region113
    $region112: #{simple_extractor_forward.1} parent=1 // pred_region
      %252 = dma.done [#allocation20], 48
    $region113: #{simple_extractor_forward.1} parent=1 // pred_fallthru
      _
    // Predicated region
    $region114: #{simple_extractor_forward.1} parent=1 // pred_check
      _
    $region115: #{simple_extractor_forward.1} parent=1 // pred_check_branch
      %254 = sbr.rel (0) target = $region117
    $region116: #{simple_extractor_forward.1} parent=1 // pred_region
      %256 = dma.done [#allocation20], 27648
    $region117: #{simple_extractor_forward.1} parent=1 // pred_fallthru
      _
    // Predicated region
    $region118: #{simple_extractor_forward.1} parent=1 // pred_check
      _
    $region119: #{simple_extractor_forward.1} parent=1 // pred_check_branch
      %258 = sbr.rel (0) target = $region121
    $region120: #{simple_extractor_forward.1} parent=1 // pred_region
      %260 = dma.done [#allocation23], 48
    $region121: #{simple_extractor_forward.1} parent=1 // pred_fallthru
      _
    %v262 = vld [vmem:[%s0] sm:$0xf]
    %v263 = vld [vmem:[%s0 + $0x4] sm:$0xf]
    %v264 = vld [vmem:[%s0 + $0x8] sm:$0xf]
    %v265 = vld [vmem:[%s0 + $0xc] sm:$0xf]
    %v266 = vld [vmem:[%s0 + $0x10] sm:$0xf]
    %v267 = vld [vmem:[%s0 + $0x14] sm:$0xf]
    %v268 = vld [vmem:[%s0 + $0x18] sm:$0xf]
    %v269 = vld [vmem:[%s0 + $0x1c] sm:$0xf]
    %v270 = vld [vmem:[#allocation4] sm:$0xf]
    %v271 = vld [vmem:[#allocation4 + $0x4] sm:$0xf]
    %v274 = vunpack.c.l.b16 %v270
    %v275 = vunpack.c.l.b16 %v271
    %v276 = vpack.c.b16 %v275, %v274
    %v285 = vunpack.c.l.b16 %v262
    %v286 = vunpack.c.l.b16 %v263
    %v287 = vunpack.c.l.b16 %v264
    %v288 = vunpack.c.l.b16 %v265
    %v289 = vunpack.c.l.b16 %v266
    %v290 = vunpack.c.l.b16 %v267
    %v291 = vunpack.c.l.b16 %v268
    %v292 = vunpack.c.l.b16 %v269
    %v293 = vpack.c.b16 %v286, %v285
    %v294 = vpack.c.b16 %v288, %v287
    %v295 = vpack.c.b16 %v290, %v289
    %v296 = vpack.c.b16 %v292, %v291
    %vm301 = vcmask 523264
    %v303 = vsel %vm301, %v276, 0
    %305 = vmatpush.bf16.msra.mxu0 0
    %306 = vmatpush.bf16.msra.mxu0 0
    %307 = vmatpush.bf16.msra.mxu0 0
    %308 = vmatpush.bf16.msra.mxu0 0
    %309 = vmatpush.bf16.msra.mxu0 %v296
    %310 = vmatpush.bf16.msra.mxu0 %v295
    %311 = vmatpush.bf16.msra.mxu0 %v294
    %312 = vmatpush.bf16.msra.mxu0 %v293
    %313 = vmatmul.bf16.gmra.mxu0 %v303
    %v314 = vpop.f32.mrf.mxu0
    %v315 = vadd.f32 0.0, %v314
    %v316 = vpop.f32.mrf.mxu0
    %v317 = vadd.f32 0.0, %v316
    %318 = vdwg.mxu0
    %v319 = vpack.c.bf16 %v317, %v315
    %v320 = vld [vmem:[#allocation2] sm:$0xff]
    %v321 = vld [vmem:[#allocation2 + $0x8] sm:$0xff]
    %v322 = vld [vmem:[#allocation2 + $0x10] sm:$0xff]
    %v323 = vld [vmem:[#allocation2 + $0x18] sm:$0xff]
    %v324 = vld [vmem:[#allocation2 + $0x20] sm:$0xff]
    %v325 = vld [vmem:[#allocation2 + $0x28] sm:$0xff]
    %v326 = vld [vmem:[#allocation2 + $0x30] sm:$0xff]
    %v327 = vld [vmem:[#allocation2 + $0x38] sm:$0xff]
    %v328 = vld [vmem:[#allocation2 + $0x40] sm:$0xff]
    %v329 = vld [vmem:[#allocation2 + $0x48] sm:$0xff]
    %v330 = vld [vmem:[#allocation2 + $0x50] sm:$0xff]
    %v331 = vld [vmem:[#allocation2 + $0x58] sm:$0xff]
    %v332 = vld [vmem:[#allocation2 + $0x60] sm:$0xff]
    %v333 = vld [vmem:[#allocation2 + $0x68] sm:$0xff]
    %v334 = vld [vmem:[#allocation2 + $0x70] sm:$0xff]
    %v335 = vld [vmem:[#allocation2 + $0x78] sm:$0xff]
    %v336 = vld [vmem:[#allocation2 + $0x80] sm:$0xff]
    %v337 = vld [vmem:[#allocation2 + $0x88] sm:$0xff]
    %v338 = vld [vmem:[#allocation2 + $0x90] sm:$0xff]
    %v339 = vld [vmem:[#allocation2 + $0x98] sm:$0xff]
    %v340 = vld [vmem:[#allocation2 + $0xa0] sm:$0xff]
    %v341 = vld [vmem:[#allocation2 + $0xa8] sm:$0xff]
    %v342 = vld [vmem:[#allocation2 + $0xb0] sm:$0xff]
    %v343 = vld [vmem:[#allocation2 + $0xb8] sm:$0xff]
    %v344 = vld [vmem:[#allocation2 + $0xc0] sm:$0xff]
    %v345 = vld [vmem:[#allocation2 + $0xc8] sm:$0xff]
    %v346 = vld [vmem:[#allocation2 + $0xd0] sm:$0xff]
    %v347 = vld [vmem:[#allocation2 + $0xd8] sm:$0xff]
    %v348 = vld [vmem:[#allocation2 + $0xe0] sm:$0xff]
    %v349 = vld [vmem:[#allocation2 + $0xe8] sm:$0xff]
    %v350 = vld [vmem:[#allocation2 + $0xf0] sm:$0xff]
    %v351 = vld [vmem:[#allocation2 + $0xf8] sm:$0xff]
    %s352 = scalar_lea.vmem [#allocation4], 8
    %v353 = vld [vmem:[%s352] sm:$0xf]
    %v354 = vld [vmem:[%s352 + $0x4] sm:$0xf]
    %v357 = vunpack.c.l.b16 %v353
    %v358 = vunpack.c.l.b16 %v354
    %v359 = vpack.c.b16 %v358, %v357
    %v361 = vsel %vm301, %v359, 0
    %363 = vmatpush.bf16.msra.mxu0 0
    %364 = vmatpush.bf16.msra.mxu0 0
    %365 = vmatpush.bf16.msra.mxu0 0
    %366 = vmatpush.bf16.msra.mxu0 0
    %367 = vmatpush.bf16.msra.mxu0 %v296
    %368 = vmatpush.bf16.msra.mxu0 %v295
    %369 = vmatpush.bf16.msra.mxu0 %v294
    %370 = vmatpush.bf16.msra.mxu0 %v293
    %371 = vmatmul.bf16.gmra.mxu0 %v361
    %v372 = vpop.f32.mrf.mxu0
    %v373 = vadd.f32 0.0, %v372
    %v374 = vpop.f32.mrf.mxu0
    %v375 = vadd.f32 0.0, %v374
    %376 = vdwg.mxu0
    %v377 = vpack.c.bf16 %v375, %v373
    %s378 = scalar_lea.vmem [#allocation2], 256
    %v379 = vld [vmem:[%s378] sm:$0xff]
    %v380 = vld [vmem:[%s378 + $0x8] sm:$0xff]
    %v381 = vld [vmem:[%s378 + $0x10] sm:$0xff]
    %v382 = vld [vmem:[%s378 + $0x18] sm:$0xff]
    %v383 = vld [vmem:[%s378 + $0x20] sm:$0xff]
    %v384 = vld [vmem:[%s378 + $0x28] sm:$0xff]
    %v385 = vld [vmem:[%s378 + $0x30] sm:$0xff]
    %v386 = vld [vmem:[%s378 + $0x38] sm:$0xff]
    %v387 = vld [vmem:[%s378 + $0x40] sm:$0xff]
    %v388 = vld [vmem:[%s378 + $0x48] sm:$0xff]
    %v389 = vld [vmem:[%s378 + $0x50] sm:$0xff]
    %v390 = vld [vmem:[%s378 + $0x58] sm:$0xff]
    %v391 = vld [vmem:[%s378 + $0x60] sm:$0xff]
    %v392 = vld [vmem:[%s378 + $0x68] sm:$0xff]
    %v393 = vld [vmem:[%s378 + $0x70] sm:$0xff]
    %v394 = vld [vmem:[%s378 + $0x78] sm:$0xff]
    %v395 = vld [vmem:[%s378 + $0x80] sm:$0xff]
    %v396 = vld [vmem:[%s378 + $0x88] sm:$0xff]
    %v397 = vld [vmem:[%s378 + $0x90] sm:$0xff]
    %v398 = vld [vmem:[%s378 + $0x98] sm:$0xff]
    %v399 = vld [vmem:[%s378 + $0xa0] sm:$0xff]
    %v400 = vld [vmem:[%s378 + $0xa8] sm:$0xff]
    %v401 = vld [vmem:[%s378 + $0xb0] sm:$0xff]
    %v402 = vld [vmem:[%s378 + $0xb8] sm:$0xff]
    %v403 = vld [vmem:[%s378 + $0xc0] sm:$0xff]
    %v404 = vld [vmem:[%s378 + $0xc8] sm:$0xff]
    %v405 = vld [vmem:[%s378 + $0xd0] sm:$0xff]
    %v406 = vld [vmem:[%s378 + $0xd8] sm:$0xff]
    %v407 = vld [vmem:[%s378 + $0xe0] sm:$0xff]
    %v408 = vld [vmem:[%s378 + $0xe8] sm:$0xff]
    %v409 = vld [vmem:[%s378 + $0xf0] sm:$0xff]
    %v410 = vld [vmem:[%s378 + $0xf8] sm:$0xff]
    %v443 = vunpack.c.l.b16 %v379
    %v444 = vunpack.c.h.b16 %v379
    %v445 = vunpack.c.l.b16 %v380
    %v446 = vunpack.c.h.b16 %v380
    %v447 = vunpack.c.l.b16 %v381
    %v448 = vunpack.c.h.b16 %v381
    %v449 = vunpack.c.l.b16 %v382
    %v450 = vunpack.c.h.b16 %v382
    %v451 = vunpack.c.l.b16 %v383
    %v452 = vunpack.c.h.b16 %v383
    %v453 = vunpack.c.l.b16 %v384
    %v454 = vunpack.c.h.b16 %v384
    %v455 = vunpack.c.l.b16 %v385
    %v456 = vunpack.c.h.b16 %v385
    %v457 = vunpack.c.l.b16 %v386
    %v458 = vunpack.c.h.b16 %v386
    %v459 = vunpack.c.l.b16 %v387
    %v460 = vunpack.c.h.b16 %v387
    %v461 = vunpack.c.l.b16 %v388
    %v462 = vunpack.c.h.b16 %v388
    %v463 = vunpack.c.l.b16 %v389
    %v464 = vunpack.c.h.b16 %v389
    %v465 = vunpack.c.l.b16 %v390
    %v466 = vunpack.c.h.b16 %v390
    %v467 = vunpack.c.l.b16 %v391
    %v468 = vunpack.c.h.b16 %v391
    %v469 = vunpack.c.l.b16 %v392
    %v470 = vunpack.c.h.b16 %v392
    %v471 = vunpack.c.l.b16 %v393
    %v472 = vunpack.c.h.b16 %v393
    %v473 = vunpack.c.l.b16 %v394
    %v474 = vunpack.c.h.b16 %v394
    %v475 = vunpack.c.l.b16 %v395
    %v476 = vunpack.c.h.b16 %v395
    %v477 = vunpack.c.l.b16 %v396
    %v478 = vunpack.c.h.b16 %v396
    %v479 = vunpack.c.l.b16 %v397
    %v480 = vunpack.c.h.b16 %v397
    %v481 = vunpack.c.l.b16 %v398
    %v482 = vunpack.c.h.b16 %v398
    %v483 = vunpack.c.l.b16 %v399
    %v484 = vunpack.c.h.b16 %v399
    %v485 = vunpack.c.l.b16 %v400
    %v486 = vunpack.c.h.b16 %v400
    %v487 = vunpack.c.l.b16 %v401
    %v488 = vunpack.c.h.b16 %v401
    %v489 = vunpack.c.l.b16 %v402
    %v490 = vunpack.c.h.b16 %v402
    %v491 = vunpack.c.l.b16 %v403
    %v492 = vunpack.c.h.b16 %v403
    %v493 = vunpack.c.l.b16 %v404
    %v494 = vunpack.c.h.b16 %v404
    %v495 = vunpack.c.l.b16 %v405
    %v496 = vunpack.c.h.b16 %v405
    %v497 = vunpack.c.l.b16 %v406
    %v498 = vunpack.c.h.b16 %v406
    %v499 = vunpack.c.l.b16 %v407
    %v500 = vunpack.c.h.b16 %v407
    %v501 = vunpack.c.l.b16 %v408
    %v502 = vunpack.c.h.b16 %v408
    %v503 = vunpack.c.l.b16 %v409
    %v504 = vunpack.c.h.b16 %v409
    %v505 = vunpack.c.l.b16 %v410
    %v506 = vunpack.c.h.b16 %v410
    %v507 = vpack.c.b16 %v447, %v443
    %v508 = vpack.c.b16 %v448, %v444
    %v509 = vpack.c.b16 %v449, %v445
    %v510 = vpack.c.b16 %v450, %v446
    %v511 = vpack.c.b16 %v455, %v451
    %v512 = vpack.c.b16 %v456, %v452
    %v513 = vpack.c.b16 %v457, %v453
    %v514 = vpack.c.b16 %v458, %v454
    %v515 = vpack.c.b16 %v463, %v459
    %v516 = vpack.c.b16 %v464, %v460
    %v517 = vpack.c.b16 %v465, %v461
    %v518 = vpack.c.b16 %v466, %v462
    %v519 = vpack.c.b16 %v471, %v467
    %v520 = vpack.c.b16 %v472, %v468
    %v521 = vpack.c.b16 %v473, %v469
    %v522 = vpack.c.b16 %v474, %v470
    %v523 = vpack.c.b16 %v479, %v475
    %v524 = vpack.c.b16 %v480, %v476
    %v525 = vpack.c.b16 %v481, %v477
    %v526 = vpack.c.b16 %v482, %v478
    %v527 = vpack.c.b16 %v487, %v483
    %v528 = vpack.c.b16 %v488, %v484
    %v529 = vpack.c.b16 %v489, %v485
    %v530 = vpack.c.b16 %v490, %v486
    %v531 = vpack.c.b16 %v495, %v491
    %v532 = vpack.c.b16 %v496, %v492
    %v533 = vpack.c.b16 %v497, %v493
    %v534 = vpack.c.b16 %v498, %v494
    %v535 = vpack.c.b16 %v503, %v499
    %v536 = vpack.c.b16 %v504, %v500
    %v537 = vpack.c.b16 %v505, %v501
    %v538 = vpack.c.b16 %v506, %v502
    %571 = vmatpush.bf16.msra.mxu0 %v535
    %572 = vmatpush.bf16.msra.mxu0 %v531
    %573 = vmatpush.bf16.msra.mxu0 %v527
    %574 = vmatpush.bf16.msra.mxu0 %v523
    %575 = vmatpush.bf16.msra.mxu0 %v519
    %576 = vmatpush.bf16.msra.mxu0 %v515
    %577 = vmatpush.bf16.msra.mxu0 %v511
    %578 = vmatpush.bf16.msra.mxu0 %v507
    %579 = vmatmul.bf16.gmra.mxu0 %v377
    %v580 = vpop.f32.mrf.mxu0
    %v581 = vadd.f32 0.0, %v580
    %v582 = vpop.f32.mrf.mxu0
    %v583 = vadd.f32 0.0, %v582
    %584 = vdwg.mxu0
    %585 = vmatpush.bf16.msra.mxu0 %v536
    %586 = vmatpush.bf16.msra.mxu0 %v532
    %587 = vmatpush.bf16.msra.mxu0 %v528
    %588 = vmatpush.bf16.msra.mxu0 %v524
    %589 = vmatpush.bf16.msra.mxu0 %v520
    %590 = vmatpush.bf16.msra.mxu0 %v516
    %591 = vmatpush.bf16.msra.mxu0 %v512
    %592 = vmatpush.bf16.msra.mxu0 %v508
    %593 = vmatmul.bf16.gmra.mxu0 %v377
    %v594 = vpop.f32.mrf.mxu0
    %v595 = vadd.f32 0.0, %v594
    %v596 = vpop.f32.mrf.mxu0
    %v597 = vadd.f32 0.0, %v596
    %598 = vdwg.mxu0
    %599 = vmatpush.bf16.msra.mxu0 %v537
    %600 = vmatpush.bf16.msra.mxu0 %v533
    %601 = vmatpush.bf16.msra.mxu0 %v529
    %602 = vmatpush.bf16.msra.mxu0 %v525
    %603 = vmatpush.bf16.msra.mxu0 %v521
    %604 = vmatpush.bf16.msra.mxu0 %v517
    %605 = vmatpush.bf16.msra.mxu0 %v513
    %606 = vmatpush.bf16.msra.mxu0 %v509
    %607 = vmatmul.bf16.gmra.mxu0 %v377
    %v608 = vpop.f32.mrf.mxu0
    %v609 = vadd.f32 0.0, %v608
    %v610 = vpop.f32.mrf.mxu0
    %v611 = vadd.f32 0.0, %v610
    %612 = vdwg.mxu0
    %613 = vmatpush.bf16.msra.mxu0 %v538
    %614 = vmatpush.bf16.msra.mxu0 %v534
    %615 = vmatpush.bf16.msra.mxu0 %v530
    %616 = vmatpush.bf16.msra.mxu0 %v526
    %617 = vmatpush.bf16.msra.mxu0 %v522
    %618 = vmatpush.bf16.msra.mxu0 %v518
    %619 = vmatpush.bf16.msra.mxu0 %v514
    %620 = vmatpush.bf16.msra.mxu0 %v510
    %621 = vmatmul.bf16.gmra.mxu0 %v377
    %v622 = vpop.f32.mrf.mxu0
    %v623 = vadd.f32 0.0, %v622
    %v624 = vpop.f32.mrf.mxu0
    %v625 = vadd.f32 0.0, %v624
    %626 = vdwg.mxu0
    %v659 = vunpack.c.l.b16 %v320
    %v660 = vunpack.c.h.b16 %v320
    %v661 = vunpack.c.l.b16 %v321
    %v662 = vunpack.c.h.b16 %v321
    %v663 = vunpack.c.l.b16 %v322
    %v664 = vunpack.c.h.b16 %v322
    %v665 = vunpack.c.l.b16 %v323
    %v666 = vunpack.c.h.b16 %v323
    %v667 = vunpack.c.l.b16 %v324
    %v668 = vunpack.c.h.b16 %v324
    %v669 = vunpack.c.l.b16 %v325
    %v670 = vunpack.c.h.b16 %v325
    %v671 = vunpack.c.l.b16 %v326
    %v672 = vunpack.c.h.b16 %v326
    %v673 = vunpack.c.l.b16 %v327
    %v674 = vunpack.c.h.b16 %v327
    %v675 = vunpack.c.l.b16 %v328
    %v676 = vunpack.c.h.b16 %v328
    %v677 = vunpack.c.l.b16 %v329
    %v678 = vunpack.c.h.b16 %v329
    %v679 = vunpack.c.l.b16 %v330
    %v680 = vunpack.c.h.b16 %v330
    %v681 = vunpack.c.l.b16 %v331
    %v682 = vunpack.c.h.b16 %v331
    %v683 = vunpack.c.l.b16 %v332
    %v684 = vunpack.c.h.b16 %v332
    %v685 = vunpack.c.l.b16 %v333
    %v686 = vunpack.c.h.b16 %v333
    %v687 = vunpack.c.l.b16 %v334
    %v688 = vunpack.c.h.b16 %v334
    %v689 = vunpack.c.l.b16 %v335
    %v690 = vunpack.c.h.b16 %v335
    %v691 = vunpack.c.l.b16 %v336
    %v692 = vunpack.c.h.b16 %v336
    %v693 = vunpack.c.l.b16 %v337
    %v694 = vunpack.c.h.b16 %v337
    %v695 = vunpack.c.l.b16 %v338
    %v696 = vunpack.c.h.b16 %v338
    %v697 = vunpack.c.l.b16 %v339
    %v698 = vunpack.c.h.b16 %v339
    %v699 = vunpack.c.l.b16 %v340
    %v700 = vunpack.c.h.b16 %v340
    %v701 = vunpack.c.l.b16 %v341
    %v702 = vunpack.c.h.b16 %v341
    %v703 = vunpack.c.l.b16 %v342
    %v704 = vunpack.c.h.b16 %v342
    %v705 = vunpack.c.l.b16 %v343
    %v706 = vunpack.c.h.b16 %v343
    %v707 = vunpack.c.l.b16 %v344
    %v708 = vunpack.c.h.b16 %v344
    %v709 = vunpack.c.l.b16 %v345
    %v710 = vunpack.c.h.b16 %v345
    %v711 = vunpack.c.l.b16 %v346
    %v712 = vunpack.c.h.b16 %v346
    %v713 = vunpack.c.l.b16 %v347
    %v714 = vunpack.c.h.b16 %v347
    %v715 = vunpack.c.l.b16 %v348
    %v716 = vunpack.c.h.b16 %v348
    %v717 = vunpack.c.l.b16 %v349
    %v718 = vunpack.c.h.b16 %v349
    %v719 = vunpack.c.l.b16 %v350
    %v720 = vunpack.c.h.b16 %v350
    %v721 = vunpack.c.l.b16 %v351
    %v722 = vunpack.c.h.b16 %v351
    %v723 = vpack.c.b16 %v663, %v659
    %v724 = vpack.c.b16 %v664, %v660
    %v725 = vpack.c.b16 %v665, %v661
    %v726 = vpack.c.b16 %v666, %v662
    %v727 = vpack.c.b16 %v671, %v667
    %v728 = vpack.c.b16 %v672, %v668
    %v729 = vpack.c.b16 %v673, %v669
    %v730 = vpack.c.b16 %v674, %v670
    %v731 = vpack.c.b16 %v679, %v675
    %v732 = vpack.c.b16 %v680, %v676
    %v733 = vpack.c.b16 %v681, %v677
    %v734 = vpack.c.b16 %v682, %v678
    %v735 = vpack.c.b16 %v687, %v683
    %v736 = vpack.c.b16 %v688, %v684
    %v737 = vpack.c.b16 %v689, %v685
    %v738 = vpack.c.b16 %v690, %v686
    %v739 = vpack.c.b16 %v695, %v691
    %v740 = vpack.c.b16 %v696, %v692
    %v741 = vpack.c.b16 %v697, %v693
    %v742 = vpack.c.b16 %v698, %v694
    %v743 = vpack.c.b16 %v703, %v699
    %v744 = vpack.c.b16 %v704, %v700
    %v745 = vpack.c.b16 %v705, %v701
    %v746 = vpack.c.b16 %v706, %v702
    %v747 = vpack.c.b16 %v711, %v707
    %v748 = vpack.c.b16 %v712, %v708
    %v749 = vpack.c.b16 %v713, %v709
    %v750 = vpack.c.b16 %v714, %v710
    %v751 = vpack.c.b16 %v719, %v715
    %v752 = vpack.c.b16 %v720, %v716
    %v753 = vpack.c.b16 %v721, %v717
    %v754 = vpack.c.b16 %v722, %v718
    %787 = vmatpush.bf16.msra.mxu0 %v751
    %788 = vmatpush.bf16.msra.mxu0 %v747
    %789 = vmatpush.bf16.msra.mxu0 %v743
    %790 = vmatpush.bf16.msra.mxu0 %v739
    %791 = vmatpush.bf16.msra.mxu0 %v735
    %792 = vmatpush.bf16.msra.mxu0 %v731
    %793 = vmatpush.bf16.msra.mxu0 %v727
    %794 = vmatpush.bf16.msra.mxu0 %v723
    %795 = vmatmul.bf16.gmra.mxu0 %v319
    %v796 = vpop.f32.mrf.mxu0
    %v797 = vadd.f32 %v581, %v796
    %v798 = vpop.f32.mrf.mxu0
    %v799 = vadd.f32 %v583, %v798
    %800 = vdwg.mxu0
    %801 = vmatpush.bf16.msra.mxu0 %v752
    %802 = vmatpush.bf16.msra.mxu0 %v748
    %803 = vmatpush.bf16.msra.mxu0 %v744
    %804 = vmatpush.bf16.msra.mxu0 %v740
    %805 = vmatpush.bf16.msra.mxu0 %v736
    %806 = vmatpush.bf16.msra.mxu0 %v732
    %807 = vmatpush.bf16.msra.mxu0 %v728
    %808 = vmatpush.bf16.msra.mxu0 %v724
    %809 = vmatmul.bf16.gmra.mxu0 %v319
    %v810 = vpop.f32.mrf.mxu0
    %v811 = vadd.f32 %v595, %v810
    %v812 = vpop.f32.mrf.mxu0
    %v813 = vadd.f32 %v597, %v812
    %814 = vdwg.mxu0
    %815 = vmatpush.bf16.msra.mxu0 %v753
    %816 = vmatpush.bf16.msra.mxu0 %v749
    %817 = vmatpush.bf16.msra.mxu0 %v745
    %818 = vmatpush.bf16.msra.mxu0 %v741
    %819 = vmatpush.bf16.msra.mxu0 %v737
    %820 = vmatpush.bf16.msra.mxu0 %v733
    %821 = vmatpush.bf16.msra.mxu0 %v729
    %822 = vmatpush.bf16.msra.mxu0 %v725
    %823 = vmatmul.bf16.gmra.mxu0 %v319
    %v824 = vpop.f32.mrf.mxu0
    %v825 = vadd.f32 %v609, %v824
    %v826 = vpop.f32.mrf.mxu0
    %v827 = vadd.f32 %v611, %v826
    %828 = vdwg.mxu0
    %829 = vmatpush.bf16.msra.mxu0 %v754
    %830 = vmatpush.bf16.msra.mxu0 %v750
    %831 = vmatpush.bf16.msra.mxu0 %v746
    %832 = vmatpush.bf16.msra.mxu0 %v742
    %833 = vmatpush.bf16.msra.mxu0 %v738
    %834 = vmatpush.bf16.msra.mxu0 %v734
    %835 = vmatpush.bf16.msra.mxu0 %v730
    %836 = vmatpush.bf16.msra.mxu0 %v726
    %837 = vmatmul.bf16.gmra.mxu0 %v319
    %v838 = vpop.f32.mrf.mxu0
    %v839 = vadd.f32 %v623, %v838
    %v840 = vpop.f32.mrf.mxu0
    %v841 = vadd.f32 %v625, %v840
    %842 = vdwg.mxu0
    %s843 = scalar_lea.vmem [#allocation4], 16
    %v844 = vld [vmem:[%s843] sm:$0xf]
    %v845 = vld [vmem:[%s843 + $0x4] sm:$0xf]
    %v848 = vunpack.c.l.b16 %v844
    %v849 = vunpack.c.l.b16 %v845
    %v850 = vpack.c.b16 %v849, %v848
    %v852 = vsel %vm301, %v850, 0
    %854 = vmatpush.bf16.msra.mxu0 0
    %855 = vmatpush.bf16.msra.mxu0 0
    %856 = vmatpush.bf16.msra.mxu0 0
    %857 = vmatpush.bf16.msra.mxu0 0
    %858 = vmatpush.bf16.msra.mxu0 %v296
    %859 = vmatpush.bf16.msra.mxu0 %v295
    %860 = vmatpush.bf16.msra.mxu0 %v294
    %861 = vmatpush.bf16.msra.mxu0 %v293
    %862 = vmatmul.bf16.gmra.mxu0 %v852
    %v863 = vpop.f32.mrf.mxu0
    %v864 = vadd.f32 0.0, %v863
    %v865 = vpop.f32.mrf.mxu0
    %v866 = vadd.f32 0.0, %v865
    %867 = vdwg.mxu0
    %v868 = vpack.c.bf16 %v866, %v864
    %s869 = scalar_lea.vmem [#allocation2], 512
    %v870 = vld [vmem:[%s869] sm:$0xff]
    %v871 = vld [vmem:[%s869 + $0x8] sm:$0xff]
    %v872 = vld [vmem:[%s869 + $0x10] sm:$0xff]
    %v873 = vld [vmem:[%s869 + $0x18] sm:$0xff]
    %v874 = vld [vmem:[%s869 + $0x20] sm:$0xff]
    %v875 = vld [vmem:[%s869 + $0x28] sm:$0xff]
    %v876 = vld [vmem:[%s869 + $0x30] sm:$0xff]
    %v877 = vld [vmem:[%s869 + $0x38] sm:$0xff]
    %v878 = vld [vmem:[%s869 + $0x40] sm:$0xff]
    %v879 = vld [vmem:[%s869 + $0x48] sm:$0xff]
    %v880 = vld [vmem:[%s869 + $0x50] sm:$0xff]
    %v881 = vld [vmem:[%s869 + $0x58] sm:$0xff]
    %v882 = vld [vmem:[%s869 + $0x60] sm:$0xff]
    %v883 = vld [vmem:[%s869 + $0x68] sm:$0xff]
    %v884 = vld [vmem:[%s869 + $0x70] sm:$0xff]
    %v885 = vld [vmem:[%s869 + $0x78] sm:$0xff]
    %v886 = vld [vmem:[%s869 + $0x80] sm:$0xff]
    %v887 = vld [vmem:[%s869 + $0x88] sm:$0xff]
    %v888 = vld [vmem:[%s869 + $0x90] sm:$0xff]
    %v889 = vld [vmem:[%s869 + $0x98] sm:$0xff]
    %v890 = vld [vmem:[%s869 + $0xa0] sm:$0xff]
    %v891 = vld [vmem:[%s869 + $0xa8] sm:$0xff]
    %v892 = vld [vmem:[%s869 + $0xb0] sm:$0xff]
    %v893 = vld [vmem:[%s869 + $0xb8] sm:$0xff]
    %v894 = vld [vmem:[%s869 + $0xc0] sm:$0xff]
    %v895 = vld [vmem:[%s869 + $0xc8] sm:$0xff]
    %v896 = vld [vmem:[%s869 + $0xd0] sm:$0xff]
    %v897 = vld [vmem:[%s869 + $0xd8] sm:$0xff]
    %v898 = vld [vmem:[%s869 + $0xe0] sm:$0xff]
    %v899 = vld [vmem:[%s869 + $0xe8] sm:$0xff]
    %v900 = vld [vmem:[%s869 + $0xf0] sm:$0xff]
    %v901 = vld [vmem:[%s869 + $0xf8] sm:$0xff]
    %v934 = vunpack.c.l.b16 %v870
    %v935 = vunpack.c.h.b16 %v870
    %v936 = vunpack.c.l.b16 %v871
    %v937 = vunpack.c.h.b16 %v871
    %v938 = vunpack.c.l.b16 %v872
    %v939 = vunpack.c.h.b16 %v872
    %v940 = vunpack.c.l.b16 %v873
    %v941 = vunpack.c.h.b16 %v873
    %v942 = vunpack.c.l.b16 %v874
    %v943 = vunpack.c.h.b16 %v874
    %v944 = vunpack.c.l.b16 %v875
    %v945 = vunpack.c.h.b16 %v875
    %v946 = vunpack.c.l.b16 %v876
    %v947 = vunpack.c.h.b16 %v876
    %v948 = vunpack.c.l.b16 %v877
    %v949 = vunpack.c.h.b16 %v877
    %v950 = vunpack.c.l.b16 %v878
    %v951 = vunpack.c.h.b16 %v878
    %v952 = vunpack.c.l.b16 %v879
    %v953 = vunpack.c.h.b16 %v879
    %v954 = vunpack.c.l.b16 %v880
    %v955 = vunpack.c.h.b16 %v880
    %v956 = vunpack.c.l.b16 %v881
    %v957 = vunpack.c.h.b16 %v881
    %v958 = vunpack.c.l.b16 %v882
    %v959 = vunpack.c.h.b16 %v882
    %v960 = vunpack.c.l.b16 %v883
    %v961 = vunpack.c.h.b16 %v883
    %v962 = vunpack.c.l.b16 %v884
    %v963 = vunpack.c.h.b16 %v884
    %v964 = vunpack.c.l.b16 %v885
    %v965 = vunpack.c.h.b16 %v885
    %v966 = vunpack.c.l.b16 %v886
    %v967 = vunpack.c.h.b16 %v886
    %v968 = vunpack.c.l.b16 %v887
    %v969 = vunpack.c.h.b16 %v887
    %v970 = vunpack.c.l.b16 %v888
    %v971 = vunpack.c.h.b16 %v888
    %v972 = vunpack.c.l.b16 %v889
    %v973 = vunpack.c.h.b16 %v889
    %v974 = vunpack.c.l.b16 %v890
    %v975 = vunpack.c.h.b16 %v890
    %v976 = vunpack.c.l.b16 %v891
    %v977 = vunpack.c.h.b16 %v891
    %v978 = vunpack.c.l.b16 %v892
    %v979 = vunpack.c.h.b16 %v892
    %v980 = vunpack.c.l.b16 %v893
    %v981 = vunpack.c.h.b16 %v893
    %v982 = vunpack.c.l.b16 %v894
    %v983 = vunpack.c.h.b16 %v894
    %v984 = vunpack.c.l.b16 %v895
    %v985 = vunpack.c.h.b16 %v895
    %v986 = vunpack.c.l.b16 %v896
    %v987 = vunpack.c.h.b16 %v896
    %v988 = vunpack.c.l.b16 %v897
    %v989 = vunpack.c.h.b16 %v897
    %v990 = vunpack.c.l.b16 %v898
    %v991 = vunpack.c.h.b16 %v898
    %v992 = vunpack.c.l.b16 %v899
    %v993 = vunpack.c.h.b16 %v899
    %v994 = vunpack.c.l.b16 %v900
    %v995 = vunpack.c.h.b16 %v900
    %v996 = vunpack.c.l.b16 %v901
    %v997 = vunpack.c.h.b16 %v901
    %v998 = vpack.c.b16 %v938, %v934
    %v999 = vpack.c.b16 %v939, %v935
    %v1000 = vpack.c.b16 %v940, %v936
    %v1001 = vpack.c.b16 %v941, %v937
    %v1002 = vpack.c.b16 %v946, %v942
    %v1003 = vpack.c.b16 %v947, %v943
    %v1004 = vpack.c.b16 %v948, %v944
    %v1005 = vpack.c.b16 %v949, %v945
    %v1006 = vpack.c.b16 %v954, %v950
    %v1007 = vpack.c.b16 %v955, %v951
    %v1008 = vpack.c.b16 %v956, %v952
    %v1009 = vpack.c.b16 %v957, %v953
    %v1010 = vpack.c.b16 %v962, %v958
    %v1011 = vpack.c.b16 %v963, %v959
    %v1012 = vpack.c.b16 %v964, %v960
    %v1013 = vpack.c.b16 %v965, %v961
    %v1014 = vpack.c.b16 %v970, %v966
    %v1015 = vpack.c.b16 %v971, %v967
    %v1016 = vpack.c.b16 %v972, %v968
    %v1017 = vpack.c.b16 %v973, %v969
    %v1018 = vpack.c.b16 %v978, %v974
    %v1019 = vpack.c.b16 %v979, %v975
    %v1020 = vpack.c.b16 %v980, %v976
    %v1021 = vpack.c.b16 %v981, %v977
    %v1022 = vpack.c.b16 %v986, %v982
    %v1023 = vpack.c.b16 %v987, %v983
    %v1024 = vpack.c.b16 %v988, %v984
    %v1025 = vpack.c.b16 %v989, %v985
    %v1026 = vpack.c.b16 %v994, %v990
    %v1027 = vpack.c.b16 %v995, %v991
    %v1028 = vpack.c.b16 %v996, %v992
    %v1029 = vpack.c.b16 %v997, %v993
    %1062 = vmatpush.bf16.msra.mxu0 %v1026
    %1063 = vmatpush.bf16.msra.mxu0 %v1022
    %1064 = vmatpush.bf16.msra.mxu0 %v1018
    %1065 = vmatpush.bf16.msra.mxu0 %v1014
    %1066 = vmatpush.bf16.msra.mxu0 %v1010
    %1067 = vmatpush.bf16.msra.mxu0 %v1006
    %1068 = vmatpush.bf16.msra.mxu0 %v1002
    %1069 = vmatpush.bf16.msra.mxu0 %v998
    %1070 = vmatmul.bf16.gmra.mxu0 %v868
    %v1071 = vpop.f32.mrf.mxu0
    %v1072 = vadd.f32 0.0, %v1071
    %v1073 = vpop.f32.mrf.mxu0
    %v1074 = vadd.f32 0.0, %v1073
    %1075 = vdwg.mxu0
    %1076 = vmatpush.bf16.msra.mxu0 %v1027
    %1077 = vmatpush.bf16.msra.mxu0 %v1023
    %1078 = vmatpush.bf16.msra.mxu0 %v1019
    %1079 = vmatpush.bf16.msra.mxu0 %v1015
    %1080 = vmatpush.bf16.msra.mxu0 %v1011
    %1081 = vmatpush.bf16.msra.mxu0 %v1007
    %1082 = vmatpush.bf16.msra.mxu0 %v1003
    %1083 = vmatpush.bf16.msra.mxu0 %v999
    %1084 = vmatmul.bf16.gmra.mxu0 %v868
    %v1085 = vpop.f32.mrf.mxu0
    %v1086 = vadd.f32 0.0, %v1085
    %v1087 = vpop.f32.mrf.mxu0
    %v1088 = vadd.f32 0.0, %v1087
    %1089 = vdwg.mxu0
    %1090 = vmatpush.bf16.msra.mxu0 %v1028
    %1091 = vmatpush.bf16.msra.mxu0 %v1024
    %1092 = vmatpush.bf16.msra.mxu0 %v1020
    %1093 = vmatpush.bf16.msra.mxu0 %v1016
    %1094 = vmatpush.bf16.msra.mxu0 %v1012
    %1095 = vmatpush.bf16.msra.mxu0 %v1008
    %1096 = vmatpush.bf16.msra.mxu0 %v1004
    %1097 = vmatpush.bf16.msra.mxu0 %v1000
    %1098 = vmatmul.bf16.gmra.mxu0 %v868
    %v1099 = vpop.f32.mrf.mxu0
    %v1100 = vadd.f32 0.0, %v1099
    %v1101 = vpop.f32.mrf.mxu0
    %v1102 = vadd.f32 0.0, %v1101
    %1103 = vdwg.mxu0
    %1104 = vmatpush.bf16.msra.mxu0 %v1029
    %1105 = vmatpush.bf16.msra.mxu0 %v1025
    %1106 = vmatpush.bf16.msra.mxu0 %v1021
    %1107 = vmatpush.bf16.msra.mxu0 %v1017
    %1108 = vmatpush.bf16.msra.mxu0 %v1013
    %1109 = vmatpush.bf16.msra.mxu0 %v1009
    %1110 = vmatpush.bf16.msra.mxu0 %v1005
    %1111 = vmatpush.bf16.msra.mxu0 %v1001
    %1112 = vmatmul.bf16.gmra.mxu0 %v868
    %v1113 = vpop.f32.mrf.mxu0
    %v1114 = vadd.f32 0.0, %v1113
    %v1115 = vpop.f32.mrf.mxu0
    %v1116 = vadd.f32 0.0, %v1115
    %1117 = vdwg.mxu0
    %v1118 = vadd.f32 %v797, %v1072
    %v1119 = vadd.f32 %v811, %v1086
    %v1120 = vadd.f32 %v825, %v1100
    %v1121 = vadd.f32 %v839, %v1114
    %v1122 = vadd.f32 %v799, %v1074
    %v1123 = vadd.f32 %v813, %v1088
    %v1124 = vadd.f32 %v827, %v1102
    %v1125 = vadd.f32 %v841, %v1116
    %s1126 = scalar_lea.vmem [#allocation4], 24
    %v1127 = vld [vmem:[%s1126] sm:$0xf]
    %v1128 = vld [vmem:[%s1126 + $0x4] sm:$0xf]
    %v1131 = vunpack.c.l.b16 %v1127
    %v1132 = vunpack.c.l.b16 %v1128
    %v1133 = vpack.c.b16 %v1132, %v1131
    %v1135 = vsel %vm301, %v1133, 0
    %1137 = vmatpush.bf16.msra.mxu0 0
    %1138 = vmatpush.bf16.msra.mxu0 0
    %1139 = vmatpush.bf16.msra.mxu0 0
    %1140 = vmatpush.bf16.msra.mxu0 0
    %1141 = vmatpush.bf16.msra.mxu0 %v296
    %1142 = vmatpush.bf16.msra.mxu0 %v295
    %1143 = vmatpush.bf16.msra.mxu0 %v294
    %1144 = vmatpush.bf16.msra.mxu0 %v293
    %1145 = vmatmul.bf16.gmra.mxu0 %v1135
    %v1146 = vpop.f32.mrf.mxu0
    %v1147 = vadd.f32 0.0, %v1146
    %v1148 = vpop.f32.mrf.mxu0
    %v1149 = vadd.f32 0.0, %v1148
    %1150 = vdwg.mxu0
    %v1151 = vpack.c.bf16 %v1149, %v1147
    %s1152 = scalar_lea.vmem [#allocation2], 768
    %v1153 = vld [vmem:[%s1152] sm:$0xff]
    %v1154 = vld [vmem:[%s1152 + $0x8] sm:$0xff]
    %v1155 = vld [vmem:[%s1152 + $0x10] sm:$0xff]
    %v1156 = vld [vmem:[%s1152 + $0x18] sm:$0xff]
    %v1157 = vld [vmem:[%s1152 + $0x20] sm:$0xff]
    %v1158 = vld [vmem:[%s1152 + $0x28] sm:$0xff]
    %v1159 = vld [vmem:[%s1152 + $0x30] sm:$0xff]
    %v1160 = vld [vmem:[%s1152 + $0x38] sm:$0xff]
    %v1161 = vld [vmem:[%s1152 + $0x40] sm:$0xff]
    %v1162 = vld [vmem:[%s1152 + $0x48] sm:$0xff]
    %v1163 = vld [vmem:[%s1152 + $0x50] sm:$0xff]
    %v1164 = vld [vmem:[%s1152 + $0x58] sm:$0xff]
    %v1165 = vld [vmem:[%s1152 + $0x60] sm:$0xff]
    %v1166 = vld [vmem:[%s1152 + $0x68] sm:$0xff]
    %v1167 = vld [vmem:[%s1152 + $0x70] sm:$0xff]
    %v1168 = vld [vmem:[%s1152 + $0x78] sm:$0xff]
    %v1169 = vld [vmem:[%s1152 + $0x80] sm:$0xff]
    %v1170 = vld [vmem:[%s1152 + $0x88] sm:$0xff]
    %v1171 = vld [vmem:[%s1152 + $0x90] sm:$0xff]
    %v1172 = vld [vmem:[%s1152 + $0x98] sm:$0xff]
    %v1173 = vld [vmem:[%s1152 + $0xa0] sm:$0xff]
    %v1174 = vld [vmem:[%s1152 + $0xa8] sm:$0xff]
    %v1175 = vld [vmem:[%s1152 + $0xb0] sm:$0xff]
    %v1176 = vld [vmem:[%s1152 + $0xb8] sm:$0xff]
    %v1177 = vld [vmem:[%s1152 + $0xc0] sm:$0xff]
    %v1178 = vld [vmem:[%s1152 + $0xc8] sm:$0xff]
    %v1179 = vld [vmem:[%s1152 + $0xd0] sm:$0xff]
    %v1180 = vld [vmem:[%s1152 + $0xd8] sm:$0xff]
    %v1181 = vld [vmem:[%s1152 + $0xe0] sm:$0xff]
    %v1182 = vld [vmem:[%s1152 + $0xe8] sm:$0xff]
    %v1183 = vld [vmem:[%s1152 + $0xf0] sm:$0xff]
    %v1184 = vld [vmem:[%s1152 + $0xf8] sm:$0xff]
    %v1217 = vunpack.c.l.b16 %v1153
    %v1218 = vunpack.c.h.b16 %v1153
    %v1219 = vunpack.c.l.b16 %v1154
    %v1220 = vunpack.c.h.b16 %v1154
    %v1221 = vunpack.c.l.b16 %v1155
    %v1222 = vunpack.c.h.b16 %v1155
    %v1223 = vunpack.c.l.b16 %v1156
    %v1224 = vunpack.c.h.b16 %v1156
    %v1225 = vunpack.c.l.b16 %v1157
    %v1226 = vunpack.c.h.b16 %v1157
    %v1227 = vunpack.c.l.b16 %v1158
    %v1228 = vunpack.c.h.b16 %v1158
    %v1229 = vunpack.c.l.b16 %v1159
    %v1230 = vunpack.c.h.b16 %v1159
    %v1231 = vunpack.c.l.b16 %v1160
    %v1232 = vunpack.c.h.b16 %v1160
    %v1233 = vunpack.c.l.b16 %v1161
    %v1234 = vunpack.c.h.b16 %v1161
    %v1235 = vunpack.c.l.b16 %v1162
    %v1236 = vunpack.c.h.b16 %v1162
    %v1237 = vunpack.c.l.b16 %v1163
    %v1238 = vunpack.c.h.b16 %v1163
    %v1239 = vunpack.c.l.b16 %v1164
    %v1240 = vunpack.c.h.b16 %v1164
    %v1241 = vunpack.c.l.b16 %v1165
    %v1242 = vunpack.c.h.b16 %v1165
    %v1243 = vunpack.c.l.b16 %v1166
    %v1244 = vunpack.c.h.b16 %v1166
    %v1245 = vunpack.c.l.b16 %v1167
    %v1246 = vunpack.c.h.b16 %v1167
    %v1247 = vunpack.c.l.b16 %v1168
    %v1248 = vunpack.c.h.b16 %v1168
    %v1249 = vunpack.c.l.b16 %v1169
    %v1250 = vunpack.c.h.b16 %v1169
    %v1251 = vunpack.c.l.b16 %v1170
    %v1252 = vunpack.c.h.b16 %v1170
    %v1253 = vunpack.c.l.b16 %v1171
    %v1254 = vunpack.c.h.b16 %v1171
    %v1255 = vunpack.c.l.b16 %v1172
    %v1256 = vunpack.c.h.b16 %v1172
    %v1257 = vunpack.c.l.b16 %v1173
    %v1258 = vunpack.c.h.b16 %v1173
    %v1259 = vunpack.c.l.b16 %v1174
    %v1260 = vunpack.c.h.b16 %v1174
    %v1261 = vunpack.c.l.b16 %v1175
    %v1262 = vunpack.c.h.b16 %v1175
    %v1263 = vunpack.c.l.b16 %v1176
    %v1264 = vunpack.c.h.b16 %v1176
    %v1265 = vunpack.c.l.b16 %v1177
    %v1266 = vunpack.c.h.b16 %v1177
    %v1267 = vunpack.c.l.b16 %v1178
    %v1268 = vunpack.c.h.b16 %v1178
    %v1269 = vunpack.c.l.b16 %v1179
    %v1270 = vunpack.c.h.b16 %v1179
    %v1271 = vunpack.c.l.b16 %v1180
    %v1272 = vunpack.c.h.b16 %v1180
    %v1273 = vunpack.c.l.b16 %v1181
    %v1274 = vunpack.c.h.b16 %v1181
    %v1275 = vunpack.c.l.b16 %v1182
    %v1276 = vunpack.c.h.b16 %v1182
    %v1277 = vunpack.c.l.b16 %v1183
    %v1278 = vunpack.c.h.b16 %v1183
    %v1279 = vunpack.c.l.b16 %v1184
    %v1280 = vunpack.c.h.b16 %v1184
    %v1281 = vpack.c.b16 %v1221, %v1217
    %v1282 = vpack.c.b16 %v1222, %v1218
    %v1283 = vpack.c.b16 %v1223, %v1219
    %v1284 = vpack.c.b16 %v1224, %v1220
    %v1285 = vpack.c.b16 %v1229, %v1225
    %v1286 = vpack.c.b16 %v1230, %v1226
    %v1287 = vpack.c.b16 %v1231, %v1227
    %v1288 = vpack.c.b16 %v1232, %v1228
    %v1289 = vpack.c.b16 %v1237, %v1233
    %v1290 = vpack.c.b16 %v1238, %v1234
    %v1291 = vpack.c.b16 %v1239, %v1235
    %v1292 = vpack.c.b16 %v1240, %v1236
    %v1293 = vpack.c.b16 %v1245, %v1241
    %v1294 = vpack.c.b16 %v1246, %v1242
    %v1295 = vpack.c.b16 %v1247, %v1243
    %v1296 = vpack.c.b16 %v1248, %v1244
    %v1297 = vpack.c.b16 %v1253, %v1249
    %v1298 = vpack.c.b16 %v1254, %v1250
    %v1299 = vpack.c.b16 %v1255, %v1251
    %v1300 = vpack.c.b16 %v1256, %v1252
    %v1301 = vpack.c.b16 %v1261, %v1257
    %v1302 = vpack.c.b16 %v1262, %v1258
    %v1303 = vpack.c.b16 %v1263, %v1259
    %v1304 = vpack.c.b16 %v1264, %v1260
    %v1305 = vpack.c.b16 %v1269, %v1265
    %v1306 = vpack.c.b16 %v1270, %v1266
    %v1307 = vpack.c.b16 %v1271, %v1267
    %v1308 = vpack.c.b16 %v1272, %v1268
    %v1309 = vpack.c.b16 %v1277, %v1273
    %v1310 = vpack.c.b16 %v1278, %v1274
    %v1311 = vpack.c.b16 %v1279, %v1275
    %v1312 = vpack.c.b16 %v1280, %v1276
    %1345 = vmatpush.bf16.msra.mxu0 %v1309
    %1346 = vmatpush.bf16.msra.mxu0 %v1305
    %1347 = vmatpush.bf16.msra.mxu0 %v1301
    %1348 = vmatpush.bf16.msra.mxu0 %v1297
    %1349 = vmatpush.bf16.msra.mxu0 %v1293
    %1350 = vmatpush.bf16.msra.mxu0 %v1289
    %1351 = vmatpush.bf16.msra.mxu0 %v1285
    %1352 = vmatpush.bf16.msra.mxu0 %v1281
    %1353 = vmatmul.bf16.gmra.mxu0 %v1151
    %v1354 = vpop.f32.mrf.mxu0
    %v1355 = vadd.f32 0.0, %v1354
    %v1356 = vpop.f32.mrf.mxu0
    %v1357 = vadd.f32 0.0, %v1356
    %1358 = vdwg.mxu0
    %1359 = vmatpush.bf16.msra.mxu0 %v1310
    %1360 = vmatpush.bf16.msra.mxu0 %v1306
    %1361 = vmatpush.bf16.msra.mxu0 %v1302
    %1362 = vmatpush.bf16.msra.mxu0 %v1298
    %1363 = vmatpush.bf16.msra.mxu0 %v1294
    %1364 = vmatpush.bf16.msra.mxu0 %v1290
    %1365 = vmatpush.bf16.msra.mxu0 %v1286
    %1366 = vmatpush.bf16.msra.mxu0 %v1282
    %1367 = vmatmul.bf16.gmra.mxu0 %v1151
    %v1368 = vpop.f32.mrf.mxu0
    %v1369 = vadd.f32 0.0, %v1368
    %v1370 = vpop.f32.mrf.mxu0
    %v1371 = vadd.f32 0.0, %v1370
    %1372 = vdwg.mxu0
    %1373 = vmatpush.bf16.msra.mxu0 %v1311
    %1374 = vmatpush.bf16.msra.mxu0 %v1307
    %1375 = vmatpush.bf16.msra.mxu0 %v1303
    %1376 = vmatpush.bf16.msra.mxu0 %v1299
    %1377 = vmatpush.bf16.msra.mxu0 %v1295
    %1378 = vmatpush.bf16.msra.mxu0 %v1291
    %1379 = vmatpush.bf16.msra.mxu0 %v1287
    %1380 = vmatpush.bf16.msra.mxu0 %v1283
    %1381 = vmatmul.bf16.gmra.mxu0 %v1151
    %v1382 = vpop.f32.mrf.mxu0
    %v1383 = vadd.f32 0.0, %v1382
    %v1384 = vpop.f32.mrf.mxu0
    %v1385 = vadd.f32 0.0, %v1384
    %1386 = vdwg.mxu0
    %1387 = vmatpush.bf16.msra.mxu0 %v1312
    %1388 = vmatpush.bf16.msra.mxu0 %v1308
    %1389 = vmatpush.bf16.msra.mxu0 %v1304
    %1390 = vmatpush.bf16.msra.mxu0 %v1300
    %1391 = vmatpush.bf16.msra.mxu0 %v1296
    %1392 = vmatpush.bf16.msra.mxu0 %v1292
    %1393 = vmatpush.bf16.msra.mxu0 %v1288
    %1394 = vmatpush.bf16.msra.mxu0 %v1284
    %1395 = vmatmul.bf16.gmra.mxu0 %v1151
    %v1396 = vpop.f32.mrf.mxu0
    %v1397 = vadd.f32 0.0, %v1396
    %v1398 = vpop.f32.mrf.mxu0
    %v1399 = vadd.f32 0.0, %v1398
    %1400 = vdwg.mxu0
    %v1401 = vadd.f32 %v1118, %v1355
    %v1402 = vadd.f32 %v1119, %v1369
    %v1403 = vadd.f32 %v1120, %v1383
    %v1404 = vadd.f32 %v1121, %v1397
    %v1405 = vadd.f32 %v1122, %v1357
    %v1406 = vadd.f32 %v1123, %v1371
    %v1407 = vadd.f32 %v1124, %v1385
    %v1408 = vadd.f32 %v1125, %v1399
    %s1409 = scalar_lea.vmem [#allocation4], 32
    %v1410 = vld [vmem:[%s1409] sm:$0xf]
    %v1411 = vld [vmem:[%s1409 + $0x4] sm:$0xf]
    %v1414 = vunpack.c.l.b16 %v1410
    %v1415 = vunpack.c.l.b16 %v1411
    %v1416 = vpack.c.b16 %v1415, %v1414
    %v1418 = vsel %vm301, %v1416, 0
    %1420 = vmatpush.bf16.msra.mxu0 0
    %1421 = vmatpush.bf16.msra.mxu0 0
    %1422 = vmatpush.bf16.msra.mxu0 0
    %1423 = vmatpush.bf16.msra.mxu0 0
    %1424 = vmatpush.bf16.msra.mxu0 %v296
    %1425 = vmatpush.bf16.msra.mxu0 %v295
    %1426 = vmatpush.bf16.msra.mxu0 %v294
    %1427 = vmatpush.bf16.msra.mxu0 %v293
    %1428 = vmatmul.bf16.gmra.mxu0 %v1418
    %v1429 = vpop.f32.mrf.mxu0
    %v1430 = vadd.f32 0.0, %v1429
    %v1431 = vpop.f32.mrf.mxu0
    %v1432 = vadd.f32 0.0, %v1431
    %1433 = vdwg.mxu0
    %v1434 = vpack.c.bf16 %v1432, %v1430
    %s1435 = scalar_lea.vmem [#allocation2], 1024
    %v1436 = vld [vmem:[%s1435] sm:$0xff]
    %v1437 = vld [vmem:[%s1435 + $0x8] sm:$0xff]
    %v1438 = vld [vmem:[%s1435 + $0x10] sm:$0xff]
    %v1439 = vld [vmem:[%s1435 + $0x18] sm:$0xff]
    %v1440 = vld [vmem:[%s1435 + $0x20] sm:$0xff]
    %v1441 = vld [vmem:[%s1435 + $0x28] sm:$0xff]
    %v1442 = vld [vmem:[%s1435 + $0x30] sm:$0xff]
    %v1443 = vld [vmem:[%s1435 + $0x38] sm:$0xff]
    %v1444 = vld [vmem:[%s1435 + $0x40] sm:$0xff]
    %v1445 = vld [vmem:[%s1435 + $0x48] sm:$0xff]
    %v1446 = vld [vmem:[%s1435 + $0x50] sm:$0xff]
    %v1447 = vld [vmem:[%s1435 + $0x58] sm:$0xff]
    %v1448 = vld [vmem:[%s1435 + $0x60] sm:$0xff]
    %v1449 = vld [vmem:[%s1435 + $0x68] sm:$0xff]
    %v1450 = vld [vmem:[%s1435 + $0x70] sm:$0xff]
    %v1451 = vld [vmem:[%s1435 + $0x78] sm:$0xff]
    %v1452 = vld [vmem:[%s1435 + $0x80] sm:$0xff]
    %v1453 = vld [vmem:[%s1435 + $0x88] sm:$0xff]
    %v1454 = vld [vmem:[%s1435 + $0x90] sm:$0xff]
    %v1455 = vld [vmem:[%s1435 + $0x98] sm:$0xff]
    %v1456 = vld [vmem:[%s1435 + $0xa0] sm:$0xff]
    %v1457 = vld [vmem:[%s1435 + $0xa8] sm:$0xff]
    %v1458 = vld [vmem:[%s1435 + $0xb0] sm:$0xff]
    %v1459 = vld [vmem:[%s1435 + $0xb8] sm:$0xff]
    %v1460 = vld [vmem:[%s1435 + $0xc0] sm:$0xff]
    %v1461 = vld [vmem:[%s1435 + $0xc8] sm:$0xff]
    %v1462 = vld [vmem:[%s1435 + $0xd0] sm:$0xff]
    %v1463 = vld [vmem:[%s1435 + $0xd8] sm:$0xff]
    %v1464 = vld [vmem:[%s1435 + $0xe0] sm:$0xff]
    %v1465 = vld [vmem:[%s1435 + $0xe8] sm:$0xff]
    %v1466 = vld [vmem:[%s1435 + $0xf0] sm:$0xff]
    %v1467 = vld [vmem:[%s1435 + $0xf8] sm:$0xff]
    %v1500 = vunpack.c.l.b16 %v1436
    %v1501 = vunpack.c.h.b16 %v1436
    %v1502 = vunpack.c.l.b16 %v1437
    %v1503 = vunpack.c.h.b16 %v1437
    %v1504 = vunpack.c.l.b16 %v1438
    %v1505 = vunpack.c.h.b16 %v1438
    %v1506 = vunpack.c.l.b16 %v1439
    %v1507 = vunpack.c.h.b16 %v1439
    %v1508 = vunpack.c.l.b16 %v1440
    %v1509 = vunpack.c.h.b16 %v1440
    %v1510 = vunpack.c.l.b16 %v1441
    %v1511 = vunpack.c.h.b16 %v1441
    %v1512 = vunpack.c.l.b16 %v1442
    %v1513 = vunpack.c.h.b16 %v1442
    %v1514 = vunpack.c.l.b16 %v1443
    %v1515 = vunpack.c.h.b16 %v1443
    %v1516 = vunpack.c.l.b16 %v1444
    %v1517 = vunpack.c.h.b16 %v1444
    %v1518 = vunpack.c.l.b16 %v1445
    %v1519 = vunpack.c.h.b16 %v1445
    %v1520 = vunpack.c.l.b16 %v1446
    %v1521 = vunpack.c.h.b16 %v1446
    %v1522 = vunpack.c.l.b16 %v1447
    %v1523 = vunpack.c.h.b16 %v1447
    %v1524 = vunpack.c.l.b16 %v1448
    %v1525 = vunpack.c.h.b16 %v1448
    %v1526 = vunpack.c.l.b16 %v1449
    %v1527 = vunpack.c.h.b16 %v1449
    %v1528 = vunpack.c.l.b16 %v1450
    %v1529 = vunpack.c.h.b16 %v1450
    %v1530 = vunpack.c.l.b16 %v1451
    %v1531 = vunpack.c.h.b16 %v1451
    %v1532 = vunpack.c.l.b16 %v1452
    %v1533 = vunpack.c.h.b16 %v1452
    %v1534 = vunpack.c.l.b16 %v1453
    %v1535 = vunpack.c.h.b16 %v1453
    %v1536 = vunpack.c.l.b16 %v1454
    %v1537 = vunpack.c.h.b16 %v1454
    %v1538 = vunpack.c.l.b16 %v1455
    %v1539 = vunpack.c.h.b16 %v1455
    %v1540 = vunpack.c.l.b16 %v1456
    %v1541 = vunpack.c.h.b16 %v1456
    %v1542 = vunpack.c.l.b16 %v1457
    %v1543 = vunpack.c.h.b16 %v1457
    %v1544 = vunpack.c.l.b16 %v1458
    %v1545 = vunpack.c.h.b16 %v1458
    %v1546 = vunpack.c.l.b16 %v1459
    %v1547 = vunpack.c.h.b16 %v1459
    %v1548 = vunpack.c.l.b16 %v1460
    %v1549 = vunpack.c.h.b16 %v1460
    %v1550 = vunpack.c.l.b16 %v1461
    %v1551 = vunpack.c.h.b16 %v1461
    %v1552 = vunpack.c.l.b16 %v1462
    %v1553 = vunpack.c.h.b16 %v1462
    %v1554 = vunpack.c.l.b16 %v1463
    %v1555 = vunpack.c.h.b16 %v1463
    %v1556 = vunpack.c.l.b16 %v1464
    %v1557 = vunpack.c.h.b16 %v1464
    %v1558 = vunpack.c.l.b16 %v1465
    %v1559 = vunpack.c.h.b16 %v1465
    %v1560 = vunpack.c.l.b16 %v1466
    %v1561 = vunpack.c.h.b16 %v1466
    %v1562 = vunpack.c.l.b16 %v1467
    %v1563 = vunpack.c.h.b16 %v1467
    %v1564 = vpack.c.b16 %v1504, %v1500
    %v1565 = vpack.c.b16 %v1505, %v1501
    %v1566 = vpack.c.b16 %v1506, %v1502
    %v1567 = vpack.c.b16 %v1507, %v1503
    %v1568 = vpack.c.b16 %v1512, %v1508
    %v1569 = vpack.c.b16 %v1513, %v1509
    %v1570 = vpack.c.b16 %v1514, %v1510
    %v1571 = vpack.c.b16 %v1515, %v1511
    %v1572 = vpack.c.b16 %v1520, %v1516
    %v1573 = vpack.c.b16 %v1521, %v1517
    %v1574 = vpack.c.b16 %v1522, %v1518
    %v1575 = vpack.c.b16 %v1523, %v1519
    %v1576 = vpack.c.b16 %v1528, %v1524
    %v1577 = vpack.c.b16 %v1529, %v1525
    %v1578 = vpack.c.b16 %v1530, %v1526
    %v1579 = vpack.c.b16 %v1531, %v1527
    %v1580 = vpack.c.b16 %v1536, %v1532
    %v1581 = vpack.c.b16 %v1537, %v1533
    %v1582 = vpack.c.b16 %v1538, %v1534
    %v1583 = vpack.c.b16 %v1539, %v1535
    %v1584 = vpack.c.b16 %v1544, %v1540
    %v1585 = vpack.c.b16 %v1545, %v1541
    %v1586 = vpack.c.b16 %v1546, %v1542
    %v1587 = vpack.c.b16 %v1547, %v1543
    %v1588 = vpack.c.b16 %v1552, %v1548
    %v1589 = vpack.c.b16 %v1553, %v1549
    %v1590 = vpack.c.b16 %v1554, %v1550
    %v1591 = vpack.c.b16 %v1555, %v1551
    %v1592 = vpack.c.b16 %v1560, %v1556
    %v1593 = vpack.c.b16 %v1561, %v1557
    %v1594 = vpack.c.b16 %v1562, %v1558
    %v1595 = vpack.c.b16 %v1563, %v1559
    %1628 = vmatpush.bf16.msra.mxu0 %v1592
    %1629 = vmatpush.bf16.msra.mxu0 %v1588
    %1630 = vmatpush.bf16.msra.mxu0 %v1584
    %1631 = vmatpush.bf16.msra.mxu0 %v1580
    %1632 = vmatpush.bf16.msra.mxu0 %v1576
    %1633 = vmatpush.bf16.msra.mxu0 %v1572
    %1634 = vmatpush.bf16.msra.mxu0 %v1568
    %1635 = vmatpush.bf16.msra.mxu0 %v1564
    %1636 = vmatmul.bf16.gmra.mxu0 %v1434
    %v1637 = vpop.f32.mrf.mxu0
    %v1638 = vadd.f32 0.0, %v1637
    %v1639 = vpop.f32.mrf.mxu0
    %v1640 = vadd.f32 0.0, %v1639
    %1641 = vdwg.mxu0
    %1642 = vmatpush.bf16.msra.mxu0 %v1593
    %1643 = vmatpush.bf16.msra.mxu0 %v1589
    %1644 = vmatpush.bf16.msra.mxu0 %v1585
    %1645 = vmatpush.bf16.msra.mxu0 %v1581
    %1646 = vmatpush.bf16.msra.mxu0 %v1577
    %1647 = vmatpush.bf16.msra.mxu0 %v1573
    %1648 = vmatpush.bf16.msra.mxu0 %v1569
    %1649 = vmatpush.bf16.msra.mxu0 %v1565
    %1650 = vmatmul.bf16.gmra.mxu0 %v1434
    %v1651 = vpop.f32.mrf.mxu0
    %v1652 = vadd.f32 0.0, %v1651
    %v1653 = vpop.f32.mrf.mxu0
    %v1654 = vadd.f32 0.0, %v1653
    %1655 = vdwg.mxu0
    %1656 = vmatpush.bf16.msra.mxu0 %v1594
    %1657 = vmatpush.bf16.msra.mxu0 %v1590
    %1658 = vmatpush.bf16.msra.mxu0 %v1586
    %1659 = vmatpush.bf16.msra.mxu0 %v1582
    %1660 = vmatpush.bf16.msra.mxu0 %v1578
    %1661 = vmatpush.bf16.msra.mxu0 %v1574
    %1662 = vmatpush.bf16.msra.mxu0 %v1570
    %1663 = vmatpush.bf16.msra.mxu0 %v1566
    %1664 = vmatmul.bf16.gmra.mxu0 %v1434
    %v1665 = vpop.f32.mrf.mxu0
    %v1666 = vadd.f32 0.0, %v1665
    %v1667 = vpop.f32.mrf.mxu0
    %v1668 = vadd.f32 0.0, %v1667
    %1669 = vdwg.mxu0
    %1670 = vmatpush.bf16.msra.mxu0 %v1595
    %1671 = vmatpush.bf16.msra.mxu0 %v1591
    %1672 = vmatpush.bf16.msra.mxu0 %v1587
    %1673 = vmatpush.bf16.msra.mxu0 %v1583
    %1674 = vmatpush.bf16.msra.mxu0 %v1579
    %1675 = vmatpush.bf16.msra.mxu0 %v1575
    %1676 = vmatpush.bf16.msra.mxu0 %v1571
    %1677 = vmatpush.bf16.msra.mxu0 %v1567
    %1678 = vmatmul.bf16.gmra.mxu0 %v1434
    %v1679 = vpop.f32.mrf.mxu0
    %v1680 = vadd.f32 0.0, %v1679
    %v1681 = vpop.f32.mrf.mxu0
    %v1682 = vadd.f32 0.0, %v1681
    %1683 = vdwg.mxu0
    %v1684 = vadd.f32 %v1401, %v1638
    %v1685 = vadd.f32 %v1402, %v1652
    %v1686 = vadd.f32 %v1403, %v1666
    %v1687 = vadd.f32 %v1404, %v1680
    %v1688 = vadd.f32 %v1405, %v1640
    %v1689 = vadd.f32 %v1406, %v1654
    %v1690 = vadd.f32 %v1407, %v1668
    %v1691 = vadd.f32 %v1408, %v1682
    %s1692 = scalar_lea.vmem [#allocation4], 40
    %v1693 = vld [vmem:[%s1692] sm:$0xf]
    %v1694 = vld [vmem:[%s1692 + $0x4] sm:$0xf]
    %v1697 = vunpack.c.l.b16 %v1693
    %v1698 = vunpack.c.l.b16 %v1694
    %v1699 = vpack.c.b16 %v1698, %v1697
    %v1701 = vsel %vm301, %v1699, 0
    %1703 = vmatpush.bf16.msra.mxu0 0
    %1704 = vmatpush.bf16.msra.mxu0 0
    %1705 = vmatpush.bf16.msra.mxu0 0
    %1706 = vmatpush.bf16.msra.mxu0 0
    %1707 = vmatpush.bf16.msra.mxu0 %v296
    %1708 = vmatpush.bf16.msra.mxu0 %v295
    %1709 = vmatpush.bf16.msra.mxu0 %v294
    %1710 = vmatpush.bf16.msra.mxu0 %v293
    %1711 = vmatmul.bf16.gmra.mxu0 %v1701
    %v1712 = vpop.f32.mrf.mxu0
    %v1713 = vadd.f32 0.0, %v1712
    %v1714 = vpop.f32.mrf.mxu0
    %v1715 = vadd.f32 0.0, %v1714
    %1716 = vdwg.mxu0
    %v1717 = vpack.c.bf16 %v1715, %v1713
    %s1718 = scalar_lea.vmem [#allocation2], 1280
    %v1719 = vld [vmem:[%s1718] sm:$0xff]
    %v1720 = vld [vmem:[%s1718 + $0x8] sm:$0xff]
    %v1721 = vld [vmem:[%s1718 + $0x10] sm:$0xff]
    %v1722 = vld [vmem:[%s1718 + $0x18] sm:$0xff]
    %v1723 = vld [vmem:[%s1718 + $0x20] sm:$0xff]
    %v1724 = vld [vmem:[%s1718 + $0x28] sm:$0xff]
    %v1725 = vld [vmem:[%s1718 + $0x30] sm:$0xff]
    %v1726 = vld [vmem:[%s1718 + $0x38] sm:$0xff]
    %v1727 = vld [vmem:[%s1718 + $0x40] sm:$0xff]
    %v1728 = vld [vmem:[%s1718 + $0x48] sm:$0xff]
    %v1729 = vld [vmem:[%s1718 + $0x50] sm:$0xff]
    %v1730 = vld [vmem:[%s1718 + $0x58] sm:$0xff]
    %v1731 = vld [vmem:[%s1718 + $0x60] sm:$0xff]
    %v1732 = vld [vmem:[%s1718 + $0x68] sm:$0xff]
    %v1733 = vld [vmem:[%s1718 + $0x70] sm:$0xff]
    %v1734 = vld [vmem:[%s1718 + $0x78] sm:$0xff]
    %v1735 = vld [vmem:[%s1718 + $0x80] sm:$0xff]
    %v1736 = vld [vmem:[%s1718 + $0x88] sm:$0xff]
    %v1737 = vld [vmem:[%s1718 + $0x90] sm:$0xff]
    %v1738 = vld [vmem:[%s1718 + $0x98] sm:$0xff]
    %v1739 = vld [vmem:[%s1718 + $0xa0] sm:$0xff]
    %v1740 = vld [vmem:[%s1718 + $0xa8] sm:$0xff]
    %v1741 = vld [vmem:[%s1718 + $0xb0] sm:$0xff]
    %v1742 = vld [vmem:[%s1718 + $0xb8] sm:$0xff]
    %v1743 = vld [vmem:[%s1718 + $0xc0] sm:$0xff]
    %v1744 = vld [vmem:[%s1718 + $0xc8] sm:$0xff]
    %v1745 = vld [vmem:[%s1718 + $0xd0] sm:$0xff]
    %v1746 = vld [vmem:[%s1718 + $0xd8] sm:$0xff]
    %v1747 = vld [vmem:[%s1718 + $0xe0] sm:$0xff]
    %v1748 = vld [vmem:[%s1718 + $0xe8] sm:$0xff]
    %v1749 = vld [vmem:[%s1718 + $0xf0] sm:$0xff]
    %v1750 = vld [vmem:[%s1718 + $0xf8] sm:$0xff]
    %v1783 = vunpack.c.l.b16 %v1719
    %v1784 = vunpack.c.h.b16 %v1719
    %v1785 = vunpack.c.l.b16 %v1720
    %v1786 = vunpack.c.h.b16 %v1720
    %v1787 = vunpack.c.l.b16 %v1721
    %v1788 = vunpack.c.h.b16 %v1721
    %v1789 = vunpack.c.l.b16 %v1722
    %v1790 = vunpack.c.h.b16 %v1722
    %v1791 = vunpack.c.l.b16 %v1723
    %v1792 = vunpack.c.h.b16 %v1723
    %v1793 = vunpack.c.l.b16 %v1724
    %v1794 = vunpack.c.h.b16 %v1724
    %v1795 = vunpack.c.l.b16 %v1725
    %v1796 = vunpack.c.h.b16 %v1725
    %v1797 = vunpack.c.l.b16 %v1726
    %v1798 = vunpack.c.h.b16 %v1726
    %v1799 = vunpack.c.l.b16 %v1727
    %v1800 = vunpack.c.h.b16 %v1727
    %v1801 = vunpack.c.l.b16 %v1728
    %v1802 = vunpack.c.h.b16 %v1728
    %v1803 = vunpack.c.l.b16 %v1729
    %v1804 = vunpack.c.h.b16 %v1729
    %v1805 = vunpack.c.l.b16 %v1730
    %v1806 = vunpack.c.h.b16 %v1730
    %v1807 = vunpack.c.l.b16 %v1731
    %v1808 = vunpack.c.h.b16 %v1731
    %v1809 = vunpack.c.l.b16 %v1732
    %v1810 = vunpack.c.h.b16 %v1732
    %v1811 = vunpack.c.l.b16 %v1733
    %v1812 = vunpack.c.h.b16 %v1733
    %v1813 = vunpack.c.l.b16 %v1734
    %v1814 = vunpack.c.h.b16 %v1734
    %v1815 = vunpack.c.l.b16 %v1735
    %v1816 = vunpack.c.h.b16 %v1735
    %v1817 = vunpack.c.l.b16 %v1736
    %v1818 = vunpack.c.h.b16 %v1736
    %v1819 = vunpack.c.l.b16 %v1737
    %v1820 = vunpack.c.h.b16 %v1737
    %v1821 = vunpack.c.l.b16 %v1738
    %v1822 = vunpack.c.h.b16 %v1738
    %v1823 = vunpack.c.l.b16 %v1739
    %v1824 = vunpack.c.h.b16 %v1739
    %v1825 = vunpack.c.l.b16 %v1740
    %v1826 = vunpack.c.h.b16 %v1740
    %v1827 = vunpack.c.l.b16 %v1741
    %v1828 = vunpack.c.h.b16 %v1741
    %v1829 = vunpack.c.l.b16 %v1742
    %v1830 = vunpack.c.h.b16 %v1742
    %v1831 = vunpack.c.l.b16 %v1743
    %v1832 = vunpack.c.h.b16 %v1743
    %v1833 = vunpack.c.l.b16 %v1744
    %v1834 = vunpack.c.h.b16 %v1744
    %v1835 = vunpack.c.l.b16 %v1745
    %v1836 = vunpack.c.h.b16 %v1745
    %v1837 = vunpack.c.l.b16 %v1746
    %v1838 = vunpack.c.h.b16 %v1746
    %v1839 = vunpack.c.l.b16 %v1747
    %v1840 = vunpack.c.h.b16 %v1747
    %v1841 = vunpack.c.l.b16 %v1748
    %v1842 = vunpack.c.h.b16 %v1748
    %v1843 = vunpack.c.l.b16 %v1749
    %v1844 = vunpack.c.h.b16 %v1749
    %v1845 = vunpack.c.l.b16 %v1750
    %v1846 = vunpack.c.h.b16 %v1750
    %v1847 = vpack.c.b16 %v1787, %v1783
    %v1848 = vpack.c.b16 %v1788, %v1784
    %v1849 = vpack.c.b16 %v1789, %v1785
    %v1850 = vpack.c.b16 %v1790, %v1786
    %v1851 = vpack.c.b16 %v1795, %v1791
    %v1852 = vpack.c.b16 %v1796, %v1792
    %v1853 = vpack.c.b16 %v1797, %v1793
    %v1854 = vpack.c.b16 %v1798, %v1794
    %v1855 = vpack.c.b16 %v1803, %v1799
    %v1856 = vpack.c.b16 %v1804, %v1800
    %v1857 = vpack.c.b16 %v1805, %v1801
    %v1858 = vpack.c.b16 %v1806, %v1802
    %v1859 = vpack.c.b16 %v1811, %v1807
    %v1860 = vpack.c.b16 %v1812, %v1808
    %v1861 = vpack.c.b16 %v1813, %v1809
    %v1862 = vpack.c.b16 %v1814, %v1810
    %v1863 = vpack.c.b16 %v1819, %v1815
    %v1864 = vpack.c.b16 %v1820, %v1816
    %v1865 = vpack.c.b16 %v1821, %v1817
    %v1866 = vpack.c.b16 %v1822, %v1818
    %v1867 = vpack.c.b16 %v1827, %v1823
    %v1868 = vpack.c.b16 %v1828, %v1824
    %v1869 = vpack.c.b16 %v1829, %v1825
    %v1870 = vpack.c.b16 %v1830, %v1826
    %v1871 = vpack.c.b16 %v1835, %v1831
    %v1872 = vpack.c.b16 %v1836, %v1832
    %v1873 = vpack.c.b16 %v1837, %v1833
    %v1874 = vpack.c.b16 %v1838, %v1834
    %v1875 = vpack.c.b16 %v1843, %v1839
    %v1876 = vpack.c.b16 %v1844, %v1840
    %v1877 = vpack.c.b16 %v1845, %v1841
    %v1878 = vpack.c.b16 %v1846, %v1842
    %1911 = vmatpush.bf16.msra.mxu0 %v1875
    %1912 = vmatpush.bf16.msra.mxu0 %v1871
    %1913 = vmatpush.bf16.msra.mxu0 %v1867
    %1914 = vmatpush.bf16.msra.mxu0 %v1863
    %1915 = vmatpush.bf16.msra.mxu0 %v1859
    %1916 = vmatpush.bf16.msra.mxu0 %v1855
    %1917 = vmatpush.bf16.msra.mxu0 %v1851
    %1918 = vmatpush.bf16.msra.mxu0 %v1847
    %1919 = vmatmul.bf16.gmra.mxu0 %v1717
    %v1920 = vpop.f32.mrf.mxu0
    %v1921 = vadd.f32 0.0, %v1920
    %v1922 = vpop.f32.mrf.mxu0
    %v1923 = vadd.f32 0.0, %v1922
    %1924 = vdwg.mxu0
    %1925 = vmatpush.bf16.msra.mxu0 %v1876
    %1926 = vmatpush.bf16.msra.mxu0 %v1872
    %1927 = vmatpush.bf16.msra.mxu0 %v1868
    %1928 = vmatpush.bf16.msra.mxu0 %v1864
    %1929 = vmatpush.bf16.msra.mxu0 %v1860
    %1930 = vmatpush.bf16.msra.mxu0 %v1856
    %1931 = vmatpush.bf16.msra.mxu0 %v1852
    %1932 = vmatpush.bf16.msra.mxu0 %v1848
    %1933 = vmatmul.bf16.gmra.mxu0 %v1717
    %v1934 = vpop.f32.mrf.mxu0
    %v1935 = vadd.f32 0.0, %v1934
    %v1936 = vpop.f32.mrf.mxu0
    %v1937 = vadd.f32 0.0, %v1936
    %1938 = vdwg.mxu0
    %1939 = vmatpush.bf16.msra.mxu0 %v1877
    %1940 = vmatpush.bf16.msra.mxu0 %v1873
    %1941 = vmatpush.bf16.msra.mxu0 %v1869
    %1942 = vmatpush.bf16.msra.mxu0 %v1865
    %1943 = vmatpush.bf16.msra.mxu0 %v1861
    %1944 = vmatpush.bf16.msra.mxu0 %v1857
    %1945 = vmatpush.bf16.msra.mxu0 %v1853
    %1946 = vmatpush.bf16.msra.mxu0 %v1849
    %1947 = vmatmul.bf16.gmra.mxu0 %v1717
    %v1948 = vpop.f32.mrf.mxu0
    %v1949 = vadd.f32 0.0, %v1948
    %v1950 = vpop.f32.mrf.mxu0
    %v1951 = vadd.f32 0.0, %v1950
    %1952 = vdwg.mxu0
    %1953 = vmatpush.bf16.msra.mxu0 %v1878
    %1954 = vmatpush.bf16.msra.mxu0 %v1874
    %1955 = vmatpush.bf16.msra.mxu0 %v1870
    %1956 = vmatpush.bf16.msra.mxu0 %v1866
    %1957 = vmatpush.bf16.msra.mxu0 %v1862
    %1958 = vmatpush.bf16.msra.mxu0 %v1858
    %1959 = vmatpush.bf16.msra.mxu0 %v1854
    %1960 = vmatpush.bf16.msra.mxu0 %v1850
    %1961 = vmatmul.bf16.gmra.mxu0 %v1717
    %v1962 = vpop.f32.mrf.mxu0
    %v1963 = vadd.f32 0.0, %v1962
    %v1964 = vpop.f32.mrf.mxu0
    %v1965 = vadd.f32 0.0, %v1964
    %1966 = vdwg.mxu0
    %v1967 = vadd.f32 %v1684, %v1921
    %v1968 = vadd.f32 %v1685, %v1935
    %v1969 = vadd.f32 %v1686, %v1949
    %v1970 = vadd.f32 %v1687, %v1963
    %v1971 = vadd.f32 %v1688, %v1923
    %v1972 = vadd.f32 %v1689, %v1937
    %v1973 = vadd.f32 %v1690, %v1951
    %v1974 = vadd.f32 %v1691, %v1965
    %s1975 = scalar_lea.vmem [#allocation4], 48
    %v1976 = vld [vmem:[%s1975] sm:$0xf]
    %v1977 = vld [vmem:[%s1975 + $0x4] sm:$0xf]
    %v1980 = vunpack.c.l.b16 %v1976
    %v1981 = vunpack.c.l.b16 %v1977
    %v1982 = vpack.c.b16 %v1981, %v1980
    %v1984 = vsel %vm301, %v1982, 0
    %1986 = vmatpush.bf16.msra.mxu0 0
    %1987 = vmatpush.bf16.msra.mxu0 0
    %1988 = vmatpush.bf16.msra.mxu0 0
    %1989 = vmatpush.bf16.msra.mxu0 0
    %1990 = vmatpush.bf16.msra.mxu0 %v296
    %1991 = vmatpush.bf16.msra.mxu0 %v295
    %1992 = vmatpush.bf16.msra.mxu0 %v294
    %1993 = vmatpush.bf16.msra.mxu0 %v293
    %1994 = vmatmul.bf16.gmra.mxu0 %v1984
    %v1995 = vpop.f32.mrf.mxu0
    %v1996 = vadd.f32 0.0, %v1995
    %v1997 = vpop.f32.mrf.mxu0
    %v1998 = vadd.f32 0.0, %v1997
    %1999 = vdwg.mxu0
    %v2000 = vpack.c.bf16 %v1998, %v1996
    %s2001 = scalar_lea.vmem [#allocation2], 1536
    %v2002 = vld [vmem:[%s2001] sm:$0xff]
    %v2003 = vld [vmem:[%s2001 + $0x8] sm:$0xff]
    %v2004 = vld [vmem:[%s2001 + $0x10] sm:$0xff]
    %v2005 = vld [vmem:[%s2001 + $0x18] sm:$0xff]
    %v2006 = vld [vmem:[%s2001 + $0x20] sm:$0xff]
    %v2007 = vld [vmem:[%s2001 + $0x28] sm:$0xff]
    %v2008 = vld [vmem:[%s2001 + $0x30] sm:$0xff]
    %v2009 = vld [vmem:[%s2001 + $0x38] sm:$0xff]
    %v2010 = vld [vmem:[%s2001 + $0x40] sm:$0xff]
    %v2011 = vld [vmem:[%s2001 + $0x48] sm:$0xff]
    %v2012 = vld [vmem:[%s2001 + $0x50] sm:$0xff]
    %v2013 = vld [vmem:[%s2001 + $0x58] sm:$0xff]
    %v2014 = vld [vmem:[%s2001 + $0x60] sm:$0xff]
    %v2015 = vld [vmem:[%s2001 + $0x68] sm:$0xff]
    %v2016 = vld [vmem:[%s2001 + $0x70] sm:$0xff]
    %v2017 = vld [vmem:[%s2001 + $0x78] sm:$0xff]
    %v2018 = vld [vmem:[%s2001 + $0x80] sm:$0xff]
    %v2019 = vld [vmem:[%s2001 + $0x88] sm:$0xff]
    %v2020 = vld [vmem:[%s2001 + $0x90] sm:$0xff]
    %v2021 = vld [vmem:[%s2001 + $0x98] sm:$0xff]
    %v2022 = vld [vmem:[%s2001 + $0xa0] sm:$0xff]
    %v2023 = vld [vmem:[%s2001 + $0xa8] sm:$0xff]
    %v2024 = vld [vmem:[%s2001 + $0xb0] sm:$0xff]
    %v2025 = vld [vmem:[%s2001 + $0xb8] sm:$0xff]
    %v2026 = vld [vmem:[%s2001 + $0xc0] sm:$0xff]
    %v2027 = vld [vmem:[%s2001 + $0xc8] sm:$0xff]
    %v2028 = vld [vmem:[%s2001 + $0xd0] sm:$0xff]
    %v2029 = vld [vmem:[%s2001 + $0xd8] sm:$0xff]
    %v2030 = vld [vmem:[%s2001 + $0xe0] sm:$0xff]
    %v2031 = vld [vmem:[%s2001 + $0xe8] sm:$0xff]
    %v2032 = vld [vmem:[%s2001 + $0xf0] sm:$0xff]
    %v2033 = vld [vmem:[%s2001 + $0xf8] sm:$0xff]
    %v2066 = vunpack.c.l.b16 %v2002
    %v2067 = vunpack.c.h.b16 %v2002
    %v2068 = vunpack.c.l.b16 %v2003
    %v2069 = vunpack.c.h.b16 %v2003
    %v2070 = vunpack.c.l.b16 %v2004
    %v2071 = vunpack.c.h.b16 %v2004
    %v2072 = vunpack.c.l.b16 %v2005
    %v2073 = vunpack.c.h.b16 %v2005
    %v2074 = vunpack.c.l.b16 %v2006
    %v2075 = vunpack.c.h.b16 %v2006
    %v2076 = vunpack.c.l.b16 %v2007
    %v2077 = vunpack.c.h.b16 %v2007
    %v2078 = vunpack.c.l.b16 %v2008
    %v2079 = vunpack.c.h.b16 %v2008
    %v2080 = vunpack.c.l.b16 %v2009
    %v2081 = vunpack.c.h.b16 %v2009
    %v2082 = vunpack.c.l.b16 %v2010
    %v2083 = vunpack.c.h.b16 %v2010
    %v2084 = vunpack.c.l.b16 %v2011
    %v2085 = vunpack.c.h.b16 %v2011
    %v2086 = vunpack.c.l.b16 %v2012
    %v2087 = vunpack.c.h.b16 %v2012
    %v2088 = vunpack.c.l.b16 %v2013
    %v2089 = vunpack.c.h.b16 %v2013
    %v2090 = vunpack.c.l.b16 %v2014
    %v2091 = vunpack.c.h.b16 %v2014
    %v2092 = vunpack.c.l.b16 %v2015
    %v2093 = vunpack.c.h.b16 %v2015
    %v2094 = vunpack.c.l.b16 %v2016
    %v2095 = vunpack.c.h.b16 %v2016
    %v2096 = vunpack.c.l.b16 %v2017
    %v2097 = vunpack.c.h.b16 %v2017
    %v2098 = vunpack.c.l.b16 %v2018
    %v2099 = vunpack.c.h.b16 %v2018
    %v2100 = vunpack.c.l.b16 %v2019
    %v2101 = vunpack.c.h.b16 %v2019
    %v2102 = vunpack.c.l.b16 %v2020
    %v2103 = vunpack.c.h.b16 %v2020
    %v2104 = vunpack.c.l.b16 %v2021
    %v2105 = vunpack.c.h.b16 %v2021
    %v2106 = vunpack.c.l.b16 %v2022
    %v2107 = vunpack.c.h.b16 %v2022
    %v2108 = vunpack.c.l.b16 %v2023
    %v2109 = vunpack.c.h.b16 %v2023
    %v2110 = vunpack.c.l.b16 %v2024
    %v2111 = vunpack.c.h.b16 %v2024
    %v2112 = vunpack.c.l.b16 %v2025
    %v2113 = vunpack.c.h.b16 %v2025
    %v2114 = vunpack.c.l.b16 %v2026
    %v2115 = vunpack.c.h.b16 %v2026
    %v2116 = vunpack.c.l.b16 %v2027
    %v2117 = vunpack.c.h.b16 %v2027
    %v2118 = vunpack.c.l.b16 %v2028
    %v2119 = vunpack.c.h.b16 %v2028
    %v2120 = vunpack.c.l.b16 %v2029
    %v2121 = vunpack.c.h.b16 %v2029
    %v2122 = vunpack.c.l.b16 %v2030
    %v2123 = vunpack.c.h.b16 %v2030
    %v2124 = vunpack.c.l.b16 %v2031
    %v2125 = vunpack.c.h.b16 %v2031
    %v2126 = vunpack.c.l.b16 %v2032
    %v2127 = vunpack.c.h.b16 %v2032
    %v2128 = vunpack.c.l.b16 %v2033
    %v2129 = vunpack.c.h.b16 %v2033
    %v2130 = vpack.c.b16 %v2070, %v2066
    %v2131 = vpack.c.b16 %v2071, %v2067
    %v2132 = vpack.c.b16 %v2072, %v2068
    %v2133 = vpack.c.b16 %v2073, %v2069
    %v2134 = vpack.c.b16 %v2078, %v2074
    %v2135 = vpack.c.b16 %v2079, %v2075
    %v2136 = vpack.c.b16 %v2080, %v2076
    %v2137 = vpack.c.b16 %v2081, %v2077
    %v2138 = vpack.c.b16 %v2086, %v2082
    %v2139 = vpack.c.b16 %v2087, %v2083
    %v2140 = vpack.c.b16 %v2088, %v2084
    %v2141 = vpack.c.b16 %v2089, %v2085
    %v2142 = vpack.c.b16 %v2094, %v2090
    %v2143 = vpack.c.b16 %v2095, %v2091
    %v2144 = vpack.c.b16 %v2096, %v2092
    %v2145 = vpack.c.b16 %v2097, %v2093
    %v2146 = vpack.c.b16 %v2102, %v2098
    %v2147 = vpack.c.b16 %v2103, %v2099
    %v2148 = vpack.c.b16 %v2104, %v2100
    %v2149 = vpack.c.b16 %v2105, %v2101
    %v2150 = vpack.c.b16 %v2110, %v2106
    %v2151 = vpack.c.b16 %v2111, %v2107
    %v2152 = vpack.c.b16 %v2112, %v2108
    %v2153 = vpack.c.b16 %v2113, %v2109
    %v2154 = vpack.c.b16 %v2118, %v2114
    %v2155 = vpack.c.b16 %v2119, %v2115
    %v2156 = vpack.c.b16 %v2120, %v2116
    %v2157 = vpack.c.b16 %v2121, %v2117
    %v2158 = vpack.c.b16 %v2126, %v2122
    %v2159 = vpack.c.b16 %v2127, %v2123
    %v2160 = vpack.c.b16 %v2128, %v2124
    %v2161 = vpack.c.b16 %v2129, %v2125
    %2194 = vmatpush.bf16.msra.mxu0 %v2158
    %2195 = vmatpush.bf16.msra.mxu0 %v2154
    %2196 = vmatpush.bf16.msra.mxu0 %v2150
    %2197 = vmatpush.bf16.msra.mxu0 %v2146
    %2198 = vmatpush.bf16.msra.mxu0 %v2142
    %2199 = vmatpush.bf16.msra.mxu0 %v2138
    %2200 = vmatpush.bf16.msra.mxu0 %v2134
    %2201 = vmatpush.bf16.msra.mxu0 %v2130
    %2202 = vmatmul.bf16.gmra.mxu0 %v2000
    %v2203 = vpop.f32.mrf.mxu0
    %v2204 = vadd.f32 0.0, %v2203
    %v2205 = vpop.f32.mrf.mxu0
    %v2206 = vadd.f32 0.0, %v2205
    %2207 = vdwg.mxu0
    %2208 = vmatpush.bf16.msra.mxu0 %v2159
    %2209 = vmatpush.bf16.msra.mxu0 %v2155
    %2210 = vmatpush.bf16.msra.mxu0 %v2151
    %2211 = vmatpush.bf16.msra.mxu0 %v2147
    %2212 = vmatpush.bf16.msra.mxu0 %v2143
    %2213 = vmatpush.bf16.msra.mxu0 %v2139
    %2214 = vmatpush.bf16.msra.mxu0 %v2135
    %2215 = vmatpush.bf16.msra.mxu0 %v2131
    %2216 = vmatmul.bf16.gmra.mxu0 %v2000
    %v2217 = vpop.f32.mrf.mxu0
    %v2218 = vadd.f32 0.0, %v2217
    %v2219 = vpop.f32.mrf.mxu0
    %v2220 = vadd.f32 0.0, %v2219
    %2221 = vdwg.mxu0
    %2222 = vmatpush.bf16.msra.mxu0 %v2160
    %2223 = vmatpush.bf16.msra.mxu0 %v2156
    %2224 = vmatpush.bf16.msra.mxu0 %v2152
    %2225 = vmatpush.bf16.msra.mxu0 %v2148
    %2226 = vmatpush.bf16.msra.mxu0 %v2144
    %2227 = vmatpush.bf16.msra.mxu0 %v2140
    %2228 = vmatpush.bf16.msra.mxu0 %v2136
    %2229 = vmatpush.bf16.msra.mxu0 %v2132
    %2230 = vmatmul.bf16.gmra.mxu0 %v2000
    %v2231 = vpop.f32.mrf.mxu0
    %v2232 = vadd.f32 0.0, %v2231
    %v2233 = vpop.f32.mrf.mxu0
    %v2234 = vadd.f32 0.0, %v2233
    %2235 = vdwg.mxu0
    %2236 = vmatpush.bf16.msra.mxu0 %v2161
    %2237 = vmatpush.bf16.msra.mxu0 %v2157
    %2238 = vmatpush.bf16.msra.mxu0 %v2153
    %2239 = vmatpush.bf16.msra.mxu0 %v2149
    %2240 = vmatpush.bf16.msra.mxu0 %v2145
    %2241 = vmatpush.bf16.msra.mxu0 %v2141
    %2242 = vmatpush.bf16.msra.mxu0 %v2137
    %2243 = vmatpush.bf16.msra.mxu0 %v2133
    %2244 = vmatmul.bf16.gmra.mxu0 %v2000
    %v2245 = vpop.f32.mrf.mxu0
    %v2246 = vadd.f32 0.0, %v2245
    %v2247 = vpop.f32.mrf.mxu0
    %v2248 = vadd.f32 0.0, %v2247
    %2249 = vdwg.mxu0
    %v2250 = vadd.f32 %v1967, %v2204
    %v2251 = vadd.f32 %v1968, %v2218
    %v2252 = vadd.f32 %v1969, %v2232
    %v2253 = vadd.f32 %v1970, %v2246
    %v2254 = vadd.f32 %v1971, %v2206
    %v2255 = vadd.f32 %v1972, %v2220
    %v2256 = vadd.f32 %v1973, %v2234
    %v2257 = vadd.f32 %v1974, %v2248
    %v2258 = vld [vmem:[#allocation6] sm:$0xf]
    %v2260 = vperm.slane %v2258, 0
    %v2261 = vperm.slane %v2258, 1
    %v2262 = vperm.slane %v2258, 2
    %v2263 = vperm.slane %v2258, 3
    %v2268 = vadd.f32 %v2250, %v2260
    %v2269 = vadd.f32 %v2251, %v2261
    %v2270 = vadd.f32 %v2252, %v2262
    %v2271 = vadd.f32 %v2253, %v2263
    %v2272 = vadd.f32 %v2254, %v2260
    %v2273 = vadd.f32 %v2255, %v2261
    %v2274 = vadd.f32 %v2256, %v2262
    %v2275 = vadd.f32 %v2257, %v2263
    %vm2276 = vcmp.ge.f32.partialorder %v2268, 0.0
    %vm2277 = vcmp.ge.f32.partialorder %v2269, 0.0
    %vm2278 = vcmp.ge.f32.partialorder %v2270, 0.0
    %vm2279 = vcmp.ge.f32.partialorder %v2271, 0.0
    %vm2280 = vcmp.ge.f32.partialorder %v2272, 0.0
    %vm2281 = vcmp.ge.f32.partialorder %v2273, 0.0
    %vm2282 = vcmp.ge.f32.partialorder %v2274, 0.0
    %vm2283 = vcmp.ge.f32.partialorder %v2275, 0.0
    %v2284 = vmul.f32 %v2268, 0.15
    %v2285 = vmul.f32 %v2269, 0.15
    %v2286 = vmul.f32 %v2270, 0.15
    %v2287 = vmul.f32 %v2271, 0.15
    %v2288 = vmul.f32 %v2272, 0.15
    %v2289 = vmul.f32 %v2273, 0.15
    %v2290 = vmul.f32 %v2274, 0.15
    %v2291 = vmul.f32 %v2275, 0.15
    %v2292 = vsel %vm2276, %v2268, %v2284
    %v2293 = vsel %vm2277, %v2269, %v2285
    %v2294 = vsel %vm2278, %v2270, %v2286
    %v2295 = vsel %vm2279, %v2271, %v2287
    %v2296 = vsel %vm2280, %v2272, %v2288
    %v2297 = vsel %vm2281, %v2273, %v2289
    %v2298 = vsel %vm2282, %v2274, %v2290
    %v2299 = vsel %vm2283, %v2275, %v2291
    %v2300 = vpack.c.bf16 %v2296, %v2292
    %v2301 = vpack.c.bf16 %v2297, %v2293
    %v2302 = vpack.c.bf16 %v2298, %v2294
    %v2303 = vpack.c.bf16 %v2299, %v2295
    %v2304 = vld [vmem:[#allocation9] sm:$0xf]
    %vm2305 = vcmask 130048
    %v2307 = vsel %vm2305, %v2304, 0
    %2309 = vmatpush.bf16.msra.mxu0 0
    %2310 = vmatpush.bf16.msra.mxu0 0
    %2311 = vmatpush.bf16.msra.mxu0 0
    %2312 = vmatpush.bf16.msra.mxu0 0
    %2313 = vmatpush.bf16.msra.mxu0 0
    %2314 = vmatpush.bf16.msra.mxu0 0
    %2315 = vmatpush.bf16.msra.mxu0 0
    %2316 = vmatpush.bf16.msra.mxu0 %v2300
    %2317 = vmatmul.bf16.gmra.mxu0 %v2307
    %v2318 = vpop.f32.mrf.mxu0
    %v2319 = vadd.f32 0.0, %v2318
    %v2320 = vpop.f32.mrf.mxu0
    %2321 = vdwg.mxu0
    %2322 = vmatpush.bf16.msra.mxu0 0
    %2323 = vmatpush.bf16.msra.mxu0 0
    %2324 = vmatpush.bf16.msra.mxu0 0
    %2325 = vmatpush.bf16.msra.mxu0 0
    %2326 = vmatpush.bf16.msra.mxu0 0
    %2327 = vmatpush.bf16.msra.mxu0 0
    %2328 = vmatpush.bf16.msra.mxu0 0
    %2329 = vmatpush.bf16.msra.mxu0 %v2301
    %2330 = vmatmul.bf16.gmra.mxu0 %v2307
    %v2331 = vpop.f32.mrf.mxu0
    %v2332 = vadd.f32 0.0, %v2331
    %v2333 = vpop.f32.mrf.mxu0
    %2334 = vdwg.mxu0
    %2335 = vmatpush.bf16.msra.mxu0 0
    %2336 = vmatpush.bf16.msra.mxu0 0
    %2337 = vmatpush.bf16.msra.mxu0 0
    %2338 = vmatpush.bf16.msra.mxu0 0
    %2339 = vmatpush.bf16.msra.mxu0 0
    %2340 = vmatpush.bf16.msra.mxu0 0
    %2341 = vmatpush.bf16.msra.mxu0 0
    %2342 = vmatpush.bf16.msra.mxu0 %v2302
    %2343 = vmatmul.bf16.gmra.mxu0 %v2307
    %v2344 = vpop.f32.mrf.mxu0
    %v2345 = vadd.f32 0.0, %v2344
    %v2346 = vpop.f32.mrf.mxu0
    %2347 = vdwg.mxu0
    %2348 = vmatpush.bf16.msra.mxu0 0
    %2349 = vmatpush.bf16.msra.mxu0 0
    %2350 = vmatpush.bf16.msra.mxu0 0
    %2351 = vmatpush.bf16.msra.mxu0 0
    %2352 = vmatpush.bf16.msra.mxu0 0
    %2353 = vmatpush.bf16.msra.mxu0 0
    %2354 = vmatpush.bf16.msra.mxu0 0
    %2355 = vmatpush.bf16.msra.mxu0 %v2303
    %2356 = vmatmul.bf16.gmra.mxu0 %v2307
    %v2357 = vpop.f32.mrf.mxu0
    %v2358 = vadd.f32 0.0, %v2357
    %v2359 = vpop.f32.mrf.mxu0
    %2360 = vdwg.mxu0
    %v2361 = vpack.c.bf16 %v2319, %v2319
    %v2362 = vpack.c.bf16 %v2332, %v2332
    %v2363 = vpack.c.bf16 %v2345, %v2345
    %v2364 = vpack.c.bf16 %v2358, %v2358
    %v2365 = vld [vmem:[#allocation7] sm:$0xff]
    %v2366 = vld [vmem:[#allocation7 + $0x8] sm:$0xff]
    %v2367 = vld [vmem:[#allocation7 + $0x10] sm:$0xff]
    %v2368 = vld [vmem:[#allocation7 + $0x18] sm:$0xff]
    %v2369 = vld [vmem:[#allocation7 + $0x20] sm:$0xff]
    %v2370 = vld [vmem:[#allocation7 + $0x28] sm:$0xff]
    %v2371 = vld [vmem:[#allocation7 + $0x30] sm:$0xff]
    %v2372 = vld [vmem:[#allocation7 + $0x38] sm:$0xff]
    %v2373 = vld [vmem:[#allocation7 + $0x40] sm:$0xff]
    %v2374 = vld [vmem:[#allocation7 + $0x48] sm:$0xff]
    %v2375 = vld [vmem:[#allocation7 + $0x50] sm:$0xff]
    %v2376 = vld [vmem:[#allocation7 + $0x58] sm:$0xff]
    %v2377 = vld [vmem:[#allocation7 + $0x60] sm:$0xff]
    %v2378 = vld [vmem:[#allocation7 + $0x68] sm:$0xff]
    %v2379 = vld [vmem:[#allocation7 + $0x70] sm:$0xff]
    %v2380 = vld [vmem:[#allocation7 + $0x78] sm:$0xff]
    %v2381 = vld [vmem:[#allocation7 + $0x80] sm:$0xff]
    %v2382 = vld [vmem:[#allocation7 + $0x88] sm:$0xff]
    %v2383 = vld [vmem:[#allocation7 + $0x90] sm:$0xff]
    %v2384 = vld [vmem:[#allocation7 + $0x98] sm:$0xff]
    %v2385 = vld [vmem:[#allocation7 + $0xa0] sm:$0xff]
    %v2386 = vld [vmem:[#allocation7 + $0xa8] sm:$0xff]
    %v2387 = vld [vmem:[#allocation7 + $0xb0] sm:$0xff]
    %v2388 = vld [vmem:[#allocation7 + $0xb8] sm:$0xff]
    %v2389 = vld [vmem:[#allocation7 + $0xc0] sm:$0xff]
    %v2390 = vld [vmem:[#allocation7 + $0xc8] sm:$0xff]
    %v2391 = vld [vmem:[#allocation7 + $0xd0] sm:$0xff]
    %v2392 = vld [vmem:[#allocation7 + $0xd8] sm:$0xff]
    %v2393 = vld [vmem:[#allocation7 + $0xe0] sm:$0xff]
    %v2394 = vld [vmem:[#allocation7 + $0xe8] sm:$0xff]
    %v2395 = vld [vmem:[#allocation7 + $0xf0] sm:$0xff]
    %v2396 = vld [vmem:[#allocation7 + $0xf8] sm:$0xff]
    %v2397 = vld [vmem:[#allocation7 + $0x100] sm:$0xff]
    %v2398 = vld [vmem:[#allocation7 + $0x108] sm:$0xff]
    %v2399 = vld [vmem:[#allocation7 + $0x110] sm:$0xff]
    %v2400 = vld [vmem:[#allocation7 + $0x118] sm:$0xff]
    %v2401 = vld [vmem:[#allocation7 + $0x120] sm:$0xff]
    %v2402 = vld [vmem:[#allocation7 + $0x128] sm:$0xff]
    %v2403 = vld [vmem:[#allocation7 + $0x130] sm:$0xff]
    %v2404 = vld [vmem:[#allocation7 + $0x138] sm:$0xff]
    %v2405 = vld [vmem:[#allocation7 + $0x140] sm:$0xff]
    %v2406 = vld [vmem:[#allocation7 + $0x148] sm:$0xff]
    %v2407 = vld [vmem:[#allocation7 + $0x150] sm:$0xff]
    %v2408 = vld [vmem:[#allocation7 + $0x158] sm:$0xff]
    %v2409 = vld [vmem:[#allocation7 + $0x160] sm:$0xff]
    %v2410 = vld [vmem:[#allocation7 + $0x168] sm:$0xff]
    %v2411 = vld [vmem:[#allocation7 + $0x170] sm:$0xff]
    %v2412 = vld [vmem:[#allocation7 + $0x178] sm:$0xff]
    %v2413 = vld [vmem:[#allocation7 + $0x180] sm:$0xff]
    %v2414 = vld [vmem:[#allocation7 + $0x188] sm:$0xff]
    %v2415 = vld [vmem:[#allocation7 + $0x190] sm:$0xff]
    %v2416 = vld [vmem:[#allocation7 + $0x198] sm:$0xff]
    %v2417 = vld [vmem:[#allocation7 + $0x1a0] sm:$0xff]
    %v2418 = vld [vmem:[#allocation7 + $0x1a8] sm:$0xff]
    %v2419 = vld [vmem:[#allocation7 + $0x1b0] sm:$0xff]
    %v2420 = vld [vmem:[#allocation7 + $0x1b8] sm:$0xff]
    %v2421 = vld [vmem:[#allocation7 + $0x1c0] sm:$0xff]
    %v2422 = vld [vmem:[#allocation7 + $0x1c8] sm:$0xff]
    %v2423 = vld [vmem:[#allocation7 + $0x1d0] sm:$0xff]
    %v2424 = vld [vmem:[#allocation7 + $0x1d8] sm:$0xff]
    %v2425 = vld [vmem:[#allocation7 + $0x1e0] sm:$0xff]
    %v2426 = vld [vmem:[#allocation7 + $0x1e8] sm:$0xff]
    %v2427 = vld [vmem:[#allocation7 + $0x1f0] sm:$0xff]
    %v2428 = vld [vmem:[#allocation7 + $0x1f8] sm:$0xff]
    %v2429 = vld [vmem:[#allocation7 + $0x200] sm:$0xff]
    %v2430 = vld [vmem:[#allocation7 + $0x208] sm:$0xff]
    %v2431 = vld [vmem:[#allocation7 + $0x210] sm:$0xff]
    %v2432 = vld [vmem:[#allocation7 + $0x218] sm:$0xff]
    %v2433 = vld [vmem:[#allocation7 + $0x220] sm:$0xff]
    %v2434 = vld [vmem:[#allocation7 + $0x228] sm:$0xff]
    %v2435 = vld [vmem:[#allocation7 + $0x230] sm:$0xff]
    %v2436 = vld [vmem:[#allocation7 + $0x238] sm:$0xff]
    %v2437 = vld [vmem:[#allocation7 + $0x240] sm:$0xff]
    %v2438 = vld [vmem:[#allocation7 + $0x248] sm:$0xff]
    %v2439 = vld [vmem:[#allocation7 + $0x250] sm:$0xff]
    %v2440 = vld [vmem:[#allocation7 + $0x258] sm:$0xff]
    %v2441 = vld [vmem:[#allocation7 + $0x260] sm:$0xff]
    %v2442 = vld [vmem:[#allocation7 + $0x268] sm:$0xff]
    %v2443 = vld [vmem:[#allocation7 + $0x270] sm:$0xff]
    %v2444 = vld [vmem:[#allocation7 + $0x278] sm:$0xff]
    %v2445 = vld [vmem:[#allocation7 + $0x280] sm:$0xff]
    %v2446 = vld [vmem:[#allocation7 + $0x288] sm:$0xff]
    %v2447 = vld [vmem:[#allocation7 + $0x290] sm:$0xff]
    %v2448 = vld [vmem:[#allocation7 + $0x298] sm:$0xff]
    %v2449 = vld [vmem:[#allocation7 + $0x2a0] sm:$0xff]
    %v2450 = vld [vmem:[#allocation7 + $0x2a8] sm:$0xff]
    %v2451 = vld [vmem:[#allocation7 + $0x2b0] sm:$0xff]
    %v2452 = vld [vmem:[#allocation7 + $0x2b8] sm:$0xff]
    %v2453 = vld [vmem:[#allocation7 + $0x2c0] sm:$0xff]
    %v2454 = vld [vmem:[#allocation7 + $0x2c8] sm:$0xff]
    %v2455 = vld [vmem:[#allocation7 + $0x2d0] sm:$0xff]
    %v2456 = vld [vmem:[#allocation7 + $0x2d8] sm:$0xff]
    %v2457 = vld [vmem:[#allocation7 + $0x2e0] sm:$0xff]
    %v2458 = vld [vmem:[#allocation7 + $0x2e8] sm:$0xff]
    %v2459 = vld [vmem:[#allocation7 + $0x2f0] sm:$0xff]
    %v2460 = vld [vmem:[#allocation7 + $0x2f8] sm:$0xff]
    %v2461 = vld [vmem:[#allocation7 + $0x300] sm:$0xff]
    %v2462 = vld [vmem:[#allocation7 + $0x308] sm:$0xff]
    %v2463 = vld [vmem:[#allocation7 + $0x310] sm:$0xff]
    %v2464 = vld [vmem:[#allocation7 + $0x318] sm:$0xff]
    %v2465 = vld [vmem:[#allocation7 + $0x320] sm:$0xff]
    %v2466 = vld [vmem:[#allocation7 + $0x328] sm:$0xff]
    %v2467 = vld [vmem:[#allocation7 + $0x330] sm:$0xff]
    %v2468 = vld [vmem:[#allocation7 + $0x338] sm:$0xff]
    %v2469 = vld [vmem:[#allocation7 + $0x340] sm:$0xff]
    %v2470 = vld [vmem:[#allocation7 + $0x348] sm:$0xff]
    %v2471 = vld [vmem:[#allocation7 + $0x350] sm:$0xff]
    %v2472 = vld [vmem:[#allocation7 + $0x358] sm:$0xff]
    %v2473 = vld [vmem:[#allocation7 + $0x360] sm:$0xff]
    %v2474 = vld [vmem:[#allocation7 + $0x368] sm:$0xff]
    %v2475 = vld [vmem:[#allocation7 + $0x370] sm:$0xff]
    %v2476 = vld [vmem:[#allocation7 + $0x378] sm:$0xff]
    %v2477 = vld [vmem:[#allocation7 + $0x380] sm:$0xff]
    %v2478 = vld [vmem:[#allocation7 + $0x388] sm:$0xff]
    %v2479 = vld [vmem:[#allocation7 + $0x390] sm:$0xff]
    %v2480 = vld [vmem:[#allocation7 + $0x398] sm:$0xff]
    %v2481 = vld [vmem:[#allocation7 + $0x3a0] sm:$0xff]
    %v2482 = vld [vmem:[#allocation7 + $0x3a8] sm:$0xff]
    %v2483 = vld [vmem:[#allocation7 + $0x3b0] sm:$0xff]
    %v2484 = vld [vmem:[#allocation7 + $0x3b8] sm:$0xff]
    %v2485 = vld [vmem:[#allocation7 + $0x3c0] sm:$0xff]
    %v2486 = vld [vmem:[#allocation7 + $0x3c8] sm:$0xff]
    %v2487 = vld [vmem:[#allocation7 + $0x3d0] sm:$0xff]
    %v2488 = vld [vmem:[#allocation7 + $0x3d8] sm:$0xff]
    %v2489 = vld [vmem:[#allocation7 + $0x3e0] sm:$0xff]
    %v2490 = vld [vmem:[#allocation7 + $0x3e8] sm:$0xff]
    %v2491 = vld [vmem:[#allocation7 + $0x3f0] sm:$0xff]
    %v2492 = vld [vmem:[#allocation7 + $0x3f8] sm:$0xff]
    %s2493 = scalar_lea.vmem [#allocation9], 4
    %v2494 = vld [vmem:[%s2493] sm:$0xf]
    %v2496 = vsel %vm2305, %v2494, 0
    %2498 = vmatpush.bf16.msra.mxu0 0
    %2499 = vmatpush.bf16.msra.mxu0 0
    %2500 = vmatpush.bf16.msra.mxu0 0
    %2501 = vmatpush.bf16.msra.mxu0 0
    %2502 = vmatpush.bf16.msra.mxu0 0
    %2503 = vmatpush.bf16.msra.mxu0 0
    %2504 = vmatpush.bf16.msra.mxu0 0
    %2505 = vmatpush.bf16.msra.mxu0 %v2300
    %2506 = vmatmul.bf16.gmra.mxu0 %v2496
    %v2507 = vpop.f32.mrf.mxu0
    %v2508 = vadd.f32 0.0, %v2507
    %v2509 = vpop.f32.mrf.mxu0
    %2510 = vdwg.mxu0
    %2511 = vmatpush.bf16.msra.mxu0 0
    %2512 = vmatpush.bf16.msra.mxu0 0
    %2513 = vmatpush.bf16.msra.mxu0 0
    %2514 = vmatpush.bf16.msra.mxu0 0
    %2515 = vmatpush.bf16.msra.mxu0 0
    %2516 = vmatpush.bf16.msra.mxu0 0
    %2517 = vmatpush.bf16.msra.mxu0 0
    %2518 = vmatpush.bf16.msra.mxu0 %v2301
    %2519 = vmatmul.bf16.gmra.mxu0 %v2496
    %v2520 = vpop.f32.mrf.mxu0
    %v2521 = vadd.f32 0.0, %v2520
    %v2522 = vpop.f32.mrf.mxu0
    %2523 = vdwg.mxu0
    %2524 = vmatpush.bf16.msra.mxu0 0
    %2525 = vmatpush.bf16.msra.mxu0 0
    %2526 = vmatpush.bf16.msra.mxu0 0
    %2527 = vmatpush.bf16.msra.mxu0 0
    %2528 = vmatpush.bf16.msra.mxu0 0
    %2529 = vmatpush.bf16.msra.mxu0 0
    %2530 = vmatpush.bf16.msra.mxu0 0
    %2531 = vmatpush.bf16.msra.mxu0 %v2302
    %2532 = vmatmul.bf16.gmra.mxu0 %v2496
    %v2533 = vpop.f32.mrf.mxu0
    %v2534 = vadd.f32 0.0, %v2533
    %v2535 = vpop.f32.mrf.mxu0
    %2536 = vdwg.mxu0
    %2537 = vmatpush.bf16.msra.mxu0 0
    %2538 = vmatpush.bf16.msra.mxu0 0
    %2539 = vmatpush.bf16.msra.mxu0 0
    %2540 = vmatpush.bf16.msra.mxu0 0
    %2541 = vmatpush.bf16.msra.mxu0 0
    %2542 = vmatpush.bf16.msra.mxu0 0
    %2543 = vmatpush.bf16.msra.mxu0 0
    %2544 = vmatpush.bf16.msra.mxu0 %v2303
    %2545 = vmatmul.bf16.gmra.mxu0 %v2496
    %v2546 = vpop.f32.mrf.mxu0
    %v2547 = vadd.f32 0.0, %v2546
    %v2548 = vpop.f32.mrf.mxu0
    %2549 = vdwg.mxu0
    %v2550 = vpack.c.bf16 %v2508, %v2508
    %v2551 = vpack.c.bf16 %v2521, %v2521
    %v2552 = vpack.c.bf16 %v2534, %v2534
    %v2553 = vpack.c.bf16 %v2547, %v2547
    %s2554 = scalar_lea.vmem [#allocation7], 1024
    %v2555 = vld [vmem:[%s2554] sm:$0xff]
    %v2556 = vld [vmem:[%s2554 + $0x8] sm:$0xff]
    %v2557 = vld [vmem:[%s2554 + $0x10] sm:$0xff]
    %v2558 = vld [vmem:[%s2554 + $0x18] sm:$0xff]
    %v2559 = vld [vmem:[%s2554 + $0x20] sm:$0xff]
    %v2560 = vld [vmem:[%s2554 + $0x28] sm:$0xff]
    %v2561 = vld [vmem:[%s2554 + $0x30] sm:$0xff]
    %v2562 = vld [vmem:[%s2554 + $0x38] sm:$0xff]
    %v2563 = vld [vmem:[%s2554 + $0x40] sm:$0xff]
    %v2564 = vld [vmem:[%s2554 + $0x48] sm:$0xff]
    %v2565 = vld [vmem:[%s2554 + $0x50] sm:$0xff]
    %v2566 = vld [vmem:[%s2554 + $0x58] sm:$0xff]
    %v2567 = vld [vmem:[%s2554 + $0x60] sm:$0xff]
    %v2568 = vld [vmem:[%s2554 + $0x68] sm:$0xff]
    %v2569 = vld [vmem:[%s2554 + $0x70] sm:$0xff]
    %v2570 = vld [vmem:[%s2554 + $0x78] sm:$0xff]
    %v2571 = vld [vmem:[%s2554 + $0x80] sm:$0xff]
    %v2572 = vld [vmem:[%s2554 + $0x88] sm:$0xff]
    %v2573 = vld [vmem:[%s2554 + $0x90] sm:$0xff]
    %v2574 = vld [vmem:[%s2554 + $0x98] sm:$0xff]
    %v2575 = vld [vmem:[%s2554 + $0xa0] sm:$0xff]
    %v2576 = vld [vmem:[%s2554 + $0xa8] sm:$0xff]
    %v2577 = vld [vmem:[%s2554 + $0xb0] sm:$0xff]
    %v2578 = vld [vmem:[%s2554 + $0xb8] sm:$0xff]
    %v2579 = vld [vmem:[%s2554 + $0xc0] sm:$0xff]
    %v2580 = vld [vmem:[%s2554 + $0xc8] sm:$0xff]
    %v2581 = vld [vmem:[%s2554 + $0xd0] sm:$0xff]
    %v2582 = vld [vmem:[%s2554 + $0xd8] sm:$0xff]
    %v2583 = vld [vmem:[%s2554 + $0xe0] sm:$0xff]
    %v2584 = vld [vmem:[%s2554 + $0xe8] sm:$0xff]
    %v2585 = vld [vmem:[%s2554 + $0xf0] sm:$0xff]
    %v2586 = vld [vmem:[%s2554 + $0xf8] sm:$0xff]
    %v2587 = vld [vmem:[%s2554 + $0x100] sm:$0xff]
    %v2588 = vld [vmem:[%s2554 + $0x108] sm:$0xff]
    %v2589 = vld [vmem:[%s2554 + $0x110] sm:$0xff]
    %v2590 = vld [vmem:[%s2554 + $0x118] sm:$0xff]
    %v2591 = vld [vmem:[%s2554 + $0x120] sm:$0xff]
    %v2592 = vld [vmem:[%s2554 + $0x128] sm:$0xff]
    %v2593 = vld [vmem:[%s2554 + $0x130] sm:$0xff]
    %v2594 = vld [vmem:[%s2554 + $0x138] sm:$0xff]
    %v2595 = vld [vmem:[%s2554 + $0x140] sm:$0xff]
    %v2596 = vld [vmem:[%s2554 + $0x148] sm:$0xff]
    %v2597 = vld [vmem:[%s2554 + $0x150] sm:$0xff]
    %v2598 = vld [vmem:[%s2554 + $0x158] sm:$0xff]
    %v2599 = vld [vmem:[%s2554 + $0x160] sm:$0xff]
    %v2600 = vld [vmem:[%s2554 + $0x168] sm:$0xff]
    %v2601 = vld [vmem:[%s2554 + $0x170] sm:$0xff]
    %v2602 = vld [vmem:[%s2554 + $0x178] sm:$0xff]
    %v2603 = vld [vmem:[%s2554 + $0x180] sm:$0xff]
    %v2604 = vld [vmem:[%s2554 + $0x188] sm:$0xff]
    %v2605 = vld [vmem:[%s2554 + $0x190] sm:$0xff]
    %v2606 = vld [vmem:[%s2554 + $0x198] sm:$0xff]
    %v2607 = vld [vmem:[%s2554 + $0x1a0] sm:$0xff]
    %v2608 = vld [vmem:[%s2554 + $0x1a8] sm:$0xff]
    %v2609 = vld [vmem:[%s2554 + $0x1b0] sm:$0xff]
    %v2610 = vld [vmem:[%s2554 + $0x1b8] sm:$0xff]
    %v2611 = vld [vmem:[%s2554 + $0x1c0] sm:$0xff]
    %v2612 = vld [vmem:[%s2554 + $0x1c8] sm:$0xff]
    %v2613 = vld [vmem:[%s2554 + $0x1d0] sm:$0xff]
    %v2614 = vld [vmem:[%s2554 + $0x1d8] sm:$0xff]
    %v2615 = vld [vmem:[%s2554 + $0x1e0] sm:$0xff]
    %v2616 = vld [vmem:[%s2554 + $0x1e8] sm:$0xff]
    %v2617 = vld [vmem:[%s2554 + $0x1f0] sm:$0xff]
    %v2618 = vld [vmem:[%s2554 + $0x1f8] sm:$0xff]
    %v2619 = vld [vmem:[%s2554 + $0x200] sm:$0xff]
    %v2620 = vld [vmem:[%s2554 + $0x208] sm:$0xff]
    %v2621 = vld [vmem:[%s2554 + $0x210] sm:$0xff]
    %v2622 = vld [vmem:[%s2554 + $0x218] sm:$0xff]
    %v2623 = vld [vmem:[%s2554 + $0x220] sm:$0xff]
    %v2624 = vld [vmem:[%s2554 + $0x228] sm:$0xff]
    %v2625 = vld [vmem:[%s2554 + $0x230] sm:$0xff]
    %v2626 = vld [vmem:[%s2554 + $0x238] sm:$0xff]
    %v2627 = vld [vmem:[%s2554 + $0x240] sm:$0xff]
    %v2628 = vld [vmem:[%s2554 + $0x248] sm:$0xff]
    %v2629 = vld [vmem:[%s2554 + $0x250] sm:$0xff]
    %v2630 = vld [vmem:[%s2554 + $0x258] sm:$0xff]
    %v2631 = vld [vmem:[%s2554 + $0x260] sm:$0xff]
    %v2632 = vld [vmem:[%s2554 + $0x268] sm:$0xff]
    %v2633 = vld [vmem:[%s2554 + $0x270] sm:$0xff]
    %v2634 = vld [vmem:[%s2554 + $0x278] sm:$0xff]
    %v2635 = vld [vmem:[%s2554 + $0x280] sm:$0xff]
    %v2636 = vld [vmem:[%s2554 + $0x288] sm:$0xff]
    %v2637 = vld [vmem:[%s2554 + $0x290] sm:$0xff]
    %v2638 = vld [vmem:[%s2554 + $0x298] sm:$0xff]
    %v2639 = vld [vmem:[%s2554 + $0x2a0] sm:$0xff]
    %v2640 = vld [vmem:[%s2554 + $0x2a8] sm:$0xff]
    %v2641 = vld [vmem:[%s2554 + $0x2b0] sm:$0xff]
    %v2642 = vld [vmem:[%s2554 + $0x2b8] sm:$0xff]
    %v2643 = vld [vmem:[%s2554 + $0x2c0] sm:$0xff]
    %v2644 = vld [vmem:[%s2554 + $0x2c8] sm:$0xff]
    %v2645 = vld [vmem:[%s2554 + $0x2d0] sm:$0xff]
    %v2646 = vld [vmem:[%s2554 + $0x2d8] sm:$0xff]
    %v2647 = vld [vmem:[%s2554 + $0x2e0] sm:$0xff]
    %v2648 = vld [vmem:[%s2554 + $0x2e8] sm:$0xff]
    %v2649 = vld [vmem:[%s2554 + $0x2f0] sm:$0xff]
    %v2650 = vld [vmem:[%s2554 + $0x2f8] sm:$0xff]
    %v2651 = vld [vmem:[%s2554 + $0x300] sm:$0xff]
    %v2652 = vld [vmem:[%s2554 + $0x308] sm:$0xff]
    %v2653 = vld [vmem:[%s2554 + $0x310] sm:$0xff]
    %v2654 = vld [vmem:[%s2554 + $0x318] sm:$0xff]
    %v2655 = vld [vmem:[%s2554 + $0x320] sm:$0xff]
    %v2656 = vld [vmem:[%s2554 + $0x328] sm:$0xff]
    %v2657 = vld [vmem:[%s2554 + $0x330] sm:$0xff]
    %v2658 = vld [vmem:[%s2554 + $0x338] sm:$0xff]
    %v2659 = vld [vmem:[%s2554 + $0x340] sm:$0xff]
    %v2660 = vld [vmem:[%s2554 + $0x348] sm:$0xff]
    %v2661 = vld [vmem:[%s2554 + $0x350] sm:$0xff]
    %v2662 = vld [vmem:[%s2554 + $0x358] sm:$0xff]
    %v2663 = vld [vmem:[%s2554 + $0x360] sm:$0xff]
    %v2664 = vld [vmem:[%s2554 + $0x368] sm:$0xff]
    %v2665 = vld [vmem:[%s2554 + $0x370] sm:$0xff]
    %v2666 = vld [vmem:[%s2554 + $0x378] sm:$0xff]
    %v2667 = vld [vmem:[%s2554 + $0x380] sm:$0xff]
    %v2668 = vld [vmem:[%s2554 + $0x388] sm:$0xff]
    %v2669 = vld [vmem:[%s2554 + $0x390] sm:$0xff]
    %v2670 = vld [vmem:[%s2554 + $0x398] sm:$0xff]
    %v2671 = vld [vmem:[%s2554 + $0x3a0] sm:$0xff]
    %v2672 = vld [vmem:[%s2554 + $0x3a8] sm:$0xff]
    %v2673 = vld [vmem:[%s2554 + $0x3b0] sm:$0xff]
    %v2674 = vld [vmem:[%s2554 + $0x3b8] sm:$0xff]
    %v2675 = vld [vmem:[%s2554 + $0x3c0] sm:$0xff]
    %v2676 = vld [vmem:[%s2554 + $0x3c8] sm:$0xff]
    %v2677 = vld [vmem:[%s2554 + $0x3d0] sm:$0xff]
    %v2678 = vld [vmem:[%s2554 + $0x3d8] sm:$0xff]
    %v2679 = vld [vmem:[%s2554 + $0x3e0] sm:$0xff]
    %v2680 = vld [vmem:[%s2554 + $0x3e8] sm:$0xff]
    %v2681 = vld [vmem:[%s2554 + $0x3f0] sm:$0xff]
    %v2682 = vld [vmem:[%s2554 + $0x3f8] sm:$0xff]
    %v2811 = vunpack.c.l.b16 %v2555
    %v2812 = vunpack.c.h.b16 %v2555
    %v2813 = vunpack.c.l.b16 %v2556
    %v2814 = vunpack.c.h.b16 %v2556
    %v2815 = vunpack.c.l.b16 %v2557
    %v2816 = vunpack.c.h.b16 %v2557
    %v2817 = vunpack.c.l.b16 %v2558
    %v2818 = vunpack.c.h.b16 %v2558
    %v2819 = vunpack.c.l.b16 %v2559
    %v2820 = vunpack.c.h.b16 %v2559
    %v2821 = vunpack.c.l.b16 %v2560
    %v2822 = vunpack.c.h.b16 %v2560
    %v2823 = vunpack.c.l.b16 %v2561
    %v2824 = vunpack.c.h.b16 %v2561
    %v2825 = vunpack.c.l.b16 %v2562
    %v2826 = vunpack.c.h.b16 %v2562
    %v2827 = vunpack.c.l.b16 %v2563
    %v2828 = vunpack.c.h.b16 %v2563
    %v2829 = vunpack.c.l.b16 %v2564
    %v2830 = vunpack.c.h.b16 %v2564
    %v2831 = vunpack.c.l.b16 %v2565
    %v2832 = vunpack.c.h.b16 %v2565
    %v2833 = vunpack.c.l.b16 %v2566
    %v2834 = vunpack.c.h.b16 %v2566
    %v2835 = vunpack.c.l.b16 %v2567
    %v2836 = vunpack.c.h.b16 %v2567
    %v2837 = vunpack.c.l.b16 %v2568
    %v2838 = vunpack.c.h.b16 %v2568
    %v2839 = vunpack.c.l.b16 %v2569
    %v2840 = vunpack.c.h.b16 %v2569
    %v2841 = vunpack.c.l.b16 %v2570
    %v2842 = vunpack.c.h.b16 %v2570
    %v2843 = vunpack.c.l.b16 %v2571
    %v2844 = vunpack.c.h.b16 %v2571
    %v2845 = vunpack.c.l.b16 %v2572
    %v2846 = vunpack.c.h.b16 %v2572
    %v2847 = vunpack.c.l.b16 %v2573
    %v2848 = vunpack.c.h.b16 %v2573
    %v2849 = vunpack.c.l.b16 %v2574
    %v2850 = vunpack.c.h.b16 %v2574
    %v2851 = vunpack.c.l.b16 %v2575
    %v2852 = vunpack.c.h.b16 %v2575
    %v2853 = vunpack.c.l.b16 %v2576
    %v2854 = vunpack.c.h.b16 %v2576
    %v2855 = vunpack.c.l.b16 %v2577
    %v2856 = vunpack.c.h.b16 %v2577
    %v2857 = vunpack.c.l.b16 %v2578
    %v2858 = vunpack.c.h.b16 %v2578
    %v2859 = vunpack.c.l.b16 %v2579
    %v2860 = vunpack.c.h.b16 %v2579
    %v2861 = vunpack.c.l.b16 %v2580
    %v2862 = vunpack.c.h.b16 %v2580
    %v2863 = vunpack.c.l.b16 %v2581
    %v2864 = vunpack.c.h.b16 %v2581
    %v2865 = vunpack.c.l.b16 %v2582
    %v2866 = vunpack.c.h.b16 %v2582
    %v2867 = vunpack.c.l.b16 %v2583
    %v2868 = vunpack.c.h.b16 %v2583
    %v2869 = vunpack.c.l.b16 %v2584
    %v2870 = vunpack.c.h.b16 %v2584
    %v2871 = vunpack.c.l.b16 %v2585
    %v2872 = vunpack.c.h.b16 %v2585
    %v2873 = vunpack.c.l.b16 %v2586
    %v2874 = vunpack.c.h.b16 %v2586
    %v2875 = vunpack.c.l.b16 %v2587
    %v2876 = vunpack.c.h.b16 %v2587
    %v2877 = vunpack.c.l.b16 %v2588
    %v2878 = vunpack.c.h.b16 %v2588
    %v2879 = vunpack.c.l.b16 %v2589
    %v2880 = vunpack.c.h.b16 %v2589
    %v2881 = vunpack.c.l.b16 %v2590
    %v2882 = vunpack.c.h.b16 %v2590
    %v2883 = vunpack.c.l.b16 %v2591
    %v2884 = vunpack.c.h.b16 %v2591
    %v2885 = vunpack.c.l.b16 %v2592
    %v2886 = vunpack.c.h.b16 %v2592
    %v2887 = vunpack.c.l.b16 %v2593
    %v2888 = vunpack.c.h.b16 %v2593
    %v2889 = vunpack.c.l.b16 %v2594
    %v2890 = vunpack.c.h.b16 %v2594
    %v2891 = vunpack.c.l.b16 %v2595
    %v2892 = vunpack.c.h.b16 %v2595
    %v2893 = vunpack.c.l.b16 %v2596
    %v2894 = vunpack.c.h.b16 %v2596
    %v2895 = vunpack.c.l.b16 %v2597
    %v2896 = vunpack.c.h.b16 %v2597
    %v2897 = vunpack.c.l.b16 %v2598
    %v2898 = vunpack.c.h.b16 %v2598
    %v2899 = vunpack.c.l.b16 %v2599
    %v2900 = vunpack.c.h.b16 %v2599
    %v2901 = vunpack.c.l.b16 %v2600
    %v2902 = vunpack.c.h.b16 %v2600
    %v2903 = vunpack.c.l.b16 %v2601
    %v2904 = vunpack.c.h.b16 %v2601
    %v2905 = vunpack.c.l.b16 %v2602
    %v2906 = vunpack.c.h.b16 %v2602
    %v2907 = vunpack.c.l.b16 %v2603
    %v2908 = vunpack.c.h.b16 %v2603
    %v2909 = vunpack.c.l.b16 %v2604
    %v2910 = vunpack.c.h.b16 %v2604
    %v2911 = vunpack.c.l.b16 %v2605
    %v2912 = vunpack.c.h.b16 %v2605
    %v2913 = vunpack.c.l.b16 %v2606
    %v2914 = vunpack.c.h.b16 %v2606
    %v2915 = vunpack.c.l.b16 %v2607
    %v2916 = vunpack.c.h.b16 %v2607
    %v2917 = vunpack.c.l.b16 %v2608
    %v2918 = vunpack.c.h.b16 %v2608
    %v2919 = vunpack.c.l.b16 %v2609
    %v2920 = vunpack.c.h.b16 %v2609
    %v2921 = vunpack.c.l.b16 %v2610
    %v2922 = vunpack.c.h.b16 %v2610
    %v2923 = vunpack.c.l.b16 %v2611
    %v2924 = vunpack.c.h.b16 %v2611
    %v2925 = vunpack.c.l.b16 %v2612
    %v2926 = vunpack.c.h.b16 %v2612
    %v2927 = vunpack.c.l.b16 %v2613
    %v2928 = vunpack.c.h.b16 %v2613
    %v2929 = vunpack.c.l.b16 %v2614
    %v2930 = vunpack.c.h.b16 %v2614
    %v2931 = vunpack.c.l.b16 %v2615
    %v2932 = vunpack.c.h.b16 %v2615
    %v2933 = vunpack.c.l.b16 %v2616
    %v2934 = vunpack.c.h.b16 %v2616
    %v2935 = vunpack.c.l.b16 %v2617
    %v2936 = vunpack.c.h.b16 %v2617
    %v2937 = vunpack.c.l.b16 %v2618
    %v2938 = vunpack.c.h.b16 %v2618
    %v2939 = vunpack.c.l.b16 %v2619
    %v2940 = vunpack.c.h.b16 %v2619
    %v2941 = vunpack.c.l.b16 %v2620
    %v2942 = vunpack.c.h.b16 %v2620
    %v2943 = vunpack.c.l.b16 %v2621
    %v2944 = vunpack.c.h.b16 %v2621
    %v2945 = vunpack.c.l.b16 %v2622
    %v2946 = vunpack.c.h.b16 %v2622
    %v2947 = vunpack.c.l.b16 %v2623
    %v2948 = vunpack.c.h.b16 %v2623
    %v2949 = vunpack.c.l.b16 %v2624
    %v2950 = vunpack.c.h.b16 %v2624
    %v2951 = vunpack.c.l.b16 %v2625
    %v2952 = vunpack.c.h.b16 %v2625
    %v2953 = vunpack.c.l.b16 %v2626
    %v2954 = vunpack.c.h.b16 %v2626
    %v2955 = vunpack.c.l.b16 %v2627
    %v2956 = vunpack.c.h.b16 %v2627
    %v2957 = vunpack.c.l.b16 %v2628
    %v2958 = vunpack.c.h.b16 %v2628
    %v2959 = vunpack.c.l.b16 %v2629
    %v2960 = vunpack.c.h.b16 %v2629
    %v2961 = vunpack.c.l.b16 %v2630
    %v2962 = vunpack.c.h.b16 %v2630
    %v2963 = vunpack.c.l.b16 %v2631
    %v2964 = vunpack.c.h.b16 %v2631
    %v2965 = vunpack.c.l.b16 %v2632
    %v2966 = vunpack.c.h.b16 %v2632
    %v2967 = vunpack.c.l.b16 %v2633
    %v2968 = vunpack.c.h.b16 %v2633
    %v2969 = vunpack.c.l.b16 %v2634
    %v2970 = vunpack.c.h.b16 %v2634
    %v2971 = vunpack.c.l.b16 %v2635
    %v2972 = vunpack.c.h.b16 %v2635
    %v2973 = vunpack.c.l.b16 %v2636
    %v2974 = vunpack.c.h.b16 %v2636
    %v2975 = vunpack.c.l.b16 %v2637
    %v2976 = vunpack.c.h.b16 %v2637
    %v2977 = vunpack.c.l.b16 %v2638
    %v2978 = vunpack.c.h.b16 %v2638
    %v2979 = vunpack.c.l.b16 %v2639
    %v2980 = vunpack.c.h.b16 %v2639
    %v2981 = vunpack.c.l.b16 %v2640
    %v2982 = vunpack.c.h.b16 %v2640
    %v2983 = vunpack.c.l.b16 %v2641
    %v2984 = vunpack.c.h.b16 %v2641
    %v2985 = vunpack.c.l.b16 %v2642
    %v2986 = vunpack.c.h.b16 %v2642
    %v2987 = vunpack.c.l.b16 %v2643
    %v2988 = vunpack.c.h.b16 %v2643
    %v2989 = vunpack.c.l.b16 %v2644
    %v2990 = vunpack.c.h.b16 %v2644
    %v2991 = vunpack.c.l.b16 %v2645
    %v2992 = vunpack.c.h.b16 %v2645
    %v2993 = vunpack.c.l.b16 %v2646
    %v2994 = vunpack.c.h.b16 %v2646
    %v2995 = vunpack.c.l.b16 %v2647
    %v2996 = vunpack.c.h.b16 %v2647
    %v2997 = vunpack.c.l.b16 %v2648
    %v2998 = vunpack.c.h.b16 %v2648
    %v2999 = vunpack.c.l.b16 %v2649
    %v3000 = vunpack.c.h.b16 %v2649
    %v3001 = vunpack.c.l.b16 %v2650
    %v3002 = vunpack.c.h.b16 %v2650
    %v3003 = vunpack.c.l.b16 %v2651
    %v3004 = vunpack.c.h.b16 %v2651
    %v3005 = vunpack.c.l.b16 %v2652
    %v3006 = vunpack.c.h.b16 %v2652
    %v3007 = vunpack.c.l.b16 %v2653
    %v3008 = vunpack.c.h.b16 %v2653
    %v3009 = vunpack.c.l.b16 %v2654
    %v3010 = vunpack.c.h.b16 %v2654
    %v3011 = vunpack.c.l.b16 %v2655
    %v3012 = vunpack.c.h.b16 %v2655
    %v3013 = vunpack.c.l.b16 %v2656
    %v3014 = vunpack.c.h.b16 %v2656
    %v3015 = vunpack.c.l.b16 %v2657
    %v3016 = vunpack.c.h.b16 %v2657
    %v3017 = vunpack.c.l.b16 %v2658
    %v3018 = vunpack.c.h.b16 %v2658
    %v3019 = vunpack.c.l.b16 %v2659
    %v3020 = vunpack.c.h.b16 %v2659
    %v3021 = vunpack.c.l.b16 %v2660
    %v3022 = vunpack.c.h.b16 %v2660
    %v3023 = vunpack.c.l.b16 %v2661
    %v3024 = vunpack.c.h.b16 %v2661
    %v3025 = vunpack.c.l.b16 %v2662
    %v3026 = vunpack.c.h.b16 %v2662
    %v3027 = vunpack.c.l.b16 %v2663
    %v3028 = vunpack.c.h.b16 %v2663
    %v3029 = vunpack.c.l.b16 %v2664
    %v3030 = vunpack.c.h.b16 %v2664
    %v3031 = vunpack.c.l.b16 %v2665
    %v3032 = vunpack.c.h.b16 %v2665
    %v3033 = vunpack.c.l.b16 %v2666
    %v3034 = vunpack.c.h.b16 %v2666
    %v3035 = vunpack.c.l.b16 %v2667
    %v3036 = vunpack.c.h.b16 %v2667
    %v3037 = vunpack.c.l.b16 %v2668
    %v3038 = vunpack.c.h.b16 %v2668
    %v3039 = vunpack.c.l.b16 %v2669
    %v3040 = vunpack.c.h.b16 %v2669
    %v3041 = vunpack.c.l.b16 %v2670
    %v3042 = vunpack.c.h.b16 %v2670
    %v3043 = vunpack.c.l.b16 %v2671
    %v3044 = vunpack.c.h.b16 %v2671
    %v3045 = vunpack.c.l.b16 %v2672
    %v3046 = vunpack.c.h.b16 %v2672
    %v3047 = vunpack.c.l.b16 %v2673
    %v3048 = vunpack.c.h.b16 %v2673
    %v3049 = vunpack.c.l.b16 %v2674
    %v3050 = vunpack.c.h.b16 %v2674
    %v3051 = vunpack.c.l.b16 %v2675
    %v3052 = vunpack.c.h.b16 %v2675
    %v3053 = vunpack.c.l.b16 %v2676
    %v3054 = vunpack.c.h.b16 %v2676
    %v3055 = vunpack.c.l.b16 %v2677
    %v3056 = vunpack.c.h.b16 %v2677
    %v3057 = vunpack.c.l.b16 %v2678
    %v3058 = vunpack.c.h.b16 %v2678
    %v3059 = vunpack.c.l.b16 %v2679
    %v3060 = vunpack.c.h.b16 %v2679
    %v3061 = vunpack.c.l.b16 %v2680
    %v3062 = vunpack.c.h.b16 %v2680
    %v3063 = vunpack.c.l.b16 %v2681
    %v3064 = vunpack.c.h.b16 %v2681
    %v3065 = vunpack.c.l.b16 %v2682
    %v3066 = vunpack.c.h.b16 %v2682
    %v3067 = vpack.c.b16 %v2815, %v2811
    %v3068 = vpack.c.b16 %v2816, %v2812
    %v3069 = vpack.c.b16 %v2817, %v2813
    %v3070 = vpack.c.b16 %v2818, %v2814
    %v3071 = vpack.c.b16 %v2823, %v2819
    %v3072 = vpack.c.b16 %v2824, %v2820
    %v3073 = vpack.c.b16 %v2825, %v2821
    %v3074 = vpack.c.b16 %v2826, %v2822
    %v3075 = vpack.c.b16 %v2831, %v2827
    %v3076 = vpack.c.b16 %v2832, %v2828
    %v3077 = vpack.c.b16 %v2833, %v2829
    %v3078 = vpack.c.b16 %v2834, %v2830
    %v3079 = vpack.c.b16 %v2839, %v2835
    %v3080 = vpack.c.b16 %v2840, %v2836
    %v3081 = vpack.c.b16 %v2841, %v2837
    %v3082 = vpack.c.b16 %v2842, %v2838
    %v3083 = vpack.c.b16 %v2847, %v2843
    %v3084 = vpack.c.b16 %v2848, %v2844
    %v3085 = vpack.c.b16 %v2849, %v2845
    %v3086 = vpack.c.b16 %v2850, %v2846
    %v3087 = vpack.c.b16 %v2855, %v2851
    %v3088 = vpack.c.b16 %v2856, %v2852
    %v3089 = vpack.c.b16 %v2857, %v2853
    %v3090 = vpack.c.b16 %v2858, %v2854
    %v3091 = vpack.c.b16 %v2863, %v2859
    %v3092 = vpack.c.b16 %v2864, %v2860
    %v3093 = vpack.c.b16 %v2865, %v2861
    %v3094 = vpack.c.b16 %v2866, %v2862
    %v3095 = vpack.c.b16 %v2871, %v2867
    %v3096 = vpack.c.b16 %v2872, %v2868
    %v3097 = vpack.c.b16 %v2873, %v2869
    %v3098 = vpack.c.b16 %v2874, %v2870
    %v3099 = vpack.c.b16 %v2879, %v2875
    %v3100 = vpack.c.b16 %v2880, %v2876
    %v3101 = vpack.c.b16 %v2881, %v2877
    %v3102 = vpack.c.b16 %v2882, %v2878
    %v3103 = vpack.c.b16 %v2887, %v2883
    %v3104 = vpack.c.b16 %v2888, %v2884
    %v3105 = vpack.c.b16 %v2889, %v2885
    %v3106 = vpack.c.b16 %v2890, %v2886
    %v3107 = vpack.c.b16 %v2895, %v2891
    %v3108 = vpack.c.b16 %v2896, %v2892
    %v3109 = vpack.c.b16 %v2897, %v2893
    %v3110 = vpack.c.b16 %v2898, %v2894
    %v3111 = vpack.c.b16 %v2903, %v2899
    %v3112 = vpack.c.b16 %v2904, %v2900
    %v3113 = vpack.c.b16 %v2905, %v2901
    %v3114 = vpack.c.b16 %v2906, %v2902
    %v3115 = vpack.c.b16 %v2911, %v2907
    %v3116 = vpack.c.b16 %v2912, %v2908
    %v3117 = vpack.c.b16 %v2913, %v2909
    %v3118 = vpack.c.b16 %v2914, %v2910
    %v3119 = vpack.c.b16 %v2919, %v2915
    %v3120 = vpack.c.b16 %v2920, %v2916
    %v3121 = vpack.c.b16 %v2921, %v2917
    %v3122 = vpack.c.b16 %v2922, %v2918
    %v3123 = vpack.c.b16 %v2927, %v2923
    %v3124 = vpack.c.b16 %v2928, %v2924
    %v3125 = vpack.c.b16 %v2929, %v2925
    %v3126 = vpack.c.b16 %v2930, %v2926
    %v3127 = vpack.c.b16 %v2935, %v2931
    %v3128 = vpack.c.b16 %v2936, %v2932
    %v3129 = vpack.c.b16 %v2937, %v2933
    %v3130 = vpack.c.b16 %v2938, %v2934
    %v3131 = vpack.c.b16 %v2943, %v2939
    %v3132 = vpack.c.b16 %v2944, %v2940
    %v3133 = vpack.c.b16 %v2945, %v2941
    %v3134 = vpack.c.b16 %v2946, %v2942
    %v3135 = vpack.c.b16 %v2951, %v2947
    %v3136 = vpack.c.b16 %v2952, %v2948
    %v3137 = vpack.c.b16 %v2953, %v2949
    %v3138 = vpack.c.b16 %v2954, %v2950
    %v3139 = vpack.c.b16 %v2959, %v2955
    %v3140 = vpack.c.b16 %v2960, %v2956
    %v3141 = vpack.c.b16 %v2961, %v2957
    %v3142 = vpack.c.b16 %v2962, %v2958
    %v3143 = vpack.c.b16 %v2967, %v2963
    %v3144 = vpack.c.b16 %v2968, %v2964
    %v3145 = vpack.c.b16 %v2969, %v2965
    %v3146 = vpack.c.b16 %v2970, %v2966
    %v3147 = vpack.c.b16 %v2975, %v2971
    %v3148 = vpack.c.b16 %v2976, %v2972
    %v3149 = vpack.c.b16 %v2977, %v2973
    %v3150 = vpack.c.b16 %v2978, %v2974
    %v3151 = vpack.c.b16 %v2983, %v2979
    %v3152 = vpack.c.b16 %v2984, %v2980
    %v3153 = vpack.c.b16 %v2985, %v2981
    %v3154 = vpack.c.b16 %v2986, %v2982
    %v3155 = vpack.c.b16 %v2991, %v2987
    %v3156 = vpack.c.b16 %v2992, %v2988
    %v3157 = vpack.c.b16 %v2993, %v2989
    %v3158 = vpack.c.b16 %v2994, %v2990
    %v3159 = vpack.c.b16 %v2999, %v2995
    %v3160 = vpack.c.b16 %v3000, %v2996
    %v3161 = vpack.c.b16 %v3001, %v2997
    %v3162 = vpack.c.b16 %v3002, %v2998
    %v3163 = vpack.c.b16 %v3007, %v3003
    %v3164 = vpack.c.b16 %v3008, %v3004
    %v3165 = vpack.c.b16 %v3009, %v3005
    %v3166 = vpack.c.b16 %v3010, %v3006
    %v3167 = vpack.c.b16 %v3015, %v3011
    %v3168 = vpack.c.b16 %v3016, %v3012
    %v3169 = vpack.c.b16 %v3017, %v3013
    %v3170 = vpack.c.b16 %v3018, %v3014
    %v3171 = vpack.c.b16 %v3023, %v3019
    %v3172 = vpack.c.b16 %v3024, %v3020
    %v3173 = vpack.c.b16 %v3025, %v3021
    %v3174 = vpack.c.b16 %v3026, %v3022
    %v3175 = vpack.c.b16 %v3031, %v3027
    %v3176 = vpack.c.b16 %v3032, %v3028
    %v3177 = vpack.c.b16 %v3033, %v3029
    %v3178 = vpack.c.b16 %v3034, %v3030
    %v3179 = vpack.c.b16 %v3039, %v3035
    %v3180 = vpack.c.b16 %v3040, %v3036
    %v3181 = vpack.c.b16 %v3041, %v3037
    %v3182 = vpack.c.b16 %v3042, %v3038
    %v3183 = vpack.c.b16 %v3047, %v3043
    %v3184 = vpack.c.b16 %v3048, %v3044
    %v3185 = vpack.c.b16 %v3049, %v3045
    %v3186 = vpack.c.b16 %v3050, %v3046
    %v3187 = vpack.c.b16 %v3055, %v3051
    %v3188 = vpack.c.b16 %v3056, %v3052
    %v3189 = vpack.c.b16 %v3057, %v3053
    %v3190 = vpack.c.b16 %v3058, %v3054
    %v3191 = vpack.c.b16 %v3063, %v3059
    %v3192 = vpack.c.b16 %v3064, %v3060
    %v3193 = vpack.c.b16 %v3065, %v3061
    %v3194 = vpack.c.b16 %v3066, %v3062
    %3323 = vmatpush.bf16.msra.mxu0 %v3095
    %3324 = vmatpush.bf16.msra.mxu0 %v3091
    %3325 = vmatpush.bf16.msra.mxu0 %v3087
    %3326 = vmatpush.bf16.msra.mxu0 %v3083
    %3327 = vmatpush.bf16.msra.mxu0 %v3079
    %3328 = vmatpush.bf16.msra.mxu0 %v3075
    %3329 = vmatpush.bf16.msra.mxu0 %v3071
    %3330 = vmatpush.bf16.msra.mxu0 %v3067
    %3331 = vmatmul.bf16.gmra.mxu0 %v2550
    %v3332 = vpop.f32.mrf.mxu0
    %v3333 = vadd.f32 0.0, %v3332
    %v3334 = vpop.f32.mrf.mxu0
    %3335 = vdwg.mxu0
    %3336 = vmatpush.bf16.msra.mxu0 %v3127
    %3337 = vmatpush.bf16.msra.mxu0 %v3123
    %3338 = vmatpush.bf16.msra.mxu0 %v3119
    %3339 = vmatpush.bf16.msra.mxu0 %v3115
    %3340 = vmatpush.bf16.msra.mxu0 %v3111
    %3341 = vmatpush.bf16.msra.mxu0 %v3107
    %3342 = vmatpush.bf16.msra.mxu0 %v3103
    %3343 = vmatpush.bf16.msra.mxu0 %v3099
    %3344 = vmatmul.bf16.gmra.mxu0 %v2551
    %v3345 = vpop.f32.mrf.mxu0
    %v3346 = vadd.f32 %v3333, %v3345
    %v3347 = vpop.f32.mrf.mxu0
    %3348 = vdwg.mxu0
    %3349 = vmatpush.bf16.msra.mxu0 %v3159
    %3350 = vmatpush.bf16.msra.mxu0 %v3155
    %3351 = vmatpush.bf16.msra.mxu0 %v3151
    %3352 = vmatpush.bf16.msra.mxu0 %v3147
    %3353 = vmatpush.bf16.msra.mxu0 %v3143
    %3354 = vmatpush.bf16.msra.mxu0 %v3139
    %3355 = vmatpush.bf16.msra.mxu0 %v3135
    %3356 = vmatpush.bf16.msra.mxu0 %v3131
    %3357 = vmatmul.bf16.gmra.mxu0 %v2552
    %v3358 = vpop.f32.mrf.mxu0
    %v3359 = vadd.f32 %v3346, %v3358
    %v3360 = vpop.f32.mrf.mxu0
    %3361 = vdwg.mxu0
    %3362 = vmatpush.bf16.msra.mxu0 %v3191
    %3363 = vmatpush.bf16.msra.mxu0 %v3187
    %3364 = vmatpush.bf16.msra.mxu0 %v3183
    %3365 = vmatpush.bf16.msra.mxu0 %v3179
    %3366 = vmatpush.bf16.msra.mxu0 %v3175
    %3367 = vmatpush.bf16.msra.mxu0 %v3171
    %3368 = vmatpush.bf16.msra.mxu0 %v3167
    %3369 = vmatpush.bf16.msra.mxu0 %v3163
    %3370 = vmatmul.bf16.gmra.mxu0 %v2553
    %v3371 = vpop.f32.mrf.mxu0
    %v3372 = vadd.f32 %v3359, %v3371
    %v3373 = vpop.f32.mrf.mxu0
    %3374 = vdwg.mxu0
    %3375 = vmatpush.bf16.msra.mxu0 %v3096
    %3376 = vmatpush.bf16.msra.mxu0 %v3092
    %3377 = vmatpush.bf16.msra.mxu0 %v3088
    %3378 = vmatpush.bf16.msra.mxu0 %v3084
    %3379 = vmatpush.bf16.msra.mxu0 %v3080
    %3380 = vmatpush.bf16.msra.mxu0 %v3076
    %3381 = vmatpush.bf16.msra.mxu0 %v3072
    %3382 = vmatpush.bf16.msra.mxu0 %v3068
    %3383 = vmatmul.bf16.gmra.mxu0 %v2550
    %v3384 = vpop.f32.mrf.mxu0
    %v3385 = vadd.f32 0.0, %v3384
    %v3386 = vpop.f32.mrf.mxu0
    %3387 = vdwg.mxu0
    %3388 = vmatpush.bf16.msra.mxu0 %v3128
    %3389 = vmatpush.bf16.msra.mxu0 %v3124
    %3390 = vmatpush.bf16.msra.mxu0 %v3120
    %3391 = vmatpush.bf16.msra.mxu0 %v3116
    %3392 = vmatpush.bf16.msra.mxu0 %v3112
    %3393 = vmatpush.bf16.msra.mxu0 %v3108
    %3394 = vmatpush.bf16.msra.mxu0 %v3104
    %3395 = vmatpush.bf16.msra.mxu0 %v3100
    %3396 = vmatmul.bf16.gmra.mxu0 %v2551
    %v3397 = vpop.f32.mrf.mxu0
    %v3398 = vadd.f32 %v3385, %v3397
    %v3399 = vpop.f32.mrf.mxu0
    %3400 = vdwg.mxu0
    %3401 = vmatpush.bf16.msra.mxu0 %v3160
    %3402 = vmatpush.bf16.msra.mxu0 %v3156
    %3403 = vmatpush.bf16.msra.mxu0 %v3152
    %3404 = vmatpush.bf16.msra.mxu0 %v3148
    %3405 = vmatpush.bf16.msra.mxu0 %v3144
    %3406 = vmatpush.bf16.msra.mxu0 %v3140
    %3407 = vmatpush.bf16.msra.mxu0 %v3136
    %3408 = vmatpush.bf16.msra.mxu0 %v3132
    %3409 = vmatmul.bf16.gmra.mxu0 %v2552
    %v3410 = vpop.f32.mrf.mxu0
    %v3411 = vadd.f32 %v3398, %v3410
    %v3412 = vpop.f32.mrf.mxu0
    %3413 = vdwg.mxu0
    %3414 = vmatpush.bf16.msra.mxu0 %v3192
    %3415 = vmatpush.bf16.msra.mxu0 %v3188
    %3416 = vmatpush.bf16.msra.mxu0 %v3184
    %3417 = vmatpush.bf16.msra.mxu0 %v3180
    %3418 = vmatpush.bf16.msra.mxu0 %v3176
    %3419 = vmatpush.bf16.msra.mxu0 %v3172
    %3420 = vmatpush.bf16.msra.mxu0 %v3168
    %3421 = vmatpush.bf16.msra.mxu0 %v3164
    %3422 = vmatmul.bf16.gmra.mxu0 %v2553
    %v3423 = vpop.f32.mrf.mxu0
    %v3424 = vadd.f32 %v3411, %v3423
    %v3425 = vpop.f32.mrf.mxu0
    %3426 = vdwg.mxu0
    %3427 = vmatpush.bf16.msra.mxu0 %v3097
    %3428 = vmatpush.bf16.msra.mxu0 %v3093
    %3429 = vmatpush.bf16.msra.mxu0 %v3089
    %3430 = vmatpush.bf16.msra.mxu0 %v3085
    %3431 = vmatpush.bf16.msra.mxu0 %v3081
    %3432 = vmatpush.bf16.msra.mxu0 %v3077
    %3433 = vmatpush.bf16.msra.mxu0 %v3073
    %3434 = vmatpush.bf16.msra.mxu0 %v3069
    %3435 = vmatmul.bf16.gmra.mxu0 %v2550
    %v3436 = vpop.f32.mrf.mxu0
    %v3437 = vadd.f32 0.0, %v3436
    %v3438 = vpop.f32.mrf.mxu0
    %3439 = vdwg.mxu0
    %3440 = vmatpush.bf16.msra.mxu0 %v3129
    %3441 = vmatpush.bf16.msra.mxu0 %v3125
    %3442 = vmatpush.bf16.msra.mxu0 %v3121
    %3443 = vmatpush.bf16.msra.mxu0 %v3117
    %3444 = vmatpush.bf16.msra.mxu0 %v3113
    %3445 = vmatpush.bf16.msra.mxu0 %v3109
    %3446 = vmatpush.bf16.msra.mxu0 %v3105
    %3447 = vmatpush.bf16.msra.mxu0 %v3101
    %3448 = vmatmul.bf16.gmra.mxu0 %v2551
    %v3449 = vpop.f32.mrf.mxu0
    %v3450 = vadd.f32 %v3437, %v3449
    %v3451 = vpop.f32.mrf.mxu0
    %3452 = vdwg.mxu0
    %3453 = vmatpush.bf16.msra.mxu0 %v3161
    %3454 = vmatpush.bf16.msra.mxu0 %v3157
    %3455 = vmatpush.bf16.msra.mxu0 %v3153
    %3456 = vmatpush.bf16.msra.mxu0 %v3149
    %3457 = vmatpush.bf16.msra.mxu0 %v3145
    %3458 = vmatpush.bf16.msra.mxu0 %v3141
    %3459 = vmatpush.bf16.msra.mxu0 %v3137
    %3460 = vmatpush.bf16.msra.mxu0 %v3133
    %3461 = vmatmul.bf16.gmra.mxu0 %v2552
    %v3462 = vpop.f32.mrf.mxu0
    %v3463 = vadd.f32 %v3450, %v3462
    %v3464 = vpop.f32.mrf.mxu0
    %3465 = vdwg.mxu0
    %3466 = vmatpush.bf16.msra.mxu0 %v3193
    %3467 = vmatpush.bf16.msra.mxu0 %v3189
    %3468 = vmatpush.bf16.msra.mxu0 %v3185
    %3469 = vmatpush.bf16.msra.mxu0 %v3181
    %3470 = vmatpush.bf16.msra.mxu0 %v3177
    %3471 = vmatpush.bf16.msra.mxu0 %v3173
    %3472 = vmatpush.bf16.msra.mxu0 %v3169
    %3473 = vmatpush.bf16.msra.mxu0 %v3165
    %3474 = vmatmul.bf16.gmra.mxu0 %v2553
    %v3475 = vpop.f32.mrf.mxu0
    %v3476 = vadd.f32 %v3463, %v3475
    %v3477 = vpop.f32.mrf.mxu0
    %3478 = vdwg.mxu0
    %3479 = vmatpush.bf16.msra.mxu0 %v3098
    %3480 = vmatpush.bf16.msra.mxu0 %v3094
    %3481 = vmatpush.bf16.msra.mxu0 %v3090
    %3482 = vmatpush.bf16.msra.mxu0 %v3086
    %3483 = vmatpush.bf16.msra.mxu0 %v3082
    %3484 = vmatpush.bf16.msra.mxu0 %v3078
    %3485 = vmatpush.bf16.msra.mxu0 %v3074
    %3486 = vmatpush.bf16.msra.mxu0 %v3070
    %3487 = vmatmul.bf16.gmra.mxu0 %v2550
    %v3488 = vpop.f32.mrf.mxu0
    %v3489 = vadd.f32 0.0, %v3488
    %v3490 = vpop.f32.mrf.mxu0
    %3491 = vdwg.mxu0
    %3492 = vmatpush.bf16.msra.mxu0 %v3130
    %3493 = vmatpush.bf16.msra.mxu0 %v3126
    %3494 = vmatpush.bf16.msra.mxu0 %v3122
    %3495 = vmatpush.bf16.msra.mxu0 %v3118
    %3496 = vmatpush.bf16.msra.mxu0 %v3114
    %3497 = vmatpush.bf16.msra.mxu0 %v3110
    %3498 = vmatpush.bf16.msra.mxu0 %v3106
    %3499 = vmatpush.bf16.msra.mxu0 %v3102
    %3500 = vmatmul.bf16.gmra.mxu0 %v2551
    %v3501 = vpop.f32.mrf.mxu0
    %v3502 = vadd.f32 %v3489, %v3501
    %v3503 = vpop.f32.mrf.mxu0
    %3504 = vdwg.mxu0
    %3505 = vmatpush.bf16.msra.mxu0 %v3162
    %3506 = vmatpush.bf16.msra.mxu0 %v3158
    %3507 = vmatpush.bf16.msra.mxu0 %v3154
    %3508 = vmatpush.bf16.msra.mxu0 %v3150
    %3509 = vmatpush.bf16.msra.mxu0 %v3146
    %3510 = vmatpush.bf16.msra.mxu0 %v3142
    %3511 = vmatpush.bf16.msra.mxu0 %v3138
    %3512 = vmatpush.bf16.msra.mxu0 %v3134
    %3513 = vmatmul.bf16.gmra.mxu0 %v2552
    %v3514 = vpop.f32.mrf.mxu0
    %v3515 = vadd.f32 %v3502, %v3514
    %v3516 = vpop.f32.mrf.mxu0
    %3517 = vdwg.mxu0
    %3518 = vmatpush.bf16.msra.mxu0 %v3194
    %3519 = vmatpush.bf16.msra.mxu0 %v3190
    %3520 = vmatpush.bf16.msra.mxu0 %v3186
    %3521 = vmatpush.bf16.msra.mxu0 %v3182
    %3522 = vmatpush.bf16.msra.mxu0 %v3178
    %3523 = vmatpush.bf16.msra.mxu0 %v3174
    %3524 = vmatpush.bf16.msra.mxu0 %v3170
    %3525 = vmatpush.bf16.msra.mxu0 %v3166
    %3526 = vmatmul.bf16.gmra.mxu0 %v2553
    %v3527 = vpop.f32.mrf.mxu0
    %v3528 = vadd.f32 %v3515, %v3527
    %v3529 = vpop.f32.mrf.mxu0
    %3530 = vdwg.mxu0
    %v3659 = vunpack.c.l.b16 %v2365
    %v3660 = vunpack.c.h.b16 %v2365
    %v3661 = vunpack.c.l.b16 %v2366
    %v3662 = vunpack.c.h.b16 %v2366
    %v3663 = vunpack.c.l.b16 %v2367
    %v3664 = vunpack.c.h.b16 %v2367
    %v3665 = vunpack.c.l.b16 %v2368
    %v3666 = vunpack.c.h.b16 %v2368
    %v3667 = vunpack.c.l.b16 %v2369
    %v3668 = vunpack.c.h.b16 %v2369
    %v3669 = vunpack.c.l.b16 %v2370
    %v3670 = vunpack.c.h.b16 %v2370
    %v3671 = vunpack.c.l.b16 %v2371
    %v3672 = vunpack.c.h.b16 %v2371
    %v3673 = vunpack.c.l.b16 %v2372
    %v3674 = vunpack.c.h.b16 %v2372
    %v3675 = vunpack.c.l.b16 %v2373
    %v3676 = vunpack.c.h.b16 %v2373
    %v3677 = vunpack.c.l.b16 %v2374
    %v3678 = vunpack.c.h.b16 %v2374
    %v3679 = vunpack.c.l.b16 %v2375
    %v3680 = vunpack.c.h.b16 %v2375
    %v3681 = vunpack.c.l.b16 %v2376
    %v3682 = vunpack.c.h.b16 %v2376
    %v3683 = vunpack.c.l.b16 %v2377
    %v3684 = vunpack.c.h.b16 %v2377
    %v3685 = vunpack.c.l.b16 %v2378
    %v3686 = vunpack.c.h.b16 %v2378
    %v3687 = vunpack.c.l.b16 %v2379
    %v3688 = vunpack.c.h.b16 %v2379
    %v3689 = vunpack.c.l.b16 %v2380
    %v3690 = vunpack.c.h.b16 %v2380
    %v3691 = vunpack.c.l.b16 %v2381
    %v3692 = vunpack.c.h.b16 %v2381
    %v3693 = vunpack.c.l.b16 %v2382
    %v3694 = vunpack.c.h.b16 %v2382
    %v3695 = vunpack.c.l.b16 %v2383
    %v3696 = vunpack.c.h.b16 %v2383
    %v3697 = vunpack.c.l.b16 %v2384
    %v3698 = vunpack.c.h.b16 %v2384
    %v3699 = vunpack.c.l.b16 %v2385
    %v3700 = vunpack.c.h.b16 %v2385
    %v3701 = vunpack.c.l.b16 %v2386
    %v3702 = vunpack.c.h.b16 %v2386
    %v3703 = vunpack.c.l.b16 %v2387
    %v3704 = vunpack.c.h.b16 %v2387
    %v3705 = vunpack.c.l.b16 %v2388
    %v3706 = vunpack.c.h.b16 %v2388
    %v3707 = vunpack.c.l.b16 %v2389
    %v3708 = vunpack.c.h.b16 %v2389
    %v3709 = vunpack.c.l.b16 %v2390
    %v3710 = vunpack.c.h.b16 %v2390
    %v3711 = vunpack.c.l.b16 %v2391
    %v3712 = vunpack.c.h.b16 %v2391
    %v3713 = vunpack.c.l.b16 %v2392
    %v3714 = vunpack.c.h.b16 %v2392
    %v3715 = vunpack.c.l.b16 %v2393
    %v3716 = vunpack.c.h.b16 %v2393
    %v3717 = vunpack.c.l.b16 %v2394
    %v3718 = vunpack.c.h.b16 %v2394
    %v3719 = vunpack.c.l.b16 %v2395
    %v3720 = vunpack.c.h.b16 %v2395
    %v3721 = vunpack.c.l.b16 %v2396
    %v3722 = vunpack.c.h.b16 %v2396
    %v3723 = vunpack.c.l.b16 %v2397
    %v3724 = vunpack.c.h.b16 %v2397
    %v3725 = vunpack.c.l.b16 %v2398
    %v3726 = vunpack.c.h.b16 %v2398
    %v3727 = vunpack.c.l.b16 %v2399
    %v3728 = vunpack.c.h.b16 %v2399
    %v3729 = vunpack.c.l.b16 %v2400
    %v3730 = vunpack.c.h.b16 %v2400
    %v3731 = vunpack.c.l.b16 %v2401
    %v3732 = vunpack.c.h.b16 %v2401
    %v3733 = vunpack.c.l.b16 %v2402
    %v3734 = vunpack.c.h.b16 %v2402
    %v3735 = vunpack.c.l.b16 %v2403
    %v3736 = vunpack.c.h.b16 %v2403
    %v3737 = vunpack.c.l.b16 %v2404
    %v3738 = vunpack.c.h.b16 %v2404
    %v3739 = vunpack.c.l.b16 %v2405
    %v3740 = vunpack.c.h.b16 %v2405
    %v3741 = vunpack.c.l.b16 %v2406
    %v3742 = vunpack.c.h.b16 %v2406
    %v3743 = vunpack.c.l.b16 %v2407
    %v3744 = vunpack.c.h.b16 %v2407
    %v3745 = vunpack.c.l.b16 %v2408
    %v3746 = vunpack.c.h.b16 %v2408
    %v3747 = vunpack.c.l.b16 %v2409
    %v3748 = vunpack.c.h.b16 %v2409
    %v3749 = vunpack.c.l.b16 %v2410
    %v3750 = vunpack.c.h.b16 %v2410
    %v3751 = vunpack.c.l.b16 %v2411
    %v3752 = vunpack.c.h.b16 %v2411
    %v3753 = vunpack.c.l.b16 %v2412
    %v3754 = vunpack.c.h.b16 %v2412
    %v3755 = vunpack.c.l.b16 %v2413
    %v3756 = vunpack.c.h.b16 %v2413
    %v3757 = vunpack.c.l.b16 %v2414
    %v3758 = vunpack.c.h.b16 %v2414
    %v3759 = vunpack.c.l.b16 %v2415
    %v3760 = vunpack.c.h.b16 %v2415
    %v3761 = vunpack.c.l.b16 %v2416
    %v3762 = vunpack.c.h.b16 %v2416
    %v3763 = vunpack.c.l.b16 %v2417
    %v3764 = vunpack.c.h.b16 %v2417
    %v3765 = vunpack.c.l.b16 %v2418
    %v3766 = vunpack.c.h.b16 %v2418
    %v3767 = vunpack.c.l.b16 %v2419
    %v3768 = vunpack.c.h.b16 %v2419
    %v3769 = vunpack.c.l.b16 %v2420
    %v3770 = vunpack.c.h.b16 %v2420
    %v3771 = vunpack.c.l.b16 %v2421
    %v3772 = vunpack.c.h.b16 %v2421
    %v3773 = vunpack.c.l.b16 %v2422
    %v3774 = vunpack.c.h.b16 %v2422
    %v3775 = vunpack.c.l.b16 %v2423
    %v3776 = vunpack.c.h.b16 %v2423
    %v3777 = vunpack.c.l.b16 %v2424
    %v3778 = vunpack.c.h.b16 %v2424
    %v3779 = vunpack.c.l.b16 %v2425
    %v3780 = vunpack.c.h.b16 %v2425
    %v3781 = vunpack.c.l.b16 %v2426
    %v3782 = vunpack.c.h.b16 %v2426
    %v3783 = vunpack.c.l.b16 %v2427
    %v3784 = vunpack.c.h.b16 %v2427
    %v3785 = vunpack.c.l.b16 %v2428
    %v3786 = vunpack.c.h.b16 %v2428
    %v3787 = vunpack.c.l.b16 %v2429
    %v3788 = vunpack.c.h.b16 %v2429
    %v3789 = vunpack.c.l.b16 %v2430
    %v3790 = vunpack.c.h.b16 %v2430
    %v3791 = vunpack.c.l.b16 %v2431
    %v3792 = vunpack.c.h.b16 %v2431
    %v3793 = vunpack.c.l.b16 %v2432
    %v3794 = vunpack.c.h.b16 %v2432
    %v3795 = vunpack.c.l.b16 %v2433
    %v3796 = vunpack.c.h.b16 %v2433
    %v3797 = vunpack.c.l.b16 %v2434
    %v3798 = vunpack.c.h.b16 %v2434
    %v3799 = vunpack.c.l.b16 %v2435
    %v3800 = vunpack.c.h.b16 %v2435
    %v3801 = vunpack.c.l.b16 %v2436
    %v3802 = vunpack.c.h.b16 %v2436
    %v3803 = vunpack.c.l.b16 %v2437
    %v3804 = vunpack.c.h.b16 %v2437
    %v3805 = vunpack.c.l.b16 %v2438
    %v3806 = vunpack.c.h.b16 %v2438
    %v3807 = vunpack.c.l.b16 %v2439
    %v3808 = vunpack.c.h.b16 %v2439
    %v3809 = vunpack.c.l.b16 %v2440
    %v3810 = vunpack.c.h.b16 %v2440
    %v3811 = vunpack.c.l.b16 %v2441
    %v3812 = vunpack.c.h.b16 %v2441
    %v3813 = vunpack.c.l.b16 %v2442
    %v3814 = vunpack.c.h.b16 %v2442
    %v3815 = vunpack.c.l.b16 %v2443
    %v3816 = vunpack.c.h.b16 %v2443
    %v3817 = vunpack.c.l.b16 %v2444
    %v3818 = vunpack.c.h.b16 %v2444
    %v3819 = vunpack.c.l.b16 %v2445
    %v3820 = vunpack.c.h.b16 %v2445
    %v3821 = vunpack.c.l.b16 %v2446
    %v3822 = vunpack.c.h.b16 %v2446
    %v3823 = vunpack.c.l.b16 %v2447
    %v3824 = vunpack.c.h.b16 %v2447
    %v3825 = vunpack.c.l.b16 %v2448
    %v3826 = vunpack.c.h.b16 %v2448
    %v3827 = vunpack.c.l.b16 %v2449
    %v3828 = vunpack.c.h.b16 %v2449
    %v3829 = vunpack.c.l.b16 %v2450
    %v3830 = vunpack.c.h.b16 %v2450
    %v3831 = vunpack.c.l.b16 %v2451
    %v3832 = vunpack.c.h.b16 %v2451
    %v3833 = vunpack.c.l.b16 %v2452
    %v3834 = vunpack.c.h.b16 %v2452
    %v3835 = vunpack.c.l.b16 %v2453
    %v3836 = vunpack.c.h.b16 %v2453
    %v3837 = vunpack.c.l.b16 %v2454
    %v3838 = vunpack.c.h.b16 %v2454
    %v3839 = vunpack.c.l.b16 %v2455
    %v3840 = vunpack.c.h.b16 %v2455
    %v3841 = vunpack.c.l.b16 %v2456
    %v3842 = vunpack.c.h.b16 %v2456
    %v3843 = vunpack.c.l.b16 %v2457
    %v3844 = vunpack.c.h.b16 %v2457
    %v3845 = vunpack.c.l.b16 %v2458
    %v3846 = vunpack.c.h.b16 %v2458
    %v3847 = vunpack.c.l.b16 %v2459
    %v3848 = vunpack.c.h.b16 %v2459
    %v3849 = vunpack.c.l.b16 %v2460
    %v3850 = vunpack.c.h.b16 %v2460
    %v3851 = vunpack.c.l.b16 %v2461
    %v3852 = vunpack.c.h.b16 %v2461
    %v3853 = vunpack.c.l.b16 %v2462
    %v3854 = vunpack.c.h.b16 %v2462
    %v3855 = vunpack.c.l.b16 %v2463
    %v3856 = vunpack.c.h.b16 %v2463
    %v3857 = vunpack.c.l.b16 %v2464
    %v3858 = vunpack.c.h.b16 %v2464
    %v3859 = vunpack.c.l.b16 %v2465
    %v3860 = vunpack.c.h.b16 %v2465
    %v3861 = vunpack.c.l.b16 %v2466
    %v3862 = vunpack.c.h.b16 %v2466
    %v3863 = vunpack.c.l.b16 %v2467
    %v3864 = vunpack.c.h.b16 %v2467
    %v3865 = vunpack.c.l.b16 %v2468
    %v3866 = vunpack.c.h.b16 %v2468
    %v3867 = vunpack.c.l.b16 %v2469
    %v3868 = vunpack.c.h.b16 %v2469
    %v3869 = vunpack.c.l.b16 %v2470
    %v3870 = vunpack.c.h.b16 %v2470
    %v3871 = vunpack.c.l.b16 %v2471
    %v3872 = vunpack.c.h.b16 %v2471
    %v3873 = vunpack.c.l.b16 %v2472
    %v3874 = vunpack.c.h.b16 %v2472
    %v3875 = vunpack.c.l.b16 %v2473
    %v3876 = vunpack.c.h.b16 %v2473
    %v3877 = vunpack.c.l.b16 %v2474
    %v3878 = vunpack.c.h.b16 %v2474
    %v3879 = vunpack.c.l.b16 %v2475
    %v3880 = vunpack.c.h.b16 %v2475
    %v3881 = vunpack.c.l.b16 %v2476
    %v3882 = vunpack.c.h.b16 %v2476
    %v3883 = vunpack.c.l.b16 %v2477
    %v3884 = vunpack.c.h.b16 %v2477
    %v3885 = vunpack.c.l.b16 %v2478
    %v3886 = vunpack.c.h.b16 %v2478
    %v3887 = vunpack.c.l.b16 %v2479
    %v3888 = vunpack.c.h.b16 %v2479
    %v3889 = vunpack.c.l.b16 %v2480
    %v3890 = vunpack.c.h.b16 %v2480
    %v3891 = vunpack.c.l.b16 %v2481
    %v3892 = vunpack.c.h.b16 %v2481
    %v3893 = vunpack.c.l.b16 %v2482
    %v3894 = vunpack.c.h.b16 %v2482
    %v3895 = vunpack.c.l.b16 %v2483
    %v3896 = vunpack.c.h.b16 %v2483
    %v3897 = vunpack.c.l.b16 %v2484
    %v3898 = vunpack.c.h.b16 %v2484
    %v3899 = vunpack.c.l.b16 %v2485
    %v3900 = vunpack.c.h.b16 %v2485
    %v3901 = vunpack.c.l.b16 %v2486
    %v3902 = vunpack.c.h.b16 %v2486
    %v3903 = vunpack.c.l.b16 %v2487
    %v3904 = vunpack.c.h.b16 %v2487
    %v3905 = vunpack.c.l.b16 %v2488
    %v3906 = vunpack.c.h.b16 %v2488
    %v3907 = vunpack.c.l.b16 %v2489
    %v3908 = vunpack.c.h.b16 %v2489
    %v3909 = vunpack.c.l.b16 %v2490
    %v3910 = vunpack.c.h.b16 %v2490
    %v3911 = vunpack.c.l.b16 %v2491
    %v3912 = vunpack.c.h.b16 %v2491
    %v3913 = vunpack.c.l.b16 %v2492
    %v3914 = vunpack.c.h.b16 %v2492
    %v3915 = vpack.c.b16 %v3663, %v3659
    %v3916 = vpack.c.b16 %v3664, %v3660
    %v3917 = vpack.c.b16 %v3665, %v3661
    %v3918 = vpack.c.b16 %v3666, %v3662
    %v3919 = vpack.c.b16 %v3671, %v3667
    %v3920 = vpack.c.b16 %v3672, %v3668
    %v3921 = vpack.c.b16 %v3673, %v3669
    %v3922 = vpack.c.b16 %v3674, %v3670
    %v3923 = vpack.c.b16 %v3679, %v3675
    %v3924 = vpack.c.b16 %v3680, %v3676
    %v3925 = vpack.c.b16 %v3681, %v3677
    %v3926 = vpack.c.b16 %v3682, %v3678
    %v3927 = vpack.c.b16 %v3687, %v3683
    %v3928 = vpack.c.b16 %v3688, %v3684
    %v3929 = vpack.c.b16 %v3689, %v3685
    %v3930 = vpack.c.b16 %v3690, %v3686
    %v3931 = vpack.c.b16 %v3695, %v3691
    %v3932 = vpack.c.b16 %v3696, %v3692
    %v3933 = vpack.c.b16 %v3697, %v3693
    %v3934 = vpack.c.b16 %v3698, %v3694
    %v3935 = vpack.c.b16 %v3703, %v3699
    %v3936 = vpack.c.b16 %v3704, %v3700
    %v3937 = vpack.c.b16 %v3705, %v3701
    %v3938 = vpack.c.b16 %v3706, %v3702
    %v3939 = vpack.c.b16 %v3711, %v3707
    %v3940 = vpack.c.b16 %v3712, %v3708
    %v3941 = vpack.c.b16 %v3713, %v3709
    %v3942 = vpack.c.b16 %v3714, %v3710
    %v3943 = vpack.c.b16 %v3719, %v3715
    %v3944 = vpack.c.b16 %v3720, %v3716
    %v3945 = vpack.c.b16 %v3721, %v3717
    %v3946 = vpack.c.b16 %v3722, %v3718
    %v3947 = vpack.c.b16 %v3727, %v3723
    %v3948 = vpack.c.b16 %v3728, %v3724
    %v3949 = vpack.c.b16 %v3729, %v3725
    %v3950 = vpack.c.b16 %v3730, %v3726
    %v3951 = vpack.c.b16 %v3735, %v3731
    %v3952 = vpack.c.b16 %v3736, %v3732
    %v3953 = vpack.c.b16 %v3737, %v3733
    %v3954 = vpack.c.b16 %v3738, %v3734
    %v3955 = vpack.c.b16 %v3743, %v3739
    %v3956 = vpack.c.b16 %v3744, %v3740
    %v3957 = vpack.c.b16 %v3745, %v3741
    %v3958 = vpack.c.b16 %v3746, %v3742
    %v3959 = vpack.c.b16 %v3751, %v3747
    %v3960 = vpack.c.b16 %v3752, %v3748
    %v3961 = vpack.c.b16 %v3753, %v3749
    %v3962 = vpack.c.b16 %v3754, %v3750
    %v3963 = vpack.c.b16 %v3759, %v3755
    %v3964 = vpack.c.b16 %v3760, %v3756
    %v3965 = vpack.c.b16 %v3761, %v3757
    %v3966 = vpack.c.b16 %v3762, %v3758
    %v3967 = vpack.c.b16 %v3767, %v3763
    %v3968 = vpack.c.b16 %v3768, %v3764
    %v3969 = vpack.c.b16 %v3769, %v3765
    %v3970 = vpack.c.b16 %v3770, %v3766
    %v3971 = vpack.c.b16 %v3775, %v3771
    %v3972 = vpack.c.b16 %v3776, %v3772
    %v3973 = vpack.c.b16 %v3777, %v3773
    %v3974 = vpack.c.b16 %v3778, %v3774
    %v3975 = vpack.c.b16 %v3783, %v3779
    %v3976 = vpack.c.b16 %v3784, %v3780
    %v3977 = vpack.c.b16 %v3785, %v3781
    %v3978 = vpack.c.b16 %v3786, %v3782
    %v3979 = vpack.c.b16 %v3791, %v3787
    %v3980 = vpack.c.b16 %v3792, %v3788
    %v3981 = vpack.c.b16 %v3793, %v3789
    %v3982 = vpack.c.b16 %v3794, %v3790
    %v3983 = vpack.c.b16 %v3799, %v3795
    %v3984 = vpack.c.b16 %v3800, %v3796
    %v3985 = vpack.c.b16 %v3801, %v3797
    %v3986 = vpack.c.b16 %v3802, %v3798
    %v3987 = vpack.c.b16 %v3807, %v3803
    %v3988 = vpack.c.b16 %v3808, %v3804
    %v3989 = vpack.c.b16 %v3809, %v3805
    %v3990 = vpack.c.b16 %v3810, %v3806
    %v3991 = vpack.c.b16 %v3815, %v3811
    %v3992 = vpack.c.b16 %v3816, %v3812
    %v3993 = vpack.c.b16 %v3817, %v3813
    %v3994 = vpack.c.b16 %v3818, %v3814
    %v3995 = vpack.c.b16 %v3823, %v3819
    %v3996 = vpack.c.b16 %v3824, %v3820
    %v3997 = vpack.c.b16 %v3825, %v3821
    %v3998 = vpack.c.b16 %v3826, %v3822
    %v3999 = vpack.c.b16 %v3831, %v3827
    %v4000 = vpack.c.b16 %v3832, %v3828
    %v4001 = vpack.c.b16 %v3833, %v3829
    %v4002 = vpack.c.b16 %v3834, %v3830
    %v4003 = vpack.c.b16 %v3839, %v3835
    %v4004 = vpack.c.b16 %v3840, %v3836
    %v4005 = vpack.c.b16 %v3841, %v3837
    %v4006 = vpack.c.b16 %v3842, %v3838
    %v4007 = vpack.c.b16 %v3847, %v3843
    %v4008 = vpack.c.b16 %v3848, %v3844
    %v4009 = vpack.c.b16 %v3849, %v3845
    %v4010 = vpack.c.b16 %v3850, %v3846
    %v4011 = vpack.c.b16 %v3855, %v3851
    %v4012 = vpack.c.b16 %v3856, %v3852
    %v4013 = vpack.c.b16 %v3857, %v3853
    %v4014 = vpack.c.b16 %v3858, %v3854
    %v4015 = vpack.c.b16 %v3863, %v3859
    %v4016 = vpack.c.b16 %v3864, %v3860
    %v4017 = vpack.c.b16 %v3865, %v3861
    %v4018 = vpack.c.b16 %v3866, %v3862
    %v4019 = vpack.c.b16 %v3871, %v3867
    %v4020 = vpack.c.b16 %v3872, %v3868
    %v4021 = vpack.c.b16 %v3873, %v3869
    %v4022 = vpack.c.b16 %v3874, %v3870
    %v4023 = vpack.c.b16 %v3879, %v3875
    %v4024 = vpack.c.b16 %v3880, %v3876
    %v4025 = vpack.c.b16 %v3881, %v3877
    %v4026 = vpack.c.b16 %v3882, %v3878
    %v4027 = vpack.c.b16 %v3887, %v3883
    %v4028 = vpack.c.b16 %v3888, %v3884
    %v4029 = vpack.c.b16 %v3889, %v3885
    %v4030 = vpack.c.b16 %v3890, %v3886
    %v4031 = vpack.c.b16 %v3895, %v3891
    %v4032 = vpack.c.b16 %v3896, %v3892
    %v4033 = vpack.c.b16 %v3897, %v3893
    %v4034 = vpack.c.b16 %v3898, %v3894
    %v4035 = vpack.c.b16 %v3903, %v3899
    %v4036 = vpack.c.b16 %v3904, %v3900
    %v4037 = vpack.c.b16 %v3905, %v3901
    %v4038 = vpack.c.b16 %v3906, %v3902
    %v4039 = vpack.c.b16 %v3911, %v3907
    %v4040 = vpack.c.b16 %v3912, %v3908
    %v4041 = vpack.c.b16 %v3913, %v3909
    %v4042 = vpack.c.b16 %v3914, %v3910
    %4171 = vmatpush.bf16.msra.mxu0 %v3943
    %4172 = vmatpush.bf16.msra.mxu0 %v3939
    %4173 = vmatpush.bf16.msra.mxu0 %v3935
    %4174 = vmatpush.bf16.msra.mxu0 %v3931
    %4175 = vmatpush.bf16.msra.mxu0 %v3927
    %4176 = vmatpush.bf16.msra.mxu0 %v3923
    %4177 = vmatpush.bf16.msra.mxu0 %v3919
    %4178 = vmatpush.bf16.msra.mxu0 %v3915
    %4179 = vmatmul.bf16.gmra.mxu0 %v2361
    %v4180 = vpop.f32.mrf.mxu0
    %v4181 = vadd.f32 %v3372, %v4180
    %v4182 = vpop.f32.mrf.mxu0
    %4183 = vdwg.mxu0
    %4184 = vmatpush.bf16.msra.mxu0 %v3975
    %4185 = vmatpush.bf16.msra.mxu0 %v3971
    %4186 = vmatpush.bf16.msra.mxu0 %v3967
    %4187 = vmatpush.bf16.msra.mxu0 %v3963
    %4188 = vmatpush.bf16.msra.mxu0 %v3959
    %4189 = vmatpush.bf16.msra.mxu0 %v3955
    %4190 = vmatpush.bf16.msra.mxu0 %v3951
    %4191 = vmatpush.bf16.msra.mxu0 %v3947
    %4192 = vmatmul.bf16.gmra.mxu0 %v2362
    %v4193 = vpop.f32.mrf.mxu0
    %v4194 = vadd.f32 %v4181, %v4193
    %v4195 = vpop.f32.mrf.mxu0
    %4196 = vdwg.mxu0
    %4197 = vmatpush.bf16.msra.mxu0 %v4007
    %4198 = vmatpush.bf16.msra.mxu0 %v4003
    %4199 = vmatpush.bf16.msra.mxu0 %v3999
    %4200 = vmatpush.bf16.msra.mxu0 %v3995
    %4201 = vmatpush.bf16.msra.mxu0 %v3991
    %4202 = vmatpush.bf16.msra.mxu0 %v3987
    %4203 = vmatpush.bf16.msra.mxu0 %v3983
    %4204 = vmatpush.bf16.msra.mxu0 %v3979
    %4205 = vmatmul.bf16.gmra.mxu0 %v2363
    %v4206 = vpop.f32.mrf.mxu0
    %v4207 = vadd.f32 %v4194, %v4206
    %v4208 = vpop.f32.mrf.mxu0
    %4209 = vdwg.mxu0
    %4210 = vmatpush.bf16.msra.mxu0 %v4039
    %4211 = vmatpush.bf16.msra.mxu0 %v4035
    %4212 = vmatpush.bf16.msra.mxu0 %v4031
    %4213 = vmatpush.bf16.msra.mxu0 %v4027
    %4214 = vmatpush.bf16.msra.mxu0 %v4023
    %4215 = vmatpush.bf16.msra.mxu0 %v4019
    %4216 = vmatpush.bf16.msra.mxu0 %v4015
    %4217 = vmatpush.bf16.msra.mxu0 %v4011
    %4218 = vmatmul.bf16.gmra.mxu0 %v2364
    %v4219 = vpop.f32.mrf.mxu0
    %v4220 = vadd.f32 %v4207, %v4219
    %v4221 = vpop.f32.mrf.mxu0
    %4222 = vdwg.mxu0
    %4223 = vmatpush.bf16.msra.mxu0 %v3944
    %4224 = vmatpush.bf16.msra.mxu0 %v3940
    %4225 = vmatpush.bf16.msra.mxu0 %v3936
    %4226 = vmatpush.bf16.msra.mxu0 %v3932
    %4227 = vmatpush.bf16.msra.mxu0 %v3928
    %4228 = vmatpush.bf16.msra.mxu0 %v3924
    %4229 = vmatpush.bf16.msra.mxu0 %v3920
    %4230 = vmatpush.bf16.msra.mxu0 %v3916
    %4231 = vmatmul.bf16.gmra.mxu0 %v2361
    %v4232 = vpop.f32.mrf.mxu0
    %v4233 = vadd.f32 %v3424, %v4232
    %v4234 = vpop.f32.mrf.mxu0
    %4235 = vdwg.mxu0
    %4236 = vmatpush.bf16.msra.mxu0 %v3976
    %4237 = vmatpush.bf16.msra.mxu0 %v3972
    %4238 = vmatpush.bf16.msra.mxu0 %v3968
    %4239 = vmatpush.bf16.msra.mxu0 %v3964
    %4240 = vmatpush.bf16.msra.mxu0 %v3960
    %4241 = vmatpush.bf16.msra.mxu0 %v3956
    %4242 = vmatpush.bf16.msra.mxu0 %v3952
    %4243 = vmatpush.bf16.msra.mxu0 %v3948
    %4244 = vmatmul.bf16.gmra.mxu0 %v2362
    %v4245 = vpop.f32.mrf.mxu0
    %v4246 = vadd.f32 %v4233, %v4245
    %v4247 = vpop.f32.mrf.mxu0
    %4248 = vdwg.mxu0
    %4249 = vmatpush.bf16.msra.mxu0 %v4008
    %4250 = vmatpush.bf16.msra.mxu0 %v4004
    %4251 = vmatpush.bf16.msra.mxu0 %v4000
    %4252 = vmatpush.bf16.msra.mxu0 %v3996
    %4253 = vmatpush.bf16.msra.mxu0 %v3992
    %4254 = vmatpush.bf16.msra.mxu0 %v3988
    %4255 = vmatpush.bf16.msra.mxu0 %v3984
    %4256 = vmatpush.bf16.msra.mxu0 %v3980
    %4257 = vmatmul.bf16.gmra.mxu0 %v2363
    %v4258 = vpop.f32.mrf.mxu0
    %v4259 = vadd.f32 %v4246, %v4258
    %v4260 = vpop.f32.mrf.mxu0
    %4261 = vdwg.mxu0
    %4262 = vmatpush.bf16.msra.mxu0 %v4040
    %4263 = vmatpush.bf16.msra.mxu0 %v4036
    %4264 = vmatpush.bf16.msra.mxu0 %v4032
    %4265 = vmatpush.bf16.msra.mxu0 %v4028
    %4266 = vmatpush.bf16.msra.mxu0 %v4024
    %4267 = vmatpush.bf16.msra.mxu0 %v4020
    %4268 = vmatpush.bf16.msra.mxu0 %v4016
    %4269 = vmatpush.bf16.msra.mxu0 %v4012
    %4270 = vmatmul.bf16.gmra.mxu0 %v2364
    %v4271 = vpop.f32.mrf.mxu0
    %v4272 = vadd.f32 %v4259, %v4271
    %v4273 = vpop.f32.mrf.mxu0
    %4274 = vdwg.mxu0
    %4275 = vmatpush.bf16.msra.mxu0 %v3945
    %4276 = vmatpush.bf16.msra.mxu0 %v3941
    %4277 = vmatpush.bf16.msra.mxu0 %v3937
    %4278 = vmatpush.bf16.msra.mxu0 %v3933
    %4279 = vmatpush.bf16.msra.mxu0 %v3929
    %4280 = vmatpush.bf16.msra.mxu0 %v3925
    %4281 = vmatpush.bf16.msra.mxu0 %v3921
    %4282 = vmatpush.bf16.msra.mxu0 %v3917
    %4283 = vmatmul.bf16.gmra.mxu0 %v2361
    %v4284 = vpop.f32.mrf.mxu0
    %v4285 = vadd.f32 %v3476, %v4284
    %v4286 = vpop.f32.mrf.mxu0
    %4287 = vdwg.mxu0
    %4288 = vmatpush.bf16.msra.mxu0 %v3977
    %4289 = vmatpush.bf16.msra.mxu0 %v3973
    %4290 = vmatpush.bf16.msra.mxu0 %v3969
    %4291 = vmatpush.bf16.msra.mxu0 %v3965
    %4292 = vmatpush.bf16.msra.mxu0 %v3961
    %4293 = vmatpush.bf16.msra.mxu0 %v3957
    %4294 = vmatpush.bf16.msra.mxu0 %v3953
    %4295 = vmatpush.bf16.msra.mxu0 %v3949
    %4296 = vmatmul.bf16.gmra.mxu0 %v2362
    %v4297 = vpop.f32.mrf.mxu0
    %v4298 = vadd.f32 %v4285, %v4297
    %v4299 = vpop.f32.mrf.mxu0
    %4300 = vdwg.mxu0
    %4301 = vmatpush.bf16.msra.mxu0 %v4009
    %4302 = vmatpush.bf16.msra.mxu0 %v4005
    %4303 = vmatpush.bf16.msra.mxu0 %v4001
    %4304 = vmatpush.bf16.msra.mxu0 %v3997
    %4305 = vmatpush.bf16.msra.mxu0 %v3993
    %4306 = vmatpush.bf16.msra.mxu0 %v3989
    %4307 = vmatpush.bf16.msra.mxu0 %v3985
    %4308 = vmatpush.bf16.msra.mxu0 %v3981
    %4309 = vmatmul.bf16.gmra.mxu0 %v2363
    %v4310 = vpop.f32.mrf.mxu0
    %v4311 = vadd.f32 %v4298, %v4310
    %v4312 = vpop.f32.mrf.mxu0
    %4313 = vdwg.mxu0
    %4314 = vmatpush.bf16.msra.mxu0 %v4041
    %4315 = vmatpush.bf16.msra.mxu0 %v4037
    %4316 = vmatpush.bf16.msra.mxu0 %v4033
    %4317 = vmatpush.bf16.msra.mxu0 %v4029
    %4318 = vmatpush.bf16.msra.mxu0 %v4025
    %4319 = vmatpush.bf16.msra.mxu0 %v4021
    %4320 = vmatpush.bf16.msra.mxu0 %v4017
    %4321 = vmatpush.bf16.msra.mxu0 %v4013
    %4322 = vmatmul.bf16.gmra.mxu0 %v2364
    %v4323 = vpop.f32.mrf.mxu0
    %v4324 = vadd.f32 %v4311, %v4323
    %v4325 = vpop.f32.mrf.mxu0
    %4326 = vdwg.mxu0
    %4327 = vmatpush.bf16.msra.mxu0 %v3946
    %4328 = vmatpush.bf16.msra.mxu0 %v3942
    %4329 = vmatpush.bf16.msra.mxu0 %v3938
    %4330 = vmatpush.bf16.msra.mxu0 %v3934
    %4331 = vmatpush.bf16.msra.mxu0 %v3930
    %4332 = vmatpush.bf16.msra.mxu0 %v3926
    %4333 = vmatpush.bf16.msra.mxu0 %v3922
    %4334 = vmatpush.bf16.msra.mxu0 %v3918
    %4335 = vmatmul.bf16.gmra.mxu0 %v2361
    %v4336 = vpop.f32.mrf.mxu0
    %v4337 = vadd.f32 %v3528, %v4336
    %v4338 = vpop.f32.mrf.mxu0
    %4339 = vdwg.mxu0
    %4340 = vmatpush.bf16.msra.mxu0 %v3978
    %4341 = vmatpush.bf16.msra.mxu0 %v3974
    %4342 = vmatpush.bf16.msra.mxu0 %v3970
    %4343 = vmatpush.bf16.msra.mxu0 %v3966
    %4344 = vmatpush.bf16.msra.mxu0 %v3962
    %4345 = vmatpush.bf16.msra.mxu0 %v3958
    %4346 = vmatpush.bf16.msra.mxu0 %v3954
    %4347 = vmatpush.bf16.msra.mxu0 %v3950
    %4348 = vmatmul.bf16.gmra.mxu0 %v2362
    %v4349 = vpop.f32.mrf.mxu0
    %v4350 = vadd.f32 %v4337, %v4349
    %v4351 = vpop.f32.mrf.mxu0
    %4352 = vdwg.mxu0
    %4353 = vmatpush.bf16.msra.mxu0 %v4010
    %4354 = vmatpush.bf16.msra.mxu0 %v4006
    %4355 = vmatpush.bf16.msra.mxu0 %v4002
    %4356 = vmatpush.bf16.msra.mxu0 %v3998
    %4357 = vmatpush.bf16.msra.mxu0 %v3994
    %4358 = vmatpush.bf16.msra.mxu0 %v3990
    %4359 = vmatpush.bf16.msra.mxu0 %v3986
    %4360 = vmatpush.bf16.msra.mxu0 %v3982
    %4361 = vmatmul.bf16.gmra.mxu0 %v2363
    %v4362 = vpop.f32.mrf.mxu0
    %v4363 = vadd.f32 %v4350, %v4362
    %v4364 = vpop.f32.mrf.mxu0
    %4365 = vdwg.mxu0
    %4366 = vmatpush.bf16.msra.mxu0 %v4042
    %4367 = vmatpush.bf16.msra.mxu0 %v4038
    %4368 = vmatpush.bf16.msra.mxu0 %v4034
    %4369 = vmatpush.bf16.msra.mxu0 %v4030
    %4370 = vmatpush.bf16.msra.mxu0 %v4026
    %4371 = vmatpush.bf16.msra.mxu0 %v4022
    %4372 = vmatpush.bf16.msra.mxu0 %v4018
    %4373 = vmatpush.bf16.msra.mxu0 %v4014
    %4374 = vmatmul.bf16.gmra.mxu0 %v2364
    %v4375 = vpop.f32.mrf.mxu0
    %v4376 = vadd.f32 %v4363, %v4375
    %v4377 = vpop.f32.mrf.mxu0
    %4378 = vdwg.mxu0
    %s4379 = scalar_lea.vmem [#allocation9], 8
    %v4380 = vld [vmem:[%s4379] sm:$0xf]
    %v4382 = vsel %vm2305, %v4380, 0
    %4384 = vmatpush.bf16.msra.mxu0 0
    %4385 = vmatpush.bf16.msra.mxu0 0
    %4386 = vmatpush.bf16.msra.mxu0 0
    %4387 = vmatpush.bf16.msra.mxu0 0
    %4388 = vmatpush.bf16.msra.mxu0 0
    %4389 = vmatpush.bf16.msra.mxu0 0
    %4390 = vmatpush.bf16.msra.mxu0 0
    %4391 = vmatpush.bf16.msra.mxu0 %v2300
    %4392 = vmatmul.bf16.gmra.mxu0 %v4382
    %v4393 = vpop.f32.mrf.mxu0
    %v4394 = vadd.f32 0.0, %v4393
    %v4395 = vpop.f32.mrf.mxu0
    %4396 = vdwg.mxu0
    %4397 = vmatpush.bf16.msra.mxu0 0
    %4398 = vmatpush.bf16.msra.mxu0 0
    %4399 = vmatpush.bf16.msra.mxu0 0
    %4400 = vmatpush.bf16.msra.mxu0 0
    %4401 = vmatpush.bf16.msra.mxu0 0
    %4402 = vmatpush.bf16.msra.mxu0 0
    %4403 = vmatpush.bf16.msra.mxu0 0
    %4404 = vmatpush.bf16.msra.mxu0 %v2301
    %4405 = vmatmul.bf16.gmra.mxu0 %v4382
    %v4406 = vpop.f32.mrf.mxu0
    %v4407 = vadd.f32 0.0, %v4406
    %v4408 = vpop.f32.mrf.mxu0
    %4409 = vdwg.mxu0
    %4410 = vmatpush.bf16.msra.mxu0 0
    %4411 = vmatpush.bf16.msra.mxu0 0
    %4412 = vmatpush.bf16.msra.mxu0 0
    %4413 = vmatpush.bf16.msra.mxu0 0
    %4414 = vmatpush.bf16.msra.mxu0 0
    %4415 = vmatpush.bf16.msra.mxu0 0
    %4416 = vmatpush.bf16.msra.mxu0 0
    %4417 = vmatpush.bf16.msra.mxu0 %v2302
    %4418 = vmatmul.bf16.gmra.mxu0 %v4382
    %v4419 = vpop.f32.mrf.mxu0
    %v4420 = vadd.f32 0.0, %v4419
    %v4421 = vpop.f32.mrf.mxu0
    %4422 = vdwg.mxu0
    %4423 = vmatpush.bf16.msra.mxu0 0
    %4424 = vmatpush.bf16.msra.mxu0 0
    %4425 = vmatpush.bf16.msra.mxu0 0
    %4426 = vmatpush.bf16.msra.mxu0 0
    %4427 = vmatpush.bf16.msra.mxu0 0
    %4428 = vmatpush.bf16.msra.mxu0 0
    %4429 = vmatpush.bf16.msra.mxu0 0
    %4430 = vmatpush.bf16.msra.mxu0 %v2303
    %4431 = vmatmul.bf16.gmra.mxu0 %v4382
    %v4432 = vpop.f32.mrf.mxu0
    %v4433 = vadd.f32 0.0, %v4432
    %v4434 = vpop.f32.mrf.mxu0
    %4435 = vdwg.mxu0
    %v4436 = vpack.c.bf16 %v4394, %v4394
    %v4437 = vpack.c.bf16 %v4407, %v4407
    %v4438 = vpack.c.bf16 %v4420, %v4420
    %v4439 = vpack.c.bf16 %v4433, %v4433
    %s4440 = scalar_lea.vmem [#allocation7], 2048
    %v4441 = vld [vmem:[%s4440] sm:$0xff]
    %v4442 = vld [vmem:[%s4440 + $0x8] sm:$0xff]
    %v4443 = vld [vmem:[%s4440 + $0x10] sm:$0xff]
    %v4444 = vld [vmem:[%s4440 + $0x18] sm:$0xff]
    %v4445 = vld [vmem:[%s4440 + $0x20] sm:$0xff]
    %v4446 = vld [vmem:[%s4440 + $0x28] sm:$0xff]
    %v4447 = vld [vmem:[%s4440 + $0x30] sm:$0xff]
    %v4448 = vld [vmem:[%s4440 + $0x38] sm:$0xff]
    %v4449 = vld [vmem:[%s4440 + $0x40] sm:$0xff]
    %v4450 = vld [vmem:[%s4440 + $0x48] sm:$0xff]
    %v4451 = vld [vmem:[%s4440 + $0x50] sm:$0xff]
    %v4452 = vld [vmem:[%s4440 + $0x58] sm:$0xff]
    %v4453 = vld [vmem:[%s4440 + $0x60] sm:$0xff]
    %v4454 = vld [vmem:[%s4440 + $0x68] sm:$0xff]
    %v4455 = vld [vmem:[%s4440 + $0x70] sm:$0xff]
    %v4456 = vld [vmem:[%s4440 + $0x78] sm:$0xff]
    %v4457 = vld [vmem:[%s4440 + $0x80] sm:$0xff]
    %v4458 = vld [vmem:[%s4440 + $0x88] sm:$0xff]
    %v4459 = vld [vmem:[%s4440 + $0x90] sm:$0xff]
    %v4460 = vld [vmem:[%s4440 + $0x98] sm:$0xff]
    %v4461 = vld [vmem:[%s4440 + $0xa0] sm:$0xff]
    %v4462 = vld [vmem:[%s4440 + $0xa8] sm:$0xff]
    %v4463 = vld [vmem:[%s4440 + $0xb0] sm:$0xff]
    %v4464 = vld [vmem:[%s4440 + $0xb8] sm:$0xff]
    %v4465 = vld [vmem:[%s4440 + $0xc0] sm:$0xff]
    %v4466 = vld [vmem:[%s4440 + $0xc8] sm:$0xff]
    %v4467 = vld [vmem:[%s4440 + $0xd0] sm:$0xff]
    %v4468 = vld [vmem:[%s4440 + $0xd8] sm:$0xff]
    %v4469 = vld [vmem:[%s4440 + $0xe0] sm:$0xff]
    %v4470 = vld [vmem:[%s4440 + $0xe8] sm:$0xff]
    %v4471 = vld [vmem:[%s4440 + $0xf0] sm:$0xff]
    %v4472 = vld [vmem:[%s4440 + $0xf8] sm:$0xff]
    %v4473 = vld [vmem:[%s4440 + $0x100] sm:$0xff]
    %v4474 = vld [vmem:[%s4440 + $0x108] sm:$0xff]
    %v4475 = vld [vmem:[%s4440 + $0x110] sm:$0xff]
    %v4476 = vld [vmem:[%s4440 + $0x118] sm:$0xff]
    %v4477 = vld [vmem:[%s4440 + $0x120] sm:$0xff]
    %v4478 = vld [vmem:[%s4440 + $0x128] sm:$0xff]
    %v4479 = vld [vmem:[%s4440 + $0x130] sm:$0xff]
    %v4480 = vld [vmem:[%s4440 + $0x138] sm:$0xff]
    %v4481 = vld [vmem:[%s4440 + $0x140] sm:$0xff]
    %v4482 = vld [vmem:[%s4440 + $0x148] sm:$0xff]
    %v4483 = vld [vmem:[%s4440 + $0x150] sm:$0xff]
    %v4484 = vld [vmem:[%s4440 + $0x158] sm:$0xff]
    %v4485 = vld [vmem:[%s4440 + $0x160] sm:$0xff]
    %v4486 = vld [vmem:[%s4440 + $0x168] sm:$0xff]
    %v4487 = vld [vmem:[%s4440 + $0x170] sm:$0xff]
    %v4488 = vld [vmem:[%s4440 + $0x178] sm:$0xff]
    %v4489 = vld [vmem:[%s4440 + $0x180] sm:$0xff]
    %v4490 = vld [vmem:[%s4440 + $0x188] sm:$0xff]
    %v4491 = vld [vmem:[%s4440 + $0x190] sm:$0xff]
    %v4492 = vld [vmem:[%s4440 + $0x198] sm:$0xff]
    %v4493 = vld [vmem:[%s4440 + $0x1a0] sm:$0xff]
    %v4494 = vld [vmem:[%s4440 + $0x1a8] sm:$0xff]
    %v4495 = vld [vmem:[%s4440 + $0x1b0] sm:$0xff]
    %v4496 = vld [vmem:[%s4440 + $0x1b8] sm:$0xff]
    %v4497 = vld [vmem:[%s4440 + $0x1c0] sm:$0xff]
    %v4498 = vld [vmem:[%s4440 + $0x1c8] sm:$0xff]
    %v4499 = vld [vmem:[%s4440 + $0x1d0] sm:$0xff]
    %v4500 = vld [vmem:[%s4440 + $0x1d8] sm:$0xff]
    %v4501 = vld [vmem:[%s4440 + $0x1e0] sm:$0xff]
    %v4502 = vld [vmem:[%s4440 + $0x1e8] sm:$0xff]
    %v4503 = vld [vmem:[%s4440 + $0x1f0] sm:$0xff]
    %v4504 = vld [vmem:[%s4440 + $0x1f8] sm:$0xff]
    %v4505 = vld [vmem:[%s4440 + $0x200] sm:$0xff]
    %v4506 = vld [vmem:[%s4440 + $0x208] sm:$0xff]
    %v4507 = vld [vmem:[%s4440 + $0x210] sm:$0xff]
    %v4508 = vld [vmem:[%s4440 + $0x218] sm:$0xff]
    %v4509 = vld [vmem:[%s4440 + $0x220] sm:$0xff]
    %v4510 = vld [vmem:[%s4440 + $0x228] sm:$0xff]
    %v4511 = vld [vmem:[%s4440 + $0x230] sm:$0xff]
    %v4512 = vld [vmem:[%s4440 + $0x238] sm:$0xff]
    %v4513 = vld [vmem:[%s4440 + $0x240] sm:$0xff]
    %v4514 = vld [vmem:[%s4440 + $0x248] sm:$0xff]
    %v4515 = vld [vmem:[%s4440 + $0x250] sm:$0xff]
    %v4516 = vld [vmem:[%s4440 + $0x258] sm:$0xff]
    %v4517 = vld [vmem:[%s4440 + $0x260] sm:$0xff]
    %v4518 = vld [vmem:[%s4440 + $0x268] sm:$0xff]
    %v4519 = vld [vmem:[%s4440 + $0x270] sm:$0xff]
    %v4520 = vld [vmem:[%s4440 + $0x278] sm:$0xff]
    %v4521 = vld [vmem:[%s4440 + $0x280] sm:$0xff]
    %v4522 = vld [vmem:[%s4440 + $0x288] sm:$0xff]
    %v4523 = vld [vmem:[%s4440 + $0x290] sm:$0xff]
    %v4524 = vld [vmem:[%s4440 + $0x298] sm:$0xff]
    %v4525 = vld [vmem:[%s4440 + $0x2a0] sm:$0xff]
    %v4526 = vld [vmem:[%s4440 + $0x2a8] sm:$0xff]
    %v4527 = vld [vmem:[%s4440 + $0x2b0] sm:$0xff]
    %v4528 = vld [vmem:[%s4440 + $0x2b8] sm:$0xff]
    %v4529 = vld [vmem:[%s4440 + $0x2c0] sm:$0xff]
    %v4530 = vld [vmem:[%s4440 + $0x2c8] sm:$0xff]
    %v4531 = vld [vmem:[%s4440 + $0x2d0] sm:$0xff]
    %v4532 = vld [vmem:[%s4440 + $0x2d8] sm:$0xff]
    %v4533 = vld [vmem:[%s4440 + $0x2e0] sm:$0xff]
    %v4534 = vld [vmem:[%s4440 + $0x2e8] sm:$0xff]
    %v4535 = vld [vmem:[%s4440 + $0x2f0] sm:$0xff]
    %v4536 = vld [vmem:[%s4440 + $0x2f8] sm:$0xff]
    %v4537 = vld [vmem:[%s4440 + $0x300] sm:$0xff]
    %v4538 = vld [vmem:[%s4440 + $0x308] sm:$0xff]
    %v4539 = vld [vmem:[%s4440 + $0x310] sm:$0xff]
    %v4540 = vld [vmem:[%s4440 + $0x318] sm:$0xff]
    %v4541 = vld [vmem:[%s4440 + $0x320] sm:$0xff]
    %v4542 = vld [vmem:[%s4440 + $0x328] sm:$0xff]
    %v4543 = vld [vmem:[%s4440 + $0x330] sm:$0xff]
    %v4544 = vld [vmem:[%s4440 + $0x338] sm:$0xff]
    %v4545 = vld [vmem:[%s4440 + $0x340] sm:$0xff]
    %v4546 = vld [vmem:[%s4440 + $0x348] sm:$0xff]
    %v4547 = vld [vmem:[%s4440 + $0x350] sm:$0xff]
    %v4548 = vld [vmem:[%s4440 + $0x358] sm:$0xff]
    %v4549 = vld [vmem:[%s4440 + $0x360] sm:$0xff]
    %v4550 = vld [vmem:[%s4440 + $0x368] sm:$0xff]
    %v4551 = vld [vmem:[%s4440 + $0x370] sm:$0xff]
    %v4552 = vld [vmem:[%s4440 + $0x378] sm:$0xff]
    %v4553 = vld [vmem:[%s4440 + $0x380] sm:$0xff]
    %v4554 = vld [vmem:[%s4440 + $0x388] sm:$0xff]
    %v4555 = vld [vmem:[%s4440 + $0x390] sm:$0xff]
    %v4556 = vld [vmem:[%s4440 + $0x398] sm:$0xff]
    %v4557 = vld [vmem:[%s4440 + $0x3a0] sm:$0xff]
    %v4558 = vld [vmem:[%s4440 + $0x3a8] sm:$0xff]
    %v4559 = vld [vmem:[%s4440 + $0x3b0] sm:$0xff]
    %v4560 = vld [vmem:[%s4440 + $0x3b8] sm:$0xff]
    %v4561 = vld [vmem:[%s4440 + $0x3c0] sm:$0xff]
    %v4562 = vld [vmem:[%s4440 + $0x3c8] sm:$0xff]
    %v4563 = vld [vmem:[%s4440 + $0x3d0] sm:$0xff]
    %v4564 = vld [vmem:[%s4440 + $0x3d8] sm:$0xff]
    %v4565 = vld [vmem:[%s4440 + $0x3e0] sm:$0xff]
    %v4566 = vld [vmem:[%s4440 + $0x3e8] sm:$0xff]
    %v4567 = vld [vmem:[%s4440 + $0x3f0] sm:$0xff]
    %v4568 = vld [vmem:[%s4440 + $0x3f8] sm:$0xff]
    %v4697 = vunpack.c.l.b16 %v4441
    %v4698 = vunpack.c.h.b16 %v4441
    %v4699 = vunpack.c.l.b16 %v4442
    %v4700 = vunpack.c.h.b16 %v4442
    %v4701 = vunpack.c.l.b16 %v4443
    %v4702 = vunpack.c.h.b16 %v4443
    %v4703 = vunpack.c.l.b16 %v4444
    %v4704 = vunpack.c.h.b16 %v4444
    %v4705 = vunpack.c.l.b16 %v4445
    %v4706 = vunpack.c.h.b16 %v4445
    %v4707 = vunpack.c.l.b16 %v4446
    %v4708 = vunpack.c.h.b16 %v4446
    %v4709 = vunpack.c.l.b16 %v4447
    %v4710 = vunpack.c.h.b16 %v4447
    %v4711 = vunpack.c.l.b16 %v4448
    %v4712 = vunpack.c.h.b16 %v4448
    %v4713 = vunpack.c.l.b16 %v4449
    %v4714 = vunpack.c.h.b16 %v4449
    %v4715 = vunpack.c.l.b16 %v4450
    %v4716 = vunpack.c.h.b16 %v4450
    %v4717 = vunpack.c.l.b16 %v4451
    %v4718 = vunpack.c.h.b16 %v4451
    %v4719 = vunpack.c.l.b16 %v4452
    %v4720 = vunpack.c.h.b16 %v4452
    %v4721 = vunpack.c.l.b16 %v4453
    %v4722 = vunpack.c.h.b16 %v4453
    %v4723 = vunpack.c.l.b16 %v4454
    %v4724 = vunpack.c.h.b16 %v4454
    %v4725 = vunpack.c.l.b16 %v4455
    %v4726 = vunpack.c.h.b16 %v4455
    %v4727 = vunpack.c.l.b16 %v4456
    %v4728 = vunpack.c.h.b16 %v4456
    %v4729 = vunpack.c.l.b16 %v4457
    %v4730 = vunpack.c.h.b16 %v4457
    %v4731 = vunpack.c.l.b16 %v4458
    %v4732 = vunpack.c.h.b16 %v4458
    %v4733 = vunpack.c.l.b16 %v4459
    %v4734 = vunpack.c.h.b16 %v4459
    %v4735 = vunpack.c.l.b16 %v4460
    %v4736 = vunpack.c.h.b16 %v4460
    %v4737 = vunpack.c.l.b16 %v4461
    %v4738 = vunpack.c.h.b16 %v4461
    %v4739 = vunpack.c.l.b16 %v4462
    %v4740 = vunpack.c.h.b16 %v4462
    %v4741 = vunpack.c.l.b16 %v4463
    %v4742 = vunpack.c.h.b16 %v4463
    %v4743 = vunpack.c.l.b16 %v4464
    %v4744 = vunpack.c.h.b16 %v4464
    %v4745 = vunpack.c.l.b16 %v4465
    %v4746 = vunpack.c.h.b16 %v4465
    %v4747 = vunpack.c.l.b16 %v4466
    %v4748 = vunpack.c.h.b16 %v4466
    %v4749 = vunpack.c.l.b16 %v4467
    %v4750 = vunpack.c.h.b16 %v4467
    %v4751 = vunpack.c.l.b16 %v4468
    %v4752 = vunpack.c.h.b16 %v4468
    %v4753 = vunpack.c.l.b16 %v4469
    %v4754 = vunpack.c.h.b16 %v4469
    %v4755 = vunpack.c.l.b16 %v4470
    %v4756 = vunpack.c.h.b16 %v4470
    %v4757 = vunpack.c.l.b16 %v4471
    %v4758 = vunpack.c.h.b16 %v4471
    %v4759 = vunpack.c.l.b16 %v4472
    %v4760 = vunpack.c.h.b16 %v4472
    %v4761 = vunpack.c.l.b16 %v4473
    %v4762 = vunpack.c.h.b16 %v4473
    %v4763 = vunpack.c.l.b16 %v4474
    %v4764 = vunpack.c.h.b16 %v4474
    %v4765 = vunpack.c.l.b16 %v4475
    %v4766 = vunpack.c.h.b16 %v4475
    %v4767 = vunpack.c.l.b16 %v4476
    %v4768 = vunpack.c.h.b16 %v4476
    %v4769 = vunpack.c.l.b16 %v4477
    %v4770 = vunpack.c.h.b16 %v4477
    %v4771 = vunpack.c.l.b16 %v4478
    %v4772 = vunpack.c.h.b16 %v4478
    %v4773 = vunpack.c.l.b16 %v4479
    %v4774 = vunpack.c.h.b16 %v4479
    %v4775 = vunpack.c.l.b16 %v4480
    %v4776 = vunpack.c.h.b16 %v4480
    %v4777 = vunpack.c.l.b16 %v4481
    %v4778 = vunpack.c.h.b16 %v4481
    %v4779 = vunpack.c.l.b16 %v4482
    %v4780 = vunpack.c.h.b16 %v4482
    %v4781 = vunpack.c.l.b16 %v4483
    %v4782 = vunpack.c.h.b16 %v4483
    %v4783 = vunpack.c.l.b16 %v4484
    %v4784 = vunpack.c.h.b16 %v4484
    %v4785 = vunpack.c.l.b16 %v4485
    %v4786 = vunpack.c.h.b16 %v4485
    %v4787 = vunpack.c.l.b16 %v4486
    %v4788 = vunpack.c.h.b16 %v4486
    %v4789 = vunpack.c.l.b16 %v4487
    %v4790 = vunpack.c.h.b16 %v4487
    %v4791 = vunpack.c.l.b16 %v4488
    %v4792 = vunpack.c.h.b16 %v4488
    %v4793 = vunpack.c.l.b16 %v4489
    %v4794 = vunpack.c.h.b16 %v4489
    %v4795 = vunpack.c.l.b16 %v4490
    %v4796 = vunpack.c.h.b16 %v4490
    %v4797 = vunpack.c.l.b16 %v4491
    %v4798 = vunpack.c.h.b16 %v4491
    %v4799 = vunpack.c.l.b16 %v4492
    %v4800 = vunpack.c.h.b16 %v4492
    %v4801 = vunpack.c.l.b16 %v4493
    %v4802 = vunpack.c.h.b16 %v4493
    %v4803 = vunpack.c.l.b16 %v4494
    %v4804 = vunpack.c.h.b16 %v4494
    %v4805 = vunpack.c.l.b16 %v4495
    %v4806 = vunpack.c.h.b16 %v4495
    %v4807 = vunpack.c.l.b16 %v4496
    %v4808 = vunpack.c.h.b16 %v4496
    %v4809 = vunpack.c.l.b16 %v4497
    %v4810 = vunpack.c.h.b16 %v4497
    %v4811 = vunpack.c.l.b16 %v4498
    %v4812 = vunpack.c.h.b16 %v4498
    %v4813 = vunpack.c.l.b16 %v4499
    %v4814 = vunpack.c.h.b16 %v4499
    %v4815 = vunpack.c.l.b16 %v4500
    %v4816 = vunpack.c.h.b16 %v4500
    %v4817 = vunpack.c.l.b16 %v4501
    %v4818 = vunpack.c.h.b16 %v4501
    %v4819 = vunpack.c.l.b16 %v4502
    %v4820 = vunpack.c.h.b16 %v4502
    %v4821 = vunpack.c.l.b16 %v4503
    %v4822 = vunpack.c.h.b16 %v4503
    %v4823 = vunpack.c.l.b16 %v4504
    %v4824 = vunpack.c.h.b16 %v4504
    %v4825 = vunpack.c.l.b16 %v4505
    %v4826 = vunpack.c.h.b16 %v4505
    %v4827 = vunpack.c.l.b16 %v4506
    %v4828 = vunpack.c.h.b16 %v4506
    %v4829 = vunpack.c.l.b16 %v4507
    %v4830 = vunpack.c.h.b16 %v4507
    %v4831 = vunpack.c.l.b16 %v4508
    %v4832 = vunpack.c.h.b16 %v4508
    %v4833 = vunpack.c.l.b16 %v4509
    %v4834 = vunpack.c.h.b16 %v4509
    %v4835 = vunpack.c.l.b16 %v4510
    %v4836 = vunpack.c.h.b16 %v4510
    %v4837 = vunpack.c.l.b16 %v4511
    %v4838 = vunpack.c.h.b16 %v4511
    %v4839 = vunpack.c.l.b16 %v4512
    %v4840 = vunpack.c.h.b16 %v4512
    %v4841 = vunpack.c.l.b16 %v4513
    %v4842 = vunpack.c.h.b16 %v4513
    %v4843 = vunpack.c.l.b16 %v4514
    %v4844 = vunpack.c.h.b16 %v4514
    %v4845 = vunpack.c.l.b16 %v4515
    %v4846 = vunpack.c.h.b16 %v4515
    %v4847 = vunpack.c.l.b16 %v4516
    %v4848 = vunpack.c.h.b16 %v4516
    %v4849 = vunpack.c.l.b16 %v4517
    %v4850 = vunpack.c.h.b16 %v4517
    %v4851 = vunpack.c.l.b16 %v4518
    %v4852 = vunpack.c.h.b16 %v4518
    %v4853 = vunpack.c.l.b16 %v4519
    %v4854 = vunpack.c.h.b16 %v4519
    %v4855 = vunpack.c.l.b16 %v4520
    %v4856 = vunpack.c.h.b16 %v4520
    %v4857 = vunpack.c.l.b16 %v4521
    %v4858 = vunpack.c.h.b16 %v4521
    %v4859 = vunpack.c.l.b16 %v4522
    %v4860 = vunpack.c.h.b16 %v4522
    %v4861 = vunpack.c.l.b16 %v4523
    %v4862 = vunpack.c.h.b16 %v4523
    %v4863 = vunpack.c.l.b16 %v4524
    %v4864 = vunpack.c.h.b16 %v4524
    %v4865 = vunpack.c.l.b16 %v4525
    %v4866 = vunpack.c.h.b16 %v4525
    %v4867 = vunpack.c.l.b16 %v4526
    %v4868 = vunpack.c.h.b16 %v4526
    %v4869 = vunpack.c.l.b16 %v4527
    %v4870 = vunpack.c.h.b16 %v4527
    %v4871 = vunpack.c.l.b16 %v4528
    %v4872 = vunpack.c.h.b16 %v4528
    %v4873 = vunpack.c.l.b16 %v4529
    %v4874 = vunpack.c.h.b16 %v4529
    %v4875 = vunpack.c.l.b16 %v4530
    %v4876 = vunpack.c.h.b16 %v4530
    %v4877 = vunpack.c.l.b16 %v4531
    %v4878 = vunpack.c.h.b16 %v4531
    %v4879 = vunpack.c.l.b16 %v4532
    %v4880 = vunpack.c.h.b16 %v4532
    %v4881 = vunpack.c.l.b16 %v4533
    %v4882 = vunpack.c.h.b16 %v4533
    %v4883 = vunpack.c.l.b16 %v4534
    %v4884 = vunpack.c.h.b16 %v4534
    %v4885 = vunpack.c.l.b16 %v4535
    %v4886 = vunpack.c.h.b16 %v4535
    %v4887 = vunpack.c.l.b16 %v4536
    %v4888 = vunpack.c.h.b16 %v4536
    %v4889 = vunpack.c.l.b16 %v4537
    %v4890 = vunpack.c.h.b16 %v4537
    %v4891 = vunpack.c.l.b16 %v4538
    %v4892 = vunpack.c.h.b16 %v4538
    %v4893 = vunpack.c.l.b16 %v4539
    %v4894 = vunpack.c.h.b16 %v4539
    %v4895 = vunpack.c.l.b16 %v4540
    %v4896 = vunpack.c.h.b16 %v4540
    %v4897 = vunpack.c.l.b16 %v4541
    %v4898 = vunpack.c.h.b16 %v4541
    %v4899 = vunpack.c.l.b16 %v4542
    %v4900 = vunpack.c.h.b16 %v4542
    %v4901 = vunpack.c.l.b16 %v4543
    %v4902 = vunpack.c.h.b16 %v4543
    %v4903 = vunpack.c.l.b16 %v4544
    %v4904 = vunpack.c.h.b16 %v4544
    %v4905 = vunpack.c.l.b16 %v4545
    %v4906 = vunpack.c.h.b16 %v4545
    %v4907 = vunpack.c.l.b16 %v4546
    %v4908 = vunpack.c.h.b16 %v4546
    %v4909 = vunpack.c.l.b16 %v4547
    %v4910 = vunpack.c.h.b16 %v4547
    %v4911 = vunpack.c.l.b16 %v4548
    %v4912 = vunpack.c.h.b16 %v4548
    %v4913 = vunpack.c.l.b16 %v4549
    %v4914 = vunpack.c.h.b16 %v4549
    %v4915 = vunpack.c.l.b16 %v4550
    %v4916 = vunpack.c.h.b16 %v4550
    %v4917 = vunpack.c.l.b16 %v4551
    %v4918 = vunpack.c.h.b16 %v4551
    %v4919 = vunpack.c.l.b16 %v4552
    %v4920 = vunpack.c.h.b16 %v4552
    %v4921 = vunpack.c.l.b16 %v4553
    %v4922 = vunpack.c.h.b16 %v4553
    %v4923 = vunpack.c.l.b16 %v4554
    %v4924 = vunpack.c.h.b16 %v4554
    %v4925 = vunpack.c.l.b16 %v4555
    %v4926 = vunpack.c.h.b16 %v4555
    %v4927 = vunpack.c.l.b16 %v4556
    %v4928 = vunpack.c.h.b16 %v4556
    %v4929 = vunpack.c.l.b16 %v4557
    %v4930 = vunpack.c.h.b16 %v4557
    %v4931 = vunpack.c.l.b16 %v4558
    %v4932 = vunpack.c.h.b16 %v4558
    %v4933 = vunpack.c.l.b16 %v4559
    %v4934 = vunpack.c.h.b16 %v4559
    %v4935 = vunpack.c.l.b16 %v4560
    %v4936 = vunpack.c.h.b16 %v4560
    %v4937 = vunpack.c.l.b16 %v4561
    %v4938 = vunpack.c.h.b16 %v4561
    %v4939 = vunpack.c.l.b16 %v4562
    %v4940 = vunpack.c.h.b16 %v4562
    %v4941 = vunpack.c.l.b16 %v4563
    %v4942 = vunpack.c.h.b16 %v4563
    %v4943 = vunpack.c.l.b16 %v4564
    %v4944 = vunpack.c.h.b16 %v4564
    %v4945 = vunpack.c.l.b16 %v4565
    %v4946 = vunpack.c.h.b16 %v4565
    %v4947 = vunpack.c.l.b16 %v4566
    %v4948 = vunpack.c.h.b16 %v4566
    %v4949 = vunpack.c.l.b16 %v4567
    %v4950 = vunpack.c.h.b16 %v4567
    %v4951 = vunpack.c.l.b16 %v4568
    %v4952 = vunpack.c.h.b16 %v4568
    %v4953 = vpack.c.b16 %v4701, %v4697
    %v4954 = vpack.c.b16 %v4702, %v4698
    %v4955 = vpack.c.b16 %v4703, %v4699
    %v4956 = vpack.c.b16 %v4704, %v4700
    %v4957 = vpack.c.b16 %v4709, %v4705
    %v4958 = vpack.c.b16 %v4710, %v4706
    %v4959 = vpack.c.b16 %v4711, %v4707
    %v4960 = vpack.c.b16 %v4712, %v4708
    %v4961 = vpack.c.b16 %v4717, %v4713
    %v4962 = vpack.c.b16 %v4718, %v4714
    %v4963 = vpack.c.b16 %v4719, %v4715
    %v4964 = vpack.c.b16 %v4720, %v4716
    %v4965 = vpack.c.b16 %v4725, %v4721
    %v4966 = vpack.c.b16 %v4726, %v4722
    %v4967 = vpack.c.b16 %v4727, %v4723
    %v4968 = vpack.c.b16 %v4728, %v4724
    %v4969 = vpack.c.b16 %v4733, %v4729
    %v4970 = vpack.c.b16 %v4734, %v4730
    %v4971 = vpack.c.b16 %v4735, %v4731
    %v4972 = vpack.c.b16 %v4736, %v4732
    %v4973 = vpack.c.b16 %v4741, %v4737
    %v4974 = vpack.c.b16 %v4742, %v4738
    %v4975 = vpack.c.b16 %v4743, %v4739
    %v4976 = vpack.c.b16 %v4744, %v4740
    %v4977 = vpack.c.b16 %v4749, %v4745
    %v4978 = vpack.c.b16 %v4750, %v4746
    %v4979 = vpack.c.b16 %v4751, %v4747
    %v4980 = vpack.c.b16 %v4752, %v4748
    %v4981 = vpack.c.b16 %v4757, %v4753
    %v4982 = vpack.c.b16 %v4758, %v4754
    %v4983 = vpack.c.b16 %v4759, %v4755
    %v4984 = vpack.c.b16 %v4760, %v4756
    %v4985 = vpack.c.b16 %v4765, %v4761
    %v4986 = vpack.c.b16 %v4766, %v4762
    %v4987 = vpack.c.b16 %v4767, %v4763
    %v4988 = vpack.c.b16 %v4768, %v4764
    %v4989 = vpack.c.b16 %v4773, %v4769
    %v4990 = vpack.c.b16 %v4774, %v4770
    %v4991 = vpack.c.b16 %v4775, %v4771
    %v4992 = vpack.c.b16 %v4776, %v4772
    %v4993 = vpack.c.b16 %v4781, %v4777
    %v4994 = vpack.c.b16 %v4782, %v4778
    %v4995 = vpack.c.b16 %v4783, %v4779
    %v4996 = vpack.c.b16 %v4784, %v4780
    %v4997 = vpack.c.b16 %v4789, %v4785
    %v4998 = vpack.c.b16 %v4790, %v4786
    %v4999 = vpack.c.b16 %v4791, %v4787
    %v5000 = vpack.c.b16 %v4792, %v4788
    %v5001 = vpack.c.b16 %v4797, %v4793
    %v5002 = vpack.c.b16 %v4798, %v4794
    %v5003 = vpack.c.b16 %v4799, %v4795
    %v5004 = vpack.c.b16 %v4800, %v4796
    %v5005 = vpack.c.b16 %v4805, %v4801
    %v5006 = vpack.c.b16 %v4806, %v4802
    %v5007 = vpack.c.b16 %v4807, %v4803
    %v5008 = vpack.c.b16 %v4808, %v4804
    %v5009 = vpack.c.b16 %v4813, %v4809
    %v5010 = vpack.c.b16 %v4814, %v4810
    %v5011 = vpack.c.b16 %v4815, %v4811
    %v5012 = vpack.c.b16 %v4816, %v4812
    %v5013 = vpack.c.b16 %v4821, %v4817
    %v5014 = vpack.c.b16 %v4822, %v4818
    %v5015 = vpack.c.b16 %v4823, %v4819
    %v5016 = vpack.c.b16 %v4824, %v4820
    %v5017 = vpack.c.b16 %v4829, %v4825
    %v5018 = vpack.c.b16 %v4830, %v4826
    %v5019 = vpack.c.b16 %v4831, %v4827
    %v5020 = vpack.c.b16 %v4832, %v4828
    %v5021 = vpack.c.b16 %v4837, %v4833
    %v5022 = vpack.c.b16 %v4838, %v4834
    %v5023 = vpack.c.b16 %v4839, %v4835
    %v5024 = vpack.c.b16 %v4840, %v4836
    %v5025 = vpack.c.b16 %v4845, %v4841
    %v5026 = vpack.c.b16 %v4846, %v4842
    %v5027 = vpack.c.b16 %v4847, %v4843
    %v5028 = vpack.c.b16 %v4848, %v4844
    %v5029 = vpack.c.b16 %v4853, %v4849
    %v5030 = vpack.c.b16 %v4854, %v4850
    %v5031 = vpack.c.b16 %v4855, %v4851
    %v5032 = vpack.c.b16 %v4856, %v4852
    %v5033 = vpack.c.b16 %v4861, %v4857
    %v5034 = vpack.c.b16 %v4862, %v4858
    %v5035 = vpack.c.b16 %v4863, %v4859
    %v5036 = vpack.c.b16 %v4864, %v4860
    %v5037 = vpack.c.b16 %v4869, %v4865
    %v5038 = vpack.c.b16 %v4870, %v4866
    %v5039 = vpack.c.b16 %v4871, %v4867
    %v5040 = vpack.c.b16 %v4872, %v4868
    %v5041 = vpack.c.b16 %v4877, %v4873
    %v5042 = vpack.c.b16 %v4878, %v4874
    %v5043 = vpack.c.b16 %v4879, %v4875
    %v5044 = vpack.c.b16 %v4880, %v4876
    %v5045 = vpack.c.b16 %v4885, %v4881
    %v5046 = vpack.c.b16 %v4886, %v4882
    %v5047 = vpack.c.b16 %v4887, %v4883
    %v5048 = vpack.c.b16 %v4888, %v4884
    %v5049 = vpack.c.b16 %v4893, %v4889
    %v5050 = vpack.c.b16 %v4894, %v4890
    %v5051 = vpack.c.b16 %v4895, %v4891
    %v5052 = vpack.c.b16 %v4896, %v4892
    %v5053 = vpack.c.b16 %v4901, %v4897
    %v5054 = vpack.c.b16 %v4902, %v4898
    %v5055 = vpack.c.b16 %v4903, %v4899
    %v5056 = vpack.c.b16 %v4904, %v4900
    %v5057 = vpack.c.b16 %v4909, %v4905
    %v5058 = vpack.c.b16 %v4910, %v4906
    %v5059 = vpack.c.b16 %v4911, %v4907
    %v5060 = vpack.c.b16 %v4912, %v4908
    %v5061 = vpack.c.b16 %v4917, %v4913
    %v5062 = vpack.c.b16 %v4918, %v4914
    %v5063 = vpack.c.b16 %v4919, %v4915
    %v5064 = vpack.c.b16 %v4920, %v4916
    %v5065 = vpack.c.b16 %v4925, %v4921
    %v5066 = vpack.c.b16 %v4926, %v4922
    %v5067 = vpack.c.b16 %v4927, %v4923
    %v5068 = vpack.c.b16 %v4928, %v4924
    %v5069 = vpack.c.b16 %v4933, %v4929
    %v5070 = vpack.c.b16 %v4934, %v4930
    %v5071 = vpack.c.b16 %v4935, %v4931
    %v5072 = vpack.c.b16 %v4936, %v4932
    %v5073 = vpack.c.b16 %v4941, %v4937
    %v5074 = vpack.c.b16 %v4942, %v4938
    %v5075 = vpack.c.b16 %v4943, %v4939
    %v5076 = vpack.c.b16 %v4944, %v4940
    %v5077 = vpack.c.b16 %v4949, %v4945
    %v5078 = vpack.c.b16 %v4950, %v4946
    %v5079 = vpack.c.b16 %v4951, %v4947
    %v5080 = vpack.c.b16 %v4952, %v4948
    %5209 = vmatpush.bf16.msra.mxu0 %v4981
    %5210 = vmatpush.bf16.msra.mxu0 %v4977
    %5211 = vmatpush.bf16.msra.mxu0 %v4973
    %5212 = vmatpush.bf16.msra.mxu0 %v4969
    %5213 = vmatpush.bf16.msra.mxu0 %v4965
    %5214 = vmatpush.bf16.msra.mxu0 %v4961
    %5215 = vmatpush.bf16.msra.mxu0 %v4957
    %5216 = vmatpush.bf16.msra.mxu0 %v4953
    %5217 = vmatmul.bf16.gmra.mxu0 %v4436
    %v5218 = vpop.f32.mrf.mxu0
    %v5219 = vadd.f32 0.0, %v5218
    %v5220 = vpop.f32.mrf.mxu0
    %5221 = vdwg.mxu0
    %5222 = vmatpush.bf16.msra.mxu0 %v5013
    %5223 = vmatpush.bf16.msra.mxu0 %v5009
    %5224 = vmatpush.bf16.msra.mxu0 %v5005
    %5225 = vmatpush.bf16.msra.mxu0 %v5001
    %5226 = vmatpush.bf16.msra.mxu0 %v4997
    %5227 = vmatpush.bf16.msra.mxu0 %v4993
    %5228 = vmatpush.bf16.msra.mxu0 %v4989
    %5229 = vmatpush.bf16.msra.mxu0 %v4985
    %5230 = vmatmul.bf16.gmra.mxu0 %v4437
    %v5231 = vpop.f32.mrf.mxu0
    %v5232 = vadd.f32 %v5219, %v5231
    %v5233 = vpop.f32.mrf.mxu0
    %5234 = vdwg.mxu0
    %5235 = vmatpush.bf16.msra.mxu0 %v5045
    %5236 = vmatpush.bf16.msra.mxu0 %v5041
    %5237 = vmatpush.bf16.msra.mxu0 %v5037
    %5238 = vmatpush.bf16.msra.mxu0 %v5033
    %5239 = vmatpush.bf16.msra.mxu0 %v5029
    %5240 = vmatpush.bf16.msra.mxu0 %v5025
    %5241 = vmatpush.bf16.msra.mxu0 %v5021
    %5242 = vmatpush.bf16.msra.mxu0 %v5017
    %5243 = vmatmul.bf16.gmra.mxu0 %v4438
    %v5244 = vpop.f32.mrf.mxu0
    %v5245 = vadd.f32 %v5232, %v5244
    %v5246 = vpop.f32.mrf.mxu0
    %5247 = vdwg.mxu0
    %5248 = vmatpush.bf16.msra.mxu0 %v5077
    %5249 = vmatpush.bf16.msra.mxu0 %v5073
    %5250 = vmatpush.bf16.msra.mxu0 %v5069
    %5251 = vmatpush.bf16.msra.mxu0 %v5065
    %5252 = vmatpush.bf16.msra.mxu0 %v5061
    %5253 = vmatpush.bf16.msra.mxu0 %v5057
    %5254 = vmatpush.bf16.msra.mxu0 %v5053
    %5255 = vmatpush.bf16.msra.mxu0 %v5049
    %5256 = vmatmul.bf16.gmra.mxu0 %v4439
    %v5257 = vpop.f32.mrf.mxu0
    %v5258 = vadd.f32 %v5245, %v5257
    %v5259 = vpop.f32.mrf.mxu0
    %5260 = vdwg.mxu0
    %5261 = vmatpush.bf16.msra.mxu0 %v4982
    %5262 = vmatpush.bf16.msra.mxu0 %v4978
    %5263 = vmatpush.bf16.msra.mxu0 %v4974
    %5264 = vmatpush.bf16.msra.mxu0 %v4970
    %5265 = vmatpush.bf16.msra.mxu0 %v4966
    %5266 = vmatpush.bf16.msra.mxu0 %v4962
    %5267 = vmatpush.bf16.msra.mxu0 %v4958
    %5268 = vmatpush.bf16.msra.mxu0 %v4954
    %5269 = vmatmul.bf16.gmra.mxu0 %v4436
    %v5270 = vpop.f32.mrf.mxu0
    %v5271 = vadd.f32 0.0, %v5270
    %v5272 = vpop.f32.mrf.mxu0
    %5273 = vdwg.mxu0
    %5274 = vmatpush.bf16.msra.mxu0 %v5014
    %5275 = vmatpush.bf16.msra.mxu0 %v5010
    %5276 = vmatpush.bf16.msra.mxu0 %v5006
    %5277 = vmatpush.bf16.msra.mxu0 %v5002
    %5278 = vmatpush.bf16.msra.mxu0 %v4998
    %5279 = vmatpush.bf16.msra.mxu0 %v4994
    %5280 = vmatpush.bf16.msra.mxu0 %v4990
    %5281 = vmatpush.bf16.msra.mxu0 %v4986
    %5282 = vmatmul.bf16.gmra.mxu0 %v4437
    %v5283 = vpop.f32.mrf.mxu0
    %v5284 = vadd.f32 %v5271, %v5283
    %v5285 = vpop.f32.mrf.mxu0
    %5286 = vdwg.mxu0
    %5287 = vmatpush.bf16.msra.mxu0 %v5046
    %5288 = vmatpush.bf16.msra.mxu0 %v5042
    %5289 = vmatpush.bf16.msra.mxu0 %v5038
    %5290 = vmatpush.bf16.msra.mxu0 %v5034
    %5291 = vmatpush.bf16.msra.mxu0 %v5030
    %5292 = vmatpush.bf16.msra.mxu0 %v5026
    %5293 = vmatpush.bf16.msra.mxu0 %v5022
    %5294 = vmatpush.bf16.msra.mxu0 %v5018
    %5295 = vmatmul.bf16.gmra.mxu0 %v4438
    %v5296 = vpop.f32.mrf.mxu0
    %v5297 = vadd.f32 %v5284, %v5296
    %v5298 = vpop.f32.mrf.mxu0
    %5299 = vdwg.mxu0
    %5300 = vmatpush.bf16.msra.mxu0 %v5078
    %5301 = vmatpush.bf16.msra.mxu0 %v5074
    %5302 = vmatpush.bf16.msra.mxu0 %v5070
    %5303 = vmatpush.bf16.msra.mxu0 %v5066
    %5304 = vmatpush.bf16.msra.mxu0 %v5062
    %5305 = vmatpush.bf16.msra.mxu0 %v5058
    %5306 = vmatpush.bf16.msra.mxu0 %v5054
    %5307 = vmatpush.bf16.msra.mxu0 %v5050
    %5308 = vmatmul.bf16.gmra.mxu0 %v4439
    %v5309 = vpop.f32.mrf.mxu0
    %v5310 = vadd.f32 %v5297, %v5309
    %v5311 = vpop.f32.mrf.mxu0
    %5312 = vdwg.mxu0
    %5313 = vmatpush.bf16.msra.mxu0 %v4983
    %5314 = vmatpush.bf16.msra.mxu0 %v4979
    %5315 = vmatpush.bf16.msra.mxu0 %v4975
    %5316 = vmatpush.bf16.msra.mxu0 %v4971
    %5317 = vmatpush.bf16.msra.mxu0 %v4967
    %5318 = vmatpush.bf16.msra.mxu0 %v4963
    %5319 = vmatpush.bf16.msra.mxu0 %v4959
    %5320 = vmatpush.bf16.msra.mxu0 %v4955
    %5321 = vmatmul.bf16.gmra.mxu0 %v4436
    %v5322 = vpop.f32.mrf.mxu0
    %v5323 = vadd.f32 0.0, %v5322
    %v5324 = vpop.f32.mrf.mxu0
    %5325 = vdwg.mxu0
    %5326 = vmatpush.bf16.msra.mxu0 %v5015
    %5327 = vmatpush.bf16.msra.mxu0 %v5011
    %5328 = vmatpush.bf16.msra.mxu0 %v5007
    %5329 = vmatpush.bf16.msra.mxu0 %v5003
    %5330 = vmatpush.bf16.msra.mxu0 %v4999
    %5331 = vmatpush.bf16.msra.mxu0 %v4995
    %5332 = vmatpush.bf16.msra.mxu0 %v4991
    %5333 = vmatpush.bf16.msra.mxu0 %v4987
    %5334 = vmatmul.bf16.gmra.mxu0 %v4437
    %v5335 = vpop.f32.mrf.mxu0
    %v5336 = vadd.f32 %v5323, %v5335
    %v5337 = vpop.f32.mrf.mxu0
    %5338 = vdwg.mxu0
    %5339 = vmatpush.bf16.msra.mxu0 %v5047
    %5340 = vmatpush.bf16.msra.mxu0 %v5043
    %5341 = vmatpush.bf16.msra.mxu0 %v5039
    %5342 = vmatpush.bf16.msra.mxu0 %v5035
    %5343 = vmatpush.bf16.msra.mxu0 %v5031
    %5344 = vmatpush.bf16.msra.mxu0 %v5027
    %5345 = vmatpush.bf16.msra.mxu0 %v5023
    %5346 = vmatpush.bf16.msra.mxu0 %v5019
    %5347 = vmatmul.bf16.gmra.mxu0 %v4438
    %v5348 = vpop.f32.mrf.mxu0
    %v5349 = vadd.f32 %v5336, %v5348
    %v5350 = vpop.f32.mrf.mxu0
    %5351 = vdwg.mxu0
    %5352 = vmatpush.bf16.msra.mxu0 %v5079
    %5353 = vmatpush.bf16.msra.mxu0 %v5075
    %5354 = vmatpush.bf16.msra.mxu0 %v5071
    %5355 = vmatpush.bf16.msra.mxu0 %v5067
    %5356 = vmatpush.bf16.msra.mxu0 %v5063
    %5357 = vmatpush.bf16.msra.mxu0 %v5059
    %5358 = vmatpush.bf16.msra.mxu0 %v5055
    %5359 = vmatpush.bf16.msra.mxu0 %v5051
    %5360 = vmatmul.bf16.gmra.mxu0 %v4439
    %v5361 = vpop.f32.mrf.mxu0
    %v5362 = vadd.f32 %v5349, %v5361
    %v5363 = vpop.f32.mrf.mxu0
    %5364 = vdwg.mxu0
    %5365 = vmatpush.bf16.msra.mxu0 %v4984
    %5366 = vmatpush.bf16.msra.mxu0 %v4980
    %5367 = vmatpush.bf16.msra.mxu0 %v4976
    %5368 = vmatpush.bf16.msra.mxu0 %v4972
    %5369 = vmatpush.bf16.msra.mxu0 %v4968
    %5370 = vmatpush.bf16.msra.mxu0 %v4964
    %5371 = vmatpush.bf16.msra.mxu0 %v4960
    %5372 = vmatpush.bf16.msra.mxu0 %v4956
    %5373 = vmatmul.bf16.gmra.mxu0 %v4436
    %v5374 = vpop.f32.mrf.mxu0
    %v5375 = vadd.f32 0.0, %v5374
    %v5376 = vpop.f32.mrf.mxu0
    %5377 = vdwg.mxu0
    %5378 = vmatpush.bf16.msra.mxu0 %v5016
    %5379 = vmatpush.bf16.msra.mxu0 %v5012
    %5380 = vmatpush.bf16.msra.mxu0 %v5008
    %5381 = vmatpush.bf16.msra.mxu0 %v5004
    %5382 = vmatpush.bf16.msra.mxu0 %v5000
    %5383 = vmatpush.bf16.msra.mxu0 %v4996
    %5384 = vmatpush.bf16.msra.mxu0 %v4992
    %5385 = vmatpush.bf16.msra.mxu0 %v4988
    %5386 = vmatmul.bf16.gmra.mxu0 %v4437
    %v5387 = vpop.f32.mrf.mxu0
    %v5388 = vadd.f32 %v5375, %v5387
    %v5389 = vpop.f32.mrf.mxu0
    %5390 = vdwg.mxu0
    %5391 = vmatpush.bf16.msra.mxu0 %v5048
    %5392 = vmatpush.bf16.msra.mxu0 %v5044
    %5393 = vmatpush.bf16.msra.mxu0 %v5040
    %5394 = vmatpush.bf16.msra.mxu0 %v5036
    %5395 = vmatpush.bf16.msra.mxu0 %v5032
    %5396 = vmatpush.bf16.msra.mxu0 %v5028
    %5397 = vmatpush.bf16.msra.mxu0 %v5024
    %5398 = vmatpush.bf16.msra.mxu0 %v5020
    %5399 = vmatmul.bf16.gmra.mxu0 %v4438
    %v5400 = vpop.f32.mrf.mxu0
    %v5401 = vadd.f32 %v5388, %v5400
    %v5402 = vpop.f32.mrf.mxu0
    %5403 = vdwg.mxu0
    %5404 = vmatpush.bf16.msra.mxu0 %v5080
    %5405 = vmatpush.bf16.msra.mxu0 %v5076
    %5406 = vmatpush.bf16.msra.mxu0 %v5072
    %5407 = vmatpush.bf16.msra.mxu0 %v5068
    %5408 = vmatpush.bf16.msra.mxu0 %v5064
    %5409 = vmatpush.bf16.msra.mxu0 %v5060
    %5410 = vmatpush.bf16.msra.mxu0 %v5056
    %5411 = vmatpush.bf16.msra.mxu0 %v5052
    %5412 = vmatmul.bf16.gmra.mxu0 %v4439
    %v5413 = vpop.f32.mrf.mxu0
    %v5414 = vadd.f32 %v5401, %v5413
    %v5415 = vpop.f32.mrf.mxu0
    %5416 = vdwg.mxu0
    %v5417 = vadd.f32 %v4220, %v5258
    %v5418 = vadd.f32 %v4272, %v5310
    %v5419 = vadd.f32 %v4324, %v5362
    %v5420 = vadd.f32 %v4376, %v5414
    %v5421 = vld [vmem:[#allocation10] sm:$0xf]
    %v5423 = vperm.slane %v5421, 0
    %v5424 = vperm.slane %v5421, 1
    %v5425 = vperm.slane %v5421, 2
    %v5426 = vperm.slane %v5421, 3
    %v5431 = vadd.f32 %v5417, %v5423
    %v5432 = vadd.f32 %v5418, %v5424
    %v5433 = vadd.f32 %v5419, %v5425
    %v5434 = vadd.f32 %v5420, %v5426
    %vm5435 = vcmp.ge.f32.partialorder %v5431, 0.0
    %vm5436 = vcmp.ge.f32.partialorder %v5432, 0.0
    %vm5437 = vcmp.ge.f32.partialorder %v5433, 0.0
    %vm5438 = vcmp.ge.f32.partialorder %v5434, 0.0
    %v5439 = vmul.f32 %v5431, 0.15
    %v5440 = vmul.f32 %v5432, 0.15
    %v5441 = vmul.f32 %v5433, 0.15
    %v5442 = vmul.f32 %v5434, 0.15
    %v5443 = vsel %vm5435, %v5431, %v5439
    %v5444 = vsel %vm5436, %v5432, %v5440
    %v5445 = vsel %vm5437, %v5433, %v5441
    %v5446 = vsel %vm5438, %v5434, %v5442
    %v5447 = vpack.c.bf16 %v5443, %v5443
    %v5448 = vpack.c.bf16 %v5444, %v5444
    %v5449 = vpack.c.bf16 %v5445, %v5445
    %v5450 = vpack.c.bf16 %v5446, %v5446
    %v5451 = vld [vmem:[#allocation13] sm:$0x3]
    %vm5452 = vcmask 64512
    %v5454 = vsel %vm5452, %v5451, 0
    %vm5456 = vcmask 1043456
    %v5458 = vsel %vm5456, %v5447, 0
    %v5461 = vsel %vm5456, %v5448, 0
    %v5464 = vsel %vm5456, %v5449, 0
    %v5467 = vsel %vm5456, %v5450, 0
    %5469 = vmatpush.bf16.msra.mxu0 0
    %5470 = vmatpush.bf16.msra.mxu0 0
    %5471 = vmatpush.bf16.msra.mxu0 0
    %5472 = vmatpush.bf16.msra.mxu0 0
    %5473 = vmatpush.bf16.msra.mxu0 0
    %5474 = vmatpush.bf16.msra.mxu0 0
    %5475 = vmatpush.bf16.msra.mxu0 0
    %5476 = vmatpush.bf16.msra.mxu0 %v5458
    %5477 = vmatmul.bf16.gmra.mxu0 %v5454
    %v5478 = vpop.f32.mrf.mxu0
    %v5479 = vadd.f32 0.0, %v5478
    %v5480 = vpop.f32.mrf.mxu0
    %5481 = vdwg.mxu0
    %5482 = vmatpush.bf16.msra.mxu0 0
    %5483 = vmatpush.bf16.msra.mxu0 0
    %5484 = vmatpush.bf16.msra.mxu0 0
    %5485 = vmatpush.bf16.msra.mxu0 0
    %5486 = vmatpush.bf16.msra.mxu0 0
    %5487 = vmatpush.bf16.msra.mxu0 0
    %5488 = vmatpush.bf16.msra.mxu0 0
    %5489 = vmatpush.bf16.msra.mxu0 %v5461
    %5490 = vmatmul.bf16.gmra.mxu0 %v5454
    %v5491 = vpop.f32.mrf.mxu0
    %v5492 = vadd.f32 0.0, %v5491
    %v5493 = vpop.f32.mrf.mxu0
    %5494 = vdwg.mxu0
    %5495 = vmatpush.bf16.msra.mxu0 0
    %5496 = vmatpush.bf16.msra.mxu0 0
    %5497 = vmatpush.bf16.msra.mxu0 0
    %5498 = vmatpush.bf16.msra.mxu0 0
    %5499 = vmatpush.bf16.msra.mxu0 0
    %5500 = vmatpush.bf16.msra.mxu0 0
    %5501 = vmatpush.bf16.msra.mxu0 0
    %5502 = vmatpush.bf16.msra.mxu0 %v5464
    %5503 = vmatmul.bf16.gmra.mxu0 %v5454
    %v5504 = vpop.f32.mrf.mxu0
    %v5505 = vadd.f32 0.0, %v5504
    %v5506 = vpop.f32.mrf.mxu0
    %5507 = vdwg.mxu0
    %5508 = vmatpush.bf16.msra.mxu0 0
    %5509 = vmatpush.bf16.msra.mxu0 0
    %5510 = vmatpush.bf16.msra.mxu0 0
    %5511 = vmatpush.bf16.msra.mxu0 0
    %5512 = vmatpush.bf16.msra.mxu0 0
    %5513 = vmatpush.bf16.msra.mxu0 0
    %5514 = vmatpush.bf16.msra.mxu0 0
    %5515 = vmatpush.bf16.msra.mxu0 %v5467
    %5516 = vmatmul.bf16.gmra.mxu0 %v5454
    %v5517 = vpop.f32.mrf.mxu0
    %v5518 = vadd.f32 0.0, %v5517
    %v5519 = vpop.f32.mrf.mxu0
    %5520 = vdwg.mxu0
    %v5521 = vpack.c.bf16 %v5479, %v5479
    %v5522 = vpack.c.bf16 %v5492, %v5492
    %v5523 = vpack.c.bf16 %v5505, %v5505
    %v5524 = vpack.c.bf16 %v5518, %v5518
    %v5525 = vld [vmem:[#allocation12] sm:$0xff]
    %v5526 = vld [vmem:[#allocation12 + $0x8] sm:$0xff]
    %v5527 = vld [vmem:[#allocation12 + $0x10] sm:$0xff]
    %v5528 = vld [vmem:[#allocation12 + $0x18] sm:$0xff]
    %v5529 = vld [vmem:[#allocation12 + $0x20] sm:$0xff]
    %v5530 = vld [vmem:[#allocation12 + $0x28] sm:$0xff]
    %v5531 = vld [vmem:[#allocation12 + $0x30] sm:$0xff]
    %v5532 = vld [vmem:[#allocation12 + $0x38] sm:$0xff]
    %v5533 = vld [vmem:[#allocation12 + $0x40] sm:$0xff]
    %v5534 = vld [vmem:[#allocation12 + $0x48] sm:$0xff]
    %v5535 = vld [vmem:[#allocation12 + $0x50] sm:$0xff]
    %v5536 = vld [vmem:[#allocation12 + $0x58] sm:$0xff]
    %v5537 = vld [vmem:[#allocation12 + $0x60] sm:$0xff]
    %v5538 = vld [vmem:[#allocation12 + $0x68] sm:$0xff]
    %v5539 = vld [vmem:[#allocation12 + $0x70] sm:$0xff]
    %v5540 = vld [vmem:[#allocation12 + $0x78] sm:$0xff]
    %v5541 = vld [vmem:[#allocation12 + $0x80] sm:$0xff]
    %v5542 = vld [vmem:[#allocation12 + $0x88] sm:$0xff]
    %v5543 = vld [vmem:[#allocation12 + $0x90] sm:$0xff]
    %v5544 = vld [vmem:[#allocation12 + $0x98] sm:$0xff]
    %v5545 = vld [vmem:[#allocation12 + $0xa0] sm:$0xff]
    %v5546 = vld [vmem:[#allocation12 + $0xa8] sm:$0xff]
    %v5547 = vld [vmem:[#allocation12 + $0xb0] sm:$0xff]
    %v5548 = vld [vmem:[#allocation12 + $0xb8] sm:$0xff]
    %v5549 = vld [vmem:[#allocation12 + $0xc0] sm:$0xff]
    %v5550 = vld [vmem:[#allocation12 + $0xc8] sm:$0xff]
    %v5551 = vld [vmem:[#allocation12 + $0xd0] sm:$0xff]
    %v5552 = vld [vmem:[#allocation12 + $0xd8] sm:$0xff]
    %v5553 = vld [vmem:[#allocation12 + $0xe0] sm:$0xff]
    %v5554 = vld [vmem:[#allocation12 + $0xe8] sm:$0xff]
    %v5555 = vld [vmem:[#allocation12 + $0xf0] sm:$0xff]
    %v5556 = vld [vmem:[#allocation12 + $0xf8] sm:$0xff]
    %v5557 = vld [vmem:[#allocation12 + $0x100] sm:$0xff]
    %v5558 = vld [vmem:[#allocation12 + $0x108] sm:$0xff]
    %v5559 = vld [vmem:[#allocation12 + $0x110] sm:$0xff]
    %v5560 = vld [vmem:[#allocation12 + $0x118] sm:$0xff]
    %v5561 = vld [vmem:[#allocation12 + $0x120] sm:$0xff]
    %v5562 = vld [vmem:[#allocation12 + $0x128] sm:$0xff]
    %v5563 = vld [vmem:[#allocation12 + $0x130] sm:$0xff]
    %v5564 = vld [vmem:[#allocation12 + $0x138] sm:$0xff]
    %v5565 = vld [vmem:[#allocation12 + $0x140] sm:$0xff]
    %v5566 = vld [vmem:[#allocation12 + $0x148] sm:$0xff]
    %v5567 = vld [vmem:[#allocation12 + $0x150] sm:$0xff]
    %v5568 = vld [vmem:[#allocation12 + $0x158] sm:$0xff]
    %v5569 = vld [vmem:[#allocation12 + $0x160] sm:$0xff]
    %v5570 = vld [vmem:[#allocation12 + $0x168] sm:$0xff]
    %v5571 = vld [vmem:[#allocation12 + $0x170] sm:$0xff]
    %v5572 = vld [vmem:[#allocation12 + $0x178] sm:$0xff]
    %v5573 = vld [vmem:[#allocation12 + $0x180] sm:$0xff]
    %v5574 = vld [vmem:[#allocation12 + $0x188] sm:$0xff]
    %v5575 = vld [vmem:[#allocation12 + $0x190] sm:$0xff]
    %v5576 = vld [vmem:[#allocation12 + $0x198] sm:$0xff]
    %v5577 = vld [vmem:[#allocation12 + $0x1a0] sm:$0xff]
    %v5578 = vld [vmem:[#allocation12 + $0x1a8] sm:$0xff]
    %v5579 = vld [vmem:[#allocation12 + $0x1b0] sm:$0xff]
    %v5580 = vld [vmem:[#allocation12 + $0x1b8] sm:$0xff]
    %v5581 = vld [vmem:[#allocation12 + $0x1c0] sm:$0xff]
    %v5582 = vld [vmem:[#allocation12 + $0x1c8] sm:$0xff]
    %v5583 = vld [vmem:[#allocation12 + $0x1d0] sm:$0xff]
    %v5584 = vld [vmem:[#allocation12 + $0x1d8] sm:$0xff]
    %v5585 = vld [vmem:[#allocation12 + $0x1e0] sm:$0xff]
    %v5586 = vld [vmem:[#allocation12 + $0x1e8] sm:$0xff]
    %v5587 = vld [vmem:[#allocation12 + $0x1f0] sm:$0xff]
    %v5588 = vld [vmem:[#allocation12 + $0x1f8] sm:$0xff]
    %v5589 = vld [vmem:[#allocation12 + $0x200] sm:$0xff]
    %v5590 = vld [vmem:[#allocation12 + $0x208] sm:$0xff]
    %v5591 = vld [vmem:[#allocation12 + $0x210] sm:$0xff]
    %v5592 = vld [vmem:[#allocation12 + $0x218] sm:$0xff]
    %v5593 = vld [vmem:[#allocation12 + $0x220] sm:$0xff]
    %v5594 = vld [vmem:[#allocation12 + $0x228] sm:$0xff]
    %v5595 = vld [vmem:[#allocation12 + $0x230] sm:$0xff]
    %v5596 = vld [vmem:[#allocation12 + $0x238] sm:$0xff]
    %v5597 = vld [vmem:[#allocation12 + $0x240] sm:$0xff]
    %v5598 = vld [vmem:[#allocation12 + $0x248] sm:$0xff]
    %v5599 = vld [vmem:[#allocation12 + $0x250] sm:$0xff]
    %v5600 = vld [vmem:[#allocation12 + $0x258] sm:$0xff]
    %v5601 = vld [vmem:[#allocation12 + $0x260] sm:$0xff]
    %v5602 = vld [vmem:[#allocation12 + $0x268] sm:$0xff]
    %v5603 = vld [vmem:[#allocation12 + $0x270] sm:$0xff]
    %v5604 = vld [vmem:[#allocation12 + $0x278] sm:$0xff]
    %v5605 = vld [vmem:[#allocation12 + $0x280] sm:$0xff]
    %v5606 = vld [vmem:[#allocation12 + $0x288] sm:$0xff]
    %v5607 = vld [vmem:[#allocation12 + $0x290] sm:$0xff]
    %v5608 = vld [vmem:[#allocation12 + $0x298] sm:$0xff]
    %v5609 = vld [vmem:[#allocation12 + $0x2a0] sm:$0xff]
    %v5610 = vld [vmem:[#allocation12 + $0x2a8] sm:$0xff]
    %v5611 = vld [vmem:[#allocation12 + $0x2b0] sm:$0xff]
    %v5612 = vld [vmem:[#allocation12 + $0x2b8] sm:$0xff]
    %v5613 = vld [vmem:[#allocation12 + $0x2c0] sm:$0xff]
    %v5614 = vld [vmem:[#allocation12 + $0x2c8] sm:$0xff]
    %v5615 = vld [vmem:[#allocation12 + $0x2d0] sm:$0xff]
    %v5616 = vld [vmem:[#allocation12 + $0x2d8] sm:$0xff]
    %v5617 = vld [vmem:[#allocation12 + $0x2e0] sm:$0xff]
    %v5618 = vld [vmem:[#allocation12 + $0x2e8] sm:$0xff]
    %v5619 = vld [vmem:[#allocation12 + $0x2f0] sm:$0xff]
    %v5620 = vld [vmem:[#allocation12 + $0x2f8] sm:$0xff]
    %v5621 = vld [vmem:[#allocation12 + $0x300] sm:$0xff]
    %v5622 = vld [vmem:[#allocation12 + $0x308] sm:$0xff]
    %v5623 = vld [vmem:[#allocation12 + $0x310] sm:$0xff]
    %v5624 = vld [vmem:[#allocation12 + $0x318] sm:$0xff]
    %v5625 = vld [vmem:[#allocation12 + $0x320] sm:$0xff]
    %v5626 = vld [vmem:[#allocation12 + $0x328] sm:$0xff]
    %v5627 = vld [vmem:[#allocation12 + $0x330] sm:$0xff]
    %v5628 = vld [vmem:[#allocation12 + $0x338] sm:$0xff]
    %v5629 = vld [vmem:[#allocation12 + $0x340] sm:$0xff]
    %v5630 = vld [vmem:[#allocation12 + $0x348] sm:$0xff]
    %v5631 = vld [vmem:[#allocation12 + $0x350] sm:$0xff]
    %v5632 = vld [vmem:[#allocation12 + $0x358] sm:$0xff]
    %v5633 = vld [vmem:[#allocation12 + $0x360] sm:$0xff]
    %v5634 = vld [vmem:[#allocation12 + $0x368] sm:$0xff]
    %v5635 = vld [vmem:[#allocation12 + $0x370] sm:$0xff]
    %v5636 = vld [vmem:[#allocation12 + $0x378] sm:$0xff]
    %v5637 = vld [vmem:[#allocation12 + $0x380] sm:$0xff]
    %v5638 = vld [vmem:[#allocation12 + $0x388] sm:$0xff]
    %v5639 = vld [vmem:[#allocation12 + $0x390] sm:$0xff]
    %v5640 = vld [vmem:[#allocation12 + $0x398] sm:$0xff]
    %v5641 = vld [vmem:[#allocation12 + $0x3a0] sm:$0xff]
    %v5642 = vld [vmem:[#allocation12 + $0x3a8] sm:$0xff]
    %v5643 = vld [vmem:[#allocation12 + $0x3b0] sm:$0xff]
    %v5644 = vld [vmem:[#allocation12 + $0x3b8] sm:$0xff]
    %v5645 = vld [vmem:[#allocation12 + $0x3c0] sm:$0xff]
    %v5646 = vld [vmem:[#allocation12 + $0x3c8] sm:$0xff]
    %v5647 = vld [vmem:[#allocation12 + $0x3d0] sm:$0xff]
    %v5648 = vld [vmem:[#allocation12 + $0x3d8] sm:$0xff]
    %v5649 = vld [vmem:[#allocation12 + $0x3e0] sm:$0xff]
    %v5650 = vld [vmem:[#allocation12 + $0x3e8] sm:$0xff]
    %v5651 = vld [vmem:[#allocation12 + $0x3f0] sm:$0xff]
    %v5652 = vld [vmem:[#allocation12 + $0x3f8] sm:$0xff]
    %s5653 = scalar_lea.vmem [#allocation13], 2
    %v5654 = vld [vmem:[%s5653] sm:$0x3]
    %v5656 = vsel %vm5452, %v5654, 0
    %5658 = vmatpush.bf16.msra.mxu0 0
    %5659 = vmatpush.bf16.msra.mxu0 0
    %5660 = vmatpush.bf16.msra.mxu0 0
    %5661 = vmatpush.bf16.msra.mxu0 0
    %5662 = vmatpush.bf16.msra.mxu0 0
    %5663 = vmatpush.bf16.msra.mxu0 0
    %5664 = vmatpush.bf16.msra.mxu0 0
    %5665 = vmatpush.bf16.msra.mxu0 %v5458
    %5666 = vmatmul.bf16.gmra.mxu0 %v5656
    %v5667 = vpop.f32.mrf.mxu0
    %v5668 = vadd.f32 0.0, %v5667
    %v5669 = vpop.f32.mrf.mxu0
    %5670 = vdwg.mxu0
    %5671 = vmatpush.bf16.msra.mxu0 0
    %5672 = vmatpush.bf16.msra.mxu0 0
    %5673 = vmatpush.bf16.msra.mxu0 0
    %5674 = vmatpush.bf16.msra.mxu0 0
    %5675 = vmatpush.bf16.msra.mxu0 0
    %5676 = vmatpush.bf16.msra.mxu0 0
    %5677 = vmatpush.bf16.msra.mxu0 0
    %5678 = vmatpush.bf16.msra.mxu0 %v5461
    %5679 = vmatmul.bf16.gmra.mxu0 %v5656
    %v5680 = vpop.f32.mrf.mxu0
    %v5681 = vadd.f32 0.0, %v5680
    %v5682 = vpop.f32.mrf.mxu0
    %5683 = vdwg.mxu0
    %5684 = vmatpush.bf16.msra.mxu0 0
    %5685 = vmatpush.bf16.msra.mxu0 0
    %5686 = vmatpush.bf16.msra.mxu0 0
    %5687 = vmatpush.bf16.msra.mxu0 0
    %5688 = vmatpush.bf16.msra.mxu0 0
    %5689 = vmatpush.bf16.msra.mxu0 0
    %5690 = vmatpush.bf16.msra.mxu0 0
    %5691 = vmatpush.bf16.msra.mxu0 %v5464
    %5692 = vmatmul.bf16.gmra.mxu0 %v5656
    %v5693 = vpop.f32.mrf.mxu0
    %v5694 = vadd.f32 0.0, %v5693
    %v5695 = vpop.f32.mrf.mxu0
    %5696 = vdwg.mxu0
    %5697 = vmatpush.bf16.msra.mxu0 0
    %5698 = vmatpush.bf16.msra.mxu0 0
    %5699 = vmatpush.bf16.msra.mxu0 0
    %5700 = vmatpush.bf16.msra.mxu0 0
    %5701 = vmatpush.bf16.msra.mxu0 0
    %5702 = vmatpush.bf16.msra.mxu0 0
    %5703 = vmatpush.bf16.msra.mxu0 0
    %5704 = vmatpush.bf16.msra.mxu0 %v5467
    %5705 = vmatmul.bf16.gmra.mxu0 %v5656
    %v5706 = vpop.f32.mrf.mxu0
    %v5707 = vadd.f32 0.0, %v5706
    %v5708 = vpop.f32.mrf.mxu0
    %5709 = vdwg.mxu0
    %v5710 = vpack.c.bf16 %v5668, %v5668
    %v5711 = vpack.c.bf16 %v5681, %v5681
    %v5712 = vpack.c.bf16 %v5694, %v5694
    %v5713 = vpack.c.bf16 %v5707, %v5707
    %s5714 = scalar_lea.vmem [#allocation12], 1024
    %v5715 = vld [vmem:[%s5714] sm:$0xff]
    %v5716 = vld [vmem:[%s5714 + $0x8] sm:$0xff]
    %v5717 = vld [vmem:[%s5714 + $0x10] sm:$0xff]
    %v5718 = vld [vmem:[%s5714 + $0x18] sm:$0xff]
    %v5719 = vld [vmem:[%s5714 + $0x20] sm:$0xff]
    %v5720 = vld [vmem:[%s5714 + $0x28] sm:$0xff]
    %v5721 = vld [vmem:[%s5714 + $0x30] sm:$0xff]
    %v5722 = vld [vmem:[%s5714 + $0x38] sm:$0xff]
    %v5723 = vld [vmem:[%s5714 + $0x40] sm:$0xff]
    %v5724 = vld [vmem:[%s5714 + $0x48] sm:$0xff]
    %v5725 = vld [vmem:[%s5714 + $0x50] sm:$0xff]
    %v5726 = vld [vmem:[%s5714 + $0x58] sm:$0xff]
    %v5727 = vld [vmem:[%s5714 + $0x60] sm:$0xff]
    %v5728 = vld [vmem:[%s5714 + $0x68] sm:$0xff]
    %v5729 = vld [vmem:[%s5714 + $0x70] sm:$0xff]
    %v5730 = vld [vmem:[%s5714 + $0x78] sm:$0xff]
    %v5731 = vld [vmem:[%s5714 + $0x80] sm:$0xff]
    %v5732 = vld [vmem:[%s5714 + $0x88] sm:$0xff]
    %v5733 = vld [vmem:[%s5714 + $0x90] sm:$0xff]
    %v5734 = vld [vmem:[%s5714 + $0x98] sm:$0xff]
    %v5735 = vld [vmem:[%s5714 + $0xa0] sm:$0xff]
    %v5736 = vld [vmem:[%s5714 + $0xa8] sm:$0xff]
    %v5737 = vld [vmem:[%s5714 + $0xb0] sm:$0xff]
    %v5738 = vld [vmem:[%s5714 + $0xb8] sm:$0xff]
    %v5739 = vld [vmem:[%s5714 + $0xc0] sm:$0xff]
    %v5740 = vld [vmem:[%s5714 + $0xc8] sm:$0xff]
    %v5741 = vld [vmem:[%s5714 + $0xd0] sm:$0xff]
    %v5742 = vld [vmem:[%s5714 + $0xd8] sm:$0xff]
    %v5743 = vld [vmem:[%s5714 + $0xe0] sm:$0xff]
    %v5744 = vld [vmem:[%s5714 + $0xe8] sm:$0xff]
    %v5745 = vld [vmem:[%s5714 + $0xf0] sm:$0xff]
    %v5746 = vld [vmem:[%s5714 + $0xf8] sm:$0xff]
    %v5747 = vld [vmem:[%s5714 + $0x100] sm:$0xff]
    %v5748 = vld [vmem:[%s5714 + $0x108] sm:$0xff]
    %v5749 = vld [vmem:[%s5714 + $0x110] sm:$0xff]
    %v5750 = vld [vmem:[%s5714 + $0x118] sm:$0xff]
    %v5751 = vld [vmem:[%s5714 + $0x120] sm:$0xff]
    %v5752 = vld [vmem:[%s5714 + $0x128] sm:$0xff]
    %v5753 = vld [vmem:[%s5714 + $0x130] sm:$0xff]
    %v5754 = vld [vmem:[%s5714 + $0x138] sm:$0xff]
    %v5755 = vld [vmem:[%s5714 + $0x140] sm:$0xff]
    %v5756 = vld [vmem:[%s5714 + $0x148] sm:$0xff]
    %v5757 = vld [vmem:[%s5714 + $0x150] sm:$0xff]
    %v5758 = vld [vmem:[%s5714 + $0x158] sm:$0xff]
    %v5759 = vld [vmem:[%s5714 + $0x160] sm:$0xff]
    %v5760 = vld [vmem:[%s5714 + $0x168] sm:$0xff]
    %v5761 = vld [vmem:[%s5714 + $0x170] sm:$0xff]
    %v5762 = vld [vmem:[%s5714 + $0x178] sm:$0xff]
    %v5763 = vld [vmem:[%s5714 + $0x180] sm:$0xff]
    %v5764 = vld [vmem:[%s5714 + $0x188] sm:$0xff]
    %v5765 = vld [vmem:[%s5714 + $0x190] sm:$0xff]
    %v5766 = vld [vmem:[%s5714 + $0x198] sm:$0xff]
    %v5767 = vld [vmem:[%s5714 + $0x1a0] sm:$0xff]
    %v5768 = vld [vmem:[%s5714 + $0x1a8] sm:$0xff]
    %v5769 = vld [vmem:[%s5714 + $0x1b0] sm:$0xff]
    %v5770 = vld [vmem:[%s5714 + $0x1b8] sm:$0xff]
    %v5771 = vld [vmem:[%s5714 + $0x1c0] sm:$0xff]
    %v5772 = vld [vmem:[%s5714 + $0x1c8] sm:$0xff]
    %v5773 = vld [vmem:[%s5714 + $0x1d0] sm:$0xff]
    %v5774 = vld [vmem:[%s5714 + $0x1d8] sm:$0xff]
    %v5775 = vld [vmem:[%s5714 + $0x1e0] sm:$0xff]
    %v5776 = vld [vmem:[%s5714 + $0x1e8] sm:$0xff]
    %v5777 = vld [vmem:[%s5714 + $0x1f0] sm:$0xff]
    %v5778 = vld [vmem:[%s5714 + $0x1f8] sm:$0xff]
    %v5779 = vld [vmem:[%s5714 + $0x200] sm:$0xff]
    %v5780 = vld [vmem:[%s5714 + $0x208] sm:$0xff]
    %v5781 = vld [vmem:[%s5714 + $0x210] sm:$0xff]
    %v5782 = vld [vmem:[%s5714 + $0x218] sm:$0xff]
    %v5783 = vld [vmem:[%s5714 + $0x220] sm:$0xff]
    %v5784 = vld [vmem:[%s5714 + $0x228] sm:$0xff]
    %v5785 = vld [vmem:[%s5714 + $0x230] sm:$0xff]
    %v5786 = vld [vmem:[%s5714 + $0x238] sm:$0xff]
    %v5787 = vld [vmem:[%s5714 + $0x240] sm:$0xff]
    %v5788 = vld [vmem:[%s5714 + $0x248] sm:$0xff]
    %v5789 = vld [vmem:[%s5714 + $0x250] sm:$0xff]
    %v5790 = vld [vmem:[%s5714 + $0x258] sm:$0xff]
    %v5791 = vld [vmem:[%s5714 + $0x260] sm:$0xff]
    %v5792 = vld [vmem:[%s5714 + $0x268] sm:$0xff]
    %v5793 = vld [vmem:[%s5714 + $0x270] sm:$0xff]
    %v5794 = vld [vmem:[%s5714 + $0x278] sm:$0xff]
    %v5795 = vld [vmem:[%s5714 + $0x280] sm:$0xff]
    %v5796 = vld [vmem:[%s5714 + $0x288] sm:$0xff]
    %v5797 = vld [vmem:[%s5714 + $0x290] sm:$0xff]
    %v5798 = vld [vmem:[%s5714 + $0x298] sm:$0xff]
    %v5799 = vld [vmem:[%s5714 + $0x2a0] sm:$0xff]
    %v5800 = vld [vmem:[%s5714 + $0x2a8] sm:$0xff]
    %v5801 = vld [vmem:[%s5714 + $0x2b0] sm:$0xff]
    %v5802 = vld [vmem:[%s5714 + $0x2b8] sm:$0xff]
    %v5803 = vld [vmem:[%s5714 + $0x2c0] sm:$0xff]
    %v5804 = vld [vmem:[%s5714 + $0x2c8] sm:$0xff]
    %v5805 = vld [vmem:[%s5714 + $0x2d0] sm:$0xff]
    %v5806 = vld [vmem:[%s5714 + $0x2d8] sm:$0xff]
    %v5807 = vld [vmem:[%s5714 + $0x2e0] sm:$0xff]
    %v5808 = vld [vmem:[%s5714 + $0x2e8] sm:$0xff]
    %v5809 = vld [vmem:[%s5714 + $0x2f0] sm:$0xff]
    %v5810 = vld [vmem:[%s5714 + $0x2f8] sm:$0xff]
    %v5811 = vld [vmem:[%s5714 + $0x300] sm:$0xff]
    %v5812 = vld [vmem:[%s5714 + $0x308] sm:$0xff]
    %v5813 = vld [vmem:[%s5714 + $0x310] sm:$0xff]
    %v5814 = vld [vmem:[%s5714 + $0x318] sm:$0xff]
    %v5815 = vld [vmem:[%s5714 + $0x320] sm:$0xff]
    %v5816 = vld [vmem:[%s5714 + $0x328] sm:$0xff]
    %v5817 = vld [vmem:[%s5714 + $0x330] sm:$0xff]
    %v5818 = vld [vmem:[%s5714 + $0x338] sm:$0xff]
    %v5819 = vld [vmem:[%s5714 + $0x340] sm:$0xff]
    %v5820 = vld [vmem:[%s5714 + $0x348] sm:$0xff]
    %v5821 = vld [vmem:[%s5714 + $0x350] sm:$0xff]
    %v5822 = vld [vmem:[%s5714 + $0x358] sm:$0xff]
    %v5823 = vld [vmem:[%s5714 + $0x360] sm:$0xff]
    %v5824 = vld [vmem:[%s5714 + $0x368] sm:$0xff]
    %v5825 = vld [vmem:[%s5714 + $0x370] sm:$0xff]
    %v5826 = vld [vmem:[%s5714 + $0x378] sm:$0xff]
    %v5827 = vld [vmem:[%s5714 + $0x380] sm:$0xff]
    %v5828 = vld [vmem:[%s5714 + $0x388] sm:$0xff]
    %v5829 = vld [vmem:[%s5714 + $0x390] sm:$0xff]
    %v5830 = vld [vmem:[%s5714 + $0x398] sm:$0xff]
    %v5831 = vld [vmem:[%s5714 + $0x3a0] sm:$0xff]
    %v5832 = vld [vmem:[%s5714 + $0x3a8] sm:$0xff]
    %v5833 = vld [vmem:[%s5714 + $0x3b0] sm:$0xff]
    %v5834 = vld [vmem:[%s5714 + $0x3b8] sm:$0xff]
    %v5835 = vld [vmem:[%s5714 + $0x3c0] sm:$0xff]
    %v5836 = vld [vmem:[%s5714 + $0x3c8] sm:$0xff]
    %v5837 = vld [vmem:[%s5714 + $0x3d0] sm:$0xff]
    %v5838 = vld [vmem:[%s5714 + $0x3d8] sm:$0xff]
    %v5839 = vld [vmem:[%s5714 + $0x3e0] sm:$0xff]
    %v5840 = vld [vmem:[%s5714 + $0x3e8] sm:$0xff]
    %v5841 = vld [vmem:[%s5714 + $0x3f0] sm:$0xff]
    %v5842 = vld [vmem:[%s5714 + $0x3f8] sm:$0xff]
    %v5971 = vunpack.c.l.b16 %v5715
    %v5972 = vunpack.c.h.b16 %v5715
    %v5973 = vunpack.c.l.b16 %v5716
    %v5974 = vunpack.c.h.b16 %v5716
    %v5975 = vunpack.c.l.b16 %v5717
    %v5976 = vunpack.c.h.b16 %v5717
    %v5977 = vunpack.c.l.b16 %v5718
    %v5978 = vunpack.c.h.b16 %v5718
    %v5979 = vunpack.c.l.b16 %v5719
    %v5980 = vunpack.c.h.b16 %v5719
    %v5981 = vunpack.c.l.b16 %v5720
    %v5982 = vunpack.c.h.b16 %v5720
    %v5983 = vunpack.c.l.b16 %v5721
    %v5984 = vunpack.c.h.b16 %v5721
    %v5985 = vunpack.c.l.b16 %v5722
    %v5986 = vunpack.c.h.b16 %v5722
    %v5987 = vunpack.c.l.b16 %v5723
    %v5988 = vunpack.c.h.b16 %v5723
    %v5989 = vunpack.c.l.b16 %v5724
    %v5990 = vunpack.c.h.b16 %v5724
    %v5991 = vunpack.c.l.b16 %v5725
    %v5992 = vunpack.c.h.b16 %v5725
    %v5993 = vunpack.c.l.b16 %v5726
    %v5994 = vunpack.c.h.b16 %v5726
    %v5995 = vunpack.c.l.b16 %v5727
    %v5996 = vunpack.c.h.b16 %v5727
    %v5997 = vunpack.c.l.b16 %v5728
    %v5998 = vunpack.c.h.b16 %v5728
    %v5999 = vunpack.c.l.b16 %v5729
    %v6000 = vunpack.c.h.b16 %v5729
    %v6001 = vunpack.c.l.b16 %v5730
    %v6002 = vunpack.c.h.b16 %v5730
    %v6003 = vunpack.c.l.b16 %v5731
    %v6004 = vunpack.c.h.b16 %v5731
    %v6005 = vunpack.c.l.b16 %v5732
    %v6006 = vunpack.c.h.b16 %v5732
    %v6007 = vunpack.c.l.b16 %v5733
    %v6008 = vunpack.c.h.b16 %v5733
    %v6009 = vunpack.c.l.b16 %v5734
    %v6010 = vunpack.c.h.b16 %v5734
    %v6011 = vunpack.c.l.b16 %v5735
    %v6012 = vunpack.c.h.b16 %v5735
    %v6013 = vunpack.c.l.b16 %v5736
    %v6014 = vunpack.c.h.b16 %v5736
    %v6015 = vunpack.c.l.b16 %v5737
    %v6016 = vunpack.c.h.b16 %v5737
    %v6017 = vunpack.c.l.b16 %v5738
    %v6018 = vunpack.c.h.b16 %v5738
    %v6019 = vunpack.c.l.b16 %v5739
    %v6020 = vunpack.c.h.b16 %v5739
    %v6021 = vunpack.c.l.b16 %v5740
    %v6022 = vunpack.c.h.b16 %v5740
    %v6023 = vunpack.c.l.b16 %v5741
    %v6024 = vunpack.c.h.b16 %v5741
    %v6025 = vunpack.c.l.b16 %v5742
    %v6026 = vunpack.c.h.b16 %v5742
    %v6027 = vunpack.c.l.b16 %v5743
    %v6028 = vunpack.c.h.b16 %v5743
    %v6029 = vunpack.c.l.b16 %v5744
    %v6030 = vunpack.c.h.b16 %v5744
    %v6031 = vunpack.c.l.b16 %v5745
    %v6032 = vunpack.c.h.b16 %v5745
    %v6033 = vunpack.c.l.b16 %v5746
    %v6034 = vunpack.c.h.b16 %v5746
    %v6035 = vunpack.c.l.b16 %v5747
    %v6036 = vunpack.c.h.b16 %v5747
    %v6037 = vunpack.c.l.b16 %v5748
    %v6038 = vunpack.c.h.b16 %v5748
    %v6039 = vunpack.c.l.b16 %v5749
    %v6040 = vunpack.c.h.b16 %v5749
    %v6041 = vunpack.c.l.b16 %v5750
    %v6042 = vunpack.c.h.b16 %v5750
    %v6043 = vunpack.c.l.b16 %v5751
    %v6044 = vunpack.c.h.b16 %v5751
    %v6045 = vunpack.c.l.b16 %v5752
    %v6046 = vunpack.c.h.b16 %v5752
    %v6047 = vunpack.c.l.b16 %v5753
    %v6048 = vunpack.c.h.b16 %v5753
    %v6049 = vunpack.c.l.b16 %v5754
    %v6050 = vunpack.c.h.b16 %v5754
    %v6051 = vunpack.c.l.b16 %v5755
    %v6052 = vunpack.c.h.b16 %v5755
    %v6053 = vunpack.c.l.b16 %v5756
    %v6054 = vunpack.c.h.b16 %v5756
    %v6055 = vunpack.c.l.b16 %v5757
    %v6056 = vunpack.c.h.b16 %v5757
    %v6057 = vunpack.c.l.b16 %v5758
    %v6058 = vunpack.c.h.b16 %v5758
    %v6059 = vunpack.c.l.b16 %v5759
    %v6060 = vunpack.c.h.b16 %v5759
    %v6061 = vunpack.c.l.b16 %v5760
    %v6062 = vunpack.c.h.b16 %v5760
    %v6063 = vunpack.c.l.b16 %v5761
    %v6064 = vunpack.c.h.b16 %v5761
    %v6065 = vunpack.c.l.b16 %v5762
    %v6066 = vunpack.c.h.b16 %v5762
    %v6067 = vunpack.c.l.b16 %v5763
    %v6068 = vunpack.c.h.b16 %v5763
    %v6069 = vunpack.c.l.b16 %v5764
    %v6070 = vunpack.c.h.b16 %v5764
    %v6071 = vunpack.c.l.b16 %v5765
    %v6072 = vunpack.c.h.b16 %v5765
    %v6073 = vunpack.c.l.b16 %v5766
    %v6074 = vunpack.c.h.b16 %v5766
    %v6075 = vunpack.c.l.b16 %v5767
    %v6076 = vunpack.c.h.b16 %v5767
    %v6077 = vunpack.c.l.b16 %v5768
    %v6078 = vunpack.c.h.b16 %v5768
    %v6079 = vunpack.c.l.b16 %v5769
    %v6080 = vunpack.c.h.b16 %v5769
    %v6081 = vunpack.c.l.b16 %v5770
    %v6082 = vunpack.c.h.b16 %v5770
    %v6083 = vunpack.c.l.b16 %v5771
    %v6084 = vunpack.c.h.b16 %v5771
    %v6085 = vunpack.c.l.b16 %v5772
    %v6086 = vunpack.c.h.b16 %v5772
    %v6087 = vunpack.c.l.b16 %v5773
    %v6088 = vunpack.c.h.b16 %v5773
    %v6089 = vunpack.c.l.b16 %v5774
    %v6090 = vunpack.c.h.b16 %v5774
    %v6091 = vunpack.c.l.b16 %v5775
    %v6092 = vunpack.c.h.b16 %v5775
    %v6093 = vunpack.c.l.b16 %v5776
    %v6094 = vunpack.c.h.b16 %v5776
    %v6095 = vunpack.c.l.b16 %v5777
    %v6096 = vunpack.c.h.b16 %v5777
    %v6097 = vunpack.c.l.b16 %v5778
    %v6098 = vunpack.c.h.b16 %v5778
    %v6099 = vunpack.c.l.b16 %v5779
    %v6100 = vunpack.c.h.b16 %v5779
    %v6101 = vunpack.c.l.b16 %v5780
    %v6102 = vunpack.c.h.b16 %v5780
    %v6103 = vunpack.c.l.b16 %v5781
    %v6104 = vunpack.c.h.b16 %v5781
    %v6105 = vunpack.c.l.b16 %v5782
    %v6106 = vunpack.c.h.b16 %v5782
    %v6107 = vunpack.c.l.b16 %v5783
    %v6108 = vunpack.c.h.b16 %v5783
    %v6109 = vunpack.c.l.b16 %v5784
    %v6110 = vunpack.c.h.b16 %v5784
    %v6111 = vunpack.c.l.b16 %v5785
    %v6112 = vunpack.c.h.b16 %v5785
    %v6113 = vunpack.c.l.b16 %v5786
    %v6114 = vunpack.c.h.b16 %v5786
    %v6115 = vunpack.c.l.b16 %v5787
    %v6116 = vunpack.c.h.b16 %v5787
    %v6117 = vunpack.c.l.b16 %v5788
    %v6118 = vunpack.c.h.b16 %v5788
    %v6119 = vunpack.c.l.b16 %v5789
    %v6120 = vunpack.c.h.b16 %v5789
    %v6121 = vunpack.c.l.b16 %v5790
    %v6122 = vunpack.c.h.b16 %v5790
    %v6123 = vunpack.c.l.b16 %v5791
    %v6124 = vunpack.c.h.b16 %v5791
    %v6125 = vunpack.c.l.b16 %v5792
    %v6126 = vunpack.c.h.b16 %v5792
    %v6127 = vunpack.c.l.b16 %v5793
    %v6128 = vunpack.c.h.b16 %v5793
    %v6129 = vunpack.c.l.b16 %v5794
    %v6130 = vunpack.c.h.b16 %v5794
    %v6131 = vunpack.c.l.b16 %v5795
    %v6132 = vunpack.c.h.b16 %v5795
    %v6133 = vunpack.c.l.b16 %v5796
    %v6134 = vunpack.c.h.b16 %v5796
    %v6135 = vunpack.c.l.b16 %v5797
    %v6136 = vunpack.c.h.b16 %v5797
    %v6137 = vunpack.c.l.b16 %v5798
    %v6138 = vunpack.c.h.b16 %v5798
    %v6139 = vunpack.c.l.b16 %v5799
    %v6140 = vunpack.c.h.b16 %v5799
    %v6141 = vunpack.c.l.b16 %v5800
    %v6142 = vunpack.c.h.b16 %v5800
    %v6143 = vunpack.c.l.b16 %v5801
    %v6144 = vunpack.c.h.b16 %v5801
    %v6145 = vunpack.c.l.b16 %v5802
    %v6146 = vunpack.c.h.b16 %v5802
    %v6147 = vunpack.c.l.b16 %v5803
    %v6148 = vunpack.c.h.b16 %v5803
    %v6149 = vunpack.c.l.b16 %v5804
    %v6150 = vunpack.c.h.b16 %v5804
    %v6151 = vunpack.c.l.b16 %v5805
    %v6152 = vunpack.c.h.b16 %v5805
    %v6153 = vunpack.c.l.b16 %v5806
    %v6154 = vunpack.c.h.b16 %v5806
    %v6155 = vunpack.c.l.b16 %v5807
    %v6156 = vunpack.c.h.b16 %v5807
    %v6157 = vunpack.c.l.b16 %v5808
    %v6158 = vunpack.c.h.b16 %v5808
    %v6159 = vunpack.c.l.b16 %v5809
    %v6160 = vunpack.c.h.b16 %v5809
    %v6161 = vunpack.c.l.b16 %v5810
    %v6162 = vunpack.c.h.b16 %v5810
    %v6163 = vunpack.c.l.b16 %v5811
    %v6164 = vunpack.c.h.b16 %v5811
    %v6165 = vunpack.c.l.b16 %v5812
    %v6166 = vunpack.c.h.b16 %v5812
    %v6167 = vunpack.c.l.b16 %v5813
    %v6168 = vunpack.c.h.b16 %v5813
    %v6169 = vunpack.c.l.b16 %v5814
    %v6170 = vunpack.c.h.b16 %v5814
    %v6171 = vunpack.c.l.b16 %v5815
    %v6172 = vunpack.c.h.b16 %v5815
    %v6173 = vunpack.c.l.b16 %v5816
    %v6174 = vunpack.c.h.b16 %v5816
    %v6175 = vunpack.c.l.b16 %v5817
    %v6176 = vunpack.c.h.b16 %v5817
    %v6177 = vunpack.c.l.b16 %v5818
    %v6178 = vunpack.c.h.b16 %v5818
    %v6179 = vunpack.c.l.b16 %v5819
    %v6180 = vunpack.c.h.b16 %v5819
    %v6181 = vunpack.c.l.b16 %v5820
    %v6182 = vunpack.c.h.b16 %v5820
    %v6183 = vunpack.c.l.b16 %v5821
    %v6184 = vunpack.c.h.b16 %v5821
    %v6185 = vunpack.c.l.b16 %v5822
    %v6186 = vunpack.c.h.b16 %v5822
    %v6187 = vunpack.c.l.b16 %v5823
    %v6188 = vunpack.c.h.b16 %v5823
    %v6189 = vunpack.c.l.b16 %v5824
    %v6190 = vunpack.c.h.b16 %v5824
    %v6191 = vunpack.c.l.b16 %v5825
    %v6192 = vunpack.c.h.b16 %v5825
    %v6193 = vunpack.c.l.b16 %v5826
    %v6194 = vunpack.c.h.b16 %v5826
    %v6195 = vunpack.c.l.b16 %v5827
    %v6196 = vunpack.c.h.b16 %v5827
    %v6197 = vunpack.c.l.b16 %v5828
    %v6198 = vunpack.c.h.b16 %v5828
    %v6199 = vunpack.c.l.b16 %v5829
    %v6200 = vunpack.c.h.b16 %v5829
    %v6201 = vunpack.c.l.b16 %v5830
    %v6202 = vunpack.c.h.b16 %v5830
    %v6203 = vunpack.c.l.b16 %v5831
    %v6204 = vunpack.c.h.b16 %v5831
    %v6205 = vunpack.c.l.b16 %v5832
    %v6206 = vunpack.c.h.b16 %v5832
    %v6207 = vunpack.c.l.b16 %v5833
    %v6208 = vunpack.c.h.b16 %v5833
    %v6209 = vunpack.c.l.b16 %v5834
    %v6210 = vunpack.c.h.b16 %v5834
    %v6211 = vunpack.c.l.b16 %v5835
    %v6212 = vunpack.c.h.b16 %v5835
    %v6213 = vunpack.c.l.b16 %v5836
    %v6214 = vunpack.c.h.b16 %v5836
    %v6215 = vunpack.c.l.b16 %v5837
    %v6216 = vunpack.c.h.b16 %v5837
    %v6217 = vunpack.c.l.b16 %v5838
    %v6218 = vunpack.c.h.b16 %v5838
    %v6219 = vunpack.c.l.b16 %v5839
    %v6220 = vunpack.c.h.b16 %v5839
    %v6221 = vunpack.c.l.b16 %v5840
    %v6222 = vunpack.c.h.b16 %v5840
    %v6223 = vunpack.c.l.b16 %v5841
    %v6224 = vunpack.c.h.b16 %v5841
    %v6225 = vunpack.c.l.b16 %v5842
    %v6226 = vunpack.c.h.b16 %v5842
    %v6227 = vpack.c.b16 %v5975, %v5971
    %v6228 = vpack.c.b16 %v5976, %v5972
    %v6229 = vpack.c.b16 %v5977, %v5973
    %v6230 = vpack.c.b16 %v5978, %v5974
    %v6231 = vpack.c.b16 %v5983, %v5979
    %v6232 = vpack.c.b16 %v5984, %v5980
    %v6233 = vpack.c.b16 %v5985, %v5981
    %v6234 = vpack.c.b16 %v5986, %v5982
    %v6235 = vpack.c.b16 %v5991, %v5987
    %v6236 = vpack.c.b16 %v5992, %v5988
    %v6237 = vpack.c.b16 %v5993, %v5989
    %v6238 = vpack.c.b16 %v5994, %v5990
    %v6239 = vpack.c.b16 %v5999, %v5995
    %v6240 = vpack.c.b16 %v6000, %v5996
    %v6241 = vpack.c.b16 %v6001, %v5997
    %v6242 = vpack.c.b16 %v6002, %v5998
    %v6243 = vpack.c.b16 %v6007, %v6003
    %v6244 = vpack.c.b16 %v6008, %v6004
    %v6245 = vpack.c.b16 %v6009, %v6005
    %v6246 = vpack.c.b16 %v6010, %v6006
    %v6247 = vpack.c.b16 %v6015, %v6011
    %v6248 = vpack.c.b16 %v6016, %v6012
    %v6249 = vpack.c.b16 %v6017, %v6013
    %v6250 = vpack.c.b16 %v6018, %v6014
    %v6251 = vpack.c.b16 %v6023, %v6019
    %v6252 = vpack.c.b16 %v6024, %v6020
    %v6253 = vpack.c.b16 %v6025, %v6021
    %v6254 = vpack.c.b16 %v6026, %v6022
    %v6255 = vpack.c.b16 %v6031, %v6027
    %v6256 = vpack.c.b16 %v6032, %v6028
    %v6257 = vpack.c.b16 %v6033, %v6029
    %v6258 = vpack.c.b16 %v6034, %v6030
    %v6259 = vpack.c.b16 %v6039, %v6035
    %v6260 = vpack.c.b16 %v6040, %v6036
    %v6261 = vpack.c.b16 %v6041, %v6037
    %v6262 = vpack.c.b16 %v6042, %v6038
    %v6263 = vpack.c.b16 %v6047, %v6043
    %v6264 = vpack.c.b16 %v6048, %v6044
    %v6265 = vpack.c.b16 %v6049, %v6045
    %v6266 = vpack.c.b16 %v6050, %v6046
    %v6267 = vpack.c.b16 %v6055, %v6051
    %v6268 = vpack.c.b16 %v6056, %v6052
    %v6269 = vpack.c.b16 %v6057, %v6053
    %v6270 = vpack.c.b16 %v6058, %v6054
    %v6271 = vpack.c.b16 %v6063, %v6059
    %v6272 = vpack.c.b16 %v6064, %v6060
    %v6273 = vpack.c.b16 %v6065, %v6061
    %v6274 = vpack.c.b16 %v6066, %v6062
    %v6275 = vpack.c.b16 %v6071, %v6067
    %v6276 = vpack.c.b16 %v6072, %v6068
    %v6277 = vpack.c.b16 %v6073, %v6069
    %v6278 = vpack.c.b16 %v6074, %v6070
    %v6279 = vpack.c.b16 %v6079, %v6075
    %v6280 = vpack.c.b16 %v6080, %v6076
    %v6281 = vpack.c.b16 %v6081, %v6077
    %v6282 = vpack.c.b16 %v6082, %v6078
    %v6283 = vpack.c.b16 %v6087, %v6083
    %v6284 = vpack.c.b16 %v6088, %v6084
    %v6285 = vpack.c.b16 %v6089, %v6085
    %v6286 = vpack.c.b16 %v6090, %v6086
    %v6287 = vpack.c.b16 %v6095, %v6091
    %v6288 = vpack.c.b16 %v6096, %v6092
    %v6289 = vpack.c.b16 %v6097, %v6093
    %v6290 = vpack.c.b16 %v6098, %v6094
    %v6291 = vpack.c.b16 %v6103, %v6099
    %v6292 = vpack.c.b16 %v6104, %v6100
    %v6293 = vpack.c.b16 %v6105, %v6101
    %v6294 = vpack.c.b16 %v6106, %v6102
    %v6295 = vpack.c.b16 %v6111, %v6107
    %v6296 = vpack.c.b16 %v6112, %v6108
    %v6297 = vpack.c.b16 %v6113, %v6109
    %v6298 = vpack.c.b16 %v6114, %v6110
    %v6299 = vpack.c.b16 %v6119, %v6115
    %v6300 = vpack.c.b16 %v6120, %v6116
    %v6301 = vpack.c.b16 %v6121, %v6117
    %v6302 = vpack.c.b16 %v6122, %v6118
    %v6303 = vpack.c.b16 %v6127, %v6123
    %v6304 = vpack.c.b16 %v6128, %v6124
    %v6305 = vpack.c.b16 %v6129, %v6125
    %v6306 = vpack.c.b16 %v6130, %v6126
    %v6307 = vpack.c.b16 %v6135, %v6131
    %v6308 = vpack.c.b16 %v6136, %v6132
    %v6309 = vpack.c.b16 %v6137, %v6133
    %v6310 = vpack.c.b16 %v6138, %v6134
    %v6311 = vpack.c.b16 %v6143, %v6139
    %v6312 = vpack.c.b16 %v6144, %v6140
    %v6313 = vpack.c.b16 %v6145, %v6141
    %v6314 = vpack.c.b16 %v6146, %v6142
    %v6315 = vpack.c.b16 %v6151, %v6147
    %v6316 = vpack.c.b16 %v6152, %v6148
    %v6317 = vpack.c.b16 %v6153, %v6149
    %v6318 = vpack.c.b16 %v6154, %v6150
    %v6319 = vpack.c.b16 %v6159, %v6155
    %v6320 = vpack.c.b16 %v6160, %v6156
    %v6321 = vpack.c.b16 %v6161, %v6157
    %v6322 = vpack.c.b16 %v6162, %v6158
    %v6323 = vpack.c.b16 %v6167, %v6163
    %v6324 = vpack.c.b16 %v6168, %v6164
    %v6325 = vpack.c.b16 %v6169, %v6165
    %v6326 = vpack.c.b16 %v6170, %v6166
    %v6327 = vpack.c.b16 %v6175, %v6171
    %v6328 = vpack.c.b16 %v6176, %v6172
    %v6329 = vpack.c.b16 %v6177, %v6173
    %v6330 = vpack.c.b16 %v6178, %v6174
    %v6331 = vpack.c.b16 %v6183, %v6179
    %v6332 = vpack.c.b16 %v6184, %v6180
    %v6333 = vpack.c.b16 %v6185, %v6181
    %v6334 = vpack.c.b16 %v6186, %v6182
    %v6335 = vpack.c.b16 %v6191, %v6187
    %v6336 = vpack.c.b16 %v6192, %v6188
    %v6337 = vpack.c.b16 %v6193, %v6189
    %v6338 = vpack.c.b16 %v6194, %v6190
    %v6339 = vpack.c.b16 %v6199, %v6195
    %v6340 = vpack.c.b16 %v6200, %v6196
    %v6341 = vpack.c.b16 %v6201, %v6197
    %v6342 = vpack.c.b16 %v6202, %v6198
    %v6343 = vpack.c.b16 %v6207, %v6203
    %v6344 = vpack.c.b16 %v6208, %v6204
    %v6345 = vpack.c.b16 %v6209, %v6205
    %v6346 = vpack.c.b16 %v6210, %v6206
    %v6347 = vpack.c.b16 %v6215, %v6211
    %v6348 = vpack.c.b16 %v6216, %v6212
    %v6349 = vpack.c.b16 %v6217, %v6213
    %v6350 = vpack.c.b16 %v6218, %v6214
    %v6351 = vpack.c.b16 %v6223, %v6219
    %v6352 = vpack.c.b16 %v6224, %v6220
    %v6353 = vpack.c.b16 %v6225, %v6221
    %v6354 = vpack.c.b16 %v6226, %v6222
    %6483 = vmatpush.bf16.msra.mxu0 %v6255
    %6484 = vmatpush.bf16.msra.mxu0 %v6251
    %6485 = vmatpush.bf16.msra.mxu0 %v6247
    %6486 = vmatpush.bf16.msra.mxu0 %v6243
    %6487 = vmatpush.bf16.msra.mxu0 %v6239
    %6488 = vmatpush.bf16.msra.mxu0 %v6235
    %6489 = vmatpush.bf16.msra.mxu0 %v6231
    %6490 = vmatpush.bf16.msra.mxu0 %v6227
    %6491 = vmatmul.bf16.gmra.mxu0 %v5710
    %v6492 = vpop.f32.mrf.mxu0
    %v6493 = vadd.f32 0.0, %v6492
    %v6494 = vpop.f32.mrf.mxu0
    %6495 = vdwg.mxu0
    %6496 = vmatpush.bf16.msra.mxu0 %v6287
    %6497 = vmatpush.bf16.msra.mxu0 %v6283
    %6498 = vmatpush.bf16.msra.mxu0 %v6279
    %6499 = vmatpush.bf16.msra.mxu0 %v6275
    %6500 = vmatpush.bf16.msra.mxu0 %v6271
    %6501 = vmatpush.bf16.msra.mxu0 %v6267
    %6502 = vmatpush.bf16.msra.mxu0 %v6263
    %6503 = vmatpush.bf16.msra.mxu0 %v6259
    %6504 = vmatmul.bf16.gmra.mxu0 %v5711
    %v6505 = vpop.f32.mrf.mxu0
    %v6506 = vadd.f32 %v6493, %v6505
    %v6507 = vpop.f32.mrf.mxu0
    %6508 = vdwg.mxu0
    %6509 = vmatpush.bf16.msra.mxu0 %v6319
    %6510 = vmatpush.bf16.msra.mxu0 %v6315
    %6511 = vmatpush.bf16.msra.mxu0 %v6311
    %6512 = vmatpush.bf16.msra.mxu0 %v6307
    %6513 = vmatpush.bf16.msra.mxu0 %v6303
    %6514 = vmatpush.bf16.msra.mxu0 %v6299
    %6515 = vmatpush.bf16.msra.mxu0 %v6295
    %6516 = vmatpush.bf16.msra.mxu0 %v6291
    %6517 = vmatmul.bf16.gmra.mxu0 %v5712
    %v6518 = vpop.f32.mrf.mxu0
    %v6519 = vadd.f32 %v6506, %v6518
    %v6520 = vpop.f32.mrf.mxu0
    %6521 = vdwg.mxu0
    %6522 = vmatpush.bf16.msra.mxu0 %v6351
    %6523 = vmatpush.bf16.msra.mxu0 %v6347
    %6524 = vmatpush.bf16.msra.mxu0 %v6343
    %6525 = vmatpush.bf16.msra.mxu0 %v6339
    %6526 = vmatpush.bf16.msra.mxu0 %v6335
    %6527 = vmatpush.bf16.msra.mxu0 %v6331
    %6528 = vmatpush.bf16.msra.mxu0 %v6327
    %6529 = vmatpush.bf16.msra.mxu0 %v6323
    %6530 = vmatmul.bf16.gmra.mxu0 %v5713
    %v6531 = vpop.f32.mrf.mxu0
    %v6532 = vadd.f32 %v6519, %v6531
    %v6533 = vpop.f32.mrf.mxu0
    %6534 = vdwg.mxu0
    %6535 = vmatpush.bf16.msra.mxu0 %v6256
    %6536 = vmatpush.bf16.msra.mxu0 %v6252
    %6537 = vmatpush.bf16.msra.mxu0 %v6248
    %6538 = vmatpush.bf16.msra.mxu0 %v6244
    %6539 = vmatpush.bf16.msra.mxu0 %v6240
    %6540 = vmatpush.bf16.msra.mxu0 %v6236
    %6541 = vmatpush.bf16.msra.mxu0 %v6232
    %6542 = vmatpush.bf16.msra.mxu0 %v6228
    %6543 = vmatmul.bf16.gmra.mxu0 %v5710
    %v6544 = vpop.f32.mrf.mxu0
    %v6545 = vadd.f32 0.0, %v6544
    %v6546 = vpop.f32.mrf.mxu0
    %6547 = vdwg.mxu0
    %6548 = vmatpush.bf16.msra.mxu0 %v6288
    %6549 = vmatpush.bf16.msra.mxu0 %v6284
    %6550 = vmatpush.bf16.msra.mxu0 %v6280
    %6551 = vmatpush.bf16.msra.mxu0 %v6276
    %6552 = vmatpush.bf16.msra.mxu0 %v6272
    %6553 = vmatpush.bf16.msra.mxu0 %v6268
    %6554 = vmatpush.bf16.msra.mxu0 %v6264
    %6555 = vmatpush.bf16.msra.mxu0 %v6260
    %6556 = vmatmul.bf16.gmra.mxu0 %v5711
    %v6557 = vpop.f32.mrf.mxu0
    %v6558 = vadd.f32 %v6545, %v6557
    %v6559 = vpop.f32.mrf.mxu0
    %6560 = vdwg.mxu0
    %6561 = vmatpush.bf16.msra.mxu0 %v6320
    %6562 = vmatpush.bf16.msra.mxu0 %v6316
    %6563 = vmatpush.bf16.msra.mxu0 %v6312
    %6564 = vmatpush.bf16.msra.mxu0 %v6308
    %6565 = vmatpush.bf16.msra.mxu0 %v6304
    %6566 = vmatpush.bf16.msra.mxu0 %v6300
    %6567 = vmatpush.bf16.msra.mxu0 %v6296
    %6568 = vmatpush.bf16.msra.mxu0 %v6292
    %6569 = vmatmul.bf16.gmra.mxu0 %v5712
    %v6570 = vpop.f32.mrf.mxu0
    %v6571 = vadd.f32 %v6558, %v6570
    %v6572 = vpop.f32.mrf.mxu0
    %6573 = vdwg.mxu0
    %6574 = vmatpush.bf16.msra.mxu0 %v6352
    %6575 = vmatpush.bf16.msra.mxu0 %v6348
    %6576 = vmatpush.bf16.msra.mxu0 %v6344
    %6577 = vmatpush.bf16.msra.mxu0 %v6340
    %6578 = vmatpush.bf16.msra.mxu0 %v6336
    %6579 = vmatpush.bf16.msra.mxu0 %v6332
    %6580 = vmatpush.bf16.msra.mxu0 %v6328
    %6581 = vmatpush.bf16.msra.mxu0 %v6324
    %6582 = vmatmul.bf16.gmra.mxu0 %v5713
    %v6583 = vpop.f32.mrf.mxu0
    %v6584 = vadd.f32 %v6571, %v6583
    %v6585 = vpop.f32.mrf.mxu0
    %6586 = vdwg.mxu0
    %6587 = vmatpush.bf16.msra.mxu0 %v6257
    %6588 = vmatpush.bf16.msra.mxu0 %v6253
    %6589 = vmatpush.bf16.msra.mxu0 %v6249
    %6590 = vmatpush.bf16.msra.mxu0 %v6245
    %6591 = vmatpush.bf16.msra.mxu0 %v6241
    %6592 = vmatpush.bf16.msra.mxu0 %v6237
    %6593 = vmatpush.bf16.msra.mxu0 %v6233
    %6594 = vmatpush.bf16.msra.mxu0 %v6229
    %6595 = vmatmul.bf16.gmra.mxu0 %v5710
    %v6596 = vpop.f32.mrf.mxu0
    %v6597 = vadd.f32 0.0, %v6596
    %v6598 = vpop.f32.mrf.mxu0
    %6599 = vdwg.mxu0
    %6600 = vmatpush.bf16.msra.mxu0 %v6289
    %6601 = vmatpush.bf16.msra.mxu0 %v6285
    %6602 = vmatpush.bf16.msra.mxu0 %v6281
    %6603 = vmatpush.bf16.msra.mxu0 %v6277
    %6604 = vmatpush.bf16.msra.mxu0 %v6273
    %6605 = vmatpush.bf16.msra.mxu0 %v6269
    %6606 = vmatpush.bf16.msra.mxu0 %v6265
    %6607 = vmatpush.bf16.msra.mxu0 %v6261
    %6608 = vmatmul.bf16.gmra.mxu0 %v5711
    %v6609 = vpop.f32.mrf.mxu0
    %v6610 = vadd.f32 %v6597, %v6609
    %v6611 = vpop.f32.mrf.mxu0
    %6612 = vdwg.mxu0
    %6613 = vmatpush.bf16.msra.mxu0 %v6321
    %6614 = vmatpush.bf16.msra.mxu0 %v6317
    %6615 = vmatpush.bf16.msra.mxu0 %v6313
    %6616 = vmatpush.bf16.msra.mxu0 %v6309
    %6617 = vmatpush.bf16.msra.mxu0 %v6305
    %6618 = vmatpush.bf16.msra.mxu0 %v6301
    %6619 = vmatpush.bf16.msra.mxu0 %v6297
    %6620 = vmatpush.bf16.msra.mxu0 %v6293
    %6621 = vmatmul.bf16.gmra.mxu0 %v5712
    %v6622 = vpop.f32.mrf.mxu0
    %v6623 = vadd.f32 %v6610, %v6622
    %v6624 = vpop.f32.mrf.mxu0
    %6625 = vdwg.mxu0
    %6626 = vmatpush.bf16.msra.mxu0 %v6353
    %6627 = vmatpush.bf16.msra.mxu0 %v6349
    %6628 = vmatpush.bf16.msra.mxu0 %v6345
    %6629 = vmatpush.bf16.msra.mxu0 %v6341
    %6630 = vmatpush.bf16.msra.mxu0 %v6337
    %6631 = vmatpush.bf16.msra.mxu0 %v6333
    %6632 = vmatpush.bf16.msra.mxu0 %v6329
    %6633 = vmatpush.bf16.msra.mxu0 %v6325
    %6634 = vmatmul.bf16.gmra.mxu0 %v5713
    %v6635 = vpop.f32.mrf.mxu0
    %v6636 = vadd.f32 %v6623, %v6635
    %v6637 = vpop.f32.mrf.mxu0
    %6638 = vdwg.mxu0
    %6639 = vmatpush.bf16.msra.mxu0 %v6258
    %6640 = vmatpush.bf16.msra.mxu0 %v6254
    %6641 = vmatpush.bf16.msra.mxu0 %v6250
    %6642 = vmatpush.bf16.msra.mxu0 %v6246
    %6643 = vmatpush.bf16.msra.mxu0 %v6242
    %6644 = vmatpush.bf16.msra.mxu0 %v6238
    %6645 = vmatpush.bf16.msra.mxu0 %v6234
    %6646 = vmatpush.bf16.msra.mxu0 %v6230
    %6647 = vmatmul.bf16.gmra.mxu0 %v5710
    %v6648 = vpop.f32.mrf.mxu0
    %v6649 = vadd.f32 0.0, %v6648
    %v6650 = vpop.f32.mrf.mxu0
    %6651 = vdwg.mxu0
    %6652 = vmatpush.bf16.msra.mxu0 %v6290
    %6653 = vmatpush.bf16.msra.mxu0 %v6286
    %6654 = vmatpush.bf16.msra.mxu0 %v6282
    %6655 = vmatpush.bf16.msra.mxu0 %v6278
    %6656 = vmatpush.bf16.msra.mxu0 %v6274
    %6657 = vmatpush.bf16.msra.mxu0 %v6270
    %6658 = vmatpush.bf16.msra.mxu0 %v6266
    %6659 = vmatpush.bf16.msra.mxu0 %v6262
    %6660 = vmatmul.bf16.gmra.mxu0 %v5711
    %v6661 = vpop.f32.mrf.mxu0
    %v6662 = vadd.f32 %v6649, %v6661
    %v6663 = vpop.f32.mrf.mxu0
    %6664 = vdwg.mxu0
    %6665 = vmatpush.bf16.msra.mxu0 %v6322
    %6666 = vmatpush.bf16.msra.mxu0 %v6318
    %6667 = vmatpush.bf16.msra.mxu0 %v6314
    %6668 = vmatpush.bf16.msra.mxu0 %v6310
    %6669 = vmatpush.bf16.msra.mxu0 %v6306
    %6670 = vmatpush.bf16.msra.mxu0 %v6302
    %6671 = vmatpush.bf16.msra.mxu0 %v6298
    %6672 = vmatpush.bf16.msra.mxu0 %v6294
    %6673 = vmatmul.bf16.gmra.mxu0 %v5712
    %v6674 = vpop.f32.mrf.mxu0
    %v6675 = vadd.f32 %v6662, %v6674
    %v6676 = vpop.f32.mrf.mxu0
    %6677 = vdwg.mxu0
    %6678 = vmatpush.bf16.msra.mxu0 %v6354
    %6679 = vmatpush.bf16.msra.mxu0 %v6350
    %6680 = vmatpush.bf16.msra.mxu0 %v6346
    %6681 = vmatpush.bf16.msra.mxu0 %v6342
    %6682 = vmatpush.bf16.msra.mxu0 %v6338
    %6683 = vmatpush.bf16.msra.mxu0 %v6334
    %6684 = vmatpush.bf16.msra.mxu0 %v6330
    %6685 = vmatpush.bf16.msra.mxu0 %v6326
    %6686 = vmatmul.bf16.gmra.mxu0 %v5713
    %v6687 = vpop.f32.mrf.mxu0
    %v6688 = vadd.f32 %v6675, %v6687
    %v6689 = vpop.f32.mrf.mxu0
    %6690 = vdwg.mxu0
    %v6819 = vunpack.c.l.b16 %v5525
    %v6820 = vunpack.c.h.b16 %v5525
    %v6821 = vunpack.c.l.b16 %v5526
    %v6822 = vunpack.c.h.b16 %v5526
    %v6823 = vunpack.c.l.b16 %v5527
    %v6824 = vunpack.c.h.b16 %v5527
    %v6825 = vunpack.c.l.b16 %v5528
    %v6826 = vunpack.c.h.b16 %v5528
    %v6827 = vunpack.c.l.b16 %v5529
    %v6828 = vunpack.c.h.b16 %v5529
    %v6829 = vunpack.c.l.b16 %v5530
    %v6830 = vunpack.c.h.b16 %v5530
    %v6831 = vunpack.c.l.b16 %v5531
    %v6832 = vunpack.c.h.b16 %v5531
    %v6833 = vunpack.c.l.b16 %v5532
    %v6834 = vunpack.c.h.b16 %v5532
    %v6835 = vunpack.c.l.b16 %v5533
    %v6836 = vunpack.c.h.b16 %v5533
    %v6837 = vunpack.c.l.b16 %v5534
    %v6838 = vunpack.c.h.b16 %v5534
    %v6839 = vunpack.c.l.b16 %v5535
    %v6840 = vunpack.c.h.b16 %v5535
    %v6841 = vunpack.c.l.b16 %v5536
    %v6842 = vunpack.c.h.b16 %v5536
    %v6843 = vunpack.c.l.b16 %v5537
    %v6844 = vunpack.c.h.b16 %v5537
    %v6845 = vunpack.c.l.b16 %v5538
    %v6846 = vunpack.c.h.b16 %v5538
    %v6847 = vunpack.c.l.b16 %v5539
    %v6848 = vunpack.c.h.b16 %v5539
    %v6849 = vunpack.c.l.b16 %v5540
    %v6850 = vunpack.c.h.b16 %v5540
    %v6851 = vunpack.c.l.b16 %v5541
    %v6852 = vunpack.c.h.b16 %v5541
    %v6853 = vunpack.c.l.b16 %v5542
    %v6854 = vunpack.c.h.b16 %v5542
    %v6855 = vunpack.c.l.b16 %v5543
    %v6856 = vunpack.c.h.b16 %v5543
    %v6857 = vunpack.c.l.b16 %v5544
    %v6858 = vunpack.c.h.b16 %v5544
    %v6859 = vunpack.c.l.b16 %v5545
    %v6860 = vunpack.c.h.b16 %v5545
    %v6861 = vunpack.c.l.b16 %v5546
    %v6862 = vunpack.c.h.b16 %v5546
    %v6863 = vunpack.c.l.b16 %v5547
    %v6864 = vunpack.c.h.b16 %v5547
    %v6865 = vunpack.c.l.b16 %v5548
    %v6866 = vunpack.c.h.b16 %v5548
    %v6867 = vunpack.c.l.b16 %v5549
    %v6868 = vunpack.c.h.b16 %v5549
    %v6869 = vunpack.c.l.b16 %v5550
    %v6870 = vunpack.c.h.b16 %v5550
    %v6871 = vunpack.c.l.b16 %v5551
    %v6872 = vunpack.c.h.b16 %v5551
    %v6873 = vunpack.c.l.b16 %v5552
    %v6874 = vunpack.c.h.b16 %v5552
    %v6875 = vunpack.c.l.b16 %v5553
    %v6876 = vunpack.c.h.b16 %v5553
    %v6877 = vunpack.c.l.b16 %v5554
    %v6878 = vunpack.c.h.b16 %v5554
    %v6879 = vunpack.c.l.b16 %v5555
    %v6880 = vunpack.c.h.b16 %v5555
    %v6881 = vunpack.c.l.b16 %v5556
    %v6882 = vunpack.c.h.b16 %v5556
    %v6883 = vunpack.c.l.b16 %v5557
    %v6884 = vunpack.c.h.b16 %v5557
    %v6885 = vunpack.c.l.b16 %v5558
    %v6886 = vunpack.c.h.b16 %v5558
    %v6887 = vunpack.c.l.b16 %v5559
    %v6888 = vunpack.c.h.b16 %v5559
    %v6889 = vunpack.c.l.b16 %v5560
    %v6890 = vunpack.c.h.b16 %v5560
    %v6891 = vunpack.c.l.b16 %v5561
    %v6892 = vunpack.c.h.b16 %v5561
    %v6893 = vunpack.c.l.b16 %v5562
    %v6894 = vunpack.c.h.b16 %v5562
    %v6895 = vunpack.c.l.b16 %v5563
    %v6896 = vunpack.c.h.b16 %v5563
    %v6897 = vunpack.c.l.b16 %v5564
    %v6898 = vunpack.c.h.b16 %v5564
    %v6899 = vunpack.c.l.b16 %v5565
    %v6900 = vunpack.c.h.b16 %v5565
    %v6901 = vunpack.c.l.b16 %v5566
    %v6902 = vunpack.c.h.b16 %v5566
    %v6903 = vunpack.c.l.b16 %v5567
    %v6904 = vunpack.c.h.b16 %v5567
    %v6905 = vunpack.c.l.b16 %v5568
    %v6906 = vunpack.c.h.b16 %v5568
    %v6907 = vunpack.c.l.b16 %v5569
    %v6908 = vunpack.c.h.b16 %v5569
    %v6909 = vunpack.c.l.b16 %v5570
    %v6910 = vunpack.c.h.b16 %v5570
    %v6911 = vunpack.c.l.b16 %v5571
    %v6912 = vunpack.c.h.b16 %v5571
    %v6913 = vunpack.c.l.b16 %v5572
    %v6914 = vunpack.c.h.b16 %v5572
    %v6915 = vunpack.c.l.b16 %v5573
    %v6916 = vunpack.c.h.b16 %v5573
    %v6917 = vunpack.c.l.b16 %v5574
    %v6918 = vunpack.c.h.b16 %v5574
    %v6919 = vunpack.c.l.b16 %v5575
    %v6920 = vunpack.c.h.b16 %v5575
    %v6921 = vunpack.c.l.b16 %v5576
    %v6922 = vunpack.c.h.b16 %v5576
    %v6923 = vunpack.c.l.b16 %v5577
    %v6924 = vunpack.c.h.b16 %v5577
    %v6925 = vunpack.c.l.b16 %v5578
    %v6926 = vunpack.c.h.b16 %v5578
    %v6927 = vunpack.c.l.b16 %v5579
    %v6928 = vunpack.c.h.b16 %v5579
    %v6929 = vunpack.c.l.b16 %v5580
    %v6930 = vunpack.c.h.b16 %v5580
    %v6931 = vunpack.c.l.b16 %v5581
    %v6932 = vunpack.c.h.b16 %v5581
    %v6933 = vunpack.c.l.b16 %v5582
    %v6934 = vunpack.c.h.b16 %v5582
    %v6935 = vunpack.c.l.b16 %v5583
    %v6936 = vunpack.c.h.b16 %v5583
    %v6937 = vunpack.c.l.b16 %v5584
    %v6938 = vunpack.c.h.b16 %v5584
    %v6939 = vunpack.c.l.b16 %v5585
    %v6940 = vunpack.c.h.b16 %v5585
    %v6941 = vunpack.c.l.b16 %v5586
    %v6942 = vunpack.c.h.b16 %v5586
    %v6943 = vunpack.c.l.b16 %v5587
    %v6944 = vunpack.c.h.b16 %v5587
    %v6945 = vunpack.c.l.b16 %v5588
    %v6946 = vunpack.c.h.b16 %v5588
    %v6947 = vunpack.c.l.b16 %v5589
    %v6948 = vunpack.c.h.b16 %v5589
    %v6949 = vunpack.c.l.b16 %v5590
    %v6950 = vunpack.c.h.b16 %v5590
    %v6951 = vunpack.c.l.b16 %v5591
    %v6952 = vunpack.c.h.b16 %v5591
    %v6953 = vunpack.c.l.b16 %v5592
    %v6954 = vunpack.c.h.b16 %v5592
    %v6955 = vunpack.c.l.b16 %v5593
    %v6956 = vunpack.c.h.b16 %v5593
    %v6957 = vunpack.c.l.b16 %v5594
    %v6958 = vunpack.c.h.b16 %v5594
    %v6959 = vunpack.c.l.b16 %v5595
    %v6960 = vunpack.c.h.b16 %v5595
    %v6961 = vunpack.c.l.b16 %v5596
    %v6962 = vunpack.c.h.b16 %v5596
    %v6963 = vunpack.c.l.b16 %v5597
    %v6964 = vunpack.c.h.b16 %v5597
    %v6965 = vunpack.c.l.b16 %v5598
    %v6966 = vunpack.c.h.b16 %v5598
    %v6967 = vunpack.c.l.b16 %v5599
    %v6968 = vunpack.c.h.b16 %v5599
    %v6969 = vunpack.c.l.b16 %v5600
    %v6970 = vunpack.c.h.b16 %v5600
    %v6971 = vunpack.c.l.b16 %v5601
    %v6972 = vunpack.c.h.b16 %v5601
    %v6973 = vunpack.c.l.b16 %v5602
    %v6974 = vunpack.c.h.b16 %v5602
    %v6975 = vunpack.c.l.b16 %v5603
    %v6976 = vunpack.c.h.b16 %v5603
    %v6977 = vunpack.c.l.b16 %v5604
    %v6978 = vunpack.c.h.b16 %v5604
    %v6979 = vunpack.c.l.b16 %v5605
    %v6980 = vunpack.c.h.b16 %v5605
    %v6981 = vunpack.c.l.b16 %v5606
    %v6982 = vunpack.c.h.b16 %v5606
    %v6983 = vunpack.c.l.b16 %v5607
    %v6984 = vunpack.c.h.b16 %v5607
    %v6985 = vunpack.c.l.b16 %v5608
    %v6986 = vunpack.c.h.b16 %v5608
    %v6987 = vunpack.c.l.b16 %v5609
    %v6988 = vunpack.c.h.b16 %v5609
    %v6989 = vunpack.c.l.b16 %v5610
    %v6990 = vunpack.c.h.b16 %v5610
    %v6991 = vunpack.c.l.b16 %v5611
    %v6992 = vunpack.c.h.b16 %v5611
    %v6993 = vunpack.c.l.b16 %v5612
    %v6994 = vunpack.c.h.b16 %v5612
    %v6995 = vunpack.c.l.b16 %v5613
    %v6996 = vunpack.c.h.b16 %v5613
    %v6997 = vunpack.c.l.b16 %v5614
    %v6998 = vunpack.c.h.b16 %v5614
    %v6999 = vunpack.c.l.b16 %v5615
    %v7000 = vunpack.c.h.b16 %v5615
    %v7001 = vunpack.c.l.b16 %v5616
    %v7002 = vunpack.c.h.b16 %v5616
    %v7003 = vunpack.c.l.b16 %v5617
    %v7004 = vunpack.c.h.b16 %v5617
    %v7005 = vunpack.c.l.b16 %v5618
    %v7006 = vunpack.c.h.b16 %v5618
    %v7007 = vunpack.c.l.b16 %v5619
    %v7008 = vunpack.c.h.b16 %v5619
    %v7009 = vunpack.c.l.b16 %v5620
    %v7010 = vunpack.c.h.b16 %v5620
    %v7011 = vunpack.c.l.b16 %v5621
    %v7012 = vunpack.c.h.b16 %v5621
    %v7013 = vunpack.c.l.b16 %v5622
    %v7014 = vunpack.c.h.b16 %v5622
    %v7015 = vunpack.c.l.b16 %v5623
    %v7016 = vunpack.c.h.b16 %v5623
    %v7017 = vunpack.c.l.b16 %v5624
    %v7018 = vunpack.c.h.b16 %v5624
    %v7019 = vunpack.c.l.b16 %v5625
    %v7020 = vunpack.c.h.b16 %v5625
    %v7021 = vunpack.c.l.b16 %v5626
    %v7022 = vunpack.c.h.b16 %v5626
    %v7023 = vunpack.c.l.b16 %v5627
    %v7024 = vunpack.c.h.b16 %v5627
    %v7025 = vunpack.c.l.b16 %v5628
    %v7026 = vunpack.c.h.b16 %v5628
    %v7027 = vunpack.c.l.b16 %v5629
    %v7028 = vunpack.c.h.b16 %v5629
    %v7029 = vunpack.c.l.b16 %v5630
    %v7030 = vunpack.c.h.b16 %v5630
    %v7031 = vunpack.c.l.b16 %v5631
    %v7032 = vunpack.c.h.b16 %v5631
    %v7033 = vunpack.c.l.b16 %v5632
    %v7034 = vunpack.c.h.b16 %v5632
    %v7035 = vunpack.c.l.b16 %v5633
    %v7036 = vunpack.c.h.b16 %v5633
    %v7037 = vunpack.c.l.b16 %v5634
    %v7038 = vunpack.c.h.b16 %v5634
    %v7039 = vunpack.c.l.b16 %v5635
    %v7040 = vunpack.c.h.b16 %v5635
    %v7041 = vunpack.c.l.b16 %v5636
    %v7042 = vunpack.c.h.b16 %v5636
    %v7043 = vunpack.c.l.b16 %v5637
    %v7044 = vunpack.c.h.b16 %v5637
    %v7045 = vunpack.c.l.b16 %v5638
    %v7046 = vunpack.c.h.b16 %v5638
    %v7047 = vunpack.c.l.b16 %v5639
    %v7048 = vunpack.c.h.b16 %v5639
    %v7049 = vunpack.c.l.b16 %v5640
    %v7050 = vunpack.c.h.b16 %v5640
    %v7051 = vunpack.c.l.b16 %v5641
    %v7052 = vunpack.c.h.b16 %v5641
    %v7053 = vunpack.c.l.b16 %v5642
    %v7054 = vunpack.c.h.b16 %v5642
    %v7055 = vunpack.c.l.b16 %v5643
    %v7056 = vunpack.c.h.b16 %v5643
    %v7057 = vunpack.c.l.b16 %v5644
    %v7058 = vunpack.c.h.b16 %v5644
    %v7059 = vunpack.c.l.b16 %v5645
    %v7060 = vunpack.c.h.b16 %v5645
    %v7061 = vunpack.c.l.b16 %v5646
    %v7062 = vunpack.c.h.b16 %v5646
    %v7063 = vunpack.c.l.b16 %v5647
    %v7064 = vunpack.c.h.b16 %v5647
    %v7065 = vunpack.c.l.b16 %v5648
    %v7066 = vunpack.c.h.b16 %v5648
    %v7067 = vunpack.c.l.b16 %v5649
    %v7068 = vunpack.c.h.b16 %v5649
    %v7069 = vunpack.c.l.b16 %v5650
    %v7070 = vunpack.c.h.b16 %v5650
    %v7071 = vunpack.c.l.b16 %v5651
    %v7072 = vunpack.c.h.b16 %v5651
    %v7073 = vunpack.c.l.b16 %v5652
    %v7074 = vunpack.c.h.b16 %v5652
    %v7075 = vpack.c.b16 %v6823, %v6819
    %v7076 = vpack.c.b16 %v6824, %v6820
    %v7077 = vpack.c.b16 %v6825, %v6821
    %v7078 = vpack.c.b16 %v6826, %v6822
    %v7079 = vpack.c.b16 %v6831, %v6827
    %v7080 = vpack.c.b16 %v6832, %v6828
    %v7081 = vpack.c.b16 %v6833, %v6829
    %v7082 = vpack.c.b16 %v6834, %v6830
    %v7083 = vpack.c.b16 %v6839, %v6835
    %v7084 = vpack.c.b16 %v6840, %v6836
    %v7085 = vpack.c.b16 %v6841, %v6837
    %v7086 = vpack.c.b16 %v6842, %v6838
    %v7087 = vpack.c.b16 %v6847, %v6843
    %v7088 = vpack.c.b16 %v6848, %v6844
    %v7089 = vpack.c.b16 %v6849, %v6845
    %v7090 = vpack.c.b16 %v6850, %v6846
    %v7091 = vpack.c.b16 %v6855, %v6851
    %v7092 = vpack.c.b16 %v6856, %v6852
    %v7093 = vpack.c.b16 %v6857, %v6853
    %v7094 = vpack.c.b16 %v6858, %v6854
    %v7095 = vpack.c.b16 %v6863, %v6859
    %v7096 = vpack.c.b16 %v6864, %v6860
    %v7097 = vpack.c.b16 %v6865, %v6861
    %v7098 = vpack.c.b16 %v6866, %v6862
    %v7099 = vpack.c.b16 %v6871, %v6867
    %v7100 = vpack.c.b16 %v6872, %v6868
    %v7101 = vpack.c.b16 %v6873, %v6869
    %v7102 = vpack.c.b16 %v6874, %v6870
    %v7103 = vpack.c.b16 %v6879, %v6875
    %v7104 = vpack.c.b16 %v6880, %v6876
    %v7105 = vpack.c.b16 %v6881, %v6877
    %v7106 = vpack.c.b16 %v6882, %v6878
    %v7107 = vpack.c.b16 %v6887, %v6883
    %v7108 = vpack.c.b16 %v6888, %v6884
    %v7109 = vpack.c.b16 %v6889, %v6885
    %v7110 = vpack.c.b16 %v6890, %v6886
    %v7111 = vpack.c.b16 %v6895, %v6891
    %v7112 = vpack.c.b16 %v6896, %v6892
    %v7113 = vpack.c.b16 %v6897, %v6893
    %v7114 = vpack.c.b16 %v6898, %v6894
    %v7115 = vpack.c.b16 %v6903, %v6899
    %v7116 = vpack.c.b16 %v6904, %v6900
    %v7117 = vpack.c.b16 %v6905, %v6901
    %v7118 = vpack.c.b16 %v6906, %v6902
    %v7119 = vpack.c.b16 %v6911, %v6907
    %v7120 = vpack.c.b16 %v6912, %v6908
    %v7121 = vpack.c.b16 %v6913, %v6909
    %v7122 = vpack.c.b16 %v6914, %v6910
    %v7123 = vpack.c.b16 %v6919, %v6915
    %v7124 = vpack.c.b16 %v6920, %v6916
    %v7125 = vpack.c.b16 %v6921, %v6917
    %v7126 = vpack.c.b16 %v6922, %v6918
    %v7127 = vpack.c.b16 %v6927, %v6923
    %v7128 = vpack.c.b16 %v6928, %v6924
    %v7129 = vpack.c.b16 %v6929, %v6925
    %v7130 = vpack.c.b16 %v6930, %v6926
    %v7131 = vpack.c.b16 %v6935, %v6931
    %v7132 = vpack.c.b16 %v6936, %v6932
    %v7133 = vpack.c.b16 %v6937, %v6933
    %v7134 = vpack.c.b16 %v6938, %v6934
    %v7135 = vpack.c.b16 %v6943, %v6939
    %v7136 = vpack.c.b16 %v6944, %v6940
    %v7137 = vpack.c.b16 %v6945, %v6941
    %v7138 = vpack.c.b16 %v6946, %v6942
    %v7139 = vpack.c.b16 %v6951, %v6947
    %v7140 = vpack.c.b16 %v6952, %v6948
    %v7141 = vpack.c.b16 %v6953, %v6949
    %v7142 = vpack.c.b16 %v6954, %v6950
    %v7143 = vpack.c.b16 %v6959, %v6955
    %v7144 = vpack.c.b16 %v6960, %v6956
    %v7145 = vpack.c.b16 %v6961, %v6957
    %v7146 = vpack.c.b16 %v6962, %v6958
    %v7147 = vpack.c.b16 %v6967, %v6963
    %v7148 = vpack.c.b16 %v6968, %v6964
    %v7149 = vpack.c.b16 %v6969, %v6965
    %v7150 = vpack.c.b16 %v6970, %v6966
    %v7151 = vpack.c.b16 %v6975, %v6971
    %v7152 = vpack.c.b16 %v6976, %v6972
    %v7153 = vpack.c.b16 %v6977, %v6973
    %v7154 = vpack.c.b16 %v6978, %v6974
    %v7155 = vpack.c.b16 %v6983, %v6979
    %v7156 = vpack.c.b16 %v6984, %v6980
    %v7157 = vpack.c.b16 %v6985, %v6981
    %v7158 = vpack.c.b16 %v6986, %v6982
    %v7159 = vpack.c.b16 %v6991, %v6987
    %v7160 = vpack.c.b16 %v6992, %v6988
    %v7161 = vpack.c.b16 %v6993, %v6989
    %v7162 = vpack.c.b16 %v6994, %v6990
    %v7163 = vpack.c.b16 %v6999, %v6995
    %v7164 = vpack.c.b16 %v7000, %v6996
    %v7165 = vpack.c.b16 %v7001, %v6997
    %v7166 = vpack.c.b16 %v7002, %v6998
    %v7167 = vpack.c.b16 %v7007, %v7003
    %v7168 = vpack.c.b16 %v7008, %v7004
    %v7169 = vpack.c.b16 %v7009, %v7005
    %v7170 = vpack.c.b16 %v7010, %v7006
    %v7171 = vpack.c.b16 %v7015, %v7011
    %v7172 = vpack.c.b16 %v7016, %v7012
    %v7173 = vpack.c.b16 %v7017, %v7013
    %v7174 = vpack.c.b16 %v7018, %v7014
    %v7175 = vpack.c.b16 %v7023, %v7019
    %v7176 = vpack.c.b16 %v7024, %v7020
    %v7177 = vpack.c.b16 %v7025, %v7021
    %v7178 = vpack.c.b16 %v7026, %v7022
    %v7179 = vpack.c.b16 %v7031, %v7027
    %v7180 = vpack.c.b16 %v7032, %v7028
    %v7181 = vpack.c.b16 %v7033, %v7029
    %v7182 = vpack.c.b16 %v7034, %v7030
    %v7183 = vpack.c.b16 %v7039, %v7035
    %v7184 = vpack.c.b16 %v7040, %v7036
    %v7185 = vpack.c.b16 %v7041, %v7037
    %v7186 = vpack.c.b16 %v7042, %v7038
    %v7187 = vpack.c.b16 %v7047, %v7043
    %v7188 = vpack.c.b16 %v7048, %v7044
    %v7189 = vpack.c.b16 %v7049, %v7045
    %v7190 = vpack.c.b16 %v7050, %v7046
    %v7191 = vpack.c.b16 %v7055, %v7051
    %v7192 = vpack.c.b16 %v7056, %v7052
    %v7193 = vpack.c.b16 %v7057, %v7053
    %v7194 = vpack.c.b16 %v7058, %v7054
    %v7195 = vpack.c.b16 %v7063, %v7059
    %v7196 = vpack.c.b16 %v7064, %v7060
    %v7197 = vpack.c.b16 %v7065, %v7061
    %v7198 = vpack.c.b16 %v7066, %v7062
    %v7199 = vpack.c.b16 %v7071, %v7067
    %v7200 = vpack.c.b16 %v7072, %v7068
    %v7201 = vpack.c.b16 %v7073, %v7069
    %v7202 = vpack.c.b16 %v7074, %v7070
    %7331 = vmatpush.bf16.msra.mxu0 %v7103
    %7332 = vmatpush.bf16.msra.mxu0 %v7099
    %7333 = vmatpush.bf16.msra.mxu0 %v7095
    %7334 = vmatpush.bf16.msra.mxu0 %v7091
    %7335 = vmatpush.bf16.msra.mxu0 %v7087
    %7336 = vmatpush.bf16.msra.mxu0 %v7083
    %7337 = vmatpush.bf16.msra.mxu0 %v7079
    %7338 = vmatpush.bf16.msra.mxu0 %v7075
    %7339 = vmatmul.bf16.gmra.mxu0 %v5521
    %v7340 = vpop.f32.mrf.mxu0
    %v7341 = vadd.f32 %v6532, %v7340
    %v7342 = vpop.f32.mrf.mxu0
    %7343 = vdwg.mxu0
    %7344 = vmatpush.bf16.msra.mxu0 %v7135
    %7345 = vmatpush.bf16.msra.mxu0 %v7131
    %7346 = vmatpush.bf16.msra.mxu0 %v7127
    %7347 = vmatpush.bf16.msra.mxu0 %v7123
    %7348 = vmatpush.bf16.msra.mxu0 %v7119
    %7349 = vmatpush.bf16.msra.mxu0 %v7115
    %7350 = vmatpush.bf16.msra.mxu0 %v7111
    %7351 = vmatpush.bf16.msra.mxu0 %v7107
    %7352 = vmatmul.bf16.gmra.mxu0 %v5522
    %v7353 = vpop.f32.mrf.mxu0
    %v7354 = vadd.f32 %v7341, %v7353
    %v7355 = vpop.f32.mrf.mxu0
    %7356 = vdwg.mxu0
    %7357 = vmatpush.bf16.msra.mxu0 %v7167
    %7358 = vmatpush.bf16.msra.mxu0 %v7163
    %7359 = vmatpush.bf16.msra.mxu0 %v7159
    %7360 = vmatpush.bf16.msra.mxu0 %v7155
    %7361 = vmatpush.bf16.msra.mxu0 %v7151
    %7362 = vmatpush.bf16.msra.mxu0 %v7147
    %7363 = vmatpush.bf16.msra.mxu0 %v7143
    %7364 = vmatpush.bf16.msra.mxu0 %v7139
    %7365 = vmatmul.bf16.gmra.mxu0 %v5523
    %v7366 = vpop.f32.mrf.mxu0
    %v7367 = vadd.f32 %v7354, %v7366
    %v7368 = vpop.f32.mrf.mxu0
    %7369 = vdwg.mxu0
    %7370 = vmatpush.bf16.msra.mxu0 %v7199
    %7371 = vmatpush.bf16.msra.mxu0 %v7195
    %7372 = vmatpush.bf16.msra.mxu0 %v7191
    %7373 = vmatpush.bf16.msra.mxu0 %v7187
    %7374 = vmatpush.bf16.msra.mxu0 %v7183
    %7375 = vmatpush.bf16.msra.mxu0 %v7179
    %7376 = vmatpush.bf16.msra.mxu0 %v7175
    %7377 = vmatpush.bf16.msra.mxu0 %v7171
    %7378 = vmatmul.bf16.gmra.mxu0 %v5524
    %v7379 = vpop.f32.mrf.mxu0
    %v7380 = vadd.f32 %v7367, %v7379
    %v7381 = vpop.f32.mrf.mxu0
    %7382 = vdwg.mxu0
    %7383 = vmatpush.bf16.msra.mxu0 %v7104
    %7384 = vmatpush.bf16.msra.mxu0 %v7100
    %7385 = vmatpush.bf16.msra.mxu0 %v7096
    %7386 = vmatpush.bf16.msra.mxu0 %v7092
    %7387 = vmatpush.bf16.msra.mxu0 %v7088
    %7388 = vmatpush.bf16.msra.mxu0 %v7084
    %7389 = vmatpush.bf16.msra.mxu0 %v7080
    %7390 = vmatpush.bf16.msra.mxu0 %v7076
    %7391 = vmatmul.bf16.gmra.mxu0 %v5521
    %v7392 = vpop.f32.mrf.mxu0
    %v7393 = vadd.f32 %v6584, %v7392
    %v7394 = vpop.f32.mrf.mxu0
    %7395 = vdwg.mxu0
    %7396 = vmatpush.bf16.msra.mxu0 %v7136
    %7397 = vmatpush.bf16.msra.mxu0 %v7132
    %7398 = vmatpush.bf16.msra.mxu0 %v7128
    %7399 = vmatpush.bf16.msra.mxu0 %v7124
    %7400 = vmatpush.bf16.msra.mxu0 %v7120
    %7401 = vmatpush.bf16.msra.mxu0 %v7116
    %7402 = vmatpush.bf16.msra.mxu0 %v7112
    %7403 = vmatpush.bf16.msra.mxu0 %v7108
    %7404 = vmatmul.bf16.gmra.mxu0 %v5522
    %v7405 = vpop.f32.mrf.mxu0
    %v7406 = vadd.f32 %v7393, %v7405
    %v7407 = vpop.f32.mrf.mxu0
    %7408 = vdwg.mxu0
    %7409 = vmatpush.bf16.msra.mxu0 %v7168
    %7410 = vmatpush.bf16.msra.mxu0 %v7164
    %7411 = vmatpush.bf16.msra.mxu0 %v7160
    %7412 = vmatpush.bf16.msra.mxu0 %v7156
    %7413 = vmatpush.bf16.msra.mxu0 %v7152
    %7414 = vmatpush.bf16.msra.mxu0 %v7148
    %7415 = vmatpush.bf16.msra.mxu0 %v7144
    %7416 = vmatpush.bf16.msra.mxu0 %v7140
    %7417 = vmatmul.bf16.gmra.mxu0 %v5523
    %v7418 = vpop.f32.mrf.mxu0
    %v7419 = vadd.f32 %v7406, %v7418
    %v7420 = vpop.f32.mrf.mxu0
    %7421 = vdwg.mxu0
    %7422 = vmatpush.bf16.msra.mxu0 %v7200
    %7423 = vmatpush.bf16.msra.mxu0 %v7196
    %7424 = vmatpush.bf16.msra.mxu0 %v7192
    %7425 = vmatpush.bf16.msra.mxu0 %v7188
    %7426 = vmatpush.bf16.msra.mxu0 %v7184
    %7427 = vmatpush.bf16.msra.mxu0 %v7180
    %7428 = vmatpush.bf16.msra.mxu0 %v7176
    %7429 = vmatpush.bf16.msra.mxu0 %v7172
    %7430 = vmatmul.bf16.gmra.mxu0 %v5524
    %v7431 = vpop.f32.mrf.mxu0
    %v7432 = vadd.f32 %v7419, %v7431
    %v7433 = vpop.f32.mrf.mxu0
    %7434 = vdwg.mxu0
    %7435 = vmatpush.bf16.msra.mxu0 %v7105
    %7436 = vmatpush.bf16.msra.mxu0 %v7101
    %7437 = vmatpush.bf16.msra.mxu0 %v7097
    %7438 = vmatpush.bf16.msra.mxu0 %v7093
    %7439 = vmatpush.bf16.msra.mxu0 %v7089
    %7440 = vmatpush.bf16.msra.mxu0 %v7085
    %7441 = vmatpush.bf16.msra.mxu0 %v7081
    %7442 = vmatpush.bf16.msra.mxu0 %v7077
    %7443 = vmatmul.bf16.gmra.mxu0 %v5521
    %v7444 = vpop.f32.mrf.mxu0
    %v7445 = vadd.f32 %v6636, %v7444
    %v7446 = vpop.f32.mrf.mxu0
    %7447 = vdwg.mxu0
    %7448 = vmatpush.bf16.msra.mxu0 %v7137
    %7449 = vmatpush.bf16.msra.mxu0 %v7133
    %7450 = vmatpush.bf16.msra.mxu0 %v7129
    %7451 = vmatpush.bf16.msra.mxu0 %v7125
    %7452 = vmatpush.bf16.msra.mxu0 %v7121
    %7453 = vmatpush.bf16.msra.mxu0 %v7117
    %7454 = vmatpush.bf16.msra.mxu0 %v7113
    %7455 = vmatpush.bf16.msra.mxu0 %v7109
    %7456 = vmatmul.bf16.gmra.mxu0 %v5522
    %v7457 = vpop.f32.mrf.mxu0
    %v7458 = vadd.f32 %v7445, %v7457
    %v7459 = vpop.f32.mrf.mxu0
    %7460 = vdwg.mxu0
    %7461 = vmatpush.bf16.msra.mxu0 %v7169
    %7462 = vmatpush.bf16.msra.mxu0 %v7165
    %7463 = vmatpush.bf16.msra.mxu0 %v7161
    %7464 = vmatpush.bf16.msra.mxu0 %v7157
    %7465 = vmatpush.bf16.msra.mxu0 %v7153
    %7466 = vmatpush.bf16.msra.mxu0 %v7149
    %7467 = vmatpush.bf16.msra.mxu0 %v7145
    %7468 = vmatpush.bf16.msra.mxu0 %v7141
    %7469 = vmatmul.bf16.gmra.mxu0 %v5523
    %v7470 = vpop.f32.mrf.mxu0
    %v7471 = vadd.f32 %v7458, %v7470
    %v7472 = vpop.f32.mrf.mxu0
    %7473 = vdwg.mxu0
    %7474 = vmatpush.bf16.msra.mxu0 %v7201
    %7475 = vmatpush.bf16.msra.mxu0 %v7197
    %7476 = vmatpush.bf16.msra.mxu0 %v7193
    %7477 = vmatpush.bf16.msra.mxu0 %v7189
    %7478 = vmatpush.bf16.msra.mxu0 %v7185
    %7479 = vmatpush.bf16.msra.mxu0 %v7181
    %7480 = vmatpush.bf16.msra.mxu0 %v7177
    %7481 = vmatpush.bf16.msra.mxu0 %v7173
    %7482 = vmatmul.bf16.gmra.mxu0 %v5524
    %v7483 = vpop.f32.mrf.mxu0
    %v7484 = vadd.f32 %v7471, %v7483
    %v7485 = vpop.f32.mrf.mxu0
    %7486 = vdwg.mxu0
    %7487 = vmatpush.bf16.msra.mxu0 %v7106
    %7488 = vmatpush.bf16.msra.mxu0 %v7102
    %7489 = vmatpush.bf16.msra.mxu0 %v7098
    %7490 = vmatpush.bf16.msra.mxu0 %v7094
    %7491 = vmatpush.bf16.msra.mxu0 %v7090
    %7492 = vmatpush.bf16.msra.mxu0 %v7086
    %7493 = vmatpush.bf16.msra.mxu0 %v7082
    %7494 = vmatpush.bf16.msra.mxu0 %v7078
    %7495 = vmatmul.bf16.gmra.mxu0 %v5521
    %v7496 = vpop.f32.mrf.mxu0
    %v7497 = vadd.f32 %v6688, %v7496
    %v7498 = vpop.f32.mrf.mxu0
    %7499 = vdwg.mxu0
    %7500 = vmatpush.bf16.msra.mxu0 %v7138
    %7501 = vmatpush.bf16.msra.mxu0 %v7134
    %7502 = vmatpush.bf16.msra.mxu0 %v7130
    %7503 = vmatpush.bf16.msra.mxu0 %v7126
    %7504 = vmatpush.bf16.msra.mxu0 %v7122
    %7505 = vmatpush.bf16.msra.mxu0 %v7118
    %7506 = vmatpush.bf16.msra.mxu0 %v7114
    %7507 = vmatpush.bf16.msra.mxu0 %v7110
    %7508 = vmatmul.bf16.gmra.mxu0 %v5522
    %v7509 = vpop.f32.mrf.mxu0
    %v7510 = vadd.f32 %v7497, %v7509
    %v7511 = vpop.f32.mrf.mxu0
    %7512 = vdwg.mxu0
    %7513 = vmatpush.bf16.msra.mxu0 %v7170
    %7514 = vmatpush.bf16.msra.mxu0 %v7166
    %7515 = vmatpush.bf16.msra.mxu0 %v7162
    %7516 = vmatpush.bf16.msra.mxu0 %v7158
    %7517 = vmatpush.bf16.msra.mxu0 %v7154
    %7518 = vmatpush.bf16.msra.mxu0 %v7150
    %7519 = vmatpush.bf16.msra.mxu0 %v7146
    %7520 = vmatpush.bf16.msra.mxu0 %v7142
    %7521 = vmatmul.bf16.gmra.mxu0 %v5523
    %v7522 = vpop.f32.mrf.mxu0
    %v7523 = vadd.f32 %v7510, %v7522
    %v7524 = vpop.f32.mrf.mxu0
    %7525 = vdwg.mxu0
    %7526 = vmatpush.bf16.msra.mxu0 %v7202
    %7527 = vmatpush.bf16.msra.mxu0 %v7198
    %7528 = vmatpush.bf16.msra.mxu0 %v7194
    %7529 = vmatpush.bf16.msra.mxu0 %v7190
    %7530 = vmatpush.bf16.msra.mxu0 %v7186
    %7531 = vmatpush.bf16.msra.mxu0 %v7182
    %7532 = vmatpush.bf16.msra.mxu0 %v7178
    %7533 = vmatpush.bf16.msra.mxu0 %v7174
    %7534 = vmatmul.bf16.gmra.mxu0 %v5524
    %v7535 = vpop.f32.mrf.mxu0
    %v7536 = vadd.f32 %v7523, %v7535
    %v7537 = vpop.f32.mrf.mxu0
    %7538 = vdwg.mxu0
    %s7539 = scalar_lea.vmem [#allocation13], 4
    %v7540 = vld [vmem:[%s7539] sm:$0x3]
    %v7542 = vsel %vm5452, %v7540, 0
    %7544 = vmatpush.bf16.msra.mxu0 0
    %7545 = vmatpush.bf16.msra.mxu0 0
    %7546 = vmatpush.bf16.msra.mxu0 0
    %7547 = vmatpush.bf16.msra.mxu0 0
    %7548 = vmatpush.bf16.msra.mxu0 0
    %7549 = vmatpush.bf16.msra.mxu0 0
    %7550 = vmatpush.bf16.msra.mxu0 0
    %7551 = vmatpush.bf16.msra.mxu0 %v5458
    %7552 = vmatmul.bf16.gmra.mxu0 %v7542
    %v7553 = vpop.f32.mrf.mxu0
    %v7554 = vadd.f32 0.0, %v7553
    %v7555 = vpop.f32.mrf.mxu0
    %7556 = vdwg.mxu0
    %7557 = vmatpush.bf16.msra.mxu0 0
    %7558 = vmatpush.bf16.msra.mxu0 0
    %7559 = vmatpush.bf16.msra.mxu0 0
    %7560 = vmatpush.bf16.msra.mxu0 0
    %7561 = vmatpush.bf16.msra.mxu0 0
    %7562 = vmatpush.bf16.msra.mxu0 0
    %7563 = vmatpush.bf16.msra.mxu0 0
    %7564 = vmatpush.bf16.msra.mxu0 %v5461
    %7565 = vmatmul.bf16.gmra.mxu0 %v7542
    %v7566 = vpop.f32.mrf.mxu0
    %v7567 = vadd.f32 0.0, %v7566
    %v7568 = vpop.f32.mrf.mxu0
    %7569 = vdwg.mxu0
    %7570 = vmatpush.bf16.msra.mxu0 0
    %7571 = vmatpush.bf16.msra.mxu0 0
    %7572 = vmatpush.bf16.msra.mxu0 0
    %7573 = vmatpush.bf16.msra.mxu0 0
    %7574 = vmatpush.bf16.msra.mxu0 0
    %7575 = vmatpush.bf16.msra.mxu0 0
    %7576 = vmatpush.bf16.msra.mxu0 0
    %7577 = vmatpush.bf16.msra.mxu0 %v5464
    %7578 = vmatmul.bf16.gmra.mxu0 %v7542
    %v7579 = vpop.f32.mrf.mxu0
    %v7580 = vadd.f32 0.0, %v7579
    %v7581 = vpop.f32.mrf.mxu0
    %7582 = vdwg.mxu0
    %7583 = vmatpush.bf16.msra.mxu0 0
    %7584 = vmatpush.bf16.msra.mxu0 0
    %7585 = vmatpush.bf16.msra.mxu0 0
    %7586 = vmatpush.bf16.msra.mxu0 0
    %7587 = vmatpush.bf16.msra.mxu0 0
    %7588 = vmatpush.bf16.msra.mxu0 0
    %7589 = vmatpush.bf16.msra.mxu0 0
    %7590 = vmatpush.bf16.msra.mxu0 %v5467
    %7591 = vmatmul.bf16.gmra.mxu0 %v7542
    %v7592 = vpop.f32.mrf.mxu0
    %v7593 = vadd.f32 0.0, %v7592
    %v7594 = vpop.f32.mrf.mxu0
    %7595 = vdwg.mxu0
    %v7596 = vpack.c.bf16 %v7554, %v7554
    %v7597 = vpack.c.bf16 %v7567, %v7567
    %v7598 = vpack.c.bf16 %v7580, %v7580
    %v7599 = vpack.c.bf16 %v7593, %v7593
    %s7600 = scalar_lea.vmem [#allocation12], 2048
    %v7601 = vld [vmem:[%s7600] sm:$0xff]
    %v7602 = vld [vmem:[%s7600 + $0x8] sm:$0xff]
    %v7603 = vld [vmem:[%s7600 + $0x10] sm:$0xff]
    %v7604 = vld [vmem:[%s7600 + $0x18] sm:$0xff]
    %v7605 = vld [vmem:[%s7600 + $0x20] sm:$0xff]
    %v7606 = vld [vmem:[%s7600 + $0x28] sm:$0xff]
    %v7607 = vld [vmem:[%s7600 + $0x30] sm:$0xff]
    %v7608 = vld [vmem:[%s7600 + $0x38] sm:$0xff]
    %v7609 = vld [vmem:[%s7600 + $0x40] sm:$0xff]
    %v7610 = vld [vmem:[%s7600 + $0x48] sm:$0xff]
    %v7611 = vld [vmem:[%s7600 + $0x50] sm:$0xff]
    %v7612 = vld [vmem:[%s7600 + $0x58] sm:$0xff]
    %v7613 = vld [vmem:[%s7600 + $0x60] sm:$0xff]
    %v7614 = vld [vmem:[%s7600 + $0x68] sm:$0xff]
    %v7615 = vld [vmem:[%s7600 + $0x70] sm:$0xff]
    %v7616 = vld [vmem:[%s7600 + $0x78] sm:$0xff]
    %v7617 = vld [vmem:[%s7600 + $0x80] sm:$0xff]
    %v7618 = vld [vmem:[%s7600 + $0x88] sm:$0xff]
    %v7619 = vld [vmem:[%s7600 + $0x90] sm:$0xff]
    %v7620 = vld [vmem:[%s7600 + $0x98] sm:$0xff]
    %v7621 = vld [vmem:[%s7600 + $0xa0] sm:$0xff]
    %v7622 = vld [vmem:[%s7600 + $0xa8] sm:$0xff]
    %v7623 = vld [vmem:[%s7600 + $0xb0] sm:$0xff]
    %v7624 = vld [vmem:[%s7600 + $0xb8] sm:$0xff]
    %v7625 = vld [vmem:[%s7600 + $0xc0] sm:$0xff]
    %v7626 = vld [vmem:[%s7600 + $0xc8] sm:$0xff]
    %v7627 = vld [vmem:[%s7600 + $0xd0] sm:$0xff]
    %v7628 = vld [vmem:[%s7600 + $0xd8] sm:$0xff]
    %v7629 = vld [vmem:[%s7600 + $0xe0] sm:$0xff]
    %v7630 = vld [vmem:[%s7600 + $0xe8] sm:$0xff]
    %v7631 = vld [vmem:[%s7600 + $0xf0] sm:$0xff]
    %v7632 = vld [vmem:[%s7600 + $0xf8] sm:$0xff]
    %v7633 = vld [vmem:[%s7600 + $0x100] sm:$0xff]
    %v7634 = vld [vmem:[%s7600 + $0x108] sm:$0xff]
    %v7635 = vld [vmem:[%s7600 + $0x110] sm:$0xff]
    %v7636 = vld [vmem:[%s7600 + $0x118] sm:$0xff]
    %v7637 = vld [vmem:[%s7600 + $0x120] sm:$0xff]
    %v7638 = vld [vmem:[%s7600 + $0x128] sm:$0xff]
    %v7639 = vld [vmem:[%s7600 + $0x130] sm:$0xff]
    %v7640 = vld [vmem:[%s7600 + $0x138] sm:$0xff]
    %v7641 = vld [vmem:[%s7600 + $0x140] sm:$0xff]
    %v7642 = vld [vmem:[%s7600 + $0x148] sm:$0xff]
    %v7643 = vld [vmem:[%s7600 + $0x150] sm:$0xff]
    %v7644 = vld [vmem:[%s7600 + $0x158] sm:$0xff]
    %v7645 = vld [vmem:[%s7600 + $0x160] sm:$0xff]
    %v7646 = vld [vmem:[%s7600 + $0x168] sm:$0xff]
    %v7647 = vld [vmem:[%s7600 + $0x170] sm:$0xff]
    %v7648 = vld [vmem:[%s7600 + $0x178] sm:$0xff]
    %v7649 = vld [vmem:[%s7600 + $0x180] sm:$0xff]
    %v7650 = vld [vmem:[%s7600 + $0x188] sm:$0xff]
    %v7651 = vld [vmem:[%s7600 + $0x190] sm:$0xff]
    %v7652 = vld [vmem:[%s7600 + $0x198] sm:$0xff]
    %v7653 = vld [vmem:[%s7600 + $0x1a0] sm:$0xff]
    %v7654 = vld [vmem:[%s7600 + $0x1a8] sm:$0xff]
    %v7655 = vld [vmem:[%s7600 + $0x1b0] sm:$0xff]
    %v7656 = vld [vmem:[%s7600 + $0x1b8] sm:$0xff]
    %v7657 = vld [vmem:[%s7600 + $0x1c0] sm:$0xff]
    %v7658 = vld [vmem:[%s7600 + $0x1c8] sm:$0xff]
    %v7659 = vld [vmem:[%s7600 + $0x1d0] sm:$0xff]
    %v7660 = vld [vmem:[%s7600 + $0x1d8] sm:$0xff]
    %v7661 = vld [vmem:[%s7600 + $0x1e0] sm:$0xff]
    %v7662 = vld [vmem:[%s7600 + $0x1e8] sm:$0xff]
    %v7663 = vld [vmem:[%s7600 + $0x1f0] sm:$0xff]
    %v7664 = vld [vmem:[%s7600 + $0x1f8] sm:$0xff]
    %v7665 = vld [vmem:[%s7600 + $0x200] sm:$0xff]
    %v7666 = vld [vmem:[%s7600 + $0x208] sm:$0xff]
    %v7667 = vld [vmem:[%s7600 + $0x210] sm:$0xff]
    %v7668 = vld [vmem:[%s7600 + $0x218] sm:$0xff]
    %v7669 = vld [vmem:[%s7600 + $0x220] sm:$0xff]
    %v7670 = vld [vmem:[%s7600 + $0x228] sm:$0xff]
    %v7671 = vld [vmem:[%s7600 + $0x230] sm:$0xff]
    %v7672 = vld [vmem:[%s7600 + $0x238] sm:$0xff]
    %v7673 = vld [vmem:[%s7600 + $0x240] sm:$0xff]
    %v7674 = vld [vmem:[%s7600 + $0x248] sm:$0xff]
    %v7675 = vld [vmem:[%s7600 + $0x250] sm:$0xff]
    %v7676 = vld [vmem:[%s7600 + $0x258] sm:$0xff]
    %v7677 = vld [vmem:[%s7600 + $0x260] sm:$0xff]
    %v7678 = vld [vmem:[%s7600 + $0x268] sm:$0xff]
    %v7679 = vld [vmem:[%s7600 + $0x270] sm:$0xff]
    %v7680 = vld [vmem:[%s7600 + $0x278] sm:$0xff]
    %v7681 = vld [vmem:[%s7600 + $0x280] sm:$0xff]
    %v7682 = vld [vmem:[%s7600 + $0x288] sm:$0xff]
    %v7683 = vld [vmem:[%s7600 + $0x290] sm:$0xff]
    %v7684 = vld [vmem:[%s7600 + $0x298] sm:$0xff]
    %v7685 = vld [vmem:[%s7600 + $0x2a0] sm:$0xff]
    %v7686 = vld [vmem:[%s7600 + $0x2a8] sm:$0xff]
    %v7687 = vld [vmem:[%s7600 + $0x2b0] sm:$0xff]
    %v7688 = vld [vmem:[%s7600 + $0x2b8] sm:$0xff]
    %v7689 = vld [vmem:[%s7600 + $0x2c0] sm:$0xff]
    %v7690 = vld [vmem:[%s7600 + $0x2c8] sm:$0xff]
    %v7691 = vld [vmem:[%s7600 + $0x2d0] sm:$0xff]
    %v7692 = vld [vmem:[%s7600 + $0x2d8] sm:$0xff]
    %v7693 = vld [vmem:[%s7600 + $0x2e0] sm:$0xff]
    %v7694 = vld [vmem:[%s7600 + $0x2e8] sm:$0xff]
    %v7695 = vld [vmem:[%s7600 + $0x2f0] sm:$0xff]
    %v7696 = vld [vmem:[%s7600 + $0x2f8] sm:$0xff]
    %v7697 = vld [vmem:[%s7600 + $0x300] sm:$0xff]
    %v7698 = vld [vmem:[%s7600 + $0x308] sm:$0xff]
    %v7699 = vld [vmem:[%s7600 + $0x310] sm:$0xff]
    %v7700 = vld [vmem:[%s7600 + $0x318] sm:$0xff]
    %v7701 = vld [vmem:[%s7600 + $0x320] sm:$0xff]
    %v7702 = vld [vmem:[%s7600 + $0x328] sm:$0xff]
    %v7703 = vld [vmem:[%s7600 + $0x330] sm:$0xff]
    %v7704 = vld [vmem:[%s7600 + $0x338] sm:$0xff]
    %v7705 = vld [vmem:[%s7600 + $0x340] sm:$0xff]
    %v7706 = vld [vmem:[%s7600 + $0x348] sm:$0xff]
    %v7707 = vld [vmem:[%s7600 + $0x350] sm:$0xff]
    %v7708 = vld [vmem:[%s7600 + $0x358] sm:$0xff]
    %v7709 = vld [vmem:[%s7600 + $0x360] sm:$0xff]
    %v7710 = vld [vmem:[%s7600 + $0x368] sm:$0xff]
    %v7711 = vld [vmem:[%s7600 + $0x370] sm:$0xff]
    %v7712 = vld [vmem:[%s7600 + $0x378] sm:$0xff]
    %v7713 = vld [vmem:[%s7600 + $0x380] sm:$0xff]
    %v7714 = vld [vmem:[%s7600 + $0x388] sm:$0xff]
    %v7715 = vld [vmem:[%s7600 + $0x390] sm:$0xff]
    %v7716 = vld [vmem:[%s7600 + $0x398] sm:$0xff]
    %v7717 = vld [vmem:[%s7600 + $0x3a0] sm:$0xff]
    %v7718 = vld [vmem:[%s7600 + $0x3a8] sm:$0xff]
    %v7719 = vld [vmem:[%s7600 + $0x3b0] sm:$0xff]
    %v7720 = vld [vmem:[%s7600 + $0x3b8] sm:$0xff]
    %v7721 = vld [vmem:[%s7600 + $0x3c0] sm:$0xff]
    %v7722 = vld [vmem:[%s7600 + $0x3c8] sm:$0xff]
    %v7723 = vld [vmem:[%s7600 + $0x3d0] sm:$0xff]
    %v7724 = vld [vmem:[%s7600 + $0x3d8] sm:$0xff]
    %v7725 = vld [vmem:[%s7600 + $0x3e0] sm:$0xff]
    %v7726 = vld [vmem:[%s7600 + $0x3e8] sm:$0xff]
    %v7727 = vld [vmem:[%s7600 + $0x3f0] sm:$0xff]
    %v7728 = vld [vmem:[%s7600 + $0x3f8] sm:$0xff]
    %v7857 = vunpack.c.l.b16 %v7601
    %v7858 = vunpack.c.h.b16 %v7601
    %v7859 = vunpack.c.l.b16 %v7602
    %v7860 = vunpack.c.h.b16 %v7602
    %v7861 = vunpack.c.l.b16 %v7603
    %v7862 = vunpack.c.h.b16 %v7603
    %v7863 = vunpack.c.l.b16 %v7604
    %v7864 = vunpack.c.h.b16 %v7604
    %v7865 = vunpack.c.l.b16 %v7605
    %v7866 = vunpack.c.h.b16 %v7605
    %v7867 = vunpack.c.l.b16 %v7606
    %v7868 = vunpack.c.h.b16 %v7606
    %v7869 = vunpack.c.l.b16 %v7607
    %v7870 = vunpack.c.h.b16 %v7607
    %v7871 = vunpack.c.l.b16 %v7608
    %v7872 = vunpack.c.h.b16 %v7608
    %v7873 = vunpack.c.l.b16 %v7609
    %v7874 = vunpack.c.h.b16 %v7609
    %v7875 = vunpack.c.l.b16 %v7610
    %v7876 = vunpack.c.h.b16 %v7610
    %v7877 = vunpack.c.l.b16 %v7611
    %v7878 = vunpack.c.h.b16 %v7611
    %v7879 = vunpack.c.l.b16 %v7612
    %v7880 = vunpack.c.h.b16 %v7612
    %v7881 = vunpack.c.l.b16 %v7613
    %v7882 = vunpack.c.h.b16 %v7613
    %v7883 = vunpack.c.l.b16 %v7614
    %v7884 = vunpack.c.h.b16 %v7614
    %v7885 = vunpack.c.l.b16 %v7615
    %v7886 = vunpack.c.h.b16 %v7615
    %v7887 = vunpack.c.l.b16 %v7616
    %v7888 = vunpack.c.h.b16 %v7616
    %v7889 = vunpack.c.l.b16 %v7617
    %v7890 = vunpack.c.h.b16 %v7617
    %v7891 = vunpack.c.l.b16 %v7618
    %v7892 = vunpack.c.h.b16 %v7618
    %v7893 = vunpack.c.l.b16 %v7619
    %v7894 = vunpack.c.h.b16 %v7619
    %v7895 = vunpack.c.l.b16 %v7620
    %v7896 = vunpack.c.h.b16 %v7620
    %v7897 = vunpack.c.l.b16 %v7621
    %v7898 = vunpack.c.h.b16 %v7621
    %v7899 = vunpack.c.l.b16 %v7622
    %v7900 = vunpack.c.h.b16 %v7622
    %v7901 = vunpack.c.l.b16 %v7623
    %v7902 = vunpack.c.h.b16 %v7623
    %v7903 = vunpack.c.l.b16 %v7624
    %v7904 = vunpack.c.h.b16 %v7624
    %v7905 = vunpack.c.l.b16 %v7625
    %v7906 = vunpack.c.h.b16 %v7625
    %v7907 = vunpack.c.l.b16 %v7626
    %v7908 = vunpack.c.h.b16 %v7626
    %v7909 = vunpack.c.l.b16 %v7627
    %v7910 = vunpack.c.h.b16 %v7627
    %v7911 = vunpack.c.l.b16 %v7628
    %v7912 = vunpack.c.h.b16 %v7628
    %v7913 = vunpack.c.l.b16 %v7629
    %v7914 = vunpack.c.h.b16 %v7629
    %v7915 = vunpack.c.l.b16 %v7630
    %v7916 = vunpack.c.h.b16 %v7630
    %v7917 = vunpack.c.l.b16 %v7631
    %v7918 = vunpack.c.h.b16 %v7631
    %v7919 = vunpack.c.l.b16 %v7632
    %v7920 = vunpack.c.h.b16 %v7632
    %v7921 = vunpack.c.l.b16 %v7633
    %v7922 = vunpack.c.h.b16 %v7633
    %v7923 = vunpack.c.l.b16 %v7634
    %v7924 = vunpack.c.h.b16 %v7634
    %v7925 = vunpack.c.l.b16 %v7635
    %v7926 = vunpack.c.h.b16 %v7635
    %v7927 = vunpack.c.l.b16 %v7636
    %v7928 = vunpack.c.h.b16 %v7636
    %v7929 = vunpack.c.l.b16 %v7637
    %v7930 = vunpack.c.h.b16 %v7637
    %v7931 = vunpack.c.l.b16 %v7638
    %v7932 = vunpack.c.h.b16 %v7638
    %v7933 = vunpack.c.l.b16 %v7639
    %v7934 = vunpack.c.h.b16 %v7639
    %v7935 = vunpack.c.l.b16 %v7640
    %v7936 = vunpack.c.h.b16 %v7640
    %v7937 = vunpack.c.l.b16 %v7641
    %v7938 = vunpack.c.h.b16 %v7641
    %v7939 = vunpack.c.l.b16 %v7642
    %v7940 = vunpack.c.h.b16 %v7642
    %v7941 = vunpack.c.l.b16 %v7643
    %v7942 = vunpack.c.h.b16 %v7643
    %v7943 = vunpack.c.l.b16 %v7644
    %v7944 = vunpack.c.h.b16 %v7644
    %v7945 = vunpack.c.l.b16 %v7645
    %v7946 = vunpack.c.h.b16 %v7645
    %v7947 = vunpack.c.l.b16 %v7646
    %v7948 = vunpack.c.h.b16 %v7646
    %v7949 = vunpack.c.l.b16 %v7647
    %v7950 = vunpack.c.h.b16 %v7647
    %v7951 = vunpack.c.l.b16 %v7648
    %v7952 = vunpack.c.h.b16 %v7648
    %v7953 = vunpack.c.l.b16 %v7649
    %v7954 = vunpack.c.h.b16 %v7649
    %v7955 = vunpack.c.l.b16 %v7650
    %v7956 = vunpack.c.h.b16 %v7650
    %v7957 = vunpack.c.l.b16 %v7651
    %v7958 = vunpack.c.h.b16 %v7651
    %v7959 = vunpack.c.l.b16 %v7652
    %v7960 = vunpack.c.h.b16 %v7652
    %v7961 = vunpack.c.l.b16 %v7653
    %v7962 = vunpack.c.h.b16 %v7653
    %v7963 = vunpack.c.l.b16 %v7654
    %v7964 = vunpack.c.h.b16 %v7654
    %v7965 = vunpack.c.l.b16 %v7655
    %v7966 = vunpack.c.h.b16 %v7655
    %v7967 = vunpack.c.l.b16 %v7656
    %v7968 = vunpack.c.h.b16 %v7656
    %v7969 = vunpack.c.l.b16 %v7657
    %v7970 = vunpack.c.h.b16 %v7657
    %v7971 = vunpack.c.l.b16 %v7658
    %v7972 = vunpack.c.h.b16 %v7658
    %v7973 = vunpack.c.l.b16 %v7659
    %v7974 = vunpack.c.h.b16 %v7659
    %v7975 = vunpack.c.l.b16 %v7660
    %v7976 = vunpack.c.h.b16 %v7660
    %v7977 = vunpack.c.l.b16 %v7661
    %v7978 = vunpack.c.h.b16 %v7661
    %v7979 = vunpack.c.l.b16 %v7662
    %v7980 = vunpack.c.h.b16 %v7662
    %v7981 = vunpack.c.l.b16 %v7663
    %v7982 = vunpack.c.h.b16 %v7663
    %v7983 = vunpack.c.l.b16 %v7664
    %v7984 = vunpack.c.h.b16 %v7664
    %v7985 = vunpack.c.l.b16 %v7665
    %v7986 = vunpack.c.h.b16 %v7665
    %v7987 = vunpack.c.l.b16 %v7666
    %v7988 = vunpack.c.h.b16 %v7666
    %v7989 = vunpack.c.l.b16 %v7667
    %v7990 = vunpack.c.h.b16 %v7667
    %v7991 = vunpack.c.l.b16 %v7668
    %v7992 = vunpack.c.h.b16 %v7668
    %v7993 = vunpack.c.l.b16 %v7669
    %v7994 = vunpack.c.h.b16 %v7669
    %v7995 = vunpack.c.l.b16 %v7670
    %v7996 = vunpack.c.h.b16 %v7670
    %v7997 = vunpack.c.l.b16 %v7671
    %v7998 = vunpack.c.h.b16 %v7671
    %v7999 = vunpack.c.l.b16 %v7672
    %v8000 = vunpack.c.h.b16 %v7672
    %v8001 = vunpack.c.l.b16 %v7673
    %v8002 = vunpack.c.h.b16 %v7673
    %v8003 = vunpack.c.l.b16 %v7674
    %v8004 = vunpack.c.h.b16 %v7674
    %v8005 = vunpack.c.l.b16 %v7675
    %v8006 = vunpack.c.h.b16 %v7675
    %v8007 = vunpack.c.l.b16 %v7676
    %v8008 = vunpack.c.h.b16 %v7676
    %v8009 = vunpack.c.l.b16 %v7677
    %v8010 = vunpack.c.h.b16 %v7677
    %v8011 = vunpack.c.l.b16 %v7678
    %v8012 = vunpack.c.h.b16 %v7678
    %v8013 = vunpack.c.l.b16 %v7679
    %v8014 = vunpack.c.h.b16 %v7679
    %v8015 = vunpack.c.l.b16 %v7680
    %v8016 = vunpack.c.h.b16 %v7680
    %v8017 = vunpack.c.l.b16 %v7681
    %v8018 = vunpack.c.h.b16 %v7681
    %v8019 = vunpack.c.l.b16 %v7682
    %v8020 = vunpack.c.h.b16 %v7682
    %v8021 = vunpack.c.l.b16 %v7683
    %v8022 = vunpack.c.h.b16 %v7683
    %v8023 = vunpack.c.l.b16 %v7684
    %v8024 = vunpack.c.h.b16 %v7684
    %v8025 = vunpack.c.l.b16 %v7685
    %v8026 = vunpack.c.h.b16 %v7685
    %v8027 = vunpack.c.l.b16 %v7686
    %v8028 = vunpack.c.h.b16 %v7686
    %v8029 = vunpack.c.l.b16 %v7687
    %v8030 = vunpack.c.h.b16 %v7687
    %v8031 = vunpack.c.l.b16 %v7688
    %v8032 = vunpack.c.h.b16 %v7688
    %v8033 = vunpack.c.l.b16 %v7689
    %v8034 = vunpack.c.h.b16 %v7689
    %v8035 = vunpack.c.l.b16 %v7690
    %v8036 = vunpack.c.h.b16 %v7690
    %v8037 = vunpack.c.l.b16 %v7691
    %v8038 = vunpack.c.h.b16 %v7691
    %v8039 = vunpack.c.l.b16 %v7692
    %v8040 = vunpack.c.h.b16 %v7692
    %v8041 = vunpack.c.l.b16 %v7693
    %v8042 = vunpack.c.h.b16 %v7693
    %v8043 = vunpack.c.l.b16 %v7694
    %v8044 = vunpack.c.h.b16 %v7694
    %v8045 = vunpack.c.l.b16 %v7695
    %v8046 = vunpack.c.h.b16 %v7695
    %v8047 = vunpack.c.l.b16 %v7696
    %v8048 = vunpack.c.h.b16 %v7696
    %v8049 = vunpack.c.l.b16 %v7697
    %v8050 = vunpack.c.h.b16 %v7697
    %v8051 = vunpack.c.l.b16 %v7698
    %v8052 = vunpack.c.h.b16 %v7698
    %v8053 = vunpack.c.l.b16 %v7699
    %v8054 = vunpack.c.h.b16 %v7699
    %v8055 = vunpack.c.l.b16 %v7700
    %v8056 = vunpack.c.h.b16 %v7700
    %v8057 = vunpack.c.l.b16 %v7701
    %v8058 = vunpack.c.h.b16 %v7701
    %v8059 = vunpack.c.l.b16 %v7702
    %v8060 = vunpack.c.h.b16 %v7702
    %v8061 = vunpack.c.l.b16 %v7703
    %v8062 = vunpack.c.h.b16 %v7703
    %v8063 = vunpack.c.l.b16 %v7704
    %v8064 = vunpack.c.h.b16 %v7704
    %v8065 = vunpack.c.l.b16 %v7705
    %v8066 = vunpack.c.h.b16 %v7705
    %v8067 = vunpack.c.l.b16 %v7706
    %v8068 = vunpack.c.h.b16 %v7706
    %v8069 = vunpack.c.l.b16 %v7707
    %v8070 = vunpack.c.h.b16 %v7707
    %v8071 = vunpack.c.l.b16 %v7708
    %v8072 = vunpack.c.h.b16 %v7708
    %v8073 = vunpack.c.l.b16 %v7709
    %v8074 = vunpack.c.h.b16 %v7709
    %v8075 = vunpack.c.l.b16 %v7710
    %v8076 = vunpack.c.h.b16 %v7710
    %v8077 = vunpack.c.l.b16 %v7711
    %v8078 = vunpack.c.h.b16 %v7711
    %v8079 = vunpack.c.l.b16 %v7712
    %v8080 = vunpack.c.h.b16 %v7712
    %v8081 = vunpack.c.l.b16 %v7713
    %v8082 = vunpack.c.h.b16 %v7713
    %v8083 = vunpack.c.l.b16 %v7714
    %v8084 = vunpack.c.h.b16 %v7714
    %v8085 = vunpack.c.l.b16 %v7715
    %v8086 = vunpack.c.h.b16 %v7715
    %v8087 = vunpack.c.l.b16 %v7716
    %v8088 = vunpack.c.h.b16 %v7716
    %v8089 = vunpack.c.l.b16 %v7717
    %v8090 = vunpack.c.h.b16 %v7717
    %v8091 = vunpack.c.l.b16 %v7718
    %v8092 = vunpack.c.h.b16 %v7718
    %v8093 = vunpack.c.l.b16 %v7719
    %v8094 = vunpack.c.h.b16 %v7719
    %v8095 = vunpack.c.l.b16 %v7720
    %v8096 = vunpack.c.h.b16 %v7720
    %v8097 = vunpack.c.l.b16 %v7721
    %v8098 = vunpack.c.h.b16 %v7721
    %v8099 = vunpack.c.l.b16 %v7722
    %v8100 = vunpack.c.h.b16 %v7722
    %v8101 = vunpack.c.l.b16 %v7723
    %v8102 = vunpack.c.h.b16 %v7723
    %v8103 = vunpack.c.l.b16 %v7724
    %v8104 = vunpack.c.h.b16 %v7724
    %v8105 = vunpack.c.l.b16 %v7725
    %v8106 = vunpack.c.h.b16 %v7725
    %v8107 = vunpack.c.l.b16 %v7726
    %v8108 = vunpack.c.h.b16 %v7726
    %v8109 = vunpack.c.l.b16 %v7727
    %v8110 = vunpack.c.h.b16 %v7727
    %v8111 = vunpack.c.l.b16 %v7728
    %v8112 = vunpack.c.h.b16 %v7728
    %v8113 = vpack.c.b16 %v7861, %v7857
    %v8114 = vpack.c.b16 %v7862, %v7858
    %v8115 = vpack.c.b16 %v7863, %v7859
    %v8116 = vpack.c.b16 %v7864, %v7860
    %v8117 = vpack.c.b16 %v7869, %v7865
    %v8118 = vpack.c.b16 %v7870, %v7866
    %v8119 = vpack.c.b16 %v7871, %v7867
    %v8120 = vpack.c.b16 %v7872, %v7868
    %v8121 = vpack.c.b16 %v7877, %v7873
    %v8122 = vpack.c.b16 %v7878, %v7874
    %v8123 = vpack.c.b16 %v7879, %v7875
    %v8124 = vpack.c.b16 %v7880, %v7876
    %v8125 = vpack.c.b16 %v7885, %v7881
    %v8126 = vpack.c.b16 %v7886, %v7882
    %v8127 = vpack.c.b16 %v7887, %v7883
    %v8128 = vpack.c.b16 %v7888, %v7884
    %v8129 = vpack.c.b16 %v7893, %v7889
    %v8130 = vpack.c.b16 %v7894, %v7890
    %v8131 = vpack.c.b16 %v7895, %v7891
    %v8132 = vpack.c.b16 %v7896, %v7892
    %v8133 = vpack.c.b16 %v7901, %v7897
    %v8134 = vpack.c.b16 %v7902, %v7898
    %v8135 = vpack.c.b16 %v7903, %v7899
    %v8136 = vpack.c.b16 %v7904, %v7900
    %v8137 = vpack.c.b16 %v7909, %v7905
    %v8138 = vpack.c.b16 %v7910, %v7906
    %v8139 = vpack.c.b16 %v7911, %v7907
    %v8140 = vpack.c.b16 %v7912, %v7908
    %v8141 = vpack.c.b16 %v7917, %v7913
    %v8142 = vpack.c.b16 %v7918, %v7914
    %v8143 = vpack.c.b16 %v7919, %v7915
    %v8144 = vpack.c.b16 %v7920, %v7916
    %v8145 = vpack.c.b16 %v7925, %v7921
    %v8146 = vpack.c.b16 %v7926, %v7922
    %v8147 = vpack.c.b16 %v7927, %v7923
    %v8148 = vpack.c.b16 %v7928, %v7924
    %v8149 = vpack.c.b16 %v7933, %v7929
    %v8150 = vpack.c.b16 %v7934, %v7930
    %v8151 = vpack.c.b16 %v7935, %v7931
    %v8152 = vpack.c.b16 %v7936, %v7932
    %v8153 = vpack.c.b16 %v7941, %v7937
    %v8154 = vpack.c.b16 %v7942, %v7938
    %v8155 = vpack.c.b16 %v7943, %v7939
    %v8156 = vpack.c.b16 %v7944, %v7940
    %v8157 = vpack.c.b16 %v7949, %v7945
    %v8158 = vpack.c.b16 %v7950, %v7946
    %v8159 = vpack.c.b16 %v7951, %v7947
    %v8160 = vpack.c.b16 %v7952, %v7948
    %v8161 = vpack.c.b16 %v7957, %v7953
    %v8162 = vpack.c.b16 %v7958, %v7954
    %v8163 = vpack.c.b16 %v7959, %v7955
    %v8164 = vpack.c.b16 %v7960, %v7956
    %v8165 = vpack.c.b16 %v7965, %v7961
    %v8166 = vpack.c.b16 %v7966, %v7962
    %v8167 = vpack.c.b16 %v7967, %v7963
    %v8168 = vpack.c.b16 %v7968, %v7964
    %v8169 = vpack.c.b16 %v7973, %v7969
    %v8170 = vpack.c.b16 %v7974, %v7970
    %v8171 = vpack.c.b16 %v7975, %v7971
    %v8172 = vpack.c.b16 %v7976, %v7972
    %v8173 = vpack.c.b16 %v7981, %v7977
    %v8174 = vpack.c.b16 %v7982, %v7978
    %v8175 = vpack.c.b16 %v7983, %v7979
    %v8176 = vpack.c.b16 %v7984, %v7980
    %v8177 = vpack.c.b16 %v7989, %v7985
    %v8178 = vpack.c.b16 %v7990, %v7986
    %v8179 = vpack.c.b16 %v7991, %v7987
    %v8180 = vpack.c.b16 %v7992, %v7988
    %v8181 = vpack.c.b16 %v7997, %v7993
    %v8182 = vpack.c.b16 %v7998, %v7994
    %v8183 = vpack.c.b16 %v7999, %v7995
    %v8184 = vpack.c.b16 %v8000, %v7996
    %v8185 = vpack.c.b16 %v8005, %v8001
    %v8186 = vpack.c.b16 %v8006, %v8002
    %v8187 = vpack.c.b16 %v8007, %v8003
    %v8188 = vpack.c.b16 %v8008, %v8004
    %v8189 = vpack.c.b16 %v8013, %v8009
    %v8190 = vpack.c.b16 %v8014, %v8010
    %v8191 = vpack.c.b16 %v8015, %v8011
    %v8192 = vpack.c.b16 %v8016, %v8012
    %v8193 = vpack.c.b16 %v8021, %v8017
    %v8194 = vpack.c.b16 %v8022, %v8018
    %v8195 = vpack.c.b16 %v8023, %v8019
    %v8196 = vpack.c.b16 %v8024, %v8020
    %v8197 = vpack.c.b16 %v8029, %v8025
    %v8198 = vpack.c.b16 %v8030, %v8026
    %v8199 = vpack.c.b16 %v8031, %v8027
    %v8200 = vpack.c.b16 %v8032, %v8028
    %v8201 = vpack.c.b16 %v8037, %v8033
    %v8202 = vpack.c.b16 %v8038, %v8034
    %v8203 = vpack.c.b16 %v8039, %v8035
    %v8204 = vpack.c.b16 %v8040, %v8036
    %v8205 = vpack.c.b16 %v8045, %v8041
    %v8206 = vpack.c.b16 %v8046, %v8042
    %v8207 = vpack.c.b16 %v8047, %v8043
    %v8208 = vpack.c.b16 %v8048, %v8044
    %v8209 = vpack.c.b16 %v8053, %v8049
    %v8210 = vpack.c.b16 %v8054, %v8050
    %v8211 = vpack.c.b16 %v8055, %v8051
    %v8212 = vpack.c.b16 %v8056, %v8052
    %v8213 = vpack.c.b16 %v8061, %v8057
    %v8214 = vpack.c.b16 %v8062, %v8058
    %v8215 = vpack.c.b16 %v8063, %v8059
    %v8216 = vpack.c.b16 %v8064, %v8060
    %v8217 = vpack.c.b16 %v8069, %v8065
    %v8218 = vpack.c.b16 %v8070, %v8066
    %v8219 = vpack.c.b16 %v8071, %v8067
    %v8220 = vpack.c.b16 %v8072, %v8068
    %v8221 = vpack.c.b16 %v8077, %v8073
    %v8222 = vpack.c.b16 %v8078, %v8074
    %v8223 = vpack.c.b16 %v8079, %v8075
    %v8224 = vpack.c.b16 %v8080, %v8076
    %v8225 = vpack.c.b16 %v8085, %v8081
    %v8226 = vpack.c.b16 %v8086, %v8082
    %v8227 = vpack.c.b16 %v8087, %v8083
    %v8228 = vpack.c.b16 %v8088, %v8084
    %v8229 = vpack.c.b16 %v8093, %v8089
    %v8230 = vpack.c.b16 %v8094, %v8090
    %v8231 = vpack.c.b16 %v8095, %v8091
    %v8232 = vpack.c.b16 %v8096, %v8092
    %v8233 = vpack.c.b16 %v8101, %v8097
    %v8234 = vpack.c.b16 %v8102, %v8098
    %v8235 = vpack.c.b16 %v8103, %v8099
    %v8236 = vpack.c.b16 %v8104, %v8100
    %v8237 = vpack.c.b16 %v8109, %v8105
    %v8238 = vpack.c.b16 %v8110, %v8106
    %v8239 = vpack.c.b16 %v8111, %v8107
    %v8240 = vpack.c.b16 %v8112, %v8108
    %8369 = vmatpush.bf16.msra.mxu0 %v8141
    %8370 = vmatpush.bf16.msra.mxu0 %v8137
    %8371 = vmatpush.bf16.msra.mxu0 %v8133
    %8372 = vmatpush.bf16.msra.mxu0 %v8129
    %8373 = vmatpush.bf16.msra.mxu0 %v8125
    %8374 = vmatpush.bf16.msra.mxu0 %v8121
    %8375 = vmatpush.bf16.msra.mxu0 %v8117
    %8376 = vmatpush.bf16.msra.mxu0 %v8113
    %8377 = vmatmul.bf16.gmra.mxu0 %v7596
    %v8378 = vpop.f32.mrf.mxu0
    %v8379 = vadd.f32 0.0, %v8378
    %v8380 = vpop.f32.mrf.mxu0
    %8381 = vdwg.mxu0
    %8382 = vmatpush.bf16.msra.mxu0 %v8173
    %8383 = vmatpush.bf16.msra.mxu0 %v8169
    %8384 = vmatpush.bf16.msra.mxu0 %v8165
    %8385 = vmatpush.bf16.msra.mxu0 %v8161
    %8386 = vmatpush.bf16.msra.mxu0 %v8157
    %8387 = vmatpush.bf16.msra.mxu0 %v8153
    %8388 = vmatpush.bf16.msra.mxu0 %v8149
    %8389 = vmatpush.bf16.msra.mxu0 %v8145
    %8390 = vmatmul.bf16.gmra.mxu0 %v7597
    %v8391 = vpop.f32.mrf.mxu0
    %v8392 = vadd.f32 %v8379, %v8391
    %v8393 = vpop.f32.mrf.mxu0
    %8394 = vdwg.mxu0
    %8395 = vmatpush.bf16.msra.mxu0 %v8205
    %8396 = vmatpush.bf16.msra.mxu0 %v8201
    %8397 = vmatpush.bf16.msra.mxu0 %v8197
    %8398 = vmatpush.bf16.msra.mxu0 %v8193
    %8399 = vmatpush.bf16.msra.mxu0 %v8189
    %8400 = vmatpush.bf16.msra.mxu0 %v8185
    %8401 = vmatpush.bf16.msra.mxu0 %v8181
    %8402 = vmatpush.bf16.msra.mxu0 %v8177
    %8403 = vmatmul.bf16.gmra.mxu0 %v7598
    %v8404 = vpop.f32.mrf.mxu0
    %v8405 = vadd.f32 %v8392, %v8404
    %v8406 = vpop.f32.mrf.mxu0
    %8407 = vdwg.mxu0
    %8408 = vmatpush.bf16.msra.mxu0 %v8237
    %8409 = vmatpush.bf16.msra.mxu0 %v8233
    %8410 = vmatpush.bf16.msra.mxu0 %v8229
    %8411 = vmatpush.bf16.msra.mxu0 %v8225
    %8412 = vmatpush.bf16.msra.mxu0 %v8221
    %8413 = vmatpush.bf16.msra.mxu0 %v8217
    %8414 = vmatpush.bf16.msra.mxu0 %v8213
    %8415 = vmatpush.bf16.msra.mxu0 %v8209
    %8416 = vmatmul.bf16.gmra.mxu0 %v7599
    %v8417 = vpop.f32.mrf.mxu0
    %v8418 = vadd.f32 %v8405, %v8417
    %v8419 = vpop.f32.mrf.mxu0
    %8420 = vdwg.mxu0
    %8421 = vmatpush.bf16.msra.mxu0 %v8142
    %8422 = vmatpush.bf16.msra.mxu0 %v8138
    %8423 = vmatpush.bf16.msra.mxu0 %v8134
    %8424 = vmatpush.bf16.msra.mxu0 %v8130
    %8425 = vmatpush.bf16.msra.mxu0 %v8126
    %8426 = vmatpush.bf16.msra.mxu0 %v8122
    %8427 = vmatpush.bf16.msra.mxu0 %v8118
    %8428 = vmatpush.bf16.msra.mxu0 %v8114
    %8429 = vmatmul.bf16.gmra.mxu0 %v7596
    %v8430 = vpop.f32.mrf.mxu0
    %v8431 = vadd.f32 0.0, %v8430
    %v8432 = vpop.f32.mrf.mxu0
    %8433 = vdwg.mxu0
    %8434 = vmatpush.bf16.msra.mxu0 %v8174
    %8435 = vmatpush.bf16.msra.mxu0 %v8170
    %8436 = vmatpush.bf16.msra.mxu0 %v8166
    %8437 = vmatpush.bf16.msra.mxu0 %v8162
    %8438 = vmatpush.bf16.msra.mxu0 %v8158
    %8439 = vmatpush.bf16.msra.mxu0 %v8154
    %8440 = vmatpush.bf16.msra.mxu0 %v8150
    %8441 = vmatpush.bf16.msra.mxu0 %v8146
    %8442 = vmatmul.bf16.gmra.mxu0 %v7597
    %v8443 = vpop.f32.mrf.mxu0
    %v8444 = vadd.f32 %v8431, %v8443
    %v8445 = vpop.f32.mrf.mxu0
    %8446 = vdwg.mxu0
    %8447 = vmatpush.bf16.msra.mxu0 %v8206
    %8448 = vmatpush.bf16.msra.mxu0 %v8202
    %8449 = vmatpush.bf16.msra.mxu0 %v8198
    %8450 = vmatpush.bf16.msra.mxu0 %v8194
    %8451 = vmatpush.bf16.msra.mxu0 %v8190
    %8452 = vmatpush.bf16.msra.mxu0 %v8186
    %8453 = vmatpush.bf16.msra.mxu0 %v8182
    %8454 = vmatpush.bf16.msra.mxu0 %v8178
    %8455 = vmatmul.bf16.gmra.mxu0 %v7598
    %v8456 = vpop.f32.mrf.mxu0
    %v8457 = vadd.f32 %v8444, %v8456
    %v8458 = vpop.f32.mrf.mxu0
    %8459 = vdwg.mxu0
    %8460 = vmatpush.bf16.msra.mxu0 %v8238
    %8461 = vmatpush.bf16.msra.mxu0 %v8234
    %8462 = vmatpush.bf16.msra.mxu0 %v8230
    %8463 = vmatpush.bf16.msra.mxu0 %v8226
    %8464 = vmatpush.bf16.msra.mxu0 %v8222
    %8465 = vmatpush.bf16.msra.mxu0 %v8218
    %8466 = vmatpush.bf16.msra.mxu0 %v8214
    %8467 = vmatpush.bf16.msra.mxu0 %v8210
    %8468 = vmatmul.bf16.gmra.mxu0 %v7599
    %v8469 = vpop.f32.mrf.mxu0
    %v8470 = vadd.f32 %v8457, %v8469
    %v8471 = vpop.f32.mrf.mxu0
    %8472 = vdwg.mxu0
    %8473 = vmatpush.bf16.msra.mxu0 %v8143
    %8474 = vmatpush.bf16.msra.mxu0 %v8139
    %8475 = vmatpush.bf16.msra.mxu0 %v8135
    %8476 = vmatpush.bf16.msra.mxu0 %v8131
    %8477 = vmatpush.bf16.msra.mxu0 %v8127
    %8478 = vmatpush.bf16.msra.mxu0 %v8123
    %8479 = vmatpush.bf16.msra.mxu0 %v8119
    %8480 = vmatpush.bf16.msra.mxu0 %v8115
    %8481 = vmatmul.bf16.gmra.mxu0 %v7596
    %v8482 = vpop.f32.mrf.mxu0
    %v8483 = vadd.f32 0.0, %v8482
    %v8484 = vpop.f32.mrf.mxu0
    %8485 = vdwg.mxu0
    %8486 = vmatpush.bf16.msra.mxu0 %v8175
    %8487 = vmatpush.bf16.msra.mxu0 %v8171
    %8488 = vmatpush.bf16.msra.mxu0 %v8167
    %8489 = vmatpush.bf16.msra.mxu0 %v8163
    %8490 = vmatpush.bf16.msra.mxu0 %v8159
    %8491 = vmatpush.bf16.msra.mxu0 %v8155
    %8492 = vmatpush.bf16.msra.mxu0 %v8151
    %8493 = vmatpush.bf16.msra.mxu0 %v8147
    %8494 = vmatmul.bf16.gmra.mxu0 %v7597
    %v8495 = vpop.f32.mrf.mxu0
    %v8496 = vadd.f32 %v8483, %v8495
    %v8497 = vpop.f32.mrf.mxu0
    %8498 = vdwg.mxu0
    %8499 = vmatpush.bf16.msra.mxu0 %v8207
    %8500 = vmatpush.bf16.msra.mxu0 %v8203
    %8501 = vmatpush.bf16.msra.mxu0 %v8199
    %8502 = vmatpush.bf16.msra.mxu0 %v8195
    %8503 = vmatpush.bf16.msra.mxu0 %v8191
    %8504 = vmatpush.bf16.msra.mxu0 %v8187
    %8505 = vmatpush.bf16.msra.mxu0 %v8183
    %8506 = vmatpush.bf16.msra.mxu0 %v8179
    %8507 = vmatmul.bf16.gmra.mxu0 %v7598
    %v8508 = vpop.f32.mrf.mxu0
    %v8509 = vadd.f32 %v8496, %v8508
    %v8510 = vpop.f32.mrf.mxu0
    %8511 = vdwg.mxu0
    %8512 = vmatpush.bf16.msra.mxu0 %v8239
    %8513 = vmatpush.bf16.msra.mxu0 %v8235
    %8514 = vmatpush.bf16.msra.mxu0 %v8231
    %8515 = vmatpush.bf16.msra.mxu0 %v8227
    %8516 = vmatpush.bf16.msra.mxu0 %v8223
    %8517 = vmatpush.bf16.msra.mxu0 %v8219
    %8518 = vmatpush.bf16.msra.mxu0 %v8215
    %8519 = vmatpush.bf16.msra.mxu0 %v8211
    %8520 = vmatmul.bf16.gmra.mxu0 %v7599
    %v8521 = vpop.f32.mrf.mxu0
    %v8522 = vadd.f32 %v8509, %v8521
    %v8523 = vpop.f32.mrf.mxu0
    %8524 = vdwg.mxu0
    %8525 = vmatpush.bf16.msra.mxu0 %v8144
    %8526 = vmatpush.bf16.msra.mxu0 %v8140
    %8527 = vmatpush.bf16.msra.mxu0 %v8136
    %8528 = vmatpush.bf16.msra.mxu0 %v8132
    %8529 = vmatpush.bf16.msra.mxu0 %v8128
    %8530 = vmatpush.bf16.msra.mxu0 %v8124
    %8531 = vmatpush.bf16.msra.mxu0 %v8120
    %8532 = vmatpush.bf16.msra.mxu0 %v8116
    %8533 = vmatmul.bf16.gmra.mxu0 %v7596
    %v8534 = vpop.f32.mrf.mxu0
    %v8535 = vadd.f32 0.0, %v8534
    %v8536 = vpop.f32.mrf.mxu0
    %8537 = vdwg.mxu0
    %8538 = vmatpush.bf16.msra.mxu0 %v8176
    %8539 = vmatpush.bf16.msra.mxu0 %v8172
    %8540 = vmatpush.bf16.msra.mxu0 %v8168
    %8541 = vmatpush.bf16.msra.mxu0 %v8164
    %8542 = vmatpush.bf16.msra.mxu0 %v8160
    %8543 = vmatpush.bf16.msra.mxu0 %v8156
    %8544 = vmatpush.bf16.msra.mxu0 %v8152
    %8545 = vmatpush.bf16.msra.mxu0 %v8148
    %8546 = vmatmul.bf16.gmra.mxu0 %v7597
    %v8547 = vpop.f32.mrf.mxu0
    %v8548 = vadd.f32 %v8535, %v8547
    %v8549 = vpop.f32.mrf.mxu0
    %8550 = vdwg.mxu0
    %8551 = vmatpush.bf16.msra.mxu0 %v8208
    %8552 = vmatpush.bf16.msra.mxu0 %v8204
    %8553 = vmatpush.bf16.msra.mxu0 %v8200
    %8554 = vmatpush.bf16.msra.mxu0 %v8196
    %8555 = vmatpush.bf16.msra.mxu0 %v8192
    %8556 = vmatpush.bf16.msra.mxu0 %v8188
    %8557 = vmatpush.bf16.msra.mxu0 %v8184
    %8558 = vmatpush.bf16.msra.mxu0 %v8180
    %8559 = vmatmul.bf16.gmra.mxu0 %v7598
    %v8560 = vpop.f32.mrf.mxu0
    %v8561 = vadd.f32 %v8548, %v8560
    %v8562 = vpop.f32.mrf.mxu0
    %8563 = vdwg.mxu0
    %8564 = vmatpush.bf16.msra.mxu0 %v8240
    %8565 = vmatpush.bf16.msra.mxu0 %v8236
    %8566 = vmatpush.bf16.msra.mxu0 %v8232
    %8567 = vmatpush.bf16.msra.mxu0 %v8228
    %8568 = vmatpush.bf16.msra.mxu0 %v8224
    %8569 = vmatpush.bf16.msra.mxu0 %v8220
    %8570 = vmatpush.bf16.msra.mxu0 %v8216
    %8571 = vmatpush.bf16.msra.mxu0 %v8212
    %8572 = vmatmul.bf16.gmra.mxu0 %v7599
    %v8573 = vpop.f32.mrf.mxu0
    %v8574 = vadd.f32 %v8561, %v8573
    %v8575 = vpop.f32.mrf.mxu0
    %8576 = vdwg.mxu0
    %v8577 = vadd.f32 %v7380, %v8418
    %v8578 = vadd.f32 %v7432, %v8470
    %v8579 = vadd.f32 %v7484, %v8522
    %v8580 = vadd.f32 %v7536, %v8574
    %v8581 = vld [vmem:[#allocation15] sm:$0xf]
    %v8583 = vperm.slane %v8581, 0
    %v8584 = vperm.slane %v8581, 1
    %v8585 = vperm.slane %v8581, 2
    %v8586 = vperm.slane %v8581, 3
    %v8591 = vadd.f32 %v8577, %v8583
    %v8592 = vadd.f32 %v8578, %v8584
    %v8593 = vadd.f32 %v8579, %v8585
    %v8594 = vadd.f32 %v8580, %v8586
    %vm8595 = vcmp.ge.f32.partialorder %v8591, 0.0
    %vm8596 = vcmp.ge.f32.partialorder %v8592, 0.0
    %vm8597 = vcmp.ge.f32.partialorder %v8593, 0.0
    %vm8598 = vcmp.ge.f32.partialorder %v8594, 0.0
    %v8599 = vmul.f32 %v8591, 0.15
    %v8600 = vmul.f32 %v8592, 0.15
    %v8601 = vmul.f32 %v8593, 0.15
    %v8602 = vmul.f32 %v8594, 0.15
    %v8603 = vsel %vm8595, %v8591, %v8599
    %v8604 = vsel %vm8596, %v8592, %v8600
    %v8605 = vsel %vm8597, %v8593, %v8601
    %v8606 = vsel %vm8598, %v8594, %v8602
    %v8607 = vpack.c.bf16 %v8603, %v8603
    %v8608 = vpack.c.bf16 %v8604, %v8604
    %v8609 = vpack.c.bf16 %v8605, %v8605
    %v8610 = vpack.c.bf16 %v8606, %v8606
    %v8611 = vld [vmem:[#allocation18] sm:$0x1]
    %vm8612 = vcmask 31744
    %v8614 = vsel %vm8612, %v8611, 0
    %vm8616 = vcmask 1041408
    %v8618 = vsel %vm8616, %v8607, 0
    %v8621 = vsel %vm8616, %v8608, 0
    %v8624 = vsel %vm8616, %v8609, 0
    %v8627 = vsel %vm8616, %v8610, 0
    %8629 = vmatpush.bf16.msra.mxu0 0
    %8630 = vmatpush.bf16.msra.mxu0 0
    %8631 = vmatpush.bf16.msra.mxu0 0
    %8632 = vmatpush.bf16.msra.mxu0 0
    %8633 = vmatpush.bf16.msra.mxu0 0
    %8634 = vmatpush.bf16.msra.mxu0 0
    %8635 = vmatpush.bf16.msra.mxu0 0
    %8636 = vmatpush.bf16.msra.mxu0 %v8618
    %8637 = vmatmul.bf16.gmra.mxu0 %v8614
    %v8638 = vpop.f32.mrf.mxu0
    %v8639 = vadd.f32 0.0, %v8638
    %v8640 = vpop.f32.mrf.mxu0
    %8641 = vdwg.mxu0
    %8642 = vmatpush.bf16.msra.mxu0 0
    %8643 = vmatpush.bf16.msra.mxu0 0
    %8644 = vmatpush.bf16.msra.mxu0 0
    %8645 = vmatpush.bf16.msra.mxu0 0
    %8646 = vmatpush.bf16.msra.mxu0 0
    %8647 = vmatpush.bf16.msra.mxu0 0
    %8648 = vmatpush.bf16.msra.mxu0 0
    %8649 = vmatpush.bf16.msra.mxu0 %v8621
    %8650 = vmatmul.bf16.gmra.mxu0 %v8614
    %v8651 = vpop.f32.mrf.mxu0
    %v8652 = vadd.f32 0.0, %v8651
    %v8653 = vpop.f32.mrf.mxu0
    %8654 = vdwg.mxu0
    %8655 = vmatpush.bf16.msra.mxu0 0
    %8656 = vmatpush.bf16.msra.mxu0 0
    %8657 = vmatpush.bf16.msra.mxu0 0
    %8658 = vmatpush.bf16.msra.mxu0 0
    %8659 = vmatpush.bf16.msra.mxu0 0
    %8660 = vmatpush.bf16.msra.mxu0 0
    %8661 = vmatpush.bf16.msra.mxu0 0
    %8662 = vmatpush.bf16.msra.mxu0 %v8624
    %8663 = vmatmul.bf16.gmra.mxu0 %v8614
    %v8664 = vpop.f32.mrf.mxu0
    %v8665 = vadd.f32 0.0, %v8664
    %v8666 = vpop.f32.mrf.mxu0
    %8667 = vdwg.mxu0
    %8668 = vmatpush.bf16.msra.mxu0 0
    %8669 = vmatpush.bf16.msra.mxu0 0
    %8670 = vmatpush.bf16.msra.mxu0 0
    %8671 = vmatpush.bf16.msra.mxu0 0
    %8672 = vmatpush.bf16.msra.mxu0 0
    %8673 = vmatpush.bf16.msra.mxu0 0
    %8674 = vmatpush.bf16.msra.mxu0 0
    %8675 = vmatpush.bf16.msra.mxu0 %v8627
    %8676 = vmatmul.bf16.gmra.mxu0 %v8614
    %v8677 = vpop.f32.mrf.mxu0
    %v8678 = vadd.f32 0.0, %v8677
    %v8679 = vpop.f32.mrf.mxu0
    %8680 = vdwg.mxu0
    %v8681 = vpack.c.bf16 %v8639, %v8639
    %v8682 = vpack.c.bf16 %v8652, %v8652
    %v8683 = vpack.c.bf16 %v8665, %v8665
    %v8684 = vpack.c.bf16 %v8678, %v8678
    %v8685 = vld [vmem:[#allocation16] sm:$0xff]
    %v8686 = vld [vmem:[#allocation16 + $0x8] sm:$0xf]
    %v8687 = vld [vmem:[#allocation16 + $0xc] sm:$0xff]
    %v8688 = vld [vmem:[#allocation16 + $0x14] sm:$0xf]
    %v8689 = vld [vmem:[#allocation16 + $0x18] sm:$0xff]
    %v8690 = vld [vmem:[#allocation16 + $0x20] sm:$0xf]
    %v8691 = vld [vmem:[#allocation16 + $0x24] sm:$0xff]
    %v8692 = vld [vmem:[#allocation16 + $0x2c] sm:$0xf]
    %v8693 = vld [vmem:[#allocation16 + $0x30] sm:$0xff]
    %v8694 = vld [vmem:[#allocation16 + $0x38] sm:$0xf]
    %v8695 = vld [vmem:[#allocation16 + $0x3c] sm:$0xff]
    %v8696 = vld [vmem:[#allocation16 + $0x44] sm:$0xf]
    %v8697 = vld [vmem:[#allocation16 + $0x48] sm:$0xff]
    %v8698 = vld [vmem:[#allocation16 + $0x50] sm:$0xf]
    %v8699 = vld [vmem:[#allocation16 + $0x54] sm:$0xff]
    %v8700 = vld [vmem:[#allocation16 + $0x5c] sm:$0xf]
    %v8701 = vld [vmem:[#allocation16 + $0x60] sm:$0xff]
    %v8702 = vld [vmem:[#allocation16 + $0x68] sm:$0xf]
    %v8703 = vld [vmem:[#allocation16 + $0x6c] sm:$0xff]
    %v8704 = vld [vmem:[#allocation16 + $0x74] sm:$0xf]
    %v8705 = vld [vmem:[#allocation16 + $0x78] sm:$0xff]
    %v8706 = vld [vmem:[#allocation16 + $0x80] sm:$0xf]
    %v8707 = vld [vmem:[#allocation16 + $0x84] sm:$0xff]
    %v8708 = vld [vmem:[#allocation16 + $0x8c] sm:$0xf]
    %v8709 = vld [vmem:[#allocation16 + $0x90] sm:$0xff]
    %v8710 = vld [vmem:[#allocation16 + $0x98] sm:$0xf]
    %v8711 = vld [vmem:[#allocation16 + $0x9c] sm:$0xff]
    %v8712 = vld [vmem:[#allocation16 + $0xa4] sm:$0xf]
    %v8713 = vld [vmem:[#allocation16 + $0xa8] sm:$0xff]
    %v8714 = vld [vmem:[#allocation16 + $0xb0] sm:$0xf]
    %v8715 = vld [vmem:[#allocation16 + $0xb4] sm:$0xff]
    %v8716 = vld [vmem:[#allocation16 + $0xbc] sm:$0xf]
    %v8717 = vld [vmem:[#allocation16 + $0xc0] sm:$0xff]
    %v8718 = vld [vmem:[#allocation16 + $0xc8] sm:$0xf]
    %v8719 = vld [vmem:[#allocation16 + $0xcc] sm:$0xff]
    %v8720 = vld [vmem:[#allocation16 + $0xd4] sm:$0xf]
    %v8721 = vld [vmem:[#allocation16 + $0xd8] sm:$0xff]
    %v8722 = vld [vmem:[#allocation16 + $0xe0] sm:$0xf]
    %v8723 = vld [vmem:[#allocation16 + $0xe4] sm:$0xff]
    %v8724 = vld [vmem:[#allocation16 + $0xec] sm:$0xf]
    %v8725 = vld [vmem:[#allocation16 + $0xf0] sm:$0xff]
    %v8726 = vld [vmem:[#allocation16 + $0xf8] sm:$0xf]
    %v8727 = vld [vmem:[#allocation16 + $0xfc] sm:$0xff]
    %v8728 = vld [vmem:[#allocation16 + $0x104] sm:$0xf]
    %v8729 = vld [vmem:[#allocation16 + $0x108] sm:$0xff]
    %v8730 = vld [vmem:[#allocation16 + $0x110] sm:$0xf]
    %v8731 = vld [vmem:[#allocation16 + $0x114] sm:$0xff]
    %v8732 = vld [vmem:[#allocation16 + $0x11c] sm:$0xf]
    %v8733 = vld [vmem:[#allocation16 + $0x120] sm:$0xff]
    %v8734 = vld [vmem:[#allocation16 + $0x128] sm:$0xf]
    %v8735 = vld [vmem:[#allocation16 + $0x12c] sm:$0xff]
    %v8736 = vld [vmem:[#allocation16 + $0x134] sm:$0xf]
    %v8737 = vld [vmem:[#allocation16 + $0x138] sm:$0xff]
    %v8738 = vld [vmem:[#allocation16 + $0x140] sm:$0xf]
    %v8739 = vld [vmem:[#allocation16 + $0x144] sm:$0xff]
    %v8740 = vld [vmem:[#allocation16 + $0x14c] sm:$0xf]
    %v8741 = vld [vmem:[#allocation16 + $0x150] sm:$0xff]
    %v8742 = vld [vmem:[#allocation16 + $0x158] sm:$0xf]
    %v8743 = vld [vmem:[#allocation16 + $0x15c] sm:$0xff]
    %v8744 = vld [vmem:[#allocation16 + $0x164] sm:$0xf]
    %v8745 = vld [vmem:[#allocation16 + $0x168] sm:$0xff]
    %v8746 = vld [vmem:[#allocation16 + $0x170] sm:$0xf]
    %v8747 = vld [vmem:[#allocation16 + $0x174] sm:$0xff]
    %v8748 = vld [vmem:[#allocation16 + $0x17c] sm:$0xf]
    %v8749 = vld [vmem:[#allocation16 + $0x180] sm:$0xff]
    %v8750 = vld [vmem:[#allocation16 + $0x188] sm:$0xf]
    %v8751 = vld [vmem:[#allocation16 + $0x18c] sm:$0xff]
    %v8752 = vld [vmem:[#allocation16 + $0x194] sm:$0xf]
    %v8753 = vld [vmem:[#allocation16 + $0x198] sm:$0xff]
    %v8754 = vld [vmem:[#allocation16 + $0x1a0] sm:$0xf]
    %v8755 = vld [vmem:[#allocation16 + $0x1a4] sm:$0xff]
    %v8756 = vld [vmem:[#allocation16 + $0x1ac] sm:$0xf]
    %v8757 = vld [vmem:[#allocation16 + $0x1b0] sm:$0xff]
    %v8758 = vld [vmem:[#allocation16 + $0x1b8] sm:$0xf]
    %v8759 = vld [vmem:[#allocation16 + $0x1bc] sm:$0xff]
    %v8760 = vld [vmem:[#allocation16 + $0x1c4] sm:$0xf]
    %v8761 = vld [vmem:[#allocation16 + $0x1c8] sm:$0xff]
    %v8762 = vld [vmem:[#allocation16 + $0x1d0] sm:$0xf]
    %v8763 = vld [vmem:[#allocation16 + $0x1d4] sm:$0xff]
    %v8764 = vld [vmem:[#allocation16 + $0x1dc] sm:$0xf]
    %v8765 = vld [vmem:[#allocation16 + $0x1e0] sm:$0xff]
    %v8766 = vld [vmem:[#allocation16 + $0x1e8] sm:$0xf]
    %v8767 = vld [vmem:[#allocation16 + $0x1ec] sm:$0xff]
    %v8768 = vld [vmem:[#allocation16 + $0x1f4] sm:$0xf]
    %v8769 = vld [vmem:[#allocation16 + $0x1f8] sm:$0xff]
    %v8770 = vld [vmem:[#allocation16 + $0x200] sm:$0xf]
    %v8771 = vld [vmem:[#allocation16 + $0x204] sm:$0xff]
    %v8772 = vld [vmem:[#allocation16 + $0x20c] sm:$0xf]
    %v8773 = vld [vmem:[#allocation16 + $0x210] sm:$0xff]
    %v8774 = vld [vmem:[#allocation16 + $0x218] sm:$0xf]
    %v8775 = vld [vmem:[#allocation16 + $0x21c] sm:$0xff]
    %v8776 = vld [vmem:[#allocation16 + $0x224] sm:$0xf]
    %v8777 = vld [vmem:[#allocation16 + $0x228] sm:$0xff]
    %v8778 = vld [vmem:[#allocation16 + $0x230] sm:$0xf]
    %v8779 = vld [vmem:[#allocation16 + $0x234] sm:$0xff]
    %v8780 = vld [vmem:[#allocation16 + $0x23c] sm:$0xf]
    %v8781 = vld [vmem:[#allocation16 + $0x240] sm:$0xff]
    %v8782 = vld [vmem:[#allocation16 + $0x248] sm:$0xf]
    %v8783 = vld [vmem:[#allocation16 + $0x24c] sm:$0xff]
    %v8784 = vld [vmem:[#allocation16 + $0x254] sm:$0xf]
    %v8785 = vld [vmem:[#allocation16 + $0x258] sm:$0xff]
    %v8786 = vld [vmem:[#allocation16 + $0x260] sm:$0xf]
    %v8787 = vld [vmem:[#allocation16 + $0x264] sm:$0xff]
    %v8788 = vld [vmem:[#allocation16 + $0x26c] sm:$0xf]
    %v8789 = vld [vmem:[#allocation16 + $0x270] sm:$0xff]
    %v8790 = vld [vmem:[#allocation16 + $0x278] sm:$0xf]
    %v8791 = vld [vmem:[#allocation16 + $0x27c] sm:$0xff]
    %v8792 = vld [vmem:[#allocation16 + $0x284] sm:$0xf]
    %v8793 = vld [vmem:[#allocation16 + $0x288] sm:$0xff]
    %v8794 = vld [vmem:[#allocation16 + $0x290] sm:$0xf]
    %v8795 = vld [vmem:[#allocation16 + $0x294] sm:$0xff]
    %v8796 = vld [vmem:[#allocation16 + $0x29c] sm:$0xf]
    %v8797 = vld [vmem:[#allocation16 + $0x2a0] sm:$0xff]
    %v8798 = vld [vmem:[#allocation16 + $0x2a8] sm:$0xf]
    %v8799 = vld [vmem:[#allocation16 + $0x2ac] sm:$0xff]
    %v8800 = vld [vmem:[#allocation16 + $0x2b4] sm:$0xf]
    %v8801 = vld [vmem:[#allocation16 + $0x2b8] sm:$0xff]
    %v8802 = vld [vmem:[#allocation16 + $0x2c0] sm:$0xf]
    %v8803 = vld [vmem:[#allocation16 + $0x2c4] sm:$0xff]
    %v8804 = vld [vmem:[#allocation16 + $0x2cc] sm:$0xf]
    %v8805 = vld [vmem:[#allocation16 + $0x2d0] sm:$0xff]
    %v8806 = vld [vmem:[#allocation16 + $0x2d8] sm:$0xf]
    %v8807 = vld [vmem:[#allocation16 + $0x2dc] sm:$0xff]
    %v8808 = vld [vmem:[#allocation16 + $0x2e4] sm:$0xf]
    %v8809 = vld [vmem:[#allocation16 + $0x2e8] sm:$0xff]
    %v8810 = vld [vmem:[#allocation16 + $0x2f0] sm:$0xf]
    %v8811 = vld [vmem:[#allocation16 + $0x2f4] sm:$0xff]
    %v8812 = vld [vmem:[#allocation16 + $0x2fc] sm:$0xf]
    %s8813 = scalar_lea.vmem [#allocation18], 1
    %v8814 = vld [vmem:[%s8813] sm:$0x1]
    %v8816 = vsel %vm8612, %v8814, 0
    %8818 = vmatpush.bf16.msra.mxu0 0
    %8819 = vmatpush.bf16.msra.mxu0 0
    %8820 = vmatpush.bf16.msra.mxu0 0
    %8821 = vmatpush.bf16.msra.mxu0 0
    %8822 = vmatpush.bf16.msra.mxu0 0
    %8823 = vmatpush.bf16.msra.mxu0 0
    %8824 = vmatpush.bf16.msra.mxu0 0
    %8825 = vmatpush.bf16.msra.mxu0 %v8618
    %8826 = vmatmul.bf16.gmra.mxu0 %v8816
    %v8827 = vpop.f32.mrf.mxu0
    %v8828 = vadd.f32 0.0, %v8827
    %v8829 = vpop.f32.mrf.mxu0
    %8830 = vdwg.mxu0
    %8831 = vmatpush.bf16.msra.mxu0 0
    %8832 = vmatpush.bf16.msra.mxu0 0
    %8833 = vmatpush.bf16.msra.mxu0 0
    %8834 = vmatpush.bf16.msra.mxu0 0
    %8835 = vmatpush.bf16.msra.mxu0 0
    %8836 = vmatpush.bf16.msra.mxu0 0
    %8837 = vmatpush.bf16.msra.mxu0 0
    %8838 = vmatpush.bf16.msra.mxu0 %v8621
    %8839 = vmatmul.bf16.gmra.mxu0 %v8816
    %v8840 = vpop.f32.mrf.mxu0
    %v8841 = vadd.f32 0.0, %v8840
    %v8842 = vpop.f32.mrf.mxu0
    %8843 = vdwg.mxu0
    %8844 = vmatpush.bf16.msra.mxu0 0
    %8845 = vmatpush.bf16.msra.mxu0 0
    %8846 = vmatpush.bf16.msra.mxu0 0
    %8847 = vmatpush.bf16.msra.mxu0 0
    %8848 = vmatpush.bf16.msra.mxu0 0
    %8849 = vmatpush.bf16.msra.mxu0 0
    %8850 = vmatpush.bf16.msra.mxu0 0
    %8851 = vmatpush.bf16.msra.mxu0 %v8624
    %8852 = vmatmul.bf16.gmra.mxu0 %v8816
    %v8853 = vpop.f32.mrf.mxu0
    %v8854 = vadd.f32 0.0, %v8853
    %v8855 = vpop.f32.mrf.mxu0
    %8856 = vdwg.mxu0
    %8857 = vmatpush.bf16.msra.mxu0 0
    %8858 = vmatpush.bf16.msra.mxu0 0
    %8859 = vmatpush.bf16.msra.mxu0 0
    %8860 = vmatpush.bf16.msra.mxu0 0
    %8861 = vmatpush.bf16.msra.mxu0 0
    %8862 = vmatpush.bf16.msra.mxu0 0
    %8863 = vmatpush.bf16.msra.mxu0 0
    %8864 = vmatpush.bf16.msra.mxu0 %v8627
    %8865 = vmatmul.bf16.gmra.mxu0 %v8816
    %v8866 = vpop.f32.mrf.mxu0
    %v8867 = vadd.f32 0.0, %v8866
    %v8868 = vpop.f32.mrf.mxu0
    %8869 = vdwg.mxu0
    %v8870 = vpack.c.bf16 %v8828, %v8828
    %v8871 = vpack.c.bf16 %v8841, %v8841
    %v8872 = vpack.c.bf16 %v8854, %v8854
    %v8873 = vpack.c.bf16 %v8867, %v8867
    %s8874 = scalar_lea.vmem [#allocation16], 768
    %v8875 = vld [vmem:[%s8874] sm:$0xff]
    %v8876 = vld [vmem:[%s8874 + $0x8] sm:$0xf]
    %v8877 = vld [vmem:[%s8874 + $0xc] sm:$0xff]
    %v8878 = vld [vmem:[%s8874 + $0x14] sm:$0xf]
    %v8879 = vld [vmem:[%s8874 + $0x18] sm:$0xff]
    %v8880 = vld [vmem:[%s8874 + $0x20] sm:$0xf]
    %v8881 = vld [vmem:[%s8874 + $0x24] sm:$0xff]
    %v8882 = vld [vmem:[%s8874 + $0x2c] sm:$0xf]
    %v8883 = vld [vmem:[%s8874 + $0x30] sm:$0xff]
    %v8884 = vld [vmem:[%s8874 + $0x38] sm:$0xf]
    %v8885 = vld [vmem:[%s8874 + $0x3c] sm:$0xff]
    %v8886 = vld [vmem:[%s8874 + $0x44] sm:$0xf]
    %v8887 = vld [vmem:[%s8874 + $0x48] sm:$0xff]
    %v8888 = vld [vmem:[%s8874 + $0x50] sm:$0xf]
    %v8889 = vld [vmem:[%s8874 + $0x54] sm:$0xff]
    %v8890 = vld [vmem:[%s8874 + $0x5c] sm:$0xf]
    %v8891 = vld [vmem:[%s8874 + $0x60] sm:$0xff]
    %v8892 = vld [vmem:[%s8874 + $0x68] sm:$0xf]
    %v8893 = vld [vmem:[%s8874 + $0x6c] sm:$0xff]
    %v8894 = vld [vmem:[%s8874 + $0x74] sm:$0xf]
    %v8895 = vld [vmem:[%s8874 + $0x78] sm:$0xff]
    %v8896 = vld [vmem:[%s8874 + $0x80] sm:$0xf]
    %v8897 = vld [vmem:[%s8874 + $0x84] sm:$0xff]
    %v8898 = vld [vmem:[%s8874 + $0x8c] sm:$0xf]
    %v8899 = vld [vmem:[%s8874 + $0x90] sm:$0xff]
    %v8900 = vld [vmem:[%s8874 + $0x98] sm:$0xf]
    %v8901 = vld [vmem:[%s8874 + $0x9c] sm:$0xff]
    %v8902 = vld [vmem:[%s8874 + $0xa4] sm:$0xf]
    %v8903 = vld [vmem:[%s8874 + $0xa8] sm:$0xff]
    %v8904 = vld [vmem:[%s8874 + $0xb0] sm:$0xf]
    %v8905 = vld [vmem:[%s8874 + $0xb4] sm:$0xff]
    %v8906 = vld [vmem:[%s8874 + $0xbc] sm:$0xf]
    %v8907 = vld [vmem:[%s8874 + $0xc0] sm:$0xff]
    %v8908 = vld [vmem:[%s8874 + $0xc8] sm:$0xf]
    %v8909 = vld [vmem:[%s8874 + $0xcc] sm:$0xff]
    %v8910 = vld [vmem:[%s8874 + $0xd4] sm:$0xf]
    %v8911 = vld [vmem:[%s8874 + $0xd8] sm:$0xff]
    %v8912 = vld [vmem:[%s8874 + $0xe0] sm:$0xf]
    %v8913 = vld [vmem:[%s8874 + $0xe4] sm:$0xff]
    %v8914 = vld [vmem:[%s8874 + $0xec] sm:$0xf]
    %v8915 = vld [vmem:[%s8874 + $0xf0] sm:$0xff]
    %v8916 = vld [vmem:[%s8874 + $0xf8] sm:$0xf]
    %v8917 = vld [vmem:[%s8874 + $0xfc] sm:$0xff]
    %v8918 = vld [vmem:[%s8874 + $0x104] sm:$0xf]
    %v8919 = vld [vmem:[%s8874 + $0x108] sm:$0xff]
    %v8920 = vld [vmem:[%s8874 + $0x110] sm:$0xf]
    %v8921 = vld [vmem:[%s8874 + $0x114] sm:$0xff]
    %v8922 = vld [vmem:[%s8874 + $0x11c] sm:$0xf]
    %v8923 = vld [vmem:[%s8874 + $0x120] sm:$0xff]
    %v8924 = vld [vmem:[%s8874 + $0x128] sm:$0xf]
    %v8925 = vld [vmem:[%s8874 + $0x12c] sm:$0xff]
    %v8926 = vld [vmem:[%s8874 + $0x134] sm:$0xf]
    %v8927 = vld [vmem:[%s8874 + $0x138] sm:$0xff]
    %v8928 = vld [vmem:[%s8874 + $0x140] sm:$0xf]
    %v8929 = vld [vmem:[%s8874 + $0x144] sm:$0xff]
    %v8930 = vld [vmem:[%s8874 + $0x14c] sm:$0xf]
    %v8931 = vld [vmem:[%s8874 + $0x150] sm:$0xff]
    %v8932 = vld [vmem:[%s8874 + $0x158] sm:$0xf]
    %v8933 = vld [vmem:[%s8874 + $0x15c] sm:$0xff]
    %v8934 = vld [vmem:[%s8874 + $0x164] sm:$0xf]
    %v8935 = vld [vmem:[%s8874 + $0x168] sm:$0xff]
    %v8936 = vld [vmem:[%s8874 + $0x170] sm:$0xf]
    %v8937 = vld [vmem:[%s8874 + $0x174] sm:$0xff]
    %v8938 = vld [vmem:[%s8874 + $0x17c] sm:$0xf]
    %v8939 = vld [vmem:[%s8874 + $0x180] sm:$0xff]
    %v8940 = vld [vmem:[%s8874 + $0x188] sm:$0xf]
    %v8941 = vld [vmem:[%s8874 + $0x18c] sm:$0xff]
    %v8942 = vld [vmem:[%s8874 + $0x194] sm:$0xf]
    %v8943 = vld [vmem:[%s8874 + $0x198] sm:$0xff]
    %v8944 = vld [vmem:[%s8874 + $0x1a0] sm:$0xf]
    %v8945 = vld [vmem:[%s8874 + $0x1a4] sm:$0xff]
    %v8946 = vld [vmem:[%s8874 + $0x1ac] sm:$0xf]
    %v8947 = vld [vmem:[%s8874 + $0x1b0] sm:$0xff]
    %v8948 = vld [vmem:[%s8874 + $0x1b8] sm:$0xf]
    %v8949 = vld [vmem:[%s8874 + $0x1bc] sm:$0xff]
    %v8950 = vld [vmem:[%s8874 + $0x1c4] sm:$0xf]
    %v8951 = vld [vmem:[%s8874 + $0x1c8] sm:$0xff]
    %v8952 = vld [vmem:[%s8874 + $0x1d0] sm:$0xf]
    %v8953 = vld [vmem:[%s8874 + $0x1d4] sm:$0xff]
    %v8954 = vld [vmem:[%s8874 + $0x1dc] sm:$0xf]
    %v8955 = vld [vmem:[%s8874 + $0x1e0] sm:$0xff]
    %v8956 = vld [vmem:[%s8874 + $0x1e8] sm:$0xf]
    %v8957 = vld [vmem:[%s8874 + $0x1ec] sm:$0xff]
    %v8958 = vld [vmem:[%s8874 + $0x1f4] sm:$0xf]
    %v8959 = vld [vmem:[%s8874 + $0x1f8] sm:$0xff]
    %v8960 = vld [vmem:[%s8874 + $0x200] sm:$0xf]
    %v8961 = vld [vmem:[%s8874 + $0x204] sm:$0xff]
    %v8962 = vld [vmem:[%s8874 + $0x20c] sm:$0xf]
    %v8963 = vld [vmem:[%s8874 + $0x210] sm:$0xff]
    %v8964 = vld [vmem:[%s8874 + $0x218] sm:$0xf]
    %v8965 = vld [vmem:[%s8874 + $0x21c] sm:$0xff]
    %v8966 = vld [vmem:[%s8874 + $0x224] sm:$0xf]
    %v8967 = vld [vmem:[%s8874 + $0x228] sm:$0xff]
    %v8968 = vld [vmem:[%s8874 + $0x230] sm:$0xf]
    %v8969 = vld [vmem:[%s8874 + $0x234] sm:$0xff]
    %v8970 = vld [vmem:[%s8874 + $0x23c] sm:$0xf]
    %v8971 = vld [vmem:[%s8874 + $0x240] sm:$0xff]
    %v8972 = vld [vmem:[%s8874 + $0x248] sm:$0xf]
    %v8973 = vld [vmem:[%s8874 + $0x24c] sm:$0xff]
    %v8974 = vld [vmem:[%s8874 + $0x254] sm:$0xf]
    %v8975 = vld [vmem:[%s8874 + $0x258] sm:$0xff]
    %v8976 = vld [vmem:[%s8874 + $0x260] sm:$0xf]
    %v8977 = vld [vmem:[%s8874 + $0x264] sm:$0xff]
    %v8978 = vld [vmem:[%s8874 + $0x26c] sm:$0xf]
    %v8979 = vld [vmem:[%s8874 + $0x270] sm:$0xff]
    %v8980 = vld [vmem:[%s8874 + $0x278] sm:$0xf]
    %v8981 = vld [vmem:[%s8874 + $0x27c] sm:$0xff]
    %v8982 = vld [vmem:[%s8874 + $0x284] sm:$0xf]
    %v8983 = vld [vmem:[%s8874 + $0x288] sm:$0xff]
    %v8984 = vld [vmem:[%s8874 + $0x290] sm:$0xf]
    %v8985 = vld [vmem:[%s8874 + $0x294] sm:$0xff]
    %v8986 = vld [vmem:[%s8874 + $0x29c] sm:$0xf]
    %v8987 = vld [vmem:[%s8874 + $0x2a0] sm:$0xff]
    %v8988 = vld [vmem:[%s8874 + $0x2a8] sm:$0xf]
    %v8989 = vld [vmem:[%s8874 + $0x2ac] sm:$0xff]
    %v8990 = vld [vmem:[%s8874 + $0x2b4] sm:$0xf]
    %v8991 = vld [vmem:[%s8874 + $0x2b8] sm:$0xff]
    %v8992 = vld [vmem:[%s8874 + $0x2c0] sm:$0xf]
    %v8993 = vld [vmem:[%s8874 + $0x2c4] sm:$0xff]
    %v8994 = vld [vmem:[%s8874 + $0x2cc] sm:$0xf]
    %v8995 = vld [vmem:[%s8874 + $0x2d0] sm:$0xff]
    %v8996 = vld [vmem:[%s8874 + $0x2d8] sm:$0xf]
    %v8997 = vld [vmem:[%s8874 + $0x2dc] sm:$0xff]
    %v8998 = vld [vmem:[%s8874 + $0x2e4] sm:$0xf]
    %v8999 = vld [vmem:[%s8874 + $0x2e8] sm:$0xff]
    %v9000 = vld [vmem:[%s8874 + $0x2f0] sm:$0xf]
    %v9001 = vld [vmem:[%s8874 + $0x2f4] sm:$0xff]
    %v9002 = vld [vmem:[%s8874 + $0x2fc] sm:$0xf]
    %v9131 = vunpack.c.l.b16 %v8875
    %v9132 = vunpack.c.h.b16 %v8875
    %v9133 = vunpack.c.l.b16 %v8876
    %v9134 = vunpack.c.l.b16 %v8877
    %v9135 = vunpack.c.h.b16 %v8877
    %v9136 = vunpack.c.l.b16 %v8878
    %v9137 = vunpack.c.l.b16 %v8879
    %v9138 = vunpack.c.h.b16 %v8879
    %v9139 = vunpack.c.l.b16 %v8880
    %v9140 = vunpack.c.l.b16 %v8881
    %v9141 = vunpack.c.h.b16 %v8881
    %v9142 = vunpack.c.l.b16 %v8882
    %v9143 = vunpack.c.l.b16 %v8883
    %v9144 = vunpack.c.h.b16 %v8883
    %v9145 = vunpack.c.l.b16 %v8884
    %v9146 = vunpack.c.l.b16 %v8885
    %v9147 = vunpack.c.h.b16 %v8885
    %v9148 = vunpack.c.l.b16 %v8886
    %v9149 = vunpack.c.l.b16 %v8887
    %v9150 = vunpack.c.h.b16 %v8887
    %v9151 = vunpack.c.l.b16 %v8888
    %v9152 = vunpack.c.l.b16 %v8889
    %v9153 = vunpack.c.h.b16 %v8889
    %v9154 = vunpack.c.l.b16 %v8890
    %v9155 = vunpack.c.l.b16 %v8891
    %v9156 = vunpack.c.h.b16 %v8891
    %v9157 = vunpack.c.l.b16 %v8892
    %v9158 = vunpack.c.l.b16 %v8893
    %v9159 = vunpack.c.h.b16 %v8893
    %v9160 = vunpack.c.l.b16 %v8894
    %v9161 = vunpack.c.l.b16 %v8895
    %v9162 = vunpack.c.h.b16 %v8895
    %v9163 = vunpack.c.l.b16 %v8896
    %v9164 = vunpack.c.l.b16 %v8897
    %v9165 = vunpack.c.h.b16 %v8897
    %v9166 = vunpack.c.l.b16 %v8898
    %v9167 = vunpack.c.l.b16 %v8899
    %v9168 = vunpack.c.h.b16 %v8899
    %v9169 = vunpack.c.l.b16 %v8900
    %v9170 = vunpack.c.l.b16 %v8901
    %v9171 = vunpack.c.h.b16 %v8901
    %v9172 = vunpack.c.l.b16 %v8902
    %v9173 = vunpack.c.l.b16 %v8903
    %v9174 = vunpack.c.h.b16 %v8903
    %v9175 = vunpack.c.l.b16 %v8904
    %v9176 = vunpack.c.l.b16 %v8905
    %v9177 = vunpack.c.h.b16 %v8905
    %v9178 = vunpack.c.l.b16 %v8906
    %v9179 = vunpack.c.l.b16 %v8907
    %v9180 = vunpack.c.h.b16 %v8907
    %v9181 = vunpack.c.l.b16 %v8908
    %v9182 = vunpack.c.l.b16 %v8909
    %v9183 = vunpack.c.h.b16 %v8909
    %v9184 = vunpack.c.l.b16 %v8910
    %v9185 = vunpack.c.l.b16 %v8911
    %v9186 = vunpack.c.h.b16 %v8911
    %v9187 = vunpack.c.l.b16 %v8912
    %v9188 = vunpack.c.l.b16 %v8913
    %v9189 = vunpack.c.h.b16 %v8913
    %v9190 = vunpack.c.l.b16 %v8914
    %v9191 = vunpack.c.l.b16 %v8915
    %v9192 = vunpack.c.h.b16 %v8915
    %v9193 = vunpack.c.l.b16 %v8916
    %v9194 = vunpack.c.l.b16 %v8917
    %v9195 = vunpack.c.h.b16 %v8917
    %v9196 = vunpack.c.l.b16 %v8918
    %v9197 = vunpack.c.l.b16 %v8919
    %v9198 = vunpack.c.h.b16 %v8919
    %v9199 = vunpack.c.l.b16 %v8920
    %v9200 = vunpack.c.l.b16 %v8921
    %v9201 = vunpack.c.h.b16 %v8921
    %v9202 = vunpack.c.l.b16 %v8922
    %v9203 = vunpack.c.l.b16 %v8923
    %v9204 = vunpack.c.h.b16 %v8923
    %v9205 = vunpack.c.l.b16 %v8924
    %v9206 = vunpack.c.l.b16 %v8925
    %v9207 = vunpack.c.h.b16 %v8925
    %v9208 = vunpack.c.l.b16 %v8926
    %v9209 = vunpack.c.l.b16 %v8927
    %v9210 = vunpack.c.h.b16 %v8927
    %v9211 = vunpack.c.l.b16 %v8928
    %v9212 = vunpack.c.l.b16 %v8929
    %v9213 = vunpack.c.h.b16 %v8929
    %v9214 = vunpack.c.l.b16 %v8930
    %v9215 = vunpack.c.l.b16 %v8931
    %v9216 = vunpack.c.h.b16 %v8931
    %v9217 = vunpack.c.l.b16 %v8932
    %v9218 = vunpack.c.l.b16 %v8933
    %v9219 = vunpack.c.h.b16 %v8933
    %v9220 = vunpack.c.l.b16 %v8934
    %v9221 = vunpack.c.l.b16 %v8935
    %v9222 = vunpack.c.h.b16 %v8935
    %v9223 = vunpack.c.l.b16 %v8936
    %v9224 = vunpack.c.l.b16 %v8937
    %v9225 = vunpack.c.h.b16 %v8937
    %v9226 = vunpack.c.l.b16 %v8938
    %v9227 = vunpack.c.l.b16 %v8939
    %v9228 = vunpack.c.h.b16 %v8939
    %v9229 = vunpack.c.l.b16 %v8940
    %v9230 = vunpack.c.l.b16 %v8941
    %v9231 = vunpack.c.h.b16 %v8941
    %v9232 = vunpack.c.l.b16 %v8942
    %v9233 = vunpack.c.l.b16 %v8943
    %v9234 = vunpack.c.h.b16 %v8943
    %v9235 = vunpack.c.l.b16 %v8944
    %v9236 = vunpack.c.l.b16 %v8945
    %v9237 = vunpack.c.h.b16 %v8945
    %v9238 = vunpack.c.l.b16 %v8946
    %v9239 = vunpack.c.l.b16 %v8947
    %v9240 = vunpack.c.h.b16 %v8947
    %v9241 = vunpack.c.l.b16 %v8948
    %v9242 = vunpack.c.l.b16 %v8949
    %v9243 = vunpack.c.h.b16 %v8949
    %v9244 = vunpack.c.l.b16 %v8950
    %v9245 = vunpack.c.l.b16 %v8951
    %v9246 = vunpack.c.h.b16 %v8951
    %v9247 = vunpack.c.l.b16 %v8952
    %v9248 = vunpack.c.l.b16 %v8953
    %v9249 = vunpack.c.h.b16 %v8953
    %v9250 = vunpack.c.l.b16 %v8954
    %v9251 = vunpack.c.l.b16 %v8955
    %v9252 = vunpack.c.h.b16 %v8955
    %v9253 = vunpack.c.l.b16 %v8956
    %v9254 = vunpack.c.l.b16 %v8957
    %v9255 = vunpack.c.h.b16 %v8957
    %v9256 = vunpack.c.l.b16 %v8958
    %v9257 = vunpack.c.l.b16 %v8959
    %v9258 = vunpack.c.h.b16 %v8959
    %v9259 = vunpack.c.l.b16 %v8960
    %v9260 = vunpack.c.l.b16 %v8961
    %v9261 = vunpack.c.h.b16 %v8961
    %v9262 = vunpack.c.l.b16 %v8962
    %v9263 = vunpack.c.l.b16 %v8963
    %v9264 = vunpack.c.h.b16 %v8963
    %v9265 = vunpack.c.l.b16 %v8964
    %v9266 = vunpack.c.l.b16 %v8965
    %v9267 = vunpack.c.h.b16 %v8965
    %v9268 = vunpack.c.l.b16 %v8966
    %v9269 = vunpack.c.l.b16 %v8967
    %v9270 = vunpack.c.h.b16 %v8967
    %v9271 = vunpack.c.l.b16 %v8968
    %v9272 = vunpack.c.l.b16 %v8969
    %v9273 = vunpack.c.h.b16 %v8969
    %v9274 = vunpack.c.l.b16 %v8970
    %v9275 = vunpack.c.l.b16 %v8971
    %v9276 = vunpack.c.h.b16 %v8971
    %v9277 = vunpack.c.l.b16 %v8972
    %v9278 = vunpack.c.l.b16 %v8973
    %v9279 = vunpack.c.h.b16 %v8973
    %v9280 = vunpack.c.l.b16 %v8974
    %v9281 = vunpack.c.l.b16 %v8975
    %v9282 = vunpack.c.h.b16 %v8975
    %v9283 = vunpack.c.l.b16 %v8976
    %v9284 = vunpack.c.l.b16 %v8977
    %v9285 = vunpack.c.h.b16 %v8977
    %v9286 = vunpack.c.l.b16 %v8978
    %v9287 = vunpack.c.l.b16 %v8979
    %v9288 = vunpack.c.h.b16 %v8979
    %v9289 = vunpack.c.l.b16 %v8980
    %v9290 = vunpack.c.l.b16 %v8981
    %v9291 = vunpack.c.h.b16 %v8981
    %v9292 = vunpack.c.l.b16 %v8982
    %v9293 = vunpack.c.l.b16 %v8983
    %v9294 = vunpack.c.h.b16 %v8983
    %v9295 = vunpack.c.l.b16 %v8984
    %v9296 = vunpack.c.l.b16 %v8985
    %v9297 = vunpack.c.h.b16 %v8985
    %v9298 = vunpack.c.l.b16 %v8986
    %v9299 = vunpack.c.l.b16 %v8987
    %v9300 = vunpack.c.h.b16 %v8987
    %v9301 = vunpack.c.l.b16 %v8988
    %v9302 = vunpack.c.l.b16 %v8989
    %v9303 = vunpack.c.h.b16 %v8989
    %v9304 = vunpack.c.l.b16 %v8990
    %v9305 = vunpack.c.l.b16 %v8991
    %v9306 = vunpack.c.h.b16 %v8991
    %v9307 = vunpack.c.l.b16 %v8992
    %v9308 = vunpack.c.l.b16 %v8993
    %v9309 = vunpack.c.h.b16 %v8993
    %v9310 = vunpack.c.l.b16 %v8994
    %v9311 = vunpack.c.l.b16 %v8995
    %v9312 = vunpack.c.h.b16 %v8995
    %v9313 = vunpack.c.l.b16 %v8996
    %v9314 = vunpack.c.l.b16 %v8997
    %v9315 = vunpack.c.h.b16 %v8997
    %v9316 = vunpack.c.l.b16 %v8998
    %v9317 = vunpack.c.l.b16 %v8999
    %v9318 = vunpack.c.h.b16 %v8999
    %v9319 = vunpack.c.l.b16 %v9000
    %v9320 = vunpack.c.l.b16 %v9001
    %v9321 = vunpack.c.h.b16 %v9001
    %v9322 = vunpack.c.l.b16 %v9002
    %v9323 = vpack.c.b16 %v9134, %v9131
    %v9324 = vpack.c.b16 %v9135, %v9132
    %v9325 = vpack.c.b16 %v9136, %v9133
    %v9326 = vpack.c.b16 %v9140, %v9137
    %v9327 = vpack.c.b16 %v9141, %v9138
    %v9328 = vpack.c.b16 %v9142, %v9139
    %v9329 = vpack.c.b16 %v9146, %v9143
    %v9330 = vpack.c.b16 %v9147, %v9144
    %v9331 = vpack.c.b16 %v9148, %v9145
    %v9332 = vpack.c.b16 %v9152, %v9149
    %v9333 = vpack.c.b16 %v9153, %v9150
    %v9334 = vpack.c.b16 %v9154, %v9151
    %v9335 = vpack.c.b16 %v9158, %v9155
    %v9336 = vpack.c.b16 %v9159, %v9156
    %v9337 = vpack.c.b16 %v9160, %v9157
    %v9338 = vpack.c.b16 %v9164, %v9161
    %v9339 = vpack.c.b16 %v9165, %v9162
    %v9340 = vpack.c.b16 %v9166, %v9163
    %v9341 = vpack.c.b16 %v9170, %v9167
    %v9342 = vpack.c.b16 %v9171, %v9168
    %v9343 = vpack.c.b16 %v9172, %v9169
    %v9344 = vpack.c.b16 %v9176, %v9173
    %v9345 = vpack.c.b16 %v9177, %v9174
    %v9346 = vpack.c.b16 %v9178, %v9175
    %v9347 = vpack.c.b16 %v9182, %v9179
    %v9348 = vpack.c.b16 %v9183, %v9180
    %v9349 = vpack.c.b16 %v9184, %v9181
    %v9350 = vpack.c.b16 %v9188, %v9185
    %v9351 = vpack.c.b16 %v9189, %v9186
    %v9352 = vpack.c.b16 %v9190, %v9187
    %v9353 = vpack.c.b16 %v9194, %v9191
    %v9354 = vpack.c.b16 %v9195, %v9192
    %v9355 = vpack.c.b16 %v9196, %v9193
    %v9356 = vpack.c.b16 %v9200, %v9197
    %v9357 = vpack.c.b16 %v9201, %v9198
    %v9358 = vpack.c.b16 %v9202, %v9199
    %v9359 = vpack.c.b16 %v9206, %v9203
    %v9360 = vpack.c.b16 %v9207, %v9204
    %v9361 = vpack.c.b16 %v9208, %v9205
    %v9362 = vpack.c.b16 %v9212, %v9209
    %v9363 = vpack.c.b16 %v9213, %v9210
    %v9364 = vpack.c.b16 %v9214, %v9211
    %v9365 = vpack.c.b16 %v9218, %v9215
    %v9366 = vpack.c.b16 %v9219, %v9216
    %v9367 = vpack.c.b16 %v9220, %v9217
    %v9368 = vpack.c.b16 %v9224, %v9221
    %v9369 = vpack.c.b16 %v9225, %v9222
    %v9370 = vpack.c.b16 %v9226, %v9223
    %v9371 = vpack.c.b16 %v9230, %v9227
    %v9372 = vpack.c.b16 %v9231, %v9228
    %v9373 = vpack.c.b16 %v9232, %v9229
    %v9374 = vpack.c.b16 %v9236, %v9233
    %v9375 = vpack.c.b16 %v9237, %v9234
    %v9376 = vpack.c.b16 %v9238, %v9235
    %v9377 = vpack.c.b16 %v9242, %v9239
    %v9378 = vpack.c.b16 %v9243, %v9240
    %v9379 = vpack.c.b16 %v9244, %v9241
    %v9380 = vpack.c.b16 %v9248, %v9245
    %v9381 = vpack.c.b16 %v9249, %v9246
    %v9382 = vpack.c.b16 %v9250, %v9247
    %v9383 = vpack.c.b16 %v9254, %v9251
    %v9384 = vpack.c.b16 %v9255, %v9252
    %v9385 = vpack.c.b16 %v9256, %v9253
    %v9386 = vpack.c.b16 %v9260, %v9257
    %v9387 = vpack.c.b16 %v9261, %v9258
    %v9388 = vpack.c.b16 %v9262, %v9259
    %v9389 = vpack.c.b16 %v9266, %v9263
    %v9390 = vpack.c.b16 %v9267, %v9264
    %v9391 = vpack.c.b16 %v9268, %v9265
    %v9392 = vpack.c.b16 %v9272, %v9269
    %v9393 = vpack.c.b16 %v9273, %v9270
    %v9394 = vpack.c.b16 %v9274, %v9271
    %v9395 = vpack.c.b16 %v9278, %v9275
    %v9396 = vpack.c.b16 %v9279, %v9276
    %v9397 = vpack.c.b16 %v9280, %v9277
    %v9398 = vpack.c.b16 %v9284, %v9281
    %v9399 = vpack.c.b16 %v9285, %v9282
    %v9400 = vpack.c.b16 %v9286, %v9283
    %v9401 = vpack.c.b16 %v9290, %v9287
    %v9402 = vpack.c.b16 %v9291, %v9288
    %v9403 = vpack.c.b16 %v9292, %v9289
    %v9404 = vpack.c.b16 %v9296, %v9293
    %v9405 = vpack.c.b16 %v9297, %v9294
    %v9406 = vpack.c.b16 %v9298, %v9295
    %v9407 = vpack.c.b16 %v9302, %v9299
    %v9408 = vpack.c.b16 %v9303, %v9300
    %v9409 = vpack.c.b16 %v9304, %v9301
    %v9410 = vpack.c.b16 %v9308, %v9305
    %v9411 = vpack.c.b16 %v9309, %v9306
    %v9412 = vpack.c.b16 %v9310, %v9307
    %v9413 = vpack.c.b16 %v9314, %v9311
    %v9414 = vpack.c.b16 %v9315, %v9312
    %v9415 = vpack.c.b16 %v9316, %v9313
    %v9416 = vpack.c.b16 %v9320, %v9317
    %v9417 = vpack.c.b16 %v9321, %v9318
    %v9418 = vpack.c.b16 %v9322, %v9319
    %9515 = vmatpush.bf16.msra.mxu0 %v9344
    %9516 = vmatpush.bf16.msra.mxu0 %v9341
    %9517 = vmatpush.bf16.msra.mxu0 %v9338
    %9518 = vmatpush.bf16.msra.mxu0 %v9335
    %9519 = vmatpush.bf16.msra.mxu0 %v9332
    %9520 = vmatpush.bf16.msra.mxu0 %v9329
    %9521 = vmatpush.bf16.msra.mxu0 %v9326
    %9522 = vmatpush.bf16.msra.mxu0 %v9323
    %9523 = vmatmul.bf16.gmra.mxu0 %v8870
    %v9524 = vpop.f32.mrf.mxu0
    %v9525 = vadd.f32 0.0, %v9524
    %v9526 = vpop.f32.mrf.mxu0
    %9527 = vdwg.mxu0
    %9528 = vmatpush.bf16.msra.mxu0 %v9368
    %9529 = vmatpush.bf16.msra.mxu0 %v9365
    %9530 = vmatpush.bf16.msra.mxu0 %v9362
    %9531 = vmatpush.bf16.msra.mxu0 %v9359
    %9532 = vmatpush.bf16.msra.mxu0 %v9356
    %9533 = vmatpush.bf16.msra.mxu0 %v9353
    %9534 = vmatpush.bf16.msra.mxu0 %v9350
    %9535 = vmatpush.bf16.msra.mxu0 %v9347
    %9536 = vmatmul.bf16.gmra.mxu0 %v8871
    %v9537 = vpop.f32.mrf.mxu0
    %v9538 = vadd.f32 %v9525, %v9537
    %v9539 = vpop.f32.mrf.mxu0
    %9540 = vdwg.mxu0
    %9541 = vmatpush.bf16.msra.mxu0 %v9392
    %9542 = vmatpush.bf16.msra.mxu0 %v9389
    %9543 = vmatpush.bf16.msra.mxu0 %v9386
    %9544 = vmatpush.bf16.msra.mxu0 %v9383
    %9545 = vmatpush.bf16.msra.mxu0 %v9380
    %9546 = vmatpush.bf16.msra.mxu0 %v9377
    %9547 = vmatpush.bf16.msra.mxu0 %v9374
    %9548 = vmatpush.bf16.msra.mxu0 %v9371
    %9549 = vmatmul.bf16.gmra.mxu0 %v8872
    %v9550 = vpop.f32.mrf.mxu0
    %v9551 = vadd.f32 %v9538, %v9550
    %v9552 = vpop.f32.mrf.mxu0
    %9553 = vdwg.mxu0
    %9554 = vmatpush.bf16.msra.mxu0 %v9416
    %9555 = vmatpush.bf16.msra.mxu0 %v9413
    %9556 = vmatpush.bf16.msra.mxu0 %v9410
    %9557 = vmatpush.bf16.msra.mxu0 %v9407
    %9558 = vmatpush.bf16.msra.mxu0 %v9404
    %9559 = vmatpush.bf16.msra.mxu0 %v9401
    %9560 = vmatpush.bf16.msra.mxu0 %v9398
    %9561 = vmatpush.bf16.msra.mxu0 %v9395
    %9562 = vmatmul.bf16.gmra.mxu0 %v8873
    %v9563 = vpop.f32.mrf.mxu0
    %v9564 = vadd.f32 %v9551, %v9563
    %v9565 = vpop.f32.mrf.mxu0
    %9566 = vdwg.mxu0
    %9567 = vmatpush.bf16.msra.mxu0 %v9345
    %9568 = vmatpush.bf16.msra.mxu0 %v9342
    %9569 = vmatpush.bf16.msra.mxu0 %v9339
    %9570 = vmatpush.bf16.msra.mxu0 %v9336
    %9571 = vmatpush.bf16.msra.mxu0 %v9333
    %9572 = vmatpush.bf16.msra.mxu0 %v9330
    %9573 = vmatpush.bf16.msra.mxu0 %v9327
    %9574 = vmatpush.bf16.msra.mxu0 %v9324
    %9575 = vmatmul.bf16.gmra.mxu0 %v8870
    %v9576 = vpop.f32.mrf.mxu0
    %v9577 = vadd.f32 0.0, %v9576
    %v9578 = vpop.f32.mrf.mxu0
    %9579 = vdwg.mxu0
    %9580 = vmatpush.bf16.msra.mxu0 %v9369
    %9581 = vmatpush.bf16.msra.mxu0 %v9366
    %9582 = vmatpush.bf16.msra.mxu0 %v9363
    %9583 = vmatpush.bf16.msra.mxu0 %v9360
    %9584 = vmatpush.bf16.msra.mxu0 %v9357
    %9585 = vmatpush.bf16.msra.mxu0 %v9354
    %9586 = vmatpush.bf16.msra.mxu0 %v9351
    %9587 = vmatpush.bf16.msra.mxu0 %v9348
    %9588 = vmatmul.bf16.gmra.mxu0 %v8871
    %v9589 = vpop.f32.mrf.mxu0
    %v9590 = vadd.f32 %v9577, %v9589
    %v9591 = vpop.f32.mrf.mxu0
    %9592 = vdwg.mxu0
    %9593 = vmatpush.bf16.msra.mxu0 %v9393
    %9594 = vmatpush.bf16.msra.mxu0 %v9390
    %9595 = vmatpush.bf16.msra.mxu0 %v9387
    %9596 = vmatpush.bf16.msra.mxu0 %v9384
    %9597 = vmatpush.bf16.msra.mxu0 %v9381
    %9598 = vmatpush.bf16.msra.mxu0 %v9378
    %9599 = vmatpush.bf16.msra.mxu0 %v9375
    %9600 = vmatpush.bf16.msra.mxu0 %v9372
    %9601 = vmatmul.bf16.gmra.mxu0 %v8872
    %v9602 = vpop.f32.mrf.mxu0
    %v9603 = vadd.f32 %v9590, %v9602
    %v9604 = vpop.f32.mrf.mxu0
    %9605 = vdwg.mxu0
    %9606 = vmatpush.bf16.msra.mxu0 %v9417
    %9607 = vmatpush.bf16.msra.mxu0 %v9414
    %9608 = vmatpush.bf16.msra.mxu0 %v9411
    %9609 = vmatpush.bf16.msra.mxu0 %v9408
    %9610 = vmatpush.bf16.msra.mxu0 %v9405
    %9611 = vmatpush.bf16.msra.mxu0 %v9402
    %9612 = vmatpush.bf16.msra.mxu0 %v9399
    %9613 = vmatpush.bf16.msra.mxu0 %v9396
    %9614 = vmatmul.bf16.gmra.mxu0 %v8873
    %v9615 = vpop.f32.mrf.mxu0
    %v9616 = vadd.f32 %v9603, %v9615
    %v9617 = vpop.f32.mrf.mxu0
    %9618 = vdwg.mxu0
    %9619 = vmatpush.bf16.msra.mxu0 %v9346
    %9620 = vmatpush.bf16.msra.mxu0 %v9343
    %9621 = vmatpush.bf16.msra.mxu0 %v9340
    %9622 = vmatpush.bf16.msra.mxu0 %v9337
    %9623 = vmatpush.bf16.msra.mxu0 %v9334
    %9624 = vmatpush.bf16.msra.mxu0 %v9331
    %9625 = vmatpush.bf16.msra.mxu0 %v9328
    %9626 = vmatpush.bf16.msra.mxu0 %v9325
    %9627 = vmatmul.bf16.gmra.mxu0 %v8870
    %v9628 = vpop.f32.mrf.mxu0
    %v9629 = vadd.f32 0.0, %v9628
    %v9630 = vpop.f32.mrf.mxu0
    %9631 = vdwg.mxu0
    %9632 = vmatpush.bf16.msra.mxu0 %v9370
    %9633 = vmatpush.bf16.msra.mxu0 %v9367
    %9634 = vmatpush.bf16.msra.mxu0 %v9364
    %9635 = vmatpush.bf16.msra.mxu0 %v9361
    %9636 = vmatpush.bf16.msra.mxu0 %v9358
    %9637 = vmatpush.bf16.msra.mxu0 %v9355
    %9638 = vmatpush.bf16.msra.mxu0 %v9352
    %9639 = vmatpush.bf16.msra.mxu0 %v9349
    %9640 = vmatmul.bf16.gmra.mxu0 %v8871
    %v9641 = vpop.f32.mrf.mxu0
    %v9642 = vadd.f32 %v9629, %v9641
    %v9643 = vpop.f32.mrf.mxu0
    %9644 = vdwg.mxu0
    %9645 = vmatpush.bf16.msra.mxu0 %v9394
    %9646 = vmatpush.bf16.msra.mxu0 %v9391
    %9647 = vmatpush.bf16.msra.mxu0 %v9388
    %9648 = vmatpush.bf16.msra.mxu0 %v9385
    %9649 = vmatpush.bf16.msra.mxu0 %v9382
    %9650 = vmatpush.bf16.msra.mxu0 %v9379
    %9651 = vmatpush.bf16.msra.mxu0 %v9376
    %9652 = vmatpush.bf16.msra.mxu0 %v9373
    %9653 = vmatmul.bf16.gmra.mxu0 %v8872
    %v9654 = vpop.f32.mrf.mxu0
    %v9655 = vadd.f32 %v9642, %v9654
    %v9656 = vpop.f32.mrf.mxu0
    %9657 = vdwg.mxu0
    %9658 = vmatpush.bf16.msra.mxu0 %v9418
    %9659 = vmatpush.bf16.msra.mxu0 %v9415
    %9660 = vmatpush.bf16.msra.mxu0 %v9412
    %9661 = vmatpush.bf16.msra.mxu0 %v9409
    %9662 = vmatpush.bf16.msra.mxu0 %v9406
    %9663 = vmatpush.bf16.msra.mxu0 %v9403
    %9664 = vmatpush.bf16.msra.mxu0 %v9400
    %9665 = vmatpush.bf16.msra.mxu0 %v9397
    %9666 = vmatmul.bf16.gmra.mxu0 %v8873
    %v9667 = vpop.f32.mrf.mxu0
    %v9668 = vadd.f32 %v9655, %v9667
    %v9669 = vpop.f32.mrf.mxu0
    %9670 = vdwg.mxu0
    %v9799 = vunpack.c.l.b16 %v8685
    %v9800 = vunpack.c.h.b16 %v8685
    %v9801 = vunpack.c.l.b16 %v8686
    %v9802 = vunpack.c.l.b16 %v8687
    %v9803 = vunpack.c.h.b16 %v8687
    %v9804 = vunpack.c.l.b16 %v8688
    %v9805 = vunpack.c.l.b16 %v8689
    %v9806 = vunpack.c.h.b16 %v8689
    %v9807 = vunpack.c.l.b16 %v8690
    %v9808 = vunpack.c.l.b16 %v8691
    %v9809 = vunpack.c.h.b16 %v8691
    %v9810 = vunpack.c.l.b16 %v8692
    %v9811 = vunpack.c.l.b16 %v8693
    %v9812 = vunpack.c.h.b16 %v8693
    %v9813 = vunpack.c.l.b16 %v8694
    %v9814 = vunpack.c.l.b16 %v8695
    %v9815 = vunpack.c.h.b16 %v8695
    %v9816 = vunpack.c.l.b16 %v8696
    %v9817 = vunpack.c.l.b16 %v8697
    %v9818 = vunpack.c.h.b16 %v8697
    %v9819 = vunpack.c.l.b16 %v8698
    %v9820 = vunpack.c.l.b16 %v8699
    %v9821 = vunpack.c.h.b16 %v8699
    %v9822 = vunpack.c.l.b16 %v8700
    %v9823 = vunpack.c.l.b16 %v8701
    %v9824 = vunpack.c.h.b16 %v8701
    %v9825 = vunpack.c.l.b16 %v8702
    %v9826 = vunpack.c.l.b16 %v8703
    %v9827 = vunpack.c.h.b16 %v8703
    %v9828 = vunpack.c.l.b16 %v8704
    %v9829 = vunpack.c.l.b16 %v8705
    %v9830 = vunpack.c.h.b16 %v8705
    %v9831 = vunpack.c.l.b16 %v8706
    %v9832 = vunpack.c.l.b16 %v8707
    %v9833 = vunpack.c.h.b16 %v8707
    %v9834 = vunpack.c.l.b16 %v8708
    %v9835 = vunpack.c.l.b16 %v8709
    %v9836 = vunpack.c.h.b16 %v8709
    %v9837 = vunpack.c.l.b16 %v8710
    %v9838 = vunpack.c.l.b16 %v8711
    %v9839 = vunpack.c.h.b16 %v8711
    %v9840 = vunpack.c.l.b16 %v8712
    %v9841 = vunpack.c.l.b16 %v8713
    %v9842 = vunpack.c.h.b16 %v8713
    %v9843 = vunpack.c.l.b16 %v8714
    %v9844 = vunpack.c.l.b16 %v8715
    %v9845 = vunpack.c.h.b16 %v8715
    %v9846 = vunpack.c.l.b16 %v8716
    %v9847 = vunpack.c.l.b16 %v8717
    %v9848 = vunpack.c.h.b16 %v8717
    %v9849 = vunpack.c.l.b16 %v8718
    %v9850 = vunpack.c.l.b16 %v8719
    %v9851 = vunpack.c.h.b16 %v8719
    %v9852 = vunpack.c.l.b16 %v8720
    %v9853 = vunpack.c.l.b16 %v8721
    %v9854 = vunpack.c.h.b16 %v8721
    %v9855 = vunpack.c.l.b16 %v8722
    %v9856 = vunpack.c.l.b16 %v8723
    %v9857 = vunpack.c.h.b16 %v8723
    %v9858 = vunpack.c.l.b16 %v8724
    %v9859 = vunpack.c.l.b16 %v8725
    %v9860 = vunpack.c.h.b16 %v8725
    %v9861 = vunpack.c.l.b16 %v8726
    %v9862 = vunpack.c.l.b16 %v8727
    %v9863 = vunpack.c.h.b16 %v8727
    %v9864 = vunpack.c.l.b16 %v8728
    %v9865 = vunpack.c.l.b16 %v8729
    %v9866 = vunpack.c.h.b16 %v8729
    %v9867 = vunpack.c.l.b16 %v8730
    %v9868 = vunpack.c.l.b16 %v8731
    %v9869 = vunpack.c.h.b16 %v8731
    %v9870 = vunpack.c.l.b16 %v8732
    %v9871 = vunpack.c.l.b16 %v8733
    %v9872 = vunpack.c.h.b16 %v8733
    %v9873 = vunpack.c.l.b16 %v8734
    %v9874 = vunpack.c.l.b16 %v8735
    %v9875 = vunpack.c.h.b16 %v8735
    %v9876 = vunpack.c.l.b16 %v8736
    %v9877 = vunpack.c.l.b16 %v8737
    %v9878 = vunpack.c.h.b16 %v8737
    %v9879 = vunpack.c.l.b16 %v8738
    %v9880 = vunpack.c.l.b16 %v8739
    %v9881 = vunpack.c.h.b16 %v8739
    %v9882 = vunpack.c.l.b16 %v8740
    %v9883 = vunpack.c.l.b16 %v8741
    %v9884 = vunpack.c.h.b16 %v8741
    %v9885 = vunpack.c.l.b16 %v8742
    %v9886 = vunpack.c.l.b16 %v8743
    %v9887 = vunpack.c.h.b16 %v8743
    %v9888 = vunpack.c.l.b16 %v8744
    %v9889 = vunpack.c.l.b16 %v8745
    %v9890 = vunpack.c.h.b16 %v8745
    %v9891 = vunpack.c.l.b16 %v8746
    %v9892 = vunpack.c.l.b16 %v8747
    %v9893 = vunpack.c.h.b16 %v8747
    %v9894 = vunpack.c.l.b16 %v8748
    %v9895 = vunpack.c.l.b16 %v8749
    %v9896 = vunpack.c.h.b16 %v8749
    %v9897 = vunpack.c.l.b16 %v8750
    %v9898 = vunpack.c.l.b16 %v8751
    %v9899 = vunpack.c.h.b16 %v8751
    %v9900 = vunpack.c.l.b16 %v8752
    %v9901 = vunpack.c.l.b16 %v8753
    %v9902 = vunpack.c.h.b16 %v8753
    %v9903 = vunpack.c.l.b16 %v8754
    %v9904 = vunpack.c.l.b16 %v8755
    %v9905 = vunpack.c.h.b16 %v8755
    %v9906 = vunpack.c.l.b16 %v8756
    %v9907 = vunpack.c.l.b16 %v8757
    %v9908 = vunpack.c.h.b16 %v8757
    %v9909 = vunpack.c.l.b16 %v8758
    %v9910 = vunpack.c.l.b16 %v8759
    %v9911 = vunpack.c.h.b16 %v8759
    %v9912 = vunpack.c.l.b16 %v8760
    %v9913 = vunpack.c.l.b16 %v8761
    %v9914 = vunpack.c.h.b16 %v8761
    %v9915 = vunpack.c.l.b16 %v8762
    %v9916 = vunpack.c.l.b16 %v8763
    %v9917 = vunpack.c.h.b16 %v8763
    %v9918 = vunpack.c.l.b16 %v8764
    %v9919 = vunpack.c.l.b16 %v8765
    %v9920 = vunpack.c.h.b16 %v8765
    %v9921 = vunpack.c.l.b16 %v8766
    %v9922 = vunpack.c.l.b16 %v8767
    %v9923 = vunpack.c.h.b16 %v8767
    %v9924 = vunpack.c.l.b16 %v8768
    %v9925 = vunpack.c.l.b16 %v8769
    %v9926 = vunpack.c.h.b16 %v8769
    %v9927 = vunpack.c.l.b16 %v8770
    %v9928 = vunpack.c.l.b16 %v8771
    %v9929 = vunpack.c.h.b16 %v8771
    %v9930 = vunpack.c.l.b16 %v8772
    %v9931 = vunpack.c.l.b16 %v8773
    %v9932 = vunpack.c.h.b16 %v8773
    %v9933 = vunpack.c.l.b16 %v8774
    %v9934 = vunpack.c.l.b16 %v8775
    %v9935 = vunpack.c.h.b16 %v8775
    %v9936 = vunpack.c.l.b16 %v8776
    %v9937 = vunpack.c.l.b16 %v8777
    %v9938 = vunpack.c.h.b16 %v8777
    %v9939 = vunpack.c.l.b16 %v8778
    %v9940 = vunpack.c.l.b16 %v8779
    %v9941 = vunpack.c.h.b16 %v8779
    %v9942 = vunpack.c.l.b16 %v8780
    %v9943 = vunpack.c.l.b16 %v8781
    %v9944 = vunpack.c.h.b16 %v8781
    %v9945 = vunpack.c.l.b16 %v8782
    %v9946 = vunpack.c.l.b16 %v8783
    %v9947 = vunpack.c.h.b16 %v8783
    %v9948 = vunpack.c.l.b16 %v8784
    %v9949 = vunpack.c.l.b16 %v8785
    %v9950 = vunpack.c.h.b16 %v8785
    %v9951 = vunpack.c.l.b16 %v8786
    %v9952 = vunpack.c.l.b16 %v8787
    %v9953 = vunpack.c.h.b16 %v8787
    %v9954 = vunpack.c.l.b16 %v8788
    %v9955 = vunpack.c.l.b16 %v8789
    %v9956 = vunpack.c.h.b16 %v8789
    %v9957 = vunpack.c.l.b16 %v8790
    %v9958 = vunpack.c.l.b16 %v8791
    %v9959 = vunpack.c.h.b16 %v8791
    %v9960 = vunpack.c.l.b16 %v8792
    %v9961 = vunpack.c.l.b16 %v8793
    %v9962 = vunpack.c.h.b16 %v8793
    %v9963 = vunpack.c.l.b16 %v8794
    %v9964 = vunpack.c.l.b16 %v8795
    %v9965 = vunpack.c.h.b16 %v8795
    %v9966 = vunpack.c.l.b16 %v8796
    %v9967 = vunpack.c.l.b16 %v8797
    %v9968 = vunpack.c.h.b16 %v8797
    %v9969 = vunpack.c.l.b16 %v8798
    %v9970 = vunpack.c.l.b16 %v8799
    %v9971 = vunpack.c.h.b16 %v8799
    %v9972 = vunpack.c.l.b16 %v8800
    %v9973 = vunpack.c.l.b16 %v8801
    %v9974 = vunpack.c.h.b16 %v8801
    %v9975 = vunpack.c.l.b16 %v8802
    %v9976 = vunpack.c.l.b16 %v8803
    %v9977 = vunpack.c.h.b16 %v8803
    %v9978 = vunpack.c.l.b16 %v8804
    %v9979 = vunpack.c.l.b16 %v8805
    %v9980 = vunpack.c.h.b16 %v8805
    %v9981 = vunpack.c.l.b16 %v8806
    %v9982 = vunpack.c.l.b16 %v8807
    %v9983 = vunpack.c.h.b16 %v8807
    %v9984 = vunpack.c.l.b16 %v8808
    %v9985 = vunpack.c.l.b16 %v8809
    %v9986 = vunpack.c.h.b16 %v8809
    %v9987 = vunpack.c.l.b16 %v8810
    %v9988 = vunpack.c.l.b16 %v8811
    %v9989 = vunpack.c.h.b16 %v8811
    %v9990 = vunpack.c.l.b16 %v8812
    %v9991 = vpack.c.b16 %v9802, %v9799
    %v9992 = vpack.c.b16 %v9803, %v9800
    %v9993 = vpack.c.b16 %v9804, %v9801
    %v9994 = vpack.c.b16 %v9808, %v9805
    %v9995 = vpack.c.b16 %v9809, %v9806
    %v9996 = vpack.c.b16 %v9810, %v9807
    %v9997 = vpack.c.b16 %v9814, %v9811
    %v9998 = vpack.c.b16 %v9815, %v9812
    %v9999 = vpack.c.b16 %v9816, %v9813
    %v10000 = vpack.c.b16 %v9820, %v9817
    %v10001 = vpack.c.b16 %v9821, %v9818
    %v10002 = vpack.c.b16 %v9822, %v9819
    %v10003 = vpack.c.b16 %v9826, %v9823
    %v10004 = vpack.c.b16 %v9827, %v9824
    %v10005 = vpack.c.b16 %v9828, %v9825
    %v10006 = vpack.c.b16 %v9832, %v9829
    %v10007 = vpack.c.b16 %v9833, %v9830
    %v10008 = vpack.c.b16 %v9834, %v9831
    %v10009 = vpack.c.b16 %v9838, %v9835
    %v10010 = vpack.c.b16 %v9839, %v9836
    %v10011 = vpack.c.b16 %v9840, %v9837
    %v10012 = vpack.c.b16 %v9844, %v9841
    %v10013 = vpack.c.b16 %v9845, %v9842
    %v10014 = vpack.c.b16 %v9846, %v9843
    %v10015 = vpack.c.b16 %v9850, %v9847
    %v10016 = vpack.c.b16 %v9851, %v9848
    %v10017 = vpack.c.b16 %v9852, %v9849
    %v10018 = vpack.c.b16 %v9856, %v9853
    %v10019 = vpack.c.b16 %v9857, %v9854
    %v10020 = vpack.c.b16 %v9858, %v9855
    %v10021 = vpack.c.b16 %v9862, %v9859
    %v10022 = vpack.c.b16 %v9863, %v9860
    %v10023 = vpack.c.b16 %v9864, %v9861
    %v10024 = vpack.c.b16 %v9868, %v9865
    %v10025 = vpack.c.b16 %v9869, %v9866
    %v10026 = vpack.c.b16 %v9870, %v9867
    %v10027 = vpack.c.b16 %v9874, %v9871
    %v10028 = vpack.c.b16 %v9875, %v9872
    %v10029 = vpack.c.b16 %v9876, %v9873
    %v10030 = vpack.c.b16 %v9880, %v9877
    %v10031 = vpack.c.b16 %v9881, %v9878
    %v10032 = vpack.c.b16 %v9882, %v9879
    %v10033 = vpack.c.b16 %v9886, %v9883
    %v10034 = vpack.c.b16 %v9887, %v9884
    %v10035 = vpack.c.b16 %v9888, %v9885
    %v10036 = vpack.c.b16 %v9892, %v9889
    %v10037 = vpack.c.b16 %v9893, %v9890
    %v10038 = vpack.c.b16 %v9894, %v9891
    %v10039 = vpack.c.b16 %v9898, %v9895
    %v10040 = vpack.c.b16 %v9899, %v9896
    %v10041 = vpack.c.b16 %v9900, %v9897
    %v10042 = vpack.c.b16 %v9904, %v9901
    %v10043 = vpack.c.b16 %v9905, %v9902
    %v10044 = vpack.c.b16 %v9906, %v9903
    %v10045 = vpack.c.b16 %v9910, %v9907
    %v10046 = vpack.c.b16 %v9911, %v9908
    %v10047 = vpack.c.b16 %v9912, %v9909
    %v10048 = vpack.c.b16 %v9916, %v9913
    %v10049 = vpack.c.b16 %v9917, %v9914
    %v10050 = vpack.c.b16 %v9918, %v9915
    %v10051 = vpack.c.b16 %v9922, %v9919
    %v10052 = vpack.c.b16 %v9923, %v9920
    %v10053 = vpack.c.b16 %v9924, %v9921
    %v10054 = vpack.c.b16 %v9928, %v9925
    %v10055 = vpack.c.b16 %v9929, %v9926
    %v10056 = vpack.c.b16 %v9930, %v9927
    %v10057 = vpack.c.b16 %v9934, %v9931
    %v10058 = vpack.c.b16 %v9935, %v9932
    %v10059 = vpack.c.b16 %v9936, %v9933
    %v10060 = vpack.c.b16 %v9940, %v9937
    %v10061 = vpack.c.b16 %v9941, %v9938
    %v10062 = vpack.c.b16 %v9942, %v9939
    %v10063 = vpack.c.b16 %v9946, %v9943
    %v10064 = vpack.c.b16 %v9947, %v9944
    %v10065 = vpack.c.b16 %v9948, %v9945
    %v10066 = vpack.c.b16 %v9952, %v9949
    %v10067 = vpack.c.b16 %v9953, %v9950
    %v10068 = vpack.c.b16 %v9954, %v9951
    %v10069 = vpack.c.b16 %v9958, %v9955
    %v10070 = vpack.c.b16 %v9959, %v9956
    %v10071 = vpack.c.b16 %v9960, %v9957
    %v10072 = vpack.c.b16 %v9964, %v9961
    %v10073 = vpack.c.b16 %v9965, %v9962
    %v10074 = vpack.c.b16 %v9966, %v9963
    %v10075 = vpack.c.b16 %v9970, %v9967
    %v10076 = vpack.c.b16 %v9971, %v9968
    %v10077 = vpack.c.b16 %v9972, %v9969
    %v10078 = vpack.c.b16 %v9976, %v9973
    %v10079 = vpack.c.b16 %v9977, %v9974
    %v10080 = vpack.c.b16 %v9978, %v9975
    %v10081 = vpack.c.b16 %v9982, %v9979
    %v10082 = vpack.c.b16 %v9983, %v9980
    %v10083 = vpack.c.b16 %v9984, %v9981
    %v10084 = vpack.c.b16 %v9988, %v9985
    %v10085 = vpack.c.b16 %v9989, %v9986
    %v10086 = vpack.c.b16 %v9990, %v9987
    %10183 = vmatpush.bf16.msra.mxu0 %v10012
    %10184 = vmatpush.bf16.msra.mxu0 %v10009
    %10185 = vmatpush.bf16.msra.mxu0 %v10006
    %10186 = vmatpush.bf16.msra.mxu0 %v10003
    %10187 = vmatpush.bf16.msra.mxu0 %v10000
    %10188 = vmatpush.bf16.msra.mxu0 %v9997
    %10189 = vmatpush.bf16.msra.mxu0 %v9994
    %10190 = vmatpush.bf16.msra.mxu0 %v9991
    %10191 = vmatmul.bf16.gmra.mxu0 %v8681
    %v10192 = vpop.f32.mrf.mxu0
    %v10193 = vadd.f32 %v9564, %v10192
    %v10194 = vpop.f32.mrf.mxu0
    %10195 = vdwg.mxu0
    %10196 = vmatpush.bf16.msra.mxu0 %v10036
    %10197 = vmatpush.bf16.msra.mxu0 %v10033
    %10198 = vmatpush.bf16.msra.mxu0 %v10030
    %10199 = vmatpush.bf16.msra.mxu0 %v10027
    %10200 = vmatpush.bf16.msra.mxu0 %v10024
    %10201 = vmatpush.bf16.msra.mxu0 %v10021
    %10202 = vmatpush.bf16.msra.mxu0 %v10018
    %10203 = vmatpush.bf16.msra.mxu0 %v10015
    %10204 = vmatmul.bf16.gmra.mxu0 %v8682
    %v10205 = vpop.f32.mrf.mxu0
    %v10206 = vadd.f32 %v10193, %v10205
    %v10207 = vpop.f32.mrf.mxu0
    %10208 = vdwg.mxu0
    %10209 = vmatpush.bf16.msra.mxu0 %v10060
    %10210 = vmatpush.bf16.msra.mxu0 %v10057
    %10211 = vmatpush.bf16.msra.mxu0 %v10054
    %10212 = vmatpush.bf16.msra.mxu0 %v10051
    %10213 = vmatpush.bf16.msra.mxu0 %v10048
    %10214 = vmatpush.bf16.msra.mxu0 %v10045
    %10215 = vmatpush.bf16.msra.mxu0 %v10042
    %10216 = vmatpush.bf16.msra.mxu0 %v10039
    %10217 = vmatmul.bf16.gmra.mxu0 %v8683
    %v10218 = vpop.f32.mrf.mxu0
    %v10219 = vadd.f32 %v10206, %v10218
    %v10220 = vpop.f32.mrf.mxu0
    %10221 = vdwg.mxu0
    %10222 = vmatpush.bf16.msra.mxu0 %v10084
    %10223 = vmatpush.bf16.msra.mxu0 %v10081
    %10224 = vmatpush.bf16.msra.mxu0 %v10078
    %10225 = vmatpush.bf16.msra.mxu0 %v10075
    %10226 = vmatpush.bf16.msra.mxu0 %v10072
    %10227 = vmatpush.bf16.msra.mxu0 %v10069
    %10228 = vmatpush.bf16.msra.mxu0 %v10066
    %10229 = vmatpush.bf16.msra.mxu0 %v10063
    %10230 = vmatmul.bf16.gmra.mxu0 %v8684
    %v10231 = vpop.f32.mrf.mxu0
    %v10232 = vadd.f32 %v10219, %v10231
    %v10233 = vpop.f32.mrf.mxu0
    %10234 = vdwg.mxu0
    %10235 = vmatpush.bf16.msra.mxu0 %v10013
    %10236 = vmatpush.bf16.msra.mxu0 %v10010
    %10237 = vmatpush.bf16.msra.mxu0 %v10007
    %10238 = vmatpush.bf16.msra.mxu0 %v10004
    %10239 = vmatpush.bf16.msra.mxu0 %v10001
    %10240 = vmatpush.bf16.msra.mxu0 %v9998
    %10241 = vmatpush.bf16.msra.mxu0 %v9995
    %10242 = vmatpush.bf16.msra.mxu0 %v9992
    %10243 = vmatmul.bf16.gmra.mxu0 %v8681
    %v10244 = vpop.f32.mrf.mxu0
    %v10245 = vadd.f32 %v9616, %v10244
    %v10246 = vpop.f32.mrf.mxu0
    %10247 = vdwg.mxu0
    %10248 = vmatpush.bf16.msra.mxu0 %v10037
    %10249 = vmatpush.bf16.msra.mxu0 %v10034
    %10250 = vmatpush.bf16.msra.mxu0 %v10031
    %10251 = vmatpush.bf16.msra.mxu0 %v10028
    %10252 = vmatpush.bf16.msra.mxu0 %v10025
    %10253 = vmatpush.bf16.msra.mxu0 %v10022
    %10254 = vmatpush.bf16.msra.mxu0 %v10019
    %10255 = vmatpush.bf16.msra.mxu0 %v10016
    %10256 = vmatmul.bf16.gmra.mxu0 %v8682
    %v10257 = vpop.f32.mrf.mxu0
    %v10258 = vadd.f32 %v10245, %v10257
    %v10259 = vpop.f32.mrf.mxu0
    %10260 = vdwg.mxu0
    %10261 = vmatpush.bf16.msra.mxu0 %v10061
    %10262 = vmatpush.bf16.msra.mxu0 %v10058
    %10263 = vmatpush.bf16.msra.mxu0 %v10055
    %10264 = vmatpush.bf16.msra.mxu0 %v10052
    %10265 = vmatpush.bf16.msra.mxu0 %v10049
    %10266 = vmatpush.bf16.msra.mxu0 %v10046
    %10267 = vmatpush.bf16.msra.mxu0 %v10043
    %10268 = vmatpush.bf16.msra.mxu0 %v10040
    %10269 = vmatmul.bf16.gmra.mxu0 %v8683
    %v10270 = vpop.f32.mrf.mxu0
    %v10271 = vadd.f32 %v10258, %v10270
    %v10272 = vpop.f32.mrf.mxu0
    %10273 = vdwg.mxu0
    %10274 = vmatpush.bf16.msra.mxu0 %v10085
    %10275 = vmatpush.bf16.msra.mxu0 %v10082
    %10276 = vmatpush.bf16.msra.mxu0 %v10079
    %10277 = vmatpush.bf16.msra.mxu0 %v10076
    %10278 = vmatpush.bf16.msra.mxu0 %v10073
    %10279 = vmatpush.bf16.msra.mxu0 %v10070
    %10280 = vmatpush.bf16.msra.mxu0 %v10067
    %10281 = vmatpush.bf16.msra.mxu0 %v10064
    %10282 = vmatmul.bf16.gmra.mxu0 %v8684
    %v10283 = vpop.f32.mrf.mxu0
    %v10284 = vadd.f32 %v10271, %v10283
    %v10285 = vpop.f32.mrf.mxu0
    %10286 = vdwg.mxu0
    %10287 = vmatpush.bf16.msra.mxu0 %v10014
    %10288 = vmatpush.bf16.msra.mxu0 %v10011
    %10289 = vmatpush.bf16.msra.mxu0 %v10008
    %10290 = vmatpush.bf16.msra.mxu0 %v10005
    %10291 = vmatpush.bf16.msra.mxu0 %v10002
    %10292 = vmatpush.bf16.msra.mxu0 %v9999
    %10293 = vmatpush.bf16.msra.mxu0 %v9996
    %10294 = vmatpush.bf16.msra.mxu0 %v9993
    %10295 = vmatmul.bf16.gmra.mxu0 %v8681
    %v10296 = vpop.f32.mrf.mxu0
    %v10297 = vadd.f32 %v9668, %v10296
    %v10298 = vpop.f32.mrf.mxu0
    %10299 = vdwg.mxu0
    %10300 = vmatpush.bf16.msra.mxu0 %v10038
    %10301 = vmatpush.bf16.msra.mxu0 %v10035
    %10302 = vmatpush.bf16.msra.mxu0 %v10032
    %10303 = vmatpush.bf16.msra.mxu0 %v10029
    %10304 = vmatpush.bf16.msra.mxu0 %v10026
    %10305 = vmatpush.bf16.msra.mxu0 %v10023
    %10306 = vmatpush.bf16.msra.mxu0 %v10020
    %10307 = vmatpush.bf16.msra.mxu0 %v10017
    %10308 = vmatmul.bf16.gmra.mxu0 %v8682
    %v10309 = vpop.f32.mrf.mxu0
    %v10310 = vadd.f32 %v10297, %v10309
    %v10311 = vpop.f32.mrf.mxu0
    %10312 = vdwg.mxu0
    %10313 = vmatpush.bf16.msra.mxu0 %v10062
    %10314 = vmatpush.bf16.msra.mxu0 %v10059
    %10315 = vmatpush.bf16.msra.mxu0 %v10056
    %10316 = vmatpush.bf16.msra.mxu0 %v10053
    %10317 = vmatpush.bf16.msra.mxu0 %v10050
    %10318 = vmatpush.bf16.msra.mxu0 %v10047
    %10319 = vmatpush.bf16.msra.mxu0 %v10044
    %10320 = vmatpush.bf16.msra.mxu0 %v10041
    %10321 = vmatmul.bf16.gmra.mxu0 %v8683
    %v10322 = vpop.f32.mrf.mxu0
    %v10323 = vadd.f32 %v10310, %v10322
    %v10324 = vpop.f32.mrf.mxu0
    %10325 = vdwg.mxu0
    %10326 = vmatpush.bf16.msra.mxu0 %v10086
    %10327 = vmatpush.bf16.msra.mxu0 %v10083
    %10328 = vmatpush.bf16.msra.mxu0 %v10080
    %10329 = vmatpush.bf16.msra.mxu0 %v10077
    %10330 = vmatpush.bf16.msra.mxu0 %v10074
    %10331 = vmatpush.bf16.msra.mxu0 %v10071
    %10332 = vmatpush.bf16.msra.mxu0 %v10068
    %10333 = vmatpush.bf16.msra.mxu0 %v10065
    %10334 = vmatmul.bf16.gmra.mxu0 %v8684
    %v10335 = vpop.f32.mrf.mxu0
    %v10336 = vadd.f32 %v10323, %v10335
    %v10337 = vpop.f32.mrf.mxu0
    %10338 = vdwg.mxu0
    %s10339 = scalar_lea.vmem [#allocation18], 2
    %v10340 = vld [vmem:[%s10339] sm:$0x1]
    %v10342 = vsel %vm8612, %v10340, 0
    %10344 = vmatpush.bf16.msra.mxu0 0
    %10345 = vmatpush.bf16.msra.mxu0 0
    %10346 = vmatpush.bf16.msra.mxu0 0
    %10347 = vmatpush.bf16.msra.mxu0 0
    %10348 = vmatpush.bf16.msra.mxu0 0
    %10349 = vmatpush.bf16.msra.mxu0 0
    %10350 = vmatpush.bf16.msra.mxu0 0
    %10351 = vmatpush.bf16.msra.mxu0 %v8618
    %10352 = vmatmul.bf16.gmra.mxu0 %v10342
    %v10353 = vpop.f32.mrf.mxu0
    %v10354 = vadd.f32 0.0, %v10353
    %v10355 = vpop.f32.mrf.mxu0
    %10356 = vdwg.mxu0
    %10357 = vmatpush.bf16.msra.mxu0 0
    %10358 = vmatpush.bf16.msra.mxu0 0
    %10359 = vmatpush.bf16.msra.mxu0 0
    %10360 = vmatpush.bf16.msra.mxu0 0
    %10361 = vmatpush.bf16.msra.mxu0 0
    %10362 = vmatpush.bf16.msra.mxu0 0
    %10363 = vmatpush.bf16.msra.mxu0 0
    %10364 = vmatpush.bf16.msra.mxu0 %v8621
    %10365 = vmatmul.bf16.gmra.mxu0 %v10342
    %v10366 = vpop.f32.mrf.mxu0
    %v10367 = vadd.f32 0.0, %v10366
    %v10368 = vpop.f32.mrf.mxu0
    %10369 = vdwg.mxu0
    %10370 = vmatpush.bf16.msra.mxu0 0
    %10371 = vmatpush.bf16.msra.mxu0 0
    %10372 = vmatpush.bf16.msra.mxu0 0
    %10373 = vmatpush.bf16.msra.mxu0 0
    %10374 = vmatpush.bf16.msra.mxu0 0
    %10375 = vmatpush.bf16.msra.mxu0 0
    %10376 = vmatpush.bf16.msra.mxu0 0
    %10377 = vmatpush.bf16.msra.mxu0 %v8624
    %10378 = vmatmul.bf16.gmra.mxu0 %v10342
    %v10379 = vpop.f32.mrf.mxu0
    %v10380 = vadd.f32 0.0, %v10379
    %v10381 = vpop.f32.mrf.mxu0
    %10382 = vdwg.mxu0
    %10383 = vmatpush.bf16.msra.mxu0 0
    %10384 = vmatpush.bf16.msra.mxu0 0
    %10385 = vmatpush.bf16.msra.mxu0 0
    %10386 = vmatpush.bf16.msra.mxu0 0
    %10387 = vmatpush.bf16.msra.mxu0 0
    %10388 = vmatpush.bf16.msra.mxu0 0
    %10389 = vmatpush.bf16.msra.mxu0 0
    %10390 = vmatpush.bf16.msra.mxu0 %v8627
    %10391 = vmatmul.bf16.gmra.mxu0 %v10342
    %v10392 = vpop.f32.mrf.mxu0
    %v10393 = vadd.f32 0.0, %v10392
    %v10394 = vpop.f32.mrf.mxu0
    %10395 = vdwg.mxu0
    %v10396 = vpack.c.bf16 %v10354, %v10354
    %v10397 = vpack.c.bf16 %v10367, %v10367
    %v10398 = vpack.c.bf16 %v10380, %v10380
    %v10399 = vpack.c.bf16 %v10393, %v10393
    %s10400 = scalar_lea.vmem [#allocation16], 1536
    %v10401 = vld [vmem:[%s10400] sm:$0xff]
    %v10402 = vld [vmem:[%s10400 + $0x8] sm:$0xf]
    %v10403 = vld [vmem:[%s10400 + $0xc] sm:$0xff]
    %v10404 = vld [vmem:[%s10400 + $0x14] sm:$0xf]
    %v10405 = vld [vmem:[%s10400 + $0x18] sm:$0xff]
    %v10406 = vld [vmem:[%s10400 + $0x20] sm:$0xf]
    %v10407 = vld [vmem:[%s10400 + $0x24] sm:$0xff]
    %v10408 = vld [vmem:[%s10400 + $0x2c] sm:$0xf]
    %v10409 = vld [vmem:[%s10400 + $0x30] sm:$0xff]
    %v10410 = vld [vmem:[%s10400 + $0x38] sm:$0xf]
    %v10411 = vld [vmem:[%s10400 + $0x3c] sm:$0xff]
    %v10412 = vld [vmem:[%s10400 + $0x44] sm:$0xf]
    %v10413 = vld [vmem:[%s10400 + $0x48] sm:$0xff]
    %v10414 = vld [vmem:[%s10400 + $0x50] sm:$0xf]
    %v10415 = vld [vmem:[%s10400 + $0x54] sm:$0xff]
    %v10416 = vld [vmem:[%s10400 + $0x5c] sm:$0xf]
    %v10417 = vld [vmem:[%s10400 + $0x60] sm:$0xff]
    %v10418 = vld [vmem:[%s10400 + $0x68] sm:$0xf]
    %v10419 = vld [vmem:[%s10400 + $0x6c] sm:$0xff]
    %v10420 = vld [vmem:[%s10400 + $0x74] sm:$0xf]
    %v10421 = vld [vmem:[%s10400 + $0x78] sm:$0xff]
    %v10422 = vld [vmem:[%s10400 + $0x80] sm:$0xf]
    %v10423 = vld [vmem:[%s10400 + $0x84] sm:$0xff]
    %v10424 = vld [vmem:[%s10400 + $0x8c] sm:$0xf]
    %v10425 = vld [vmem:[%s10400 + $0x90] sm:$0xff]
    %v10426 = vld [vmem:[%s10400 + $0x98] sm:$0xf]
    %v10427 = vld [vmem:[%s10400 + $0x9c] sm:$0xff]
    %v10428 = vld [vmem:[%s10400 + $0xa4] sm:$0xf]
    %v10429 = vld [vmem:[%s10400 + $0xa8] sm:$0xff]
    %v10430 = vld [vmem:[%s10400 + $0xb0] sm:$0xf]
    %v10431 = vld [vmem:[%s10400 + $0xb4] sm:$0xff]
    %v10432 = vld [vmem:[%s10400 + $0xbc] sm:$0xf]
    %v10433 = vld [vmem:[%s10400 + $0xc0] sm:$0xff]
    %v10434 = vld [vmem:[%s10400 + $0xc8] sm:$0xf]
    %v10435 = vld [vmem:[%s10400 + $0xcc] sm:$0xff]
    %v10436 = vld [vmem:[%s10400 + $0xd4] sm:$0xf]
    %v10437 = vld [vmem:[%s10400 + $0xd8] sm:$0xff]
    %v10438 = vld [vmem:[%s10400 + $0xe0] sm:$0xf]
    %v10439 = vld [vmem:[%s10400 + $0xe4] sm:$0xff]
    %v10440 = vld [vmem:[%s10400 + $0xec] sm:$0xf]
    %v10441 = vld [vmem:[%s10400 + $0xf0] sm:$0xff]
    %v10442 = vld [vmem:[%s10400 + $0xf8] sm:$0xf]
    %v10443 = vld [vmem:[%s10400 + $0xfc] sm:$0xff]
    %v10444 = vld [vmem:[%s10400 + $0x104] sm:$0xf]
    %v10445 = vld [vmem:[%s10400 + $0x108] sm:$0xff]
    %v10446 = vld [vmem:[%s10400 + $0x110] sm:$0xf]
    %v10447 = vld [vmem:[%s10400 + $0x114] sm:$0xff]
    %v10448 = vld [vmem:[%s10400 + $0x11c] sm:$0xf]
    %v10449 = vld [vmem:[%s10400 + $0x120] sm:$0xff]
    %v10450 = vld [vmem:[%s10400 + $0x128] sm:$0xf]
    %v10451 = vld [vmem:[%s10400 + $0x12c] sm:$0xff]
    %v10452 = vld [vmem:[%s10400 + $0x134] sm:$0xf]
    %v10453 = vld [vmem:[%s10400 + $0x138] sm:$0xff]
    %v10454 = vld [vmem:[%s10400 + $0x140] sm:$0xf]
    %v10455 = vld [vmem:[%s10400 + $0x144] sm:$0xff]
    %v10456 = vld [vmem:[%s10400 + $0x14c] sm:$0xf]
    %v10457 = vld [vmem:[%s10400 + $0x150] sm:$0xff]
    %v10458 = vld [vmem:[%s10400 + $0x158] sm:$0xf]
    %v10459 = vld [vmem:[%s10400 + $0x15c] sm:$0xff]
    %v10460 = vld [vmem:[%s10400 + $0x164] sm:$0xf]
    %v10461 = vld [vmem:[%s10400 + $0x168] sm:$0xff]
    %v10462 = vld [vmem:[%s10400 + $0x170] sm:$0xf]
    %v10463 = vld [vmem:[%s10400 + $0x174] sm:$0xff]
    %v10464 = vld [vmem:[%s10400 + $0x17c] sm:$0xf]
    %v10465 = vld [vmem:[%s10400 + $0x180] sm:$0xff]
    %v10466 = vld [vmem:[%s10400 + $0x188] sm:$0xf]
    %v10467 = vld [vmem:[%s10400 + $0x18c] sm:$0xff]
    %v10468 = vld [vmem:[%s10400 + $0x194] sm:$0xf]
    %v10469 = vld [vmem:[%s10400 + $0x198] sm:$0xff]
    %v10470 = vld [vmem:[%s10400 + $0x1a0] sm:$0xf]
    %v10471 = vld [vmem:[%s10400 + $0x1a4] sm:$0xff]
    %v10472 = vld [vmem:[%s10400 + $0x1ac] sm:$0xf]
    %v10473 = vld [vmem:[%s10400 + $0x1b0] sm:$0xff]
    %v10474 = vld [vmem:[%s10400 + $0x1b8] sm:$0xf]
    %v10475 = vld [vmem:[%s10400 + $0x1bc] sm:$0xff]
    %v10476 = vld [vmem:[%s10400 + $0x1c4] sm:$0xf]
    %v10477 = vld [vmem:[%s10400 + $0x1c8] sm:$0xff]
    %v10478 = vld [vmem:[%s10400 + $0x1d0] sm:$0xf]
    %v10479 = vld [vmem:[%s10400 + $0x1d4] sm:$0xff]
    %v10480 = vld [vmem:[%s10400 + $0x1dc] sm:$0xf]
    %v10481 = vld [vmem:[%s10400 + $0x1e0] sm:$0xff]
    %v10482 = vld [vmem:[%s10400 + $0x1e8] sm:$0xf]
    %v10483 = vld [vmem:[%s10400 + $0x1ec] sm:$0xff]
    %v10484 = vld [vmem:[%s10400 + $0x1f4] sm:$0xf]
    %v10485 = vld [vmem:[%s10400 + $0x1f8] sm:$0xff]
    %v10486 = vld [vmem:[%s10400 + $0x200] sm:$0xf]
    %v10487 = vld [vmem:[%s10400 + $0x204] sm:$0xff]
    %v10488 = vld [vmem:[%s10400 + $0x20c] sm:$0xf]
    %v10489 = vld [vmem:[%s10400 + $0x210] sm:$0xff]
    %v10490 = vld [vmem:[%s10400 + $0x218] sm:$0xf]
    %v10491 = vld [vmem:[%s10400 + $0x21c] sm:$0xff]
    %v10492 = vld [vmem:[%s10400 + $0x224] sm:$0xf]
    %v10493 = vld [vmem:[%s10400 + $0x228] sm:$0xff]
    %v10494 = vld [vmem:[%s10400 + $0x230] sm:$0xf]
    %v10495 = vld [vmem:[%s10400 + $0x234] sm:$0xff]
    %v10496 = vld [vmem:[%s10400 + $0x23c] sm:$0xf]
    %v10497 = vld [vmem:[%s10400 + $0x240] sm:$0xff]
    %v10498 = vld [vmem:[%s10400 + $0x248] sm:$0xf]
    %v10499 = vld [vmem:[%s10400 + $0x24c] sm:$0xff]
    %v10500 = vld [vmem:[%s10400 + $0x254] sm:$0xf]
    %v10501 = vld [vmem:[%s10400 + $0x258] sm:$0xff]
    %v10502 = vld [vmem:[%s10400 + $0x260] sm:$0xf]
    %v10503 = vld [vmem:[%s10400 + $0x264] sm:$0xff]
    %v10504 = vld [vmem:[%s10400 + $0x26c] sm:$0xf]
    %v10505 = vld [vmem:[%s10400 + $0x270] sm:$0xff]
    %v10506 = vld [vmem:[%s10400 + $0x278] sm:$0xf]
    %v10507 = vld [vmem:[%s10400 + $0x27c] sm:$0xff]
    %v10508 = vld [vmem:[%s10400 + $0x284] sm:$0xf]
    %v10509 = vld [vmem:[%s10400 + $0x288] sm:$0xff]
    %v10510 = vld [vmem:[%s10400 + $0x290] sm:$0xf]
    %v10511 = vld [vmem:[%s10400 + $0x294] sm:$0xff]
    %v10512 = vld [vmem:[%s10400 + $0x29c] sm:$0xf]
    %v10513 = vld [vmem:[%s10400 + $0x2a0] sm:$0xff]
    %v10514 = vld [vmem:[%s10400 + $0x2a8] sm:$0xf]
    %v10515 = vld [vmem:[%s10400 + $0x2ac] sm:$0xff]
    %v10516 = vld [vmem:[%s10400 + $0x2b4] sm:$0xf]
    %v10517 = vld [vmem:[%s10400 + $0x2b8] sm:$0xff]
    %v10518 = vld [vmem:[%s10400 + $0x2c0] sm:$0xf]
    %v10519 = vld [vmem:[%s10400 + $0x2c4] sm:$0xff]
    %v10520 = vld [vmem:[%s10400 + $0x2cc] sm:$0xf]
    %v10521 = vld [vmem:[%s10400 + $0x2d0] sm:$0xff]
    %v10522 = vld [vmem:[%s10400 + $0x2d8] sm:$0xf]
    %v10523 = vld [vmem:[%s10400 + $0x2dc] sm:$0xff]
    %v10524 = vld [vmem:[%s10400 + $0x2e4] sm:$0xf]
    %v10525 = vld [vmem:[%s10400 + $0x2e8] sm:$0xff]
    %v10526 = vld [vmem:[%s10400 + $0x2f0] sm:$0xf]
    %v10527 = vld [vmem:[%s10400 + $0x2f4] sm:$0xff]
    %v10528 = vld [vmem:[%s10400 + $0x2fc] sm:$0xf]
    %v10657 = vunpack.c.l.b16 %v10401
    %v10658 = vunpack.c.h.b16 %v10401
    %v10659 = vunpack.c.l.b16 %v10402
    %v10660 = vunpack.c.l.b16 %v10403
    %v10661 = vunpack.c.h.b16 %v10403
    %v10662 = vunpack.c.l.b16 %v10404
    %v10663 = vunpack.c.l.b16 %v10405
    %v10664 = vunpack.c.h.b16 %v10405
    %v10665 = vunpack.c.l.b16 %v10406
    %v10666 = vunpack.c.l.b16 %v10407
    %v10667 = vunpack.c.h.b16 %v10407
    %v10668 = vunpack.c.l.b16 %v10408
    %v10669 = vunpack.c.l.b16 %v10409
    %v10670 = vunpack.c.h.b16 %v10409
    %v10671 = vunpack.c.l.b16 %v10410
    %v10672 = vunpack.c.l.b16 %v10411
    %v10673 = vunpack.c.h.b16 %v10411
    %v10674 = vunpack.c.l.b16 %v10412
    %v10675 = vunpack.c.l.b16 %v10413
    %v10676 = vunpack.c.h.b16 %v10413
    %v10677 = vunpack.c.l.b16 %v10414
    %v10678 = vunpack.c.l.b16 %v10415
    %v10679 = vunpack.c.h.b16 %v10415
    %v10680 = vunpack.c.l.b16 %v10416
    %v10681 = vunpack.c.l.b16 %v10417
    %v10682 = vunpack.c.h.b16 %v10417
    %v10683 = vunpack.c.l.b16 %v10418
    %v10684 = vunpack.c.l.b16 %v10419
    %v10685 = vunpack.c.h.b16 %v10419
    %v10686 = vunpack.c.l.b16 %v10420
    %v10687 = vunpack.c.l.b16 %v10421
    %v10688 = vunpack.c.h.b16 %v10421
    %v10689 = vunpack.c.l.b16 %v10422
    %v10690 = vunpack.c.l.b16 %v10423
    %v10691 = vunpack.c.h.b16 %v10423
    %v10692 = vunpack.c.l.b16 %v10424
    %v10693 = vunpack.c.l.b16 %v10425
    %v10694 = vunpack.c.h.b16 %v10425
    %v10695 = vunpack.c.l.b16 %v10426
    %v10696 = vunpack.c.l.b16 %v10427
    %v10697 = vunpack.c.h.b16 %v10427
    %v10698 = vunpack.c.l.b16 %v10428
    %v10699 = vunpack.c.l.b16 %v10429
    %v10700 = vunpack.c.h.b16 %v10429
    %v10701 = vunpack.c.l.b16 %v10430
    %v10702 = vunpack.c.l.b16 %v10431
    %v10703 = vunpack.c.h.b16 %v10431
    %v10704 = vunpack.c.l.b16 %v10432
    %v10705 = vunpack.c.l.b16 %v10433
    %v10706 = vunpack.c.h.b16 %v10433
    %v10707 = vunpack.c.l.b16 %v10434
    %v10708 = vunpack.c.l.b16 %v10435
    %v10709 = vunpack.c.h.b16 %v10435
    %v10710 = vunpack.c.l.b16 %v10436
    %v10711 = vunpack.c.l.b16 %v10437
    %v10712 = vunpack.c.h.b16 %v10437
    %v10713 = vunpack.c.l.b16 %v10438
    %v10714 = vunpack.c.l.b16 %v10439
    %v10715 = vunpack.c.h.b16 %v10439
    %v10716 = vunpack.c.l.b16 %v10440
    %v10717 = vunpack.c.l.b16 %v10441
    %v10718 = vunpack.c.h.b16 %v10441
    %v10719 = vunpack.c.l.b16 %v10442
    %v10720 = vunpack.c.l.b16 %v10443
    %v10721 = vunpack.c.h.b16 %v10443
    %v10722 = vunpack.c.l.b16 %v10444
    %v10723 = vunpack.c.l.b16 %v10445
    %v10724 = vunpack.c.h.b16 %v10445
    %v10725 = vunpack.c.l.b16 %v10446
    %v10726 = vunpack.c.l.b16 %v10447
    %v10727 = vunpack.c.h.b16 %v10447
    %v10728 = vunpack.c.l.b16 %v10448
    %v10729 = vunpack.c.l.b16 %v10449
    %v10730 = vunpack.c.h.b16 %v10449
    %v10731 = vunpack.c.l.b16 %v10450
    %v10732 = vunpack.c.l.b16 %v10451
    %v10733 = vunpack.c.h.b16 %v10451
    %v10734 = vunpack.c.l.b16 %v10452
    %v10735 = vunpack.c.l.b16 %v10453
    %v10736 = vunpack.c.h.b16 %v10453
    %v10737 = vunpack.c.l.b16 %v10454
    %v10738 = vunpack.c.l.b16 %v10455
    %v10739 = vunpack.c.h.b16 %v10455
    %v10740 = vunpack.c.l.b16 %v10456
    %v10741 = vunpack.c.l.b16 %v10457
    %v10742 = vunpack.c.h.b16 %v10457
    %v10743 = vunpack.c.l.b16 %v10458
    %v10744 = vunpack.c.l.b16 %v10459
    %v10745 = vunpack.c.h.b16 %v10459
    %v10746 = vunpack.c.l.b16 %v10460
    %v10747 = vunpack.c.l.b16 %v10461
    %v10748 = vunpack.c.h.b16 %v10461
    %v10749 = vunpack.c.l.b16 %v10462
    %v10750 = vunpack.c.l.b16 %v10463
    %v10751 = vunpack.c.h.b16 %v10463
    %v10752 = vunpack.c.l.b16 %v10464
    %v10753 = vunpack.c.l.b16 %v10465
    %v10754 = vunpack.c.h.b16 %v10465
    %v10755 = vunpack.c.l.b16 %v10466
    %v10756 = vunpack.c.l.b16 %v10467
    %v10757 = vunpack.c.h.b16 %v10467
    %v10758 = vunpack.c.l.b16 %v10468
    %v10759 = vunpack.c.l.b16 %v10469
    %v10760 = vunpack.c.h.b16 %v10469
    %v10761 = vunpack.c.l.b16 %v10470
    %v10762 = vunpack.c.l.b16 %v10471
    %v10763 = vunpack.c.h.b16 %v10471
    %v10764 = vunpack.c.l.b16 %v10472
    %v10765 = vunpack.c.l.b16 %v10473
    %v10766 = vunpack.c.h.b16 %v10473
    %v10767 = vunpack.c.l.b16 %v10474
    %v10768 = vunpack.c.l.b16 %v10475
    %v10769 = vunpack.c.h.b16 %v10475
    %v10770 = vunpack.c.l.b16 %v10476
    %v10771 = vunpack.c.l.b16 %v10477
    %v10772 = vunpack.c.h.b16 %v10477
    %v10773 = vunpack.c.l.b16 %v10478
    %v10774 = vunpack.c.l.b16 %v10479
    %v10775 = vunpack.c.h.b16 %v10479
    %v10776 = vunpack.c.l.b16 %v10480
    %v10777 = vunpack.c.l.b16 %v10481
    %v10778 = vunpack.c.h.b16 %v10481
    %v10779 = vunpack.c.l.b16 %v10482
    %v10780 = vunpack.c.l.b16 %v10483
    %v10781 = vunpack.c.h.b16 %v10483
    %v10782 = vunpack.c.l.b16 %v10484
    %v10783 = vunpack.c.l.b16 %v10485
    %v10784 = vunpack.c.h.b16 %v10485
    %v10785 = vunpack.c.l.b16 %v10486
    %v10786 = vunpack.c.l.b16 %v10487
    %v10787 = vunpack.c.h.b16 %v10487
    %v10788 = vunpack.c.l.b16 %v10488
    %v10789 = vunpack.c.l.b16 %v10489
    %v10790 = vunpack.c.h.b16 %v10489
    %v10791 = vunpack.c.l.b16 %v10490
    %v10792 = vunpack.c.l.b16 %v10491
    %v10793 = vunpack.c.h.b16 %v10491
    %v10794 = vunpack.c.l.b16 %v10492
    %v10795 = vunpack.c.l.b16 %v10493
    %v10796 = vunpack.c.h.b16 %v10493
    %v10797 = vunpack.c.l.b16 %v10494
    %v10798 = vunpack.c.l.b16 %v10495
    %v10799 = vunpack.c.h.b16 %v10495
    %v10800 = vunpack.c.l.b16 %v10496
    %v10801 = vunpack.c.l.b16 %v10497
    %v10802 = vunpack.c.h.b16 %v10497
    %v10803 = vunpack.c.l.b16 %v10498
    %v10804 = vunpack.c.l.b16 %v10499
    %v10805 = vunpack.c.h.b16 %v10499
    %v10806 = vunpack.c.l.b16 %v10500
    %v10807 = vunpack.c.l.b16 %v10501
    %v10808 = vunpack.c.h.b16 %v10501
    %v10809 = vunpack.c.l.b16 %v10502
    %v10810 = vunpack.c.l.b16 %v10503
    %v10811 = vunpack.c.h.b16 %v10503
    %v10812 = vunpack.c.l.b16 %v10504
    %v10813 = vunpack.c.l.b16 %v10505
    %v10814 = vunpack.c.h.b16 %v10505
    %v10815 = vunpack.c.l.b16 %v10506
    %v10816 = vunpack.c.l.b16 %v10507
    %v10817 = vunpack.c.h.b16 %v10507
    %v10818 = vunpack.c.l.b16 %v10508
    %v10819 = vunpack.c.l.b16 %v10509
    %v10820 = vunpack.c.h.b16 %v10509
    %v10821 = vunpack.c.l.b16 %v10510
    %v10822 = vunpack.c.l.b16 %v10511
    %v10823 = vunpack.c.h.b16 %v10511
    %v10824 = vunpack.c.l.b16 %v10512
    %v10825 = vunpack.c.l.b16 %v10513
    %v10826 = vunpack.c.h.b16 %v10513
    %v10827 = vunpack.c.l.b16 %v10514
    %v10828 = vunpack.c.l.b16 %v10515
    %v10829 = vunpack.c.h.b16 %v10515
    %v10830 = vunpack.c.l.b16 %v10516
    %v10831 = vunpack.c.l.b16 %v10517
    %v10832 = vunpack.c.h.b16 %v10517
    %v10833 = vunpack.c.l.b16 %v10518
    %v10834 = vunpack.c.l.b16 %v10519
    %v10835 = vunpack.c.h.b16 %v10519
    %v10836 = vunpack.c.l.b16 %v10520
    %v10837 = vunpack.c.l.b16 %v10521
    %v10838 = vunpack.c.h.b16 %v10521
    %v10839 = vunpack.c.l.b16 %v10522
    %v10840 = vunpack.c.l.b16 %v10523
    %v10841 = vunpack.c.h.b16 %v10523
    %v10842 = vunpack.c.l.b16 %v10524
    %v10843 = vunpack.c.l.b16 %v10525
    %v10844 = vunpack.c.h.b16 %v10525
    %v10845 = vunpack.c.l.b16 %v10526
    %v10846 = vunpack.c.l.b16 %v10527
    %v10847 = vunpack.c.h.b16 %v10527
    %v10848 = vunpack.c.l.b16 %v10528
    %v10849 = vpack.c.b16 %v10660, %v10657
    %v10850 = vpack.c.b16 %v10661, %v10658
    %v10851 = vpack.c.b16 %v10662, %v10659
    %v10852 = vpack.c.b16 %v10666, %v10663
    %v10853 = vpack.c.b16 %v10667, %v10664
    %v10854 = vpack.c.b16 %v10668, %v10665
    %v10855 = vpack.c.b16 %v10672, %v10669
    %v10856 = vpack.c.b16 %v10673, %v10670
    %v10857 = vpack.c.b16 %v10674, %v10671
    %v10858 = vpack.c.b16 %v10678, %v10675
    %v10859 = vpack.c.b16 %v10679, %v10676
    %v10860 = vpack.c.b16 %v10680, %v10677
    %v10861 = vpack.c.b16 %v10684, %v10681
    %v10862 = vpack.c.b16 %v10685, %v10682
    %v10863 = vpack.c.b16 %v10686, %v10683
    %v10864 = vpack.c.b16 %v10690, %v10687
    %v10865 = vpack.c.b16 %v10691, %v10688
    %v10866 = vpack.c.b16 %v10692, %v10689
    %v10867 = vpack.c.b16 %v10696, %v10693
    %v10868 = vpack.c.b16 %v10697, %v10694
    %v10869 = vpack.c.b16 %v10698, %v10695
    %v10870 = vpack.c.b16 %v10702, %v10699
    %v10871 = vpack.c.b16 %v10703, %v10700
    %v10872 = vpack.c.b16 %v10704, %v10701
    %v10873 = vpack.c.b16 %v10708, %v10705
    %v10874 = vpack.c.b16 %v10709, %v10706
    %v10875 = vpack.c.b16 %v10710, %v10707
    %v10876 = vpack.c.b16 %v10714, %v10711
    %v10877 = vpack.c.b16 %v10715, %v10712
    %v10878 = vpack.c.b16 %v10716, %v10713
    %v10879 = vpack.c.b16 %v10720, %v10717
    %v10880 = vpack.c.b16 %v10721, %v10718
    %v10881 = vpack.c.b16 %v10722, %v10719
    %v10882 = vpack.c.b16 %v10726, %v10723
    %v10883 = vpack.c.b16 %v10727, %v10724
    %v10884 = vpack.c.b16 %v10728, %v10725
    %v10885 = vpack.c.b16 %v10732, %v10729
    %v10886 = vpack.c.b16 %v10733, %v10730
    %v10887 = vpack.c.b16 %v10734, %v10731
    %v10888 = vpack.c.b16 %v10738, %v10735
    %v10889 = vpack.c.b16 %v10739, %v10736
    %v10890 = vpack.c.b16 %v10740, %v10737
    %v10891 = vpack.c.b16 %v10744, %v10741
    %v10892 = vpack.c.b16 %v10745, %v10742
    %v10893 = vpack.c.b16 %v10746, %v10743
    %v10894 = vpack.c.b16 %v10750, %v10747
    %v10895 = vpack.c.b16 %v10751, %v10748
    %v10896 = vpack.c.b16 %v10752, %v10749
    %v10897 = vpack.c.b16 %v10756, %v10753
    %v10898 = vpack.c.b16 %v10757, %v10754
    %v10899 = vpack.c.b16 %v10758, %v10755
    %v10900 = vpack.c.b16 %v10762, %v10759
    %v10901 = vpack.c.b16 %v10763, %v10760
    %v10902 = vpack.c.b16 %v10764, %v10761
    %v10903 = vpack.c.b16 %v10768, %v10765
    %v10904 = vpack.c.b16 %v10769, %v10766
    %v10905 = vpack.c.b16 %v10770, %v10767
    %v10906 = vpack.c.b16 %v10774, %v10771
    %v10907 = vpack.c.b16 %v10775, %v10772
    %v10908 = vpack.c.b16 %v10776, %v10773
    %v10909 = vpack.c.b16 %v10780, %v10777
    %v10910 = vpack.c.b16 %v10781, %v10778
    %v10911 = vpack.c.b16 %v10782, %v10779
    %v10912 = vpack.c.b16 %v10786, %v10783
    %v10913 = vpack.c.b16 %v10787, %v10784
    %v10914 = vpack.c.b16 %v10788, %v10785
    %v10915 = vpack.c.b16 %v10792, %v10789
    %v10916 = vpack.c.b16 %v10793, %v10790
    %v10917 = vpack.c.b16 %v10794, %v10791
    %v10918 = vpack.c.b16 %v10798, %v10795
    %v10919 = vpack.c.b16 %v10799, %v10796
    %v10920 = vpack.c.b16 %v10800, %v10797
    %v10921 = vpack.c.b16 %v10804, %v10801
    %v10922 = vpack.c.b16 %v10805, %v10802
    %v10923 = vpack.c.b16 %v10806, %v10803
    %v10924 = vpack.c.b16 %v10810, %v10807
    %v10925 = vpack.c.b16 %v10811, %v10808
    %v10926 = vpack.c.b16 %v10812, %v10809
    %v10927 = vpack.c.b16 %v10816, %v10813
    %v10928 = vpack.c.b16 %v10817, %v10814
    %v10929 = vpack.c.b16 %v10818, %v10815
    %v10930 = vpack.c.b16 %v10822, %v10819
    %v10931 = vpack.c.b16 %v10823, %v10820
    %v10932 = vpack.c.b16 %v10824, %v10821
    %v10933 = vpack.c.b16 %v10828, %v10825
    %v10934 = vpack.c.b16 %v10829, %v10826
    %v10935 = vpack.c.b16 %v10830, %v10827
    %v10936 = vpack.c.b16 %v10834, %v10831
    %v10937 = vpack.c.b16 %v10835, %v10832
    %v10938 = vpack.c.b16 %v10836, %v10833
    %v10939 = vpack.c.b16 %v10840, %v10837
    %v10940 = vpack.c.b16 %v10841, %v10838
    %v10941 = vpack.c.b16 %v10842, %v10839
    %v10942 = vpack.c.b16 %v10846, %v10843
    %v10943 = vpack.c.b16 %v10847, %v10844
    %v10944 = vpack.c.b16 %v10848, %v10845
    %11041 = vmatpush.bf16.msra.mxu0 %v10870
    %11042 = vmatpush.bf16.msra.mxu0 %v10867
    %11043 = vmatpush.bf16.msra.mxu0 %v10864
    %11044 = vmatpush.bf16.msra.mxu0 %v10861
    %11045 = vmatpush.bf16.msra.mxu0 %v10858
    %11046 = vmatpush.bf16.msra.mxu0 %v10855
    %11047 = vmatpush.bf16.msra.mxu0 %v10852
    %11048 = vmatpush.bf16.msra.mxu0 %v10849
    %11049 = vmatmul.bf16.gmra.mxu0 %v10396
    %v11050 = vpop.f32.mrf.mxu0
    %v11051 = vadd.f32 0.0, %v11050
    %v11052 = vpop.f32.mrf.mxu0
    %11053 = vdwg.mxu0
    %11054 = vmatpush.bf16.msra.mxu0 %v10894
    %11055 = vmatpush.bf16.msra.mxu0 %v10891
    %11056 = vmatpush.bf16.msra.mxu0 %v10888
    %11057 = vmatpush.bf16.msra.mxu0 %v10885
    %11058 = vmatpush.bf16.msra.mxu0 %v10882
    %11059 = vmatpush.bf16.msra.mxu0 %v10879
    %11060 = vmatpush.bf16.msra.mxu0 %v10876
    %11061 = vmatpush.bf16.msra.mxu0 %v10873
    %11062 = vmatmul.bf16.gmra.mxu0 %v10397
    %v11063 = vpop.f32.mrf.mxu0
    %v11064 = vadd.f32 %v11051, %v11063
    %v11065 = vpop.f32.mrf.mxu0
    %11066 = vdwg.mxu0
    %11067 = vmatpush.bf16.msra.mxu0 %v10918
    %11068 = vmatpush.bf16.msra.mxu0 %v10915
    %11069 = vmatpush.bf16.msra.mxu0 %v10912
    %11070 = vmatpush.bf16.msra.mxu0 %v10909
    %11071 = vmatpush.bf16.msra.mxu0 %v10906
    %11072 = vmatpush.bf16.msra.mxu0 %v10903
    %11073 = vmatpush.bf16.msra.mxu0 %v10900
    %11074 = vmatpush.bf16.msra.mxu0 %v10897
    %11075 = vmatmul.bf16.gmra.mxu0 %v10398
    %v11076 = vpop.f32.mrf.mxu0
    %v11077 = vadd.f32 %v11064, %v11076
    %v11078 = vpop.f32.mrf.mxu0
    %11079 = vdwg.mxu0
    %11080 = vmatpush.bf16.msra.mxu0 %v10942
    %11081 = vmatpush.bf16.msra.mxu0 %v10939
    %11082 = vmatpush.bf16.msra.mxu0 %v10936
    %11083 = vmatpush.bf16.msra.mxu0 %v10933
    %11084 = vmatpush.bf16.msra.mxu0 %v10930
    %11085 = vmatpush.bf16.msra.mxu0 %v10927
    %11086 = vmatpush.bf16.msra.mxu0 %v10924
    %11087 = vmatpush.bf16.msra.mxu0 %v10921
    %11088 = vmatmul.bf16.gmra.mxu0 %v10399
    %v11089 = vpop.f32.mrf.mxu0
    %v11090 = vadd.f32 %v11077, %v11089
    %v11091 = vpop.f32.mrf.mxu0
    %11092 = vdwg.mxu0
    %11093 = vmatpush.bf16.msra.mxu0 %v10871
    %11094 = vmatpush.bf16.msra.mxu0 %v10868
    %11095 = vmatpush.bf16.msra.mxu0 %v10865
    %11096 = vmatpush.bf16.msra.mxu0 %v10862
    %11097 = vmatpush.bf16.msra.mxu0 %v10859
    %11098 = vmatpush.bf16.msra.mxu0 %v10856
    %11099 = vmatpush.bf16.msra.mxu0 %v10853
    %11100 = vmatpush.bf16.msra.mxu0 %v10850
    %11101 = vmatmul.bf16.gmra.mxu0 %v10396
    %v11102 = vpop.f32.mrf.mxu0
    %v11103 = vadd.f32 0.0, %v11102
    %v11104 = vpop.f32.mrf.mxu0
    %11105 = vdwg.mxu0
    %11106 = vmatpush.bf16.msra.mxu0 %v10895
    %11107 = vmatpush.bf16.msra.mxu0 %v10892
    %11108 = vmatpush.bf16.msra.mxu0 %v10889
    %11109 = vmatpush.bf16.msra.mxu0 %v10886
    %11110 = vmatpush.bf16.msra.mxu0 %v10883
    %11111 = vmatpush.bf16.msra.mxu0 %v10880
    %11112 = vmatpush.bf16.msra.mxu0 %v10877
    %11113 = vmatpush.bf16.msra.mxu0 %v10874
    %11114 = vmatmul.bf16.gmra.mxu0 %v10397
    %v11115 = vpop.f32.mrf.mxu0
    %v11116 = vadd.f32 %v11103, %v11115
    %v11117 = vpop.f32.mrf.mxu0
    %11118 = vdwg.mxu0
    %11119 = vmatpush.bf16.msra.mxu0 %v10919
    %11120 = vmatpush.bf16.msra.mxu0 %v10916
    %11121 = vmatpush.bf16.msra.mxu0 %v10913
    %11122 = vmatpush.bf16.msra.mxu0 %v10910
    %11123 = vmatpush.bf16.msra.mxu0 %v10907
    %11124 = vmatpush.bf16.msra.mxu0 %v10904
    %11125 = vmatpush.bf16.msra.mxu0 %v10901
    %11126 = vmatpush.bf16.msra.mxu0 %v10898
    %11127 = vmatmul.bf16.gmra.mxu0 %v10398
    %v11128 = vpop.f32.mrf.mxu0
    %v11129 = vadd.f32 %v11116, %v11128
    %v11130 = vpop.f32.mrf.mxu0
    %11131 = vdwg.mxu0
    %11132 = vmatpush.bf16.msra.mxu0 %v10943
    %11133 = vmatpush.bf16.msra.mxu0 %v10940
    %11134 = vmatpush.bf16.msra.mxu0 %v10937
    %11135 = vmatpush.bf16.msra.mxu0 %v10934
    %11136 = vmatpush.bf16.msra.mxu0 %v10931
    %11137 = vmatpush.bf16.msra.mxu0 %v10928
    %11138 = vmatpush.bf16.msra.mxu0 %v10925
    %11139 = vmatpush.bf16.msra.mxu0 %v10922
    %11140 = vmatmul.bf16.gmra.mxu0 %v10399
    %v11141 = vpop.f32.mrf.mxu0
    %v11142 = vadd.f32 %v11129, %v11141
    %v11143 = vpop.f32.mrf.mxu0
    %11144 = vdwg.mxu0
    %11145 = vmatpush.bf16.msra.mxu0 %v10872
    %11146 = vmatpush.bf16.msra.mxu0 %v10869
    %11147 = vmatpush.bf16.msra.mxu0 %v10866
    %11148 = vmatpush.bf16.msra.mxu0 %v10863
    %11149 = vmatpush.bf16.msra.mxu0 %v10860
    %11150 = vmatpush.bf16.msra.mxu0 %v10857
    %11151 = vmatpush.bf16.msra.mxu0 %v10854
    %11152 = vmatpush.bf16.msra.mxu0 %v10851
    %11153 = vmatmul.bf16.gmra.mxu0 %v10396
    %v11154 = vpop.f32.mrf.mxu0
    %v11155 = vadd.f32 0.0, %v11154
    %v11156 = vpop.f32.mrf.mxu0
    %11157 = vdwg.mxu0
    %11158 = vmatpush.bf16.msra.mxu0 %v10896
    %11159 = vmatpush.bf16.msra.mxu0 %v10893
    %11160 = vmatpush.bf16.msra.mxu0 %v10890
    %11161 = vmatpush.bf16.msra.mxu0 %v10887
    %11162 = vmatpush.bf16.msra.mxu0 %v10884
    %11163 = vmatpush.bf16.msra.mxu0 %v10881
    %11164 = vmatpush.bf16.msra.mxu0 %v10878
    %11165 = vmatpush.bf16.msra.mxu0 %v10875
    %11166 = vmatmul.bf16.gmra.mxu0 %v10397
    %v11167 = vpop.f32.mrf.mxu0
    %v11168 = vadd.f32 %v11155, %v11167
    %v11169 = vpop.f32.mrf.mxu0
    %11170 = vdwg.mxu0
    %11171 = vmatpush.bf16.msra.mxu0 %v10920
    %11172 = vmatpush.bf16.msra.mxu0 %v10917
    %11173 = vmatpush.bf16.msra.mxu0 %v10914
    %11174 = vmatpush.bf16.msra.mxu0 %v10911
    %11175 = vmatpush.bf16.msra.mxu0 %v10908
    %11176 = vmatpush.bf16.msra.mxu0 %v10905
    %11177 = vmatpush.bf16.msra.mxu0 %v10902
    %11178 = vmatpush.bf16.msra.mxu0 %v10899
    %11179 = vmatmul.bf16.gmra.mxu0 %v10398
    %v11180 = vpop.f32.mrf.mxu0
    %v11181 = vadd.f32 %v11168, %v11180
    %v11182 = vpop.f32.mrf.mxu0
    %11183 = vdwg.mxu0
    %11184 = vmatpush.bf16.msra.mxu0 %v10944
    %11185 = vmatpush.bf16.msra.mxu0 %v10941
    %11186 = vmatpush.bf16.msra.mxu0 %v10938
    %11187 = vmatpush.bf16.msra.mxu0 %v10935
    %11188 = vmatpush.bf16.msra.mxu0 %v10932
    %11189 = vmatpush.bf16.msra.mxu0 %v10929
    %11190 = vmatpush.bf16.msra.mxu0 %v10926
    %11191 = vmatpush.bf16.msra.mxu0 %v10923
    %11192 = vmatmul.bf16.gmra.mxu0 %v10399
    %v11193 = vpop.f32.mrf.mxu0
    %v11194 = vadd.f32 %v11181, %v11193
    %v11195 = vpop.f32.mrf.mxu0
    %11196 = vdwg.mxu0
    %v11197 = vadd.f32 %v10232, %v11090
    %v11198 = vadd.f32 %v10284, %v11142
    %v11199 = vadd.f32 %v10336, %v11194
    %v11200 = vld [vmem:[#allocation19] sm:$0x7]
    %v11202 = vperm.slane %v11200, 0
    %v11203 = vperm.slane %v11200, 1
    %v11204 = vperm.slane %v11200, 2
    %v11208 = vadd.f32 %v11197, %v11202
    %v11209 = vadd.f32 %v11198, %v11203
    %v11210 = vadd.f32 %v11199, %v11204
    %vm11211 = vcmp.ge.f32.partialorder %v11208, 0.0
    %vm11212 = vcmp.ge.f32.partialorder %v11209, 0.0
    %vm11213 = vcmp.ge.f32.partialorder %v11210, 0.0
    %v11214 = vmul.f32 %v11208, 0.15
    %v11215 = vmul.f32 %v11209, 0.15
    %v11216 = vmul.f32 %v11210, 0.15
    %v11217 = vsel %vm11211, %v11208, %v11214
    %v11218 = vsel %vm11212, %v11209, %v11215
    %v11219 = vsel %vm11213, %v11210, %v11216
    %v11220 = vpack.c.bf16 %v11217, %v11217
    %v11221 = vpack.c.bf16 %v11218, %v11218
    %v11222 = vpack.c.bf16 %v11219, %v11219
    %v11223 = vld [vmem:[%s14] sm:$0x1]
    %vm11224 = vcmask 15360
    %v11226 = vsel %vm11224, %v11223, 0
    %vm11228 = vcmask 1040384
    %v11230 = vsel %vm11228, %v11220, 0
    %v11233 = vsel %vm11228, %v11221, 0
    %v11236 = vsel %vm11228, %v11222, 0
    %11238 = vmatpush.bf16.msra.mxu0 0
    %11239 = vmatpush.bf16.msra.mxu0 0
    %11240 = vmatpush.bf16.msra.mxu0 0
    %11241 = vmatpush.bf16.msra.mxu0 0
    %11242 = vmatpush.bf16.msra.mxu0 0
    %11243 = vmatpush.bf16.msra.mxu0 0
    %11244 = vmatpush.bf16.msra.mxu0 0
    %11245 = vmatpush.bf16.msra.mxu0 %v11230
    %11246 = vmatmul.bf16.gmra.mxu0 %v11226
    %v11247 = vpop.f32.mrf.mxu0
    %v11248 = vadd.f32 0.0, %v11247
    %v11249 = vpop.f32.mrf.mxu0
    %11250 = vdwg.mxu0
    %11251 = vmatpush.bf16.msra.mxu0 0
    %11252 = vmatpush.bf16.msra.mxu0 0
    %11253 = vmatpush.bf16.msra.mxu0 0
    %11254 = vmatpush.bf16.msra.mxu0 0
    %11255 = vmatpush.bf16.msra.mxu0 0
    %11256 = vmatpush.bf16.msra.mxu0 0
    %11257 = vmatpush.bf16.msra.mxu0 0
    %11258 = vmatpush.bf16.msra.mxu0 %v11233
    %11259 = vmatmul.bf16.gmra.mxu0 %v11226
    %v11260 = vpop.f32.mrf.mxu0
    %v11261 = vadd.f32 0.0, %v11260
    %v11262 = vpop.f32.mrf.mxu0
    %11263 = vdwg.mxu0
    %11264 = vmatpush.bf16.msra.mxu0 0
    %11265 = vmatpush.bf16.msra.mxu0 0
    %11266 = vmatpush.bf16.msra.mxu0 0
    %11267 = vmatpush.bf16.msra.mxu0 0
    %11268 = vmatpush.bf16.msra.mxu0 0
    %11269 = vmatpush.bf16.msra.mxu0 0
    %11270 = vmatpush.bf16.msra.mxu0 0
    %11271 = vmatpush.bf16.msra.mxu0 %v11236
    %11272 = vmatmul.bf16.gmra.mxu0 %v11226
    %v11273 = vpop.f32.mrf.mxu0
    %v11274 = vadd.f32 0.0, %v11273
    %v11275 = vpop.f32.mrf.mxu0
    %11276 = vdwg.mxu0
    %v11277 = vpack.c.bf16 %v11248, %v11248
    %v11278 = vpack.c.bf16 %v11261, %v11261
    %v11279 = vpack.c.bf16 %v11274, %v11274
    %v11280 = vld [vmem:[#allocation21] sm:$0xff]
    %v11281 = vld [vmem:[#allocation21 + $0x8] sm:$0xf]
    %v11282 = vld [vmem:[#allocation21 + $0xc] sm:$0xff]
    %v11283 = vld [vmem:[#allocation21 + $0x14] sm:$0xf]
    %v11284 = vld [vmem:[#allocation21 + $0x18] sm:$0xff]
    %v11285 = vld [vmem:[#allocation21 + $0x20] sm:$0xf]
    %v11286 = vld [vmem:[#allocation21 + $0x24] sm:$0xff]
    %v11287 = vld [vmem:[#allocation21 + $0x2c] sm:$0xf]
    %v11288 = vld [vmem:[#allocation21 + $0x30] sm:$0xff]
    %v11289 = vld [vmem:[#allocation21 + $0x38] sm:$0xf]
    %v11290 = vld [vmem:[#allocation21 + $0x3c] sm:$0xff]
    %v11291 = vld [vmem:[#allocation21 + $0x44] sm:$0xf]
    %v11292 = vld [vmem:[#allocation21 + $0x48] sm:$0xff]
    %v11293 = vld [vmem:[#allocation21 + $0x50] sm:$0xf]
    %v11294 = vld [vmem:[#allocation21 + $0x54] sm:$0xff]
    %v11295 = vld [vmem:[#allocation21 + $0x5c] sm:$0xf]
    %v11296 = vld [vmem:[#allocation21 + $0x60] sm:$0xff]
    %v11297 = vld [vmem:[#allocation21 + $0x68] sm:$0xf]
    %v11298 = vld [vmem:[#allocation21 + $0x6c] sm:$0xff]
    %v11299 = vld [vmem:[#allocation21 + $0x74] sm:$0xf]
    %v11300 = vld [vmem:[#allocation21 + $0x78] sm:$0xff]
    %v11301 = vld [vmem:[#allocation21 + $0x80] sm:$0xf]
    %v11302 = vld [vmem:[#allocation21 + $0x84] sm:$0xff]
    %v11303 = vld [vmem:[#allocation21 + $0x8c] sm:$0xf]
    %v11304 = vld [vmem:[#allocation21 + $0x90] sm:$0xff]
    %v11305 = vld [vmem:[#allocation21 + $0x98] sm:$0xf]
    %v11306 = vld [vmem:[#allocation21 + $0x9c] sm:$0xff]
    %v11307 = vld [vmem:[#allocation21 + $0xa4] sm:$0xf]
    %v11308 = vld [vmem:[#allocation21 + $0xa8] sm:$0xff]
    %v11309 = vld [vmem:[#allocation21 + $0xb0] sm:$0xf]
    %v11310 = vld [vmem:[#allocation21 + $0xb4] sm:$0xff]
    %v11311 = vld [vmem:[#allocation21 + $0xbc] sm:$0xf]
    %v11312 = vld [vmem:[#allocation21 + $0xc0] sm:$0xff]
    %v11313 = vld [vmem:[#allocation21 + $0xc8] sm:$0xf]
    %v11314 = vld [vmem:[#allocation21 + $0xcc] sm:$0xff]
    %v11315 = vld [vmem:[#allocation21 + $0xd4] sm:$0xf]
    %v11316 = vld [vmem:[#allocation21 + $0xd8] sm:$0xff]
    %v11317 = vld [vmem:[#allocation21 + $0xe0] sm:$0xf]
    %v11318 = vld [vmem:[#allocation21 + $0xe4] sm:$0xff]
    %v11319 = vld [vmem:[#allocation21 + $0xec] sm:$0xf]
    %v11320 = vld [vmem:[#allocation21 + $0xf0] sm:$0xff]
    %v11321 = vld [vmem:[#allocation21 + $0xf8] sm:$0xf]
    %v11322 = vld [vmem:[#allocation21 + $0xfc] sm:$0xff]
    %v11323 = vld [vmem:[#allocation21 + $0x104] sm:$0xf]
    %v11324 = vld [vmem:[#allocation21 + $0x108] sm:$0xff]
    %v11325 = vld [vmem:[#allocation21 + $0x110] sm:$0xf]
    %v11326 = vld [vmem:[#allocation21 + $0x114] sm:$0xff]
    %v11327 = vld [vmem:[#allocation21 + $0x11c] sm:$0xf]
    %v11328 = vld [vmem:[#allocation21 + $0x120] sm:$0xff]
    %v11329 = vld [vmem:[#allocation21 + $0x128] sm:$0xf]
    %v11330 = vld [vmem:[#allocation21 + $0x12c] sm:$0xff]
    %v11331 = vld [vmem:[#allocation21 + $0x134] sm:$0xf]
    %v11332 = vld [vmem:[#allocation21 + $0x138] sm:$0xff]
    %v11333 = vld [vmem:[#allocation21 + $0x140] sm:$0xf]
    %v11334 = vld [vmem:[#allocation21 + $0x144] sm:$0xff]
    %v11335 = vld [vmem:[#allocation21 + $0x14c] sm:$0xf]
    %v11336 = vld [vmem:[#allocation21 + $0x150] sm:$0xff]
    %v11337 = vld [vmem:[#allocation21 + $0x158] sm:$0xf]
    %v11338 = vld [vmem:[#allocation21 + $0x15c] sm:$0xff]
    %v11339 = vld [vmem:[#allocation21 + $0x164] sm:$0xf]
    %v11340 = vld [vmem:[#allocation21 + $0x168] sm:$0xff]
    %v11341 = vld [vmem:[#allocation21 + $0x170] sm:$0xf]
    %v11342 = vld [vmem:[#allocation21 + $0x174] sm:$0xff]
    %v11343 = vld [vmem:[#allocation21 + $0x17c] sm:$0xf]
    %v11344 = vld [vmem:[#allocation21 + $0x180] sm:$0xff]
    %v11345 = vld [vmem:[#allocation21 + $0x188] sm:$0xf]
    %v11346 = vld [vmem:[#allocation21 + $0x18c] sm:$0xff]
    %v11347 = vld [vmem:[#allocation21 + $0x194] sm:$0xf]
    %v11348 = vld [vmem:[#allocation21 + $0x198] sm:$0xff]
    %v11349 = vld [vmem:[#allocation21 + $0x1a0] sm:$0xf]
    %v11350 = vld [vmem:[#allocation21 + $0x1a4] sm:$0xff]
    %v11351 = vld [vmem:[#allocation21 + $0x1ac] sm:$0xf]
    %v11352 = vld [vmem:[#allocation21 + $0x1b0] sm:$0xff]
    %v11353 = vld [vmem:[#allocation21 + $0x1b8] sm:$0xf]
    %v11354 = vld [vmem:[#allocation21 + $0x1bc] sm:$0xff]
    %v11355 = vld [vmem:[#allocation21 + $0x1c4] sm:$0xf]
    %v11356 = vld [vmem:[#allocation21 + $0x1c8] sm:$0xff]
    %v11357 = vld [vmem:[#allocation21 + $0x1d0] sm:$0xf]
    %v11358 = vld [vmem:[#allocation21 + $0x1d4] sm:$0xff]
    %v11359 = vld [vmem:[#allocation21 + $0x1dc] sm:$0xf]
    %v11360 = vld [vmem:[#allocation21 + $0x1e0] sm:$0xff]
    %v11361 = vld [vmem:[#allocation21 + $0x1e8] sm:$0xf]
    %v11362 = vld [vmem:[#allocation21 + $0x1ec] sm:$0xff]
    %v11363 = vld [vmem:[#allocation21 + $0x1f4] sm:$0xf]
    %v11364 = vld [vmem:[#allocation21 + $0x1f8] sm:$0xff]
    %v11365 = vld [vmem:[#allocation21 + $0x200] sm:$0xf]
    %v11366 = vld [vmem:[#allocation21 + $0x204] sm:$0xff]
    %v11367 = vld [vmem:[#allocation21 + $0x20c] sm:$0xf]
    %v11368 = vld [vmem:[#allocation21 + $0x210] sm:$0xff]
    %v11369 = vld [vmem:[#allocation21 + $0x218] sm:$0xf]
    %v11370 = vld [vmem:[#allocation21 + $0x21c] sm:$0xff]
    %v11371 = vld [vmem:[#allocation21 + $0x224] sm:$0xf]
    %v11372 = vld [vmem:[#allocation21 + $0x228] sm:$0xff]
    %v11373 = vld [vmem:[#allocation21 + $0x230] sm:$0xf]
    %v11374 = vld [vmem:[#allocation21 + $0x234] sm:$0xff]
    %v11375 = vld [vmem:[#allocation21 + $0x23c] sm:$0xf]
    %s11376 = scalar_lea.vmem %s14, 1
    %v11377 = vld [vmem:[%s11376] sm:$0x1]
    %v11379 = vsel %vm11224, %v11377, 0
    %11381 = vmatpush.bf16.msra.mxu0 0
    %11382 = vmatpush.bf16.msra.mxu0 0
    %11383 = vmatpush.bf16.msra.mxu0 0
    %11384 = vmatpush.bf16.msra.mxu0 0
    %11385 = vmatpush.bf16.msra.mxu0 0
    %11386 = vmatpush.bf16.msra.mxu0 0
    %11387 = vmatpush.bf16.msra.mxu0 0
    %11388 = vmatpush.bf16.msra.mxu0 %v11230
    %11389 = vmatmul.bf16.gmra.mxu0 %v11379
    %v11390 = vpop.f32.mrf.mxu0
    %v11391 = vadd.f32 0.0, %v11390
    %v11392 = vpop.f32.mrf.mxu0
    %11393 = vdwg.mxu0
    %11394 = vmatpush.bf16.msra.mxu0 0
    %11395 = vmatpush.bf16.msra.mxu0 0
    %11396 = vmatpush.bf16.msra.mxu0 0
    %11397 = vmatpush.bf16.msra.mxu0 0
    %11398 = vmatpush.bf16.msra.mxu0 0
    %11399 = vmatpush.bf16.msra.mxu0 0
    %11400 = vmatpush.bf16.msra.mxu0 0
    %11401 = vmatpush.bf16.msra.mxu0 %v11233
    %11402 = vmatmul.bf16.gmra.mxu0 %v11379
    %v11403 = vpop.f32.mrf.mxu0
    %v11404 = vadd.f32 0.0, %v11403
    %v11405 = vpop.f32.mrf.mxu0
    %11406 = vdwg.mxu0
    %11407 = vmatpush.bf16.msra.mxu0 0
    %11408 = vmatpush.bf16.msra.mxu0 0
    %11409 = vmatpush.bf16.msra.mxu0 0
    %11410 = vmatpush.bf16.msra.mxu0 0
    %11411 = vmatpush.bf16.msra.mxu0 0
    %11412 = vmatpush.bf16.msra.mxu0 0
    %11413 = vmatpush.bf16.msra.mxu0 0
    %11414 = vmatpush.bf16.msra.mxu0 %v11236
    %11415 = vmatmul.bf16.gmra.mxu0 %v11379
    %v11416 = vpop.f32.mrf.mxu0
    %v11417 = vadd.f32 0.0, %v11416
    %v11418 = vpop.f32.mrf.mxu0
    %11419 = vdwg.mxu0
    %v11420 = vpack.c.bf16 %v11391, %v11391
    %v11421 = vpack.c.bf16 %v11404, %v11404
    %v11422 = vpack.c.bf16 %v11417, %v11417
    %s11423 = scalar_lea.vmem [#allocation21], 576
    %v11424 = vld [vmem:[%s11423] sm:$0xff]
    %v11425 = vld [vmem:[%s11423 + $0x8] sm:$0xf]
    %v11426 = vld [vmem:[%s11423 + $0xc] sm:$0xff]
    %v11427 = vld [vmem:[%s11423 + $0x14] sm:$0xf]
    %v11428 = vld [vmem:[%s11423 + $0x18] sm:$0xff]
    %v11429 = vld [vmem:[%s11423 + $0x20] sm:$0xf]
    %v11430 = vld [vmem:[%s11423 + $0x24] sm:$0xff]
    %v11431 = vld [vmem:[%s11423 + $0x2c] sm:$0xf]
    %v11432 = vld [vmem:[%s11423 + $0x30] sm:$0xff]
    %v11433 = vld [vmem:[%s11423 + $0x38] sm:$0xf]
    %v11434 = vld [vmem:[%s11423 + $0x3c] sm:$0xff]
    %v11435 = vld [vmem:[%s11423 + $0x44] sm:$0xf]
    %v11436 = vld [vmem:[%s11423 + $0x48] sm:$0xff]
    %v11437 = vld [vmem:[%s11423 + $0x50] sm:$0xf]
    %v11438 = vld [vmem:[%s11423 + $0x54] sm:$0xff]
    %v11439 = vld [vmem:[%s11423 + $0x5c] sm:$0xf]
    %v11440 = vld [vmem:[%s11423 + $0x60] sm:$0xff]
    %v11441 = vld [vmem:[%s11423 + $0x68] sm:$0xf]
    %v11442 = vld [vmem:[%s11423 + $0x6c] sm:$0xff]
    %v11443 = vld [vmem:[%s11423 + $0x74] sm:$0xf]
    %v11444 = vld [vmem:[%s11423 + $0x78] sm:$0xff]
    %v11445 = vld [vmem:[%s11423 + $0x80] sm:$0xf]
    %v11446 = vld [vmem:[%s11423 + $0x84] sm:$0xff]
    %v11447 = vld [vmem:[%s11423 + $0x8c] sm:$0xf]
    %v11448 = vld [vmem:[%s11423 + $0x90] sm:$0xff]
    %v11449 = vld [vmem:[%s11423 + $0x98] sm:$0xf]
    %v11450 = vld [vmem:[%s11423 + $0x9c] sm:$0xff]
    %v11451 = vld [vmem:[%s11423 + $0xa4] sm:$0xf]
    %v11452 = vld [vmem:[%s11423 + $0xa8] sm:$0xff]
    %v11453 = vld [vmem:[%s11423 + $0xb0] sm:$0xf]
    %v11454 = vld [vmem:[%s11423 + $0xb4] sm:$0xff]
    %v11455 = vld [vmem:[%s11423 + $0xbc] sm:$0xf]
    %v11456 = vld [vmem:[%s11423 + $0xc0] sm:$0xff]
    %v11457 = vld [vmem:[%s11423 + $0xc8] sm:$0xf]
    %v11458 = vld [vmem:[%s11423 + $0xcc] sm:$0xff]
    %v11459 = vld [vmem:[%s11423 + $0xd4] sm:$0xf]
    %v11460 = vld [vmem:[%s11423 + $0xd8] sm:$0xff]
    %v11461 = vld [vmem:[%s11423 + $0xe0] sm:$0xf]
    %v11462 = vld [vmem:[%s11423 + $0xe4] sm:$0xff]
    %v11463 = vld [vmem:[%s11423 + $0xec] sm:$0xf]
    %v11464 = vld [vmem:[%s11423 + $0xf0] sm:$0xff]
    %v11465 = vld [vmem:[%s11423 + $0xf8] sm:$0xf]
    %v11466 = vld [vmem:[%s11423 + $0xfc] sm:$0xff]
    %v11467 = vld [vmem:[%s11423 + $0x104] sm:$0xf]
    %v11468 = vld [vmem:[%s11423 + $0x108] sm:$0xff]
    %v11469 = vld [vmem:[%s11423 + $0x110] sm:$0xf]
    %v11470 = vld [vmem:[%s11423 + $0x114] sm:$0xff]
    %v11471 = vld [vmem:[%s11423 + $0x11c] sm:$0xf]
    %v11472 = vld [vmem:[%s11423 + $0x120] sm:$0xff]
    %v11473 = vld [vmem:[%s11423 + $0x128] sm:$0xf]
    %v11474 = vld [vmem:[%s11423 + $0x12c] sm:$0xff]
    %v11475 = vld [vmem:[%s11423 + $0x134] sm:$0xf]
    %v11476 = vld [vmem:[%s11423 + $0x138] sm:$0xff]
    %v11477 = vld [vmem:[%s11423 + $0x140] sm:$0xf]
    %v11478 = vld [vmem:[%s11423 + $0x144] sm:$0xff]
    %v11479 = vld [vmem:[%s11423 + $0x14c] sm:$0xf]
    %v11480 = vld [vmem:[%s11423 + $0x150] sm:$0xff]
    %v11481 = vld [vmem:[%s11423 + $0x158] sm:$0xf]
    %v11482 = vld [vmem:[%s11423 + $0x15c] sm:$0xff]
    %v11483 = vld [vmem:[%s11423 + $0x164] sm:$0xf]
    %v11484 = vld [vmem:[%s11423 + $0x168] sm:$0xff]
    %v11485 = vld [vmem:[%s11423 + $0x170] sm:$0xf]
    %v11486 = vld [vmem:[%s11423 + $0x174] sm:$0xff]
    %v11487 = vld [vmem:[%s11423 + $0x17c] sm:$0xf]
    %v11488 = vld [vmem:[%s11423 + $0x180] sm:$0xff]
    %v11489 = vld [vmem:[%s11423 + $0x188] sm:$0xf]
    %v11490 = vld [vmem:[%s11423 + $0x18c] sm:$0xff]
    %v11491 = vld [vmem:[%s11423 + $0x194] sm:$0xf]
    %v11492 = vld [vmem:[%s11423 + $0x198] sm:$0xff]
    %v11493 = vld [vmem:[%s11423 + $0x1a0] sm:$0xf]
    %v11494 = vld [vmem:[%s11423 + $0x1a4] sm:$0xff]
    %v11495 = vld [vmem:[%s11423 + $0x1ac] sm:$0xf]
    %v11496 = vld [vmem:[%s11423 + $0x1b0] sm:$0xff]
    %v11497 = vld [vmem:[%s11423 + $0x1b8] sm:$0xf]
    %v11498 = vld [vmem:[%s11423 + $0x1bc] sm:$0xff]
    %v11499 = vld [vmem:[%s11423 + $0x1c4] sm:$0xf]
    %v11500 = vld [vmem:[%s11423 + $0x1c8] sm:$0xff]
    %v11501 = vld [vmem:[%s11423 + $0x1d0] sm:$0xf]
    %v11502 = vld [vmem:[%s11423 + $0x1d4] sm:$0xff]
    %v11503 = vld [vmem:[%s11423 + $0x1dc] sm:$0xf]
    %v11504 = vld [vmem:[%s11423 + $0x1e0] sm:$0xff]
    %v11505 = vld [vmem:[%s11423 + $0x1e8] sm:$0xf]
    %v11506 = vld [vmem:[%s11423 + $0x1ec] sm:$0xff]
    %v11507 = vld [vmem:[%s11423 + $0x1f4] sm:$0xf]
    %v11508 = vld [vmem:[%s11423 + $0x1f8] sm:$0xff]
    %v11509 = vld [vmem:[%s11423 + $0x200] sm:$0xf]
    %v11510 = vld [vmem:[%s11423 + $0x204] sm:$0xff]
    %v11511 = vld [vmem:[%s11423 + $0x20c] sm:$0xf]
    %v11512 = vld [vmem:[%s11423 + $0x210] sm:$0xff]
    %v11513 = vld [vmem:[%s11423 + $0x218] sm:$0xf]
    %v11514 = vld [vmem:[%s11423 + $0x21c] sm:$0xff]
    %v11515 = vld [vmem:[%s11423 + $0x224] sm:$0xf]
    %v11516 = vld [vmem:[%s11423 + $0x228] sm:$0xff]
    %v11517 = vld [vmem:[%s11423 + $0x230] sm:$0xf]
    %v11518 = vld [vmem:[%s11423 + $0x234] sm:$0xff]
    %v11519 = vld [vmem:[%s11423 + $0x23c] sm:$0xf]
    %v11616 = vunpack.c.l.b16 %v11424
    %v11617 = vunpack.c.h.b16 %v11424
    %v11618 = vunpack.c.l.b16 %v11425
    %v11619 = vunpack.c.l.b16 %v11426
    %v11620 = vunpack.c.h.b16 %v11426
    %v11621 = vunpack.c.l.b16 %v11427
    %v11622 = vunpack.c.l.b16 %v11428
    %v11623 = vunpack.c.h.b16 %v11428
    %v11624 = vunpack.c.l.b16 %v11429
    %v11625 = vunpack.c.l.b16 %v11430
    %v11626 = vunpack.c.h.b16 %v11430
    %v11627 = vunpack.c.l.b16 %v11431
    %v11628 = vunpack.c.l.b16 %v11432
    %v11629 = vunpack.c.h.b16 %v11432
    %v11630 = vunpack.c.l.b16 %v11433
    %v11631 = vunpack.c.l.b16 %v11434
    %v11632 = vunpack.c.h.b16 %v11434
    %v11633 = vunpack.c.l.b16 %v11435
    %v11634 = vunpack.c.l.b16 %v11436
    %v11635 = vunpack.c.h.b16 %v11436
    %v11636 = vunpack.c.l.b16 %v11437
    %v11637 = vunpack.c.l.b16 %v11438
    %v11638 = vunpack.c.h.b16 %v11438
    %v11639 = vunpack.c.l.b16 %v11439
    %v11640 = vunpack.c.l.b16 %v11440
    %v11641 = vunpack.c.h.b16 %v11440
    %v11642 = vunpack.c.l.b16 %v11441
    %v11643 = vunpack.c.l.b16 %v11442
    %v11644 = vunpack.c.h.b16 %v11442
    %v11645 = vunpack.c.l.b16 %v11443
    %v11646 = vunpack.c.l.b16 %v11444
    %v11647 = vunpack.c.h.b16 %v11444
    %v11648 = vunpack.c.l.b16 %v11445
    %v11649 = vunpack.c.l.b16 %v11446
    %v11650 = vunpack.c.h.b16 %v11446
    %v11651 = vunpack.c.l.b16 %v11447
    %v11652 = vunpack.c.l.b16 %v11448
    %v11653 = vunpack.c.h.b16 %v11448
    %v11654 = vunpack.c.l.b16 %v11449
    %v11655 = vunpack.c.l.b16 %v11450
    %v11656 = vunpack.c.h.b16 %v11450
    %v11657 = vunpack.c.l.b16 %v11451
    %v11658 = vunpack.c.l.b16 %v11452
    %v11659 = vunpack.c.h.b16 %v11452
    %v11660 = vunpack.c.l.b16 %v11453
    %v11661 = vunpack.c.l.b16 %v11454
    %v11662 = vunpack.c.h.b16 %v11454
    %v11663 = vunpack.c.l.b16 %v11455
    %v11664 = vunpack.c.l.b16 %v11456
    %v11665 = vunpack.c.h.b16 %v11456
    %v11666 = vunpack.c.l.b16 %v11457
    %v11667 = vunpack.c.l.b16 %v11458
    %v11668 = vunpack.c.h.b16 %v11458
    %v11669 = vunpack.c.l.b16 %v11459
    %v11670 = vunpack.c.l.b16 %v11460
    %v11671 = vunpack.c.h.b16 %v11460
    %v11672 = vunpack.c.l.b16 %v11461
    %v11673 = vunpack.c.l.b16 %v11462
    %v11674 = vunpack.c.h.b16 %v11462
    %v11675 = vunpack.c.l.b16 %v11463
    %v11676 = vunpack.c.l.b16 %v11464
    %v11677 = vunpack.c.h.b16 %v11464
    %v11678 = vunpack.c.l.b16 %v11465
    %v11679 = vunpack.c.l.b16 %v11466
    %v11680 = vunpack.c.h.b16 %v11466
    %v11681 = vunpack.c.l.b16 %v11467
    %v11682 = vunpack.c.l.b16 %v11468
    %v11683 = vunpack.c.h.b16 %v11468
    %v11684 = vunpack.c.l.b16 %v11469
    %v11685 = vunpack.c.l.b16 %v11470
    %v11686 = vunpack.c.h.b16 %v11470
    %v11687 = vunpack.c.l.b16 %v11471
    %v11688 = vunpack.c.l.b16 %v11472
    %v11689 = vunpack.c.h.b16 %v11472
    %v11690 = vunpack.c.l.b16 %v11473
    %v11691 = vunpack.c.l.b16 %v11474
    %v11692 = vunpack.c.h.b16 %v11474
    %v11693 = vunpack.c.l.b16 %v11475
    %v11694 = vunpack.c.l.b16 %v11476
    %v11695 = vunpack.c.h.b16 %v11476
    %v11696 = vunpack.c.l.b16 %v11477
    %v11697 = vunpack.c.l.b16 %v11478
    %v11698 = vunpack.c.h.b16 %v11478
    %v11699 = vunpack.c.l.b16 %v11479
    %v11700 = vunpack.c.l.b16 %v11480
    %v11701 = vunpack.c.h.b16 %v11480
    %v11702 = vunpack.c.l.b16 %v11481
    %v11703 = vunpack.c.l.b16 %v11482
    %v11704 = vunpack.c.h.b16 %v11482
    %v11705 = vunpack.c.l.b16 %v11483
    %v11706 = vunpack.c.l.b16 %v11484
    %v11707 = vunpack.c.h.b16 %v11484
    %v11708 = vunpack.c.l.b16 %v11485
    %v11709 = vunpack.c.l.b16 %v11486
    %v11710 = vunpack.c.h.b16 %v11486
    %v11711 = vunpack.c.l.b16 %v11487
    %v11712 = vunpack.c.l.b16 %v11488
    %v11713 = vunpack.c.h.b16 %v11488
    %v11714 = vunpack.c.l.b16 %v11489
    %v11715 = vunpack.c.l.b16 %v11490
    %v11716 = vunpack.c.h.b16 %v11490
    %v11717 = vunpack.c.l.b16 %v11491
    %v11718 = vunpack.c.l.b16 %v11492
    %v11719 = vunpack.c.h.b16 %v11492
    %v11720 = vunpack.c.l.b16 %v11493
    %v11721 = vunpack.c.l.b16 %v11494
    %v11722 = vunpack.c.h.b16 %v11494
    %v11723 = vunpack.c.l.b16 %v11495
    %v11724 = vunpack.c.l.b16 %v11496
    %v11725 = vunpack.c.h.b16 %v11496
    %v11726 = vunpack.c.l.b16 %v11497
    %v11727 = vunpack.c.l.b16 %v11498
    %v11728 = vunpack.c.h.b16 %v11498
    %v11729 = vunpack.c.l.b16 %v11499
    %v11730 = vunpack.c.l.b16 %v11500
    %v11731 = vunpack.c.h.b16 %v11500
    %v11732 = vunpack.c.l.b16 %v11501
    %v11733 = vunpack.c.l.b16 %v11502
    %v11734 = vunpack.c.h.b16 %v11502
    %v11735 = vunpack.c.l.b16 %v11503
    %v11736 = vunpack.c.l.b16 %v11504
    %v11737 = vunpack.c.h.b16 %v11504
    %v11738 = vunpack.c.l.b16 %v11505
    %v11739 = vunpack.c.l.b16 %v11506
    %v11740 = vunpack.c.h.b16 %v11506
    %v11741 = vunpack.c.l.b16 %v11507
    %v11742 = vunpack.c.l.b16 %v11508
    %v11743 = vunpack.c.h.b16 %v11508
    %v11744 = vunpack.c.l.b16 %v11509
    %v11745 = vunpack.c.l.b16 %v11510
    %v11746 = vunpack.c.h.b16 %v11510
    %v11747 = vunpack.c.l.b16 %v11511
    %v11748 = vunpack.c.l.b16 %v11512
    %v11749 = vunpack.c.h.b16 %v11512
    %v11750 = vunpack.c.l.b16 %v11513
    %v11751 = vunpack.c.l.b16 %v11514
    %v11752 = vunpack.c.h.b16 %v11514
    %v11753 = vunpack.c.l.b16 %v11515
    %v11754 = vunpack.c.l.b16 %v11516
    %v11755 = vunpack.c.h.b16 %v11516
    %v11756 = vunpack.c.l.b16 %v11517
    %v11757 = vunpack.c.l.b16 %v11518
    %v11758 = vunpack.c.h.b16 %v11518
    %v11759 = vunpack.c.l.b16 %v11519
    %v11760 = vpack.c.b16 %v11619, %v11616
    %v11761 = vpack.c.b16 %v11620, %v11617
    %v11762 = vpack.c.b16 %v11621, %v11618
    %v11763 = vpack.c.b16 %v11625, %v11622
    %v11764 = vpack.c.b16 %v11626, %v11623
    %v11765 = vpack.c.b16 %v11627, %v11624
    %v11766 = vpack.c.b16 %v11631, %v11628
    %v11767 = vpack.c.b16 %v11632, %v11629
    %v11768 = vpack.c.b16 %v11633, %v11630
    %v11769 = vpack.c.b16 %v11637, %v11634
    %v11770 = vpack.c.b16 %v11638, %v11635
    %v11771 = vpack.c.b16 %v11639, %v11636
    %v11772 = vpack.c.b16 %v11643, %v11640
    %v11773 = vpack.c.b16 %v11644, %v11641
    %v11774 = vpack.c.b16 %v11645, %v11642
    %v11775 = vpack.c.b16 %v11649, %v11646
    %v11776 = vpack.c.b16 %v11650, %v11647
    %v11777 = vpack.c.b16 %v11651, %v11648
    %v11778 = vpack.c.b16 %v11655, %v11652
    %v11779 = vpack.c.b16 %v11656, %v11653
    %v11780 = vpack.c.b16 %v11657, %v11654
    %v11781 = vpack.c.b16 %v11661, %v11658
    %v11782 = vpack.c.b16 %v11662, %v11659
    %v11783 = vpack.c.b16 %v11663, %v11660
    %v11784 = vpack.c.b16 %v11667, %v11664
    %v11785 = vpack.c.b16 %v11668, %v11665
    %v11786 = vpack.c.b16 %v11669, %v11666
    %v11787 = vpack.c.b16 %v11673, %v11670
    %v11788 = vpack.c.b16 %v11674, %v11671
    %v11789 = vpack.c.b16 %v11675, %v11672
    %v11790 = vpack.c.b16 %v11679, %v11676
    %v11791 = vpack.c.b16 %v11680, %v11677
    %v11792 = vpack.c.b16 %v11681, %v11678
    %v11793 = vpack.c.b16 %v11685, %v11682
    %v11794 = vpack.c.b16 %v11686, %v11683
    %v11795 = vpack.c.b16 %v11687, %v11684
    %v11796 = vpack.c.b16 %v11691, %v11688
    %v11797 = vpack.c.b16 %v11692, %v11689
    %v11798 = vpack.c.b16 %v11693, %v11690
    %v11799 = vpack.c.b16 %v11697, %v11694
    %v11800 = vpack.c.b16 %v11698, %v11695
    %v11801 = vpack.c.b16 %v11699, %v11696
    %v11802 = vpack.c.b16 %v11703, %v11700
    %v11803 = vpack.c.b16 %v11704, %v11701
    %v11804 = vpack.c.b16 %v11705, %v11702
    %v11805 = vpack.c.b16 %v11709, %v11706
    %v11806 = vpack.c.b16 %v11710, %v11707
    %v11807 = vpack.c.b16 %v11711, %v11708
    %v11808 = vpack.c.b16 %v11715, %v11712
    %v11809 = vpack.c.b16 %v11716, %v11713
    %v11810 = vpack.c.b16 %v11717, %v11714
    %v11811 = vpack.c.b16 %v11721, %v11718
    %v11812 = vpack.c.b16 %v11722, %v11719
    %v11813 = vpack.c.b16 %v11723, %v11720
    %v11814 = vpack.c.b16 %v11727, %v11724
    %v11815 = vpack.c.b16 %v11728, %v11725
    %v11816 = vpack.c.b16 %v11729, %v11726
    %v11817 = vpack.c.b16 %v11733, %v11730
    %v11818 = vpack.c.b16 %v11734, %v11731
    %v11819 = vpack.c.b16 %v11735, %v11732
    %v11820 = vpack.c.b16 %v11739, %v11736
    %v11821 = vpack.c.b16 %v11740, %v11737
    %v11822 = vpack.c.b16 %v11741, %v11738
    %v11823 = vpack.c.b16 %v11745, %v11742
    %v11824 = vpack.c.b16 %v11746, %v11743
    %v11825 = vpack.c.b16 %v11747, %v11744
    %v11826 = vpack.c.b16 %v11751, %v11748
    %v11827 = vpack.c.b16 %v11752, %v11749
    %v11828 = vpack.c.b16 %v11753, %v11750
    %v11829 = vpack.c.b16 %v11757, %v11754
    %v11830 = vpack.c.b16 %v11758, %v11755
    %v11831 = vpack.c.b16 %v11759, %v11756
    %11904 = vmatpush.bf16.msra.mxu0 %v11781
    %11905 = vmatpush.bf16.msra.mxu0 %v11778
    %11906 = vmatpush.bf16.msra.mxu0 %v11775
    %11907 = vmatpush.bf16.msra.mxu0 %v11772
    %11908 = vmatpush.bf16.msra.mxu0 %v11769
    %11909 = vmatpush.bf16.msra.mxu0 %v11766
    %11910 = vmatpush.bf16.msra.mxu0 %v11763
    %11911 = vmatpush.bf16.msra.mxu0 %v11760
    %11912 = vmatmul.bf16.gmra.mxu0 %v11420
    %v11913 = vpop.f32.mrf.mxu0
    %v11914 = vadd.f32 0.0, %v11913
    %v11915 = vpop.f32.mrf.mxu0
    %11916 = vdwg.mxu0
    %11917 = vmatpush.bf16.msra.mxu0 %v11805
    %11918 = vmatpush.bf16.msra.mxu0 %v11802
    %11919 = vmatpush.bf16.msra.mxu0 %v11799
    %11920 = vmatpush.bf16.msra.mxu0 %v11796
    %11921 = vmatpush.bf16.msra.mxu0 %v11793
    %11922 = vmatpush.bf16.msra.mxu0 %v11790
    %11923 = vmatpush.bf16.msra.mxu0 %v11787
    %11924 = vmatpush.bf16.msra.mxu0 %v11784
    %11925 = vmatmul.bf16.gmra.mxu0 %v11421
    %v11926 = vpop.f32.mrf.mxu0
    %v11927 = vadd.f32 %v11914, %v11926
    %v11928 = vpop.f32.mrf.mxu0
    %11929 = vdwg.mxu0
    %11930 = vmatpush.bf16.msra.mxu0 %v11829
    %11931 = vmatpush.bf16.msra.mxu0 %v11826
    %11932 = vmatpush.bf16.msra.mxu0 %v11823
    %11933 = vmatpush.bf16.msra.mxu0 %v11820
    %11934 = vmatpush.bf16.msra.mxu0 %v11817
    %11935 = vmatpush.bf16.msra.mxu0 %v11814
    %11936 = vmatpush.bf16.msra.mxu0 %v11811
    %11937 = vmatpush.bf16.msra.mxu0 %v11808
    %11938 = vmatmul.bf16.gmra.mxu0 %v11422
    %v11939 = vpop.f32.mrf.mxu0
    %v11940 = vadd.f32 %v11927, %v11939
    %v11941 = vpop.f32.mrf.mxu0
    %11942 = vdwg.mxu0
    %11943 = vmatpush.bf16.msra.mxu0 %v11782
    %11944 = vmatpush.bf16.msra.mxu0 %v11779
    %11945 = vmatpush.bf16.msra.mxu0 %v11776
    %11946 = vmatpush.bf16.msra.mxu0 %v11773
    %11947 = vmatpush.bf16.msra.mxu0 %v11770
    %11948 = vmatpush.bf16.msra.mxu0 %v11767
    %11949 = vmatpush.bf16.msra.mxu0 %v11764
    %11950 = vmatpush.bf16.msra.mxu0 %v11761
    %11951 = vmatmul.bf16.gmra.mxu0 %v11420
    %v11952 = vpop.f32.mrf.mxu0
    %v11953 = vadd.f32 0.0, %v11952
    %v11954 = vpop.f32.mrf.mxu0
    %11955 = vdwg.mxu0
    %11956 = vmatpush.bf16.msra.mxu0 %v11806
    %11957 = vmatpush.bf16.msra.mxu0 %v11803
    %11958 = vmatpush.bf16.msra.mxu0 %v11800
    %11959 = vmatpush.bf16.msra.mxu0 %v11797
    %11960 = vmatpush.bf16.msra.mxu0 %v11794
    %11961 = vmatpush.bf16.msra.mxu0 %v11791
    %11962 = vmatpush.bf16.msra.mxu0 %v11788
    %11963 = vmatpush.bf16.msra.mxu0 %v11785
    %11964 = vmatmul.bf16.gmra.mxu0 %v11421
    %v11965 = vpop.f32.mrf.mxu0
    %v11966 = vadd.f32 %v11953, %v11965
    %v11967 = vpop.f32.mrf.mxu0
    %11968 = vdwg.mxu0
    %11969 = vmatpush.bf16.msra.mxu0 %v11830
    %11970 = vmatpush.bf16.msra.mxu0 %v11827
    %11971 = vmatpush.bf16.msra.mxu0 %v11824
    %11972 = vmatpush.bf16.msra.mxu0 %v11821
    %11973 = vmatpush.bf16.msra.mxu0 %v11818
    %11974 = vmatpush.bf16.msra.mxu0 %v11815
    %11975 = vmatpush.bf16.msra.mxu0 %v11812
    %11976 = vmatpush.bf16.msra.mxu0 %v11809
    %11977 = vmatmul.bf16.gmra.mxu0 %v11422
    %v11978 = vpop.f32.mrf.mxu0
    %v11979 = vadd.f32 %v11966, %v11978
    %v11980 = vpop.f32.mrf.mxu0
    %11981 = vdwg.mxu0
    %11982 = vmatpush.bf16.msra.mxu0 %v11783
    %11983 = vmatpush.bf16.msra.mxu0 %v11780
    %11984 = vmatpush.bf16.msra.mxu0 %v11777
    %11985 = vmatpush.bf16.msra.mxu0 %v11774
    %11986 = vmatpush.bf16.msra.mxu0 %v11771
    %11987 = vmatpush.bf16.msra.mxu0 %v11768
    %11988 = vmatpush.bf16.msra.mxu0 %v11765
    %11989 = vmatpush.bf16.msra.mxu0 %v11762
    %11990 = vmatmul.bf16.gmra.mxu0 %v11420
    %v11991 = vpop.f32.mrf.mxu0
    %v11992 = vadd.f32 0.0, %v11991
    %v11993 = vpop.f32.mrf.mxu0
    %11994 = vdwg.mxu0
    %11995 = vmatpush.bf16.msra.mxu0 %v11807
    %11996 = vmatpush.bf16.msra.mxu0 %v11804
    %11997 = vmatpush.bf16.msra.mxu0 %v11801
    %11998 = vmatpush.bf16.msra.mxu0 %v11798
    %11999 = vmatpush.bf16.msra.mxu0 %v11795
    %12000 = vmatpush.bf16.msra.mxu0 %v11792
    %12001 = vmatpush.bf16.msra.mxu0 %v11789
    %12002 = vmatpush.bf16.msra.mxu0 %v11786
    %12003 = vmatmul.bf16.gmra.mxu0 %v11421
    %v12004 = vpop.f32.mrf.mxu0
    %v12005 = vadd.f32 %v11992, %v12004
    %v12006 = vpop.f32.mrf.mxu0
    %12007 = vdwg.mxu0
    %12008 = vmatpush.bf16.msra.mxu0 %v11831
    %12009 = vmatpush.bf16.msra.mxu0 %v11828
    %12010 = vmatpush.bf16.msra.mxu0 %v11825
    %12011 = vmatpush.bf16.msra.mxu0 %v11822
    %12012 = vmatpush.bf16.msra.mxu0 %v11819
    %12013 = vmatpush.bf16.msra.mxu0 %v11816
    %12014 = vmatpush.bf16.msra.mxu0 %v11813
    %12015 = vmatpush.bf16.msra.mxu0 %v11810
    %12016 = vmatmul.bf16.gmra.mxu0 %v11422
    %v12017 = vpop.f32.mrf.mxu0
    %v12018 = vadd.f32 %v12005, %v12017
    %v12019 = vpop.f32.mrf.mxu0
    %12020 = vdwg.mxu0
    %v12117 = vunpack.c.l.b16 %v11280
    %v12118 = vunpack.c.h.b16 %v11280
    %v12119 = vunpack.c.l.b16 %v11281
    %v12120 = vunpack.c.l.b16 %v11282
    %v12121 = vunpack.c.h.b16 %v11282
    %v12122 = vunpack.c.l.b16 %v11283
    %v12123 = vunpack.c.l.b16 %v11284
    %v12124 = vunpack.c.h.b16 %v11284
    %v12125 = vunpack.c.l.b16 %v11285
    %v12126 = vunpack.c.l.b16 %v11286
    %v12127 = vunpack.c.h.b16 %v11286
    %v12128 = vunpack.c.l.b16 %v11287
    %v12129 = vunpack.c.l.b16 %v11288
    %v12130 = vunpack.c.h.b16 %v11288
    %v12131 = vunpack.c.l.b16 %v11289
    %v12132 = vunpack.c.l.b16 %v11290
    %v12133 = vunpack.c.h.b16 %v11290
    %v12134 = vunpack.c.l.b16 %v11291
    %v12135 = vunpack.c.l.b16 %v11292
    %v12136 = vunpack.c.h.b16 %v11292
    %v12137 = vunpack.c.l.b16 %v11293
    %v12138 = vunpack.c.l.b16 %v11294
    %v12139 = vunpack.c.h.b16 %v11294
    %v12140 = vunpack.c.l.b16 %v11295
    %v12141 = vunpack.c.l.b16 %v11296
    %v12142 = vunpack.c.h.b16 %v11296
    %v12143 = vunpack.c.l.b16 %v11297
    %v12144 = vunpack.c.l.b16 %v11298
    %v12145 = vunpack.c.h.b16 %v11298
    %v12146 = vunpack.c.l.b16 %v11299
    %v12147 = vunpack.c.l.b16 %v11300
    %v12148 = vunpack.c.h.b16 %v11300
    %v12149 = vunpack.c.l.b16 %v11301
    %v12150 = vunpack.c.l.b16 %v11302
    %v12151 = vunpack.c.h.b16 %v11302
    %v12152 = vunpack.c.l.b16 %v11303
    %v12153 = vunpack.c.l.b16 %v11304
    %v12154 = vunpack.c.h.b16 %v11304
    %v12155 = vunpack.c.l.b16 %v11305
    %v12156 = vunpack.c.l.b16 %v11306
    %v12157 = vunpack.c.h.b16 %v11306
    %v12158 = vunpack.c.l.b16 %v11307
    %v12159 = vunpack.c.l.b16 %v11308
    %v12160 = vunpack.c.h.b16 %v11308
    %v12161 = vunpack.c.l.b16 %v11309
    %v12162 = vunpack.c.l.b16 %v11310
    %v12163 = vunpack.c.h.b16 %v11310
    %v12164 = vunpack.c.l.b16 %v11311
    %v12165 = vunpack.c.l.b16 %v11312
    %v12166 = vunpack.c.h.b16 %v11312
    %v12167 = vunpack.c.l.b16 %v11313
    %v12168 = vunpack.c.l.b16 %v11314
    %v12169 = vunpack.c.h.b16 %v11314
    %v12170 = vunpack.c.l.b16 %v11315
    %v12171 = vunpack.c.l.b16 %v11316
    %v12172 = vunpack.c.h.b16 %v11316
    %v12173 = vunpack.c.l.b16 %v11317
    %v12174 = vunpack.c.l.b16 %v11318
    %v12175 = vunpack.c.h.b16 %v11318
    %v12176 = vunpack.c.l.b16 %v11319
    %v12177 = vunpack.c.l.b16 %v11320
    %v12178 = vunpack.c.h.b16 %v11320
    %v12179 = vunpack.c.l.b16 %v11321
    %v12180 = vunpack.c.l.b16 %v11322
    %v12181 = vunpack.c.h.b16 %v11322
    %v12182 = vunpack.c.l.b16 %v11323
    %v12183 = vunpack.c.l.b16 %v11324
    %v12184 = vunpack.c.h.b16 %v11324
    %v12185 = vunpack.c.l.b16 %v11325
    %v12186 = vunpack.c.l.b16 %v11326
    %v12187 = vunpack.c.h.b16 %v11326
    %v12188 = vunpack.c.l.b16 %v11327
    %v12189 = vunpack.c.l.b16 %v11328
    %v12190 = vunpack.c.h.b16 %v11328
    %v12191 = vunpack.c.l.b16 %v11329
    %v12192 = vunpack.c.l.b16 %v11330
    %v12193 = vunpack.c.h.b16 %v11330
    %v12194 = vunpack.c.l.b16 %v11331
    %v12195 = vunpack.c.l.b16 %v11332
    %v12196 = vunpack.c.h.b16 %v11332
    %v12197 = vunpack.c.l.b16 %v11333
    %v12198 = vunpack.c.l.b16 %v11334
    %v12199 = vunpack.c.h.b16 %v11334
    %v12200 = vunpack.c.l.b16 %v11335
    %v12201 = vunpack.c.l.b16 %v11336
    %v12202 = vunpack.c.h.b16 %v11336
    %v12203 = vunpack.c.l.b16 %v11337
    %v12204 = vunpack.c.l.b16 %v11338
    %v12205 = vunpack.c.h.b16 %v11338
    %v12206 = vunpack.c.l.b16 %v11339
    %v12207 = vunpack.c.l.b16 %v11340
    %v12208 = vunpack.c.h.b16 %v11340
    %v12209 = vunpack.c.l.b16 %v11341
    %v12210 = vunpack.c.l.b16 %v11342
    %v12211 = vunpack.c.h.b16 %v11342
    %v12212 = vunpack.c.l.b16 %v11343
    %v12213 = vunpack.c.l.b16 %v11344
    %v12214 = vunpack.c.h.b16 %v11344
    %v12215 = vunpack.c.l.b16 %v11345
    %v12216 = vunpack.c.l.b16 %v11346
    %v12217 = vunpack.c.h.b16 %v11346
    %v12218 = vunpack.c.l.b16 %v11347
    %v12219 = vunpack.c.l.b16 %v11348
    %v12220 = vunpack.c.h.b16 %v11348
    %v12221 = vunpack.c.l.b16 %v11349
    %v12222 = vunpack.c.l.b16 %v11350
    %v12223 = vunpack.c.h.b16 %v11350
    %v12224 = vunpack.c.l.b16 %v11351
    %v12225 = vunpack.c.l.b16 %v11352
    %v12226 = vunpack.c.h.b16 %v11352
    %v12227 = vunpack.c.l.b16 %v11353
    %v12228 = vunpack.c.l.b16 %v11354
    %v12229 = vunpack.c.h.b16 %v11354
    %v12230 = vunpack.c.l.b16 %v11355
    %v12231 = vunpack.c.l.b16 %v11356
    %v12232 = vunpack.c.h.b16 %v11356
    %v12233 = vunpack.c.l.b16 %v11357
    %v12234 = vunpack.c.l.b16 %v11358
    %v12235 = vunpack.c.h.b16 %v11358
    %v12236 = vunpack.c.l.b16 %v11359
    %v12237 = vunpack.c.l.b16 %v11360
    %v12238 = vunpack.c.h.b16 %v11360
    %v12239 = vunpack.c.l.b16 %v11361
    %v12240 = vunpack.c.l.b16 %v11362
    %v12241 = vunpack.c.h.b16 %v11362
    %v12242 = vunpack.c.l.b16 %v11363
    %v12243 = vunpack.c.l.b16 %v11364
    %v12244 = vunpack.c.h.b16 %v11364
    %v12245 = vunpack.c.l.b16 %v11365
    %v12246 = vunpack.c.l.b16 %v11366
    %v12247 = vunpack.c.h.b16 %v11366
    %v12248 = vunpack.c.l.b16 %v11367
    %v12249 = vunpack.c.l.b16 %v11368
    %v12250 = vunpack.c.h.b16 %v11368
    %v12251 = vunpack.c.l.b16 %v11369
    %v12252 = vunpack.c.l.b16 %v11370
    %v12253 = vunpack.c.h.b16 %v11370
    %v12254 = vunpack.c.l.b16 %v11371
    %v12255 = vunpack.c.l.b16 %v11372
    %v12256 = vunpack.c.h.b16 %v11372
    %v12257 = vunpack.c.l.b16 %v11373
    %v12258 = vunpack.c.l.b16 %v11374
    %v12259 = vunpack.c.h.b16 %v11374
    %v12260 = vunpack.c.l.b16 %v11375
    %v12261 = vpack.c.b16 %v12120, %v12117
    %v12262 = vpack.c.b16 %v12121, %v12118
    %v12263 = vpack.c.b16 %v12122, %v12119
    %v12264 = vpack.c.b16 %v12126, %v12123
    %v12265 = vpack.c.b16 %v12127, %v12124
    %v12266 = vpack.c.b16 %v12128, %v12125
    %v12267 = vpack.c.b16 %v12132, %v12129
    %v12268 = vpack.c.b16 %v12133, %v12130
    %v12269 = vpack.c.b16 %v12134, %v12131
    %v12270 = vpack.c.b16 %v12138, %v12135
    %v12271 = vpack.c.b16 %v12139, %v12136
    %v12272 = vpack.c.b16 %v12140, %v12137
    %v12273 = vpack.c.b16 %v12144, %v12141
    %v12274 = vpack.c.b16 %v12145, %v12142
    %v12275 = vpack.c.b16 %v12146, %v12143
    %v12276 = vpack.c.b16 %v12150, %v12147
    %v12277 = vpack.c.b16 %v12151, %v12148
    %v12278 = vpack.c.b16 %v12152, %v12149
    %v12279 = vpack.c.b16 %v12156, %v12153
    %v12280 = vpack.c.b16 %v12157, %v12154
    %v12281 = vpack.c.b16 %v12158, %v12155
    %v12282 = vpack.c.b16 %v12162, %v12159
    %v12283 = vpack.c.b16 %v12163, %v12160
    %v12284 = vpack.c.b16 %v12164, %v12161
    %v12285 = vpack.c.b16 %v12168, %v12165
    %v12286 = vpack.c.b16 %v12169, %v12166
    %v12287 = vpack.c.b16 %v12170, %v12167
    %v12288 = vpack.c.b16 %v12174, %v12171
    %v12289 = vpack.c.b16 %v12175, %v12172
    %v12290 = vpack.c.b16 %v12176, %v12173
    %v12291 = vpack.c.b16 %v12180, %v12177
    %v12292 = vpack.c.b16 %v12181, %v12178
    %v12293 = vpack.c.b16 %v12182, %v12179
    %v12294 = vpack.c.b16 %v12186, %v12183
    %v12295 = vpack.c.b16 %v12187, %v12184
    %v12296 = vpack.c.b16 %v12188, %v12185
    %v12297 = vpack.c.b16 %v12192, %v12189
    %v12298 = vpack.c.b16 %v12193, %v12190
    %v12299 = vpack.c.b16 %v12194, %v12191
    %v12300 = vpack.c.b16 %v12198, %v12195
    %v12301 = vpack.c.b16 %v12199, %v12196
    %v12302 = vpack.c.b16 %v12200, %v12197
    %v12303 = vpack.c.b16 %v12204, %v12201
    %v12304 = vpack.c.b16 %v12205, %v12202
    %v12305 = vpack.c.b16 %v12206, %v12203
    %v12306 = vpack.c.b16 %v12210, %v12207
    %v12307 = vpack.c.b16 %v12211, %v12208
    %v12308 = vpack.c.b16 %v12212, %v12209
    %v12309 = vpack.c.b16 %v12216, %v12213
    %v12310 = vpack.c.b16 %v12217, %v12214
    %v12311 = vpack.c.b16 %v12218, %v12215
    %v12312 = vpack.c.b16 %v12222, %v12219
    %v12313 = vpack.c.b16 %v12223, %v12220
    %v12314 = vpack.c.b16 %v12224, %v12221
    %v12315 = vpack.c.b16 %v12228, %v12225
    %v12316 = vpack.c.b16 %v12229, %v12226
    %v12317 = vpack.c.b16 %v12230, %v12227
    %v12318 = vpack.c.b16 %v12234, %v12231
    %v12319 = vpack.c.b16 %v12235, %v12232
    %v12320 = vpack.c.b16 %v12236, %v12233
    %v12321 = vpack.c.b16 %v12240, %v12237
    %v12322 = vpack.c.b16 %v12241, %v12238
    %v12323 = vpack.c.b16 %v12242, %v12239
    %v12324 = vpack.c.b16 %v12246, %v12243
    %v12325 = vpack.c.b16 %v12247, %v12244
    %v12326 = vpack.c.b16 %v12248, %v12245
    %v12327 = vpack.c.b16 %v12252, %v12249
    %v12328 = vpack.c.b16 %v12253, %v12250
    %v12329 = vpack.c.b16 %v12254, %v12251
    %v12330 = vpack.c.b16 %v12258, %v12255
    %v12331 = vpack.c.b16 %v12259, %v12256
    %v12332 = vpack.c.b16 %v12260, %v12257
    %12405 = vmatpush.bf16.msra.mxu0 %v12282
    %12406 = vmatpush.bf16.msra.mxu0 %v12279
    %12407 = vmatpush.bf16.msra.mxu0 %v12276
    %12408 = vmatpush.bf16.msra.mxu0 %v12273
    %12409 = vmatpush.bf16.msra.mxu0 %v12270
    %12410 = vmatpush.bf16.msra.mxu0 %v12267
    %12411 = vmatpush.bf16.msra.mxu0 %v12264
    %12412 = vmatpush.bf16.msra.mxu0 %v12261
    %12413 = vmatmul.bf16.gmra.mxu0 %v11277
    %v12414 = vpop.f32.mrf.mxu0
    %v12415 = vadd.f32 %v11940, %v12414
    %v12416 = vpop.f32.mrf.mxu0
    %12417 = vdwg.mxu0
    %12418 = vmatpush.bf16.msra.mxu0 %v12306
    %12419 = vmatpush.bf16.msra.mxu0 %v12303
    %12420 = vmatpush.bf16.msra.mxu0 %v12300
    %12421 = vmatpush.bf16.msra.mxu0 %v12297
    %12422 = vmatpush.bf16.msra.mxu0 %v12294
    %12423 = vmatpush.bf16.msra.mxu0 %v12291
    %12424 = vmatpush.bf16.msra.mxu0 %v12288
    %12425 = vmatpush.bf16.msra.mxu0 %v12285
    %12426 = vmatmul.bf16.gmra.mxu0 %v11278
    %v12427 = vpop.f32.mrf.mxu0
    %v12428 = vadd.f32 %v12415, %v12427
    %v12429 = vpop.f32.mrf.mxu0
    %12430 = vdwg.mxu0
    %12431 = vmatpush.bf16.msra.mxu0 %v12330
    %12432 = vmatpush.bf16.msra.mxu0 %v12327
    %12433 = vmatpush.bf16.msra.mxu0 %v12324
    %12434 = vmatpush.bf16.msra.mxu0 %v12321
    %12435 = vmatpush.bf16.msra.mxu0 %v12318
    %12436 = vmatpush.bf16.msra.mxu0 %v12315
    %12437 = vmatpush.bf16.msra.mxu0 %v12312
    %12438 = vmatpush.bf16.msra.mxu0 %v12309
    %12439 = vmatmul.bf16.gmra.mxu0 %v11279
    %v12440 = vpop.f32.mrf.mxu0
    %v12441 = vadd.f32 %v12428, %v12440
    %v12442 = vpop.f32.mrf.mxu0
    %12443 = vdwg.mxu0
    %12444 = vmatpush.bf16.msra.mxu0 %v12283
    %12445 = vmatpush.bf16.msra.mxu0 %v12280
    %12446 = vmatpush.bf16.msra.mxu0 %v12277
    %12447 = vmatpush.bf16.msra.mxu0 %v12274
    %12448 = vmatpush.bf16.msra.mxu0 %v12271
    %12449 = vmatpush.bf16.msra.mxu0 %v12268
    %12450 = vmatpush.bf16.msra.mxu0 %v12265
    %12451 = vmatpush.bf16.msra.mxu0 %v12262
    %12452 = vmatmul.bf16.gmra.mxu0 %v11277
    %v12453 = vpop.f32.mrf.mxu0
    %v12454 = vadd.f32 %v11979, %v12453
    %v12455 = vpop.f32.mrf.mxu0
    %12456 = vdwg.mxu0
    %12457 = vmatpush.bf16.msra.mxu0 %v12307
    %12458 = vmatpush.bf16.msra.mxu0 %v12304
    %12459 = vmatpush.bf16.msra.mxu0 %v12301
    %12460 = vmatpush.bf16.msra.mxu0 %v12298
    %12461 = vmatpush.bf16.msra.mxu0 %v12295
    %12462 = vmatpush.bf16.msra.mxu0 %v12292
    %12463 = vmatpush.bf16.msra.mxu0 %v12289
    %12464 = vmatpush.bf16.msra.mxu0 %v12286
    %12465 = vmatmul.bf16.gmra.mxu0 %v11278
    %v12466 = vpop.f32.mrf.mxu0
    %v12467 = vadd.f32 %v12454, %v12466
    %v12468 = vpop.f32.mrf.mxu0
    %12469 = vdwg.mxu0
    %12470 = vmatpush.bf16.msra.mxu0 %v12331
    %12471 = vmatpush.bf16.msra.mxu0 %v12328
    %12472 = vmatpush.bf16.msra.mxu0 %v12325
    %12473 = vmatpush.bf16.msra.mxu0 %v12322
    %12474 = vmatpush.bf16.msra.mxu0 %v12319
    %12475 = vmatpush.bf16.msra.mxu0 %v12316
    %12476 = vmatpush.bf16.msra.mxu0 %v12313
    %12477 = vmatpush.bf16.msra.mxu0 %v12310
    %12478 = vmatmul.bf16.gmra.mxu0 %v11279
    %v12479 = vpop.f32.mrf.mxu0
    %v12480 = vadd.f32 %v12467, %v12479
    %v12481 = vpop.f32.mrf.mxu0
    %12482 = vdwg.mxu0
    %12483 = vmatpush.bf16.msra.mxu0 %v12284
    %12484 = vmatpush.bf16.msra.mxu0 %v12281
    %12485 = vmatpush.bf16.msra.mxu0 %v12278
    %12486 = vmatpush.bf16.msra.mxu0 %v12275
    %12487 = vmatpush.bf16.msra.mxu0 %v12272
    %12488 = vmatpush.bf16.msra.mxu0 %v12269
    %12489 = vmatpush.bf16.msra.mxu0 %v12266
    %12490 = vmatpush.bf16.msra.mxu0 %v12263
    %12491 = vmatmul.bf16.gmra.mxu0 %v11277
    %v12492 = vpop.f32.mrf.mxu0
    %v12493 = vadd.f32 %v12018, %v12492
    %v12494 = vpop.f32.mrf.mxu0
    %12495 = vdwg.mxu0
    %12496 = vmatpush.bf16.msra.mxu0 %v12308
    %12497 = vmatpush.bf16.msra.mxu0 %v12305
    %12498 = vmatpush.bf16.msra.mxu0 %v12302
    %12499 = vmatpush.bf16.msra.mxu0 %v12299
    %12500 = vmatpush.bf16.msra.mxu0 %v12296
    %12501 = vmatpush.bf16.msra.mxu0 %v12293
    %12502 = vmatpush.bf16.msra.mxu0 %v12290
    %12503 = vmatpush.bf16.msra.mxu0 %v12287
    %12504 = vmatmul.bf16.gmra.mxu0 %v11278
    %v12505 = vpop.f32.mrf.mxu0
    %v12506 = vadd.f32 %v12493, %v12505
    %v12507 = vpop.f32.mrf.mxu0
    %12508 = vdwg.mxu0
    %12509 = vmatpush.bf16.msra.mxu0 %v12332
    %12510 = vmatpush.bf16.msra.mxu0 %v12329
    %12511 = vmatpush.bf16.msra.mxu0 %v12326
    %12512 = vmatpush.bf16.msra.mxu0 %v12323
    %12513 = vmatpush.bf16.msra.mxu0 %v12320
    %12514 = vmatpush.bf16.msra.mxu0 %v12317
    %12515 = vmatpush.bf16.msra.mxu0 %v12314
    %12516 = vmatpush.bf16.msra.mxu0 %v12311
    %12517 = vmatmul.bf16.gmra.mxu0 %v11279
    %v12518 = vpop.f32.mrf.mxu0
    %v12519 = vadd.f32 %v12506, %v12518
    %v12520 = vpop.f32.mrf.mxu0
    %12521 = vdwg.mxu0
    %s12522 = scalar_lea.vmem %s14, 2
    %v12523 = vld [vmem:[%s12522] sm:$0x1]
    %v12525 = vsel %vm11224, %v12523, 0
    %12527 = vmatpush.bf16.msra.mxu0 0
    %12528 = vmatpush.bf16.msra.mxu0 0
    %12529 = vmatpush.bf16.msra.mxu0 0
    %12530 = vmatpush.bf16.msra.mxu0 0
    %12531 = vmatpush.bf16.msra.mxu0 0
    %12532 = vmatpush.bf16.msra.mxu0 0
    %12533 = vmatpush.bf16.msra.mxu0 0
    %12534 = vmatpush.bf16.msra.mxu0 %v11230
    %12535 = vmatmul.bf16.gmra.mxu0 %v12525
    %v12536 = vpop.f32.mrf.mxu0
    %v12537 = vadd.f32 0.0, %v12536
    %v12538 = vpop.f32.mrf.mxu0
    %12539 = vdwg.mxu0
    %12540 = vmatpush.bf16.msra.mxu0 0
    %12541 = vmatpush.bf16.msra.mxu0 0
    %12542 = vmatpush.bf16.msra.mxu0 0
    %12543 = vmatpush.bf16.msra.mxu0 0
    %12544 = vmatpush.bf16.msra.mxu0 0
    %12545 = vmatpush.bf16.msra.mxu0 0
    %12546 = vmatpush.bf16.msra.mxu0 0
    %12547 = vmatpush.bf16.msra.mxu0 %v11233
    %12548 = vmatmul.bf16.gmra.mxu0 %v12525
    %v12549 = vpop.f32.mrf.mxu0
    %v12550 = vadd.f32 0.0, %v12549
    %v12551 = vpop.f32.mrf.mxu0
    %12552 = vdwg.mxu0
    %12553 = vmatpush.bf16.msra.mxu0 0
    %12554 = vmatpush.bf16.msra.mxu0 0
    %12555 = vmatpush.bf16.msra.mxu0 0
    %12556 = vmatpush.bf16.msra.mxu0 0
    %12557 = vmatpush.bf16.msra.mxu0 0
    %12558 = vmatpush.bf16.msra.mxu0 0
    %12559 = vmatpush.bf16.msra.mxu0 0
    %12560 = vmatpush.bf16.msra.mxu0 %v11236
    %12561 = vmatmul.bf16.gmra.mxu0 %v12525
    %v12562 = vpop.f32.mrf.mxu0
    %v12563 = vadd.f32 0.0, %v12562
    %v12564 = vpop.f32.mrf.mxu0
    %12565 = vdwg.mxu0
    %v12566 = vpack.c.bf16 %v12537, %v12537
    %v12567 = vpack.c.bf16 %v12550, %v12550
    %v12568 = vpack.c.bf16 %v12563, %v12563
    %s12569 = scalar_lea.vmem [#allocation21], 1152
    %v12570 = vld [vmem:[%s12569] sm:$0xff]
    %v12571 = vld [vmem:[%s12569 + $0x8] sm:$0xf]
    %v12572 = vld [vmem:[%s12569 + $0xc] sm:$0xff]
    %v12573 = vld [vmem:[%s12569 + $0x14] sm:$0xf]
    %v12574 = vld [vmem:[%s12569 + $0x18] sm:$0xff]
    %v12575 = vld [vmem:[%s12569 + $0x20] sm:$0xf]
    %v12576 = vld [vmem:[%s12569 + $0x24] sm:$0xff]
    %v12577 = vld [vmem:[%s12569 + $0x2c] sm:$0xf]
    %v12578 = vld [vmem:[%s12569 + $0x30] sm:$0xff]
    %v12579 = vld [vmem:[%s12569 + $0x38] sm:$0xf]
    %v12580 = vld [vmem:[%s12569 + $0x3c] sm:$0xff]
    %v12581 = vld [vmem:[%s12569 + $0x44] sm:$0xf]
    %v12582 = vld [vmem:[%s12569 + $0x48] sm:$0xff]
    %v12583 = vld [vmem:[%s12569 + $0x50] sm:$0xf]
    %v12584 = vld [vmem:[%s12569 + $0x54] sm:$0xff]
    %v12585 = vld [vmem:[%s12569 + $0x5c] sm:$0xf]
    %v12586 = vld [vmem:[%s12569 + $0x60] sm:$0xff]
    %v12587 = vld [vmem:[%s12569 + $0x68] sm:$0xf]
    %v12588 = vld [vmem:[%s12569 + $0x6c] sm:$0xff]
    %v12589 = vld [vmem:[%s12569 + $0x74] sm:$0xf]
    %v12590 = vld [vmem:[%s12569 + $0x78] sm:$0xff]
    %v12591 = vld [vmem:[%s12569 + $0x80] sm:$0xf]
    %v12592 = vld [vmem:[%s12569 + $0x84] sm:$0xff]
    %v12593 = vld [vmem:[%s12569 + $0x8c] sm:$0xf]
    %v12594 = vld [vmem:[%s12569 + $0x90] sm:$0xff]
    %v12595 = vld [vmem:[%s12569 + $0x98] sm:$0xf]
    %v12596 = vld [vmem:[%s12569 + $0x9c] sm:$0xff]
    %v12597 = vld [vmem:[%s12569 + $0xa4] sm:$0xf]
    %v12598 = vld [vmem:[%s12569 + $0xa8] sm:$0xff]
    %v12599 = vld [vmem:[%s12569 + $0xb0] sm:$0xf]
    %v12600 = vld [vmem:[%s12569 + $0xb4] sm:$0xff]
    %v12601 = vld [vmem:[%s12569 + $0xbc] sm:$0xf]
    %v12602 = vld [vmem:[%s12569 + $0xc0] sm:$0xff]
    %v12603 = vld [vmem:[%s12569 + $0xc8] sm:$0xf]
    %v12604 = vld [vmem:[%s12569 + $0xcc] sm:$0xff]
    %v12605 = vld [vmem:[%s12569 + $0xd4] sm:$0xf]
    %v12606 = vld [vmem:[%s12569 + $0xd8] sm:$0xff]
    %v12607 = vld [vmem:[%s12569 + $0xe0] sm:$0xf]
    %v12608 = vld [vmem:[%s12569 + $0xe4] sm:$0xff]
    %v12609 = vld [vmem:[%s12569 + $0xec] sm:$0xf]
    %v12610 = vld [vmem:[%s12569 + $0xf0] sm:$0xff]
    %v12611 = vld [vmem:[%s12569 + $0xf8] sm:$0xf]
    %v12612 = vld [vmem:[%s12569 + $0xfc] sm:$0xff]
    %v12613 = vld [vmem:[%s12569 + $0x104] sm:$0xf]
    %v12614 = vld [vmem:[%s12569 + $0x108] sm:$0xff]
    %v12615 = vld [vmem:[%s12569 + $0x110] sm:$0xf]
    %v12616 = vld [vmem:[%s12569 + $0x114] sm:$0xff]
    %v12617 = vld [vmem:[%s12569 + $0x11c] sm:$0xf]
    %v12618 = vld [vmem:[%s12569 + $0x120] sm:$0xff]
    %v12619 = vld [vmem:[%s12569 + $0x128] sm:$0xf]
    %v12620 = vld [vmem:[%s12569 + $0x12c] sm:$0xff]
    %v12621 = vld [vmem:[%s12569 + $0x134] sm:$0xf]
    %v12622 = vld [vmem:[%s12569 + $0x138] sm:$0xff]
    %v12623 = vld [vmem:[%s12569 + $0x140] sm:$0xf]
    %v12624 = vld [vmem:[%s12569 + $0x144] sm:$0xff]
    %v12625 = vld [vmem:[%s12569 + $0x14c] sm:$0xf]
    %v12626 = vld [vmem:[%s12569 + $0x150] sm:$0xff]
    %v12627 = vld [vmem:[%s12569 + $0x158] sm:$0xf]
    %v12628 = vld [vmem:[%s12569 + $0x15c] sm:$0xff]
    %v12629 = vld [vmem:[%s12569 + $0x164] sm:$0xf]
    %v12630 = vld [vmem:[%s12569 + $0x168] sm:$0xff]
    %v12631 = vld [vmem:[%s12569 + $0x170] sm:$0xf]
    %v12632 = vld [vmem:[%s12569 + $0x174] sm:$0xff]
    %v12633 = vld [vmem:[%s12569 + $0x17c] sm:$0xf]
    %v12634 = vld [vmem:[%s12569 + $0x180] sm:$0xff]
    %v12635 = vld [vmem:[%s12569 + $0x188] sm:$0xf]
    %v12636 = vld [vmem:[%s12569 + $0x18c] sm:$0xff]
    %v12637 = vld [vmem:[%s12569 + $0x194] sm:$0xf]
    %v12638 = vld [vmem:[%s12569 + $0x198] sm:$0xff]
    %v12639 = vld [vmem:[%s12569 + $0x1a0] sm:$0xf]
    %v12640 = vld [vmem:[%s12569 + $0x1a4] sm:$0xff]
    %v12641 = vld [vmem:[%s12569 + $0x1ac] sm:$0xf]
    %v12642 = vld [vmem:[%s12569 + $0x1b0] sm:$0xff]
    %v12643 = vld [vmem:[%s12569 + $0x1b8] sm:$0xf]
    %v12644 = vld [vmem:[%s12569 + $0x1bc] sm:$0xff]
    %v12645 = vld [vmem:[%s12569 + $0x1c4] sm:$0xf]
    %v12646 = vld [vmem:[%s12569 + $0x1c8] sm:$0xff]
    %v12647 = vld [vmem:[%s12569 + $0x1d0] sm:$0xf]
    %v12648 = vld [vmem:[%s12569 + $0x1d4] sm:$0xff]
    %v12649 = vld [vmem:[%s12569 + $0x1dc] sm:$0xf]
    %v12650 = vld [vmem:[%s12569 + $0x1e0] sm:$0xff]
    %v12651 = vld [vmem:[%s12569 + $0x1e8] sm:$0xf]
    %v12652 = vld [vmem:[%s12569 + $0x1ec] sm:$0xff]
    %v12653 = vld [vmem:[%s12569 + $0x1f4] sm:$0xf]
    %v12654 = vld [vmem:[%s12569 + $0x1f8] sm:$0xff]
    %v12655 = vld [vmem:[%s12569 + $0x200] sm:$0xf]
    %v12656 = vld [vmem:[%s12569 + $0x204] sm:$0xff]
    %v12657 = vld [vmem:[%s12569 + $0x20c] sm:$0xf]
    %v12658 = vld [vmem:[%s12569 + $0x210] sm:$0xff]
    %v12659 = vld [vmem:[%s12569 + $0x218] sm:$0xf]
    %v12660 = vld [vmem:[%s12569 + $0x21c] sm:$0xff]
    %v12661 = vld [vmem:[%s12569 + $0x224] sm:$0xf]
    %v12662 = vld [vmem:[%s12569 + $0x228] sm:$0xff]
    %v12663 = vld [vmem:[%s12569 + $0x230] sm:$0xf]
    %v12664 = vld [vmem:[%s12569 + $0x234] sm:$0xff]
    %v12665 = vld [vmem:[%s12569 + $0x23c] sm:$0xf]
    %v12762 = vunpack.c.l.b16 %v12570
    %v12763 = vunpack.c.h.b16 %v12570
    %v12764 = vunpack.c.l.b16 %v12571
    %v12765 = vunpack.c.l.b16 %v12572
    %v12766 = vunpack.c.h.b16 %v12572
    %v12767 = vunpack.c.l.b16 %v12573
    %v12768 = vunpack.c.l.b16 %v12574
    %v12769 = vunpack.c.h.b16 %v12574
    %v12770 = vunpack.c.l.b16 %v12575
    %v12771 = vunpack.c.l.b16 %v12576
    %v12772 = vunpack.c.h.b16 %v12576
    %v12773 = vunpack.c.l.b16 %v12577
    %v12774 = vunpack.c.l.b16 %v12578
    %v12775 = vunpack.c.h.b16 %v12578
    %v12776 = vunpack.c.l.b16 %v12579
    %v12777 = vunpack.c.l.b16 %v12580
    %v12778 = vunpack.c.h.b16 %v12580
    %v12779 = vunpack.c.l.b16 %v12581
    %v12780 = vunpack.c.l.b16 %v12582
    %v12781 = vunpack.c.h.b16 %v12582
    %v12782 = vunpack.c.l.b16 %v12583
    %v12783 = vunpack.c.l.b16 %v12584
    %v12784 = vunpack.c.h.b16 %v12584
    %v12785 = vunpack.c.l.b16 %v12585
    %v12786 = vunpack.c.l.b16 %v12586
    %v12787 = vunpack.c.h.b16 %v12586
    %v12788 = vunpack.c.l.b16 %v12587
    %v12789 = vunpack.c.l.b16 %v12588
    %v12790 = vunpack.c.h.b16 %v12588
    %v12791 = vunpack.c.l.b16 %v12589
    %v12792 = vunpack.c.l.b16 %v12590
    %v12793 = vunpack.c.h.b16 %v12590
    %v12794 = vunpack.c.l.b16 %v12591
    %v12795 = vunpack.c.l.b16 %v12592
    %v12796 = vunpack.c.h.b16 %v12592
    %v12797 = vunpack.c.l.b16 %v12593
    %v12798 = vunpack.c.l.b16 %v12594
    %v12799 = vunpack.c.h.b16 %v12594
    %v12800 = vunpack.c.l.b16 %v12595
    %v12801 = vunpack.c.l.b16 %v12596
    %v12802 = vunpack.c.h.b16 %v12596
    %v12803 = vunpack.c.l.b16 %v12597
    %v12804 = vunpack.c.l.b16 %v12598
    %v12805 = vunpack.c.h.b16 %v12598
    %v12806 = vunpack.c.l.b16 %v12599
    %v12807 = vunpack.c.l.b16 %v12600
    %v12808 = vunpack.c.h.b16 %v12600
    %v12809 = vunpack.c.l.b16 %v12601
    %v12810 = vunpack.c.l.b16 %v12602
    %v12811 = vunpack.c.h.b16 %v12602
    %v12812 = vunpack.c.l.b16 %v12603
    %v12813 = vunpack.c.l.b16 %v12604
    %v12814 = vunpack.c.h.b16 %v12604
    %v12815 = vunpack.c.l.b16 %v12605
    %v12816 = vunpack.c.l.b16 %v12606
    %v12817 = vunpack.c.h.b16 %v12606
    %v12818 = vunpack.c.l.b16 %v12607
    %v12819 = vunpack.c.l.b16 %v12608
    %v12820 = vunpack.c.h.b16 %v12608
    %v12821 = vunpack.c.l.b16 %v12609
    %v12822 = vunpack.c.l.b16 %v12610
    %v12823 = vunpack.c.h.b16 %v12610
    %v12824 = vunpack.c.l.b16 %v12611
    %v12825 = vunpack.c.l.b16 %v12612
    %v12826 = vunpack.c.h.b16 %v12612
    %v12827 = vunpack.c.l.b16 %v12613
    %v12828 = vunpack.c.l.b16 %v12614
    %v12829 = vunpack.c.h.b16 %v12614
    %v12830 = vunpack.c.l.b16 %v12615
    %v12831 = vunpack.c.l.b16 %v12616
    %v12832 = vunpack.c.h.b16 %v12616
    %v12833 = vunpack.c.l.b16 %v12617
    %v12834 = vunpack.c.l.b16 %v12618
    %v12835 = vunpack.c.h.b16 %v12618
    %v12836 = vunpack.c.l.b16 %v12619
    %v12837 = vunpack.c.l.b16 %v12620
    %v12838 = vunpack.c.h.b16 %v12620
    %v12839 = vunpack.c.l.b16 %v12621
    %v12840 = vunpack.c.l.b16 %v12622
    %v12841 = vunpack.c.h.b16 %v12622
    %v12842 = vunpack.c.l.b16 %v12623
    %v12843 = vunpack.c.l.b16 %v12624
    %v12844 = vunpack.c.h.b16 %v12624
    %v12845 = vunpack.c.l.b16 %v12625
    %v12846 = vunpack.c.l.b16 %v12626
    %v12847 = vunpack.c.h.b16 %v12626
    %v12848 = vunpack.c.l.b16 %v12627
    %v12849 = vunpack.c.l.b16 %v12628
    %v12850 = vunpack.c.h.b16 %v12628
    %v12851 = vunpack.c.l.b16 %v12629
    %v12852 = vunpack.c.l.b16 %v12630
    %v12853 = vunpack.c.h.b16 %v12630
    %v12854 = vunpack.c.l.b16 %v12631
    %v12855 = vunpack.c.l.b16 %v12632
    %v12856 = vunpack.c.h.b16 %v12632
    %v12857 = vunpack.c.l.b16 %v12633
    %v12858 = vunpack.c.l.b16 %v12634
    %v12859 = vunpack.c.h.b16 %v12634
    %v12860 = vunpack.c.l.b16 %v12635
    %v12861 = vunpack.c.l.b16 %v12636
    %v12862 = vunpack.c.h.b16 %v12636
    %v12863 = vunpack.c.l.b16 %v12637
    %v12864 = vunpack.c.l.b16 %v12638
    %v12865 = vunpack.c.h.b16 %v12638
    %v12866 = vunpack.c.l.b16 %v12639
    %v12867 = vunpack.c.l.b16 %v12640
    %v12868 = vunpack.c.h.b16 %v12640
    %v12869 = vunpack.c.l.b16 %v12641
    %v12870 = vunpack.c.l.b16 %v12642
    %v12871 = vunpack.c.h.b16 %v12642
    %v12872 = vunpack.c.l.b16 %v12643
    %v12873 = vunpack.c.l.b16 %v12644
    %v12874 = vunpack.c.h.b16 %v12644
    %v12875 = vunpack.c.l.b16 %v12645
    %v12876 = vunpack.c.l.b16 %v12646
    %v12877 = vunpack.c.h.b16 %v12646
    %v12878 = vunpack.c.l.b16 %v12647
    %v12879 = vunpack.c.l.b16 %v12648
    %v12880 = vunpack.c.h.b16 %v12648
    %v12881 = vunpack.c.l.b16 %v12649
    %v12882 = vunpack.c.l.b16 %v12650
    %v12883 = vunpack.c.h.b16 %v12650
    %v12884 = vunpack.c.l.b16 %v12651
    %v12885 = vunpack.c.l.b16 %v12652
    %v12886 = vunpack.c.h.b16 %v12652
    %v12887 = vunpack.c.l.b16 %v12653
    %v12888 = vunpack.c.l.b16 %v12654
    %v12889 = vunpack.c.h.b16 %v12654
    %v12890 = vunpack.c.l.b16 %v12655
    %v12891 = vunpack.c.l.b16 %v12656
    %v12892 = vunpack.c.h.b16 %v12656
    %v12893 = vunpack.c.l.b16 %v12657
    %v12894 = vunpack.c.l.b16 %v12658
    %v12895 = vunpack.c.h.b16 %v12658
    %v12896 = vunpack.c.l.b16 %v12659
    %v12897 = vunpack.c.l.b16 %v12660
    %v12898 = vunpack.c.h.b16 %v12660
    %v12899 = vunpack.c.l.b16 %v12661
    %v12900 = vunpack.c.l.b16 %v12662
    %v12901 = vunpack.c.h.b16 %v12662
    %v12902 = vunpack.c.l.b16 %v12663
    %v12903 = vunpack.c.l.b16 %v12664
    %v12904 = vunpack.c.h.b16 %v12664
    %v12905 = vunpack.c.l.b16 %v12665
    %v12906 = vpack.c.b16 %v12765, %v12762
    %v12907 = vpack.c.b16 %v12766, %v12763
    %v12908 = vpack.c.b16 %v12767, %v12764
    %v12909 = vpack.c.b16 %v12771, %v12768
    %v12910 = vpack.c.b16 %v12772, %v12769
    %v12911 = vpack.c.b16 %v12773, %v12770
    %v12912 = vpack.c.b16 %v12777, %v12774
    %v12913 = vpack.c.b16 %v12778, %v12775
    %v12914 = vpack.c.b16 %v12779, %v12776
    %v12915 = vpack.c.b16 %v12783, %v12780
    %v12916 = vpack.c.b16 %v12784, %v12781
    %v12917 = vpack.c.b16 %v12785, %v12782
    %v12918 = vpack.c.b16 %v12789, %v12786
    %v12919 = vpack.c.b16 %v12790, %v12787
    %v12920 = vpack.c.b16 %v12791, %v12788
    %v12921 = vpack.c.b16 %v12795, %v12792
    %v12922 = vpack.c.b16 %v12796, %v12793
    %v12923 = vpack.c.b16 %v12797, %v12794
    %v12924 = vpack.c.b16 %v12801, %v12798
    %v12925 = vpack.c.b16 %v12802, %v12799
    %v12926 = vpack.c.b16 %v12803, %v12800
    %v12927 = vpack.c.b16 %v12807, %v12804
    %v12928 = vpack.c.b16 %v12808, %v12805
    %v12929 = vpack.c.b16 %v12809, %v12806
    %v12930 = vpack.c.b16 %v12813, %v12810
    %v12931 = vpack.c.b16 %v12814, %v12811
    %v12932 = vpack.c.b16 %v12815, %v12812
    %v12933 = vpack.c.b16 %v12819, %v12816
    %v12934 = vpack.c.b16 %v12820, %v12817
    %v12935 = vpack.c.b16 %v12821, %v12818
    %v12936 = vpack.c.b16 %v12825, %v12822
    %v12937 = vpack.c.b16 %v12826, %v12823
    %v12938 = vpack.c.b16 %v12827, %v12824
    %v12939 = vpack.c.b16 %v12831, %v12828
    %v12940 = vpack.c.b16 %v12832, %v12829
    %v12941 = vpack.c.b16 %v12833, %v12830
    %v12942 = vpack.c.b16 %v12837, %v12834
    %v12943 = vpack.c.b16 %v12838, %v12835
    %v12944 = vpack.c.b16 %v12839, %v12836
    %v12945 = vpack.c.b16 %v12843, %v12840
    %v12946 = vpack.c.b16 %v12844, %v12841
    %v12947 = vpack.c.b16 %v12845, %v12842
    %v12948 = vpack.c.b16 %v12849, %v12846
    %v12949 = vpack.c.b16 %v12850, %v12847
    %v12950 = vpack.c.b16 %v12851, %v12848
    %v12951 = vpack.c.b16 %v12855, %v12852
    %v12952 = vpack.c.b16 %v12856, %v12853
    %v12953 = vpack.c.b16 %v12857, %v12854
    %v12954 = vpack.c.b16 %v12861, %v12858
    %v12955 = vpack.c.b16 %v12862, %v12859
    %v12956 = vpack.c.b16 %v12863, %v12860
    %v12957 = vpack.c.b16 %v12867, %v12864
    %v12958 = vpack.c.b16 %v12868, %v12865
    %v12959 = vpack.c.b16 %v12869, %v12866
    %v12960 = vpack.c.b16 %v12873, %v12870
    %v12961 = vpack.c.b16 %v12874, %v12871
    %v12962 = vpack.c.b16 %v12875, %v12872
    %v12963 = vpack.c.b16 %v12879, %v12876
    %v12964 = vpack.c.b16 %v12880, %v12877
    %v12965 = vpack.c.b16 %v12881, %v12878
    %v12966 = vpack.c.b16 %v12885, %v12882
    %v12967 = vpack.c.b16 %v12886, %v12883
    %v12968 = vpack.c.b16 %v12887, %v12884
    %v12969 = vpack.c.b16 %v12891, %v12888
    %v12970 = vpack.c.b16 %v12892, %v12889
    %v12971 = vpack.c.b16 %v12893, %v12890
    %v12972 = vpack.c.b16 %v12897, %v12894
    %v12973 = vpack.c.b16 %v12898, %v12895
    %v12974 = vpack.c.b16 %v12899, %v12896
    %v12975 = vpack.c.b16 %v12903, %v12900
    %v12976 = vpack.c.b16 %v12904, %v12901
    %v12977 = vpack.c.b16 %v12905, %v12902
    %13050 = vmatpush.bf16.msra.mxu0 %v12927
    %13051 = vmatpush.bf16.msra.mxu0 %v12924
    %13052 = vmatpush.bf16.msra.mxu0 %v12921
    %13053 = vmatpush.bf16.msra.mxu0 %v12918
    %13054 = vmatpush.bf16.msra.mxu0 %v12915
    %13055 = vmatpush.bf16.msra.mxu0 %v12912
    %13056 = vmatpush.bf16.msra.mxu0 %v12909
    %13057 = vmatpush.bf16.msra.mxu0 %v12906
    %13058 = vmatmul.bf16.gmra.mxu0 %v12566
    %v13059 = vpop.f32.mrf.mxu0
    %v13060 = vadd.f32 0.0, %v13059
    %v13061 = vpop.f32.mrf.mxu0
    %13062 = vdwg.mxu0
    %13063 = vmatpush.bf16.msra.mxu0 %v12951
    %13064 = vmatpush.bf16.msra.mxu0 %v12948
    %13065 = vmatpush.bf16.msra.mxu0 %v12945
    %13066 = vmatpush.bf16.msra.mxu0 %v12942
    %13067 = vmatpush.bf16.msra.mxu0 %v12939
    %13068 = vmatpush.bf16.msra.mxu0 %v12936
    %13069 = vmatpush.bf16.msra.mxu0 %v12933
    %13070 = vmatpush.bf16.msra.mxu0 %v12930
    %13071 = vmatmul.bf16.gmra.mxu0 %v12567
    %v13072 = vpop.f32.mrf.mxu0
    %v13073 = vadd.f32 %v13060, %v13072
    %v13074 = vpop.f32.mrf.mxu0
    %13075 = vdwg.mxu0
    %13076 = vmatpush.bf16.msra.mxu0 %v12975
    %13077 = vmatpush.bf16.msra.mxu0 %v12972
    %13078 = vmatpush.bf16.msra.mxu0 %v12969
    %13079 = vmatpush.bf16.msra.mxu0 %v12966
    %13080 = vmatpush.bf16.msra.mxu0 %v12963
    %13081 = vmatpush.bf16.msra.mxu0 %v12960
    %13082 = vmatpush.bf16.msra.mxu0 %v12957
    %13083 = vmatpush.bf16.msra.mxu0 %v12954
    %13084 = vmatmul.bf16.gmra.mxu0 %v12568
    %v13085 = vpop.f32.mrf.mxu0
    %v13086 = vadd.f32 %v13073, %v13085
    %v13087 = vpop.f32.mrf.mxu0
    %13088 = vdwg.mxu0
    %13089 = vmatpush.bf16.msra.mxu0 %v12928
    %13090 = vmatpush.bf16.msra.mxu0 %v12925
    %13091 = vmatpush.bf16.msra.mxu0 %v12922
    %13092 = vmatpush.bf16.msra.mxu0 %v12919
    %13093 = vmatpush.bf16.msra.mxu0 %v12916
    %13094 = vmatpush.bf16.msra.mxu0 %v12913
    %13095 = vmatpush.bf16.msra.mxu0 %v12910
    %13096 = vmatpush.bf16.msra.mxu0 %v12907
    %13097 = vmatmul.bf16.gmra.mxu0 %v12566
    %v13098 = vpop.f32.mrf.mxu0
    %v13099 = vadd.f32 0.0, %v13098
    %v13100 = vpop.f32.mrf.mxu0
    %13101 = vdwg.mxu0
    %13102 = vmatpush.bf16.msra.mxu0 %v12952
    %13103 = vmatpush.bf16.msra.mxu0 %v12949
    %13104 = vmatpush.bf16.msra.mxu0 %v12946
    %13105 = vmatpush.bf16.msra.mxu0 %v12943
    %13106 = vmatpush.bf16.msra.mxu0 %v12940
    %13107 = vmatpush.bf16.msra.mxu0 %v12937
    %13108 = vmatpush.bf16.msra.mxu0 %v12934
    %13109 = vmatpush.bf16.msra.mxu0 %v12931
    %13110 = vmatmul.bf16.gmra.mxu0 %v12567
    %v13111 = vpop.f32.mrf.mxu0
    %v13112 = vadd.f32 %v13099, %v13111
    %v13113 = vpop.f32.mrf.mxu0
    %13114 = vdwg.mxu0
    %13115 = vmatpush.bf16.msra.mxu0 %v12976
    %13116 = vmatpush.bf16.msra.mxu0 %v12973
    %13117 = vmatpush.bf16.msra.mxu0 %v12970
    %13118 = vmatpush.bf16.msra.mxu0 %v12967
    %13119 = vmatpush.bf16.msra.mxu0 %v12964
    %13120 = vmatpush.bf16.msra.mxu0 %v12961
    %13121 = vmatpush.bf16.msra.mxu0 %v12958
    %13122 = vmatpush.bf16.msra.mxu0 %v12955
    %13123 = vmatmul.bf16.gmra.mxu0 %v12568
    %v13124 = vpop.f32.mrf.mxu0
    %v13125 = vadd.f32 %v13112, %v13124
    %v13126 = vpop.f32.mrf.mxu0
    %13127 = vdwg.mxu0
    %13128 = vmatpush.bf16.msra.mxu0 %v12929
    %13129 = vmatpush.bf16.msra.mxu0 %v12926
    %13130 = vmatpush.bf16.msra.mxu0 %v12923
    %13131 = vmatpush.bf16.msra.mxu0 %v12920
    %13132 = vmatpush.bf16.msra.mxu0 %v12917
    %13133 = vmatpush.bf16.msra.mxu0 %v12914
    %13134 = vmatpush.bf16.msra.mxu0 %v12911
    %13135 = vmatpush.bf16.msra.mxu0 %v12908
    %13136 = vmatmul.bf16.gmra.mxu0 %v12566
    %v13137 = vpop.f32.mrf.mxu0
    %v13138 = vadd.f32 0.0, %v13137
    %v13139 = vpop.f32.mrf.mxu0
    %13140 = vdwg.mxu0
    %13141 = vmatpush.bf16.msra.mxu0 %v12953
    %13142 = vmatpush.bf16.msra.mxu0 %v12950
    %13143 = vmatpush.bf16.msra.mxu0 %v12947
    %13144 = vmatpush.bf16.msra.mxu0 %v12944
    %13145 = vmatpush.bf16.msra.mxu0 %v12941
    %13146 = vmatpush.bf16.msra.mxu0 %v12938
    %13147 = vmatpush.bf16.msra.mxu0 %v12935
    %13148 = vmatpush.bf16.msra.mxu0 %v12932
    %13149 = vmatmul.bf16.gmra.mxu0 %v12567
    %v13150 = vpop.f32.mrf.mxu0
    %v13151 = vadd.f32 %v13138, %v13150
    %v13152 = vpop.f32.mrf.mxu0
    %13153 = vdwg.mxu0
    %13154 = vmatpush.bf16.msra.mxu0 %v12977
    %13155 = vmatpush.bf16.msra.mxu0 %v12974
    %13156 = vmatpush.bf16.msra.mxu0 %v12971
    %13157 = vmatpush.bf16.msra.mxu0 %v12968
    %13158 = vmatpush.bf16.msra.mxu0 %v12965
    %13159 = vmatpush.bf16.msra.mxu0 %v12962
    %13160 = vmatpush.bf16.msra.mxu0 %v12959
    %13161 = vmatpush.bf16.msra.mxu0 %v12956
    %13162 = vmatmul.bf16.gmra.mxu0 %v12568
    %v13163 = vpop.f32.mrf.mxu0
    %v13164 = vadd.f32 %v13151, %v13163
    %v13165 = vpop.f32.mrf.mxu0
    %13166 = vdwg.mxu0
    %v13167 = vadd.f32 %v12441, %v13086
    %v13168 = vadd.f32 %v12480, %v13125
    %v13169 = vadd.f32 %v12519, %v13164
    %v13170 = vld [vmem:[#allocation22] sm:$0x7]
    %v13172 = vperm.slane %v13170, 0
    %v13173 = vperm.slane %v13170, 1
    %v13174 = vperm.slane %v13170, 2
    %v13178 = vadd.f32 %v13167, %v13172
    %v13179 = vadd.f32 %v13168, %v13173
    %v13180 = vadd.f32 %v13169, %v13174
    %vm13181 = vcmp.ge.f32.partialorder %v13178, 0.0
    %vm13182 = vcmp.ge.f32.partialorder %v13179, 0.0
    %vm13183 = vcmp.ge.f32.partialorder %v13180, 0.0
    %v13184 = vmul.f32 %v13178, 0.15
    %v13185 = vmul.f32 %v13179, 0.15
    %v13186 = vmul.f32 %v13180, 0.15
    %v13187 = vsel %vm13181, %v13178, %v13184
    %v13188 = vsel %vm13182, %v13179, %v13185
    %v13189 = vsel %vm13183, %v13180, %v13186
    %v13193 = vrot.slane %v13188, 6
    %v13194 = vrot.slane %v13189, 4
    %v13195 = vsel %vm8616, %v13187, %v13193
    %v13196 = vsel %vm5456, %v13195, %v13194
    %13198 = vst [vmem:[%s16] sm:$0x3f] %v13196
    // Predicated region
    $region122: #{simple_extractor_forward.1} parent=1 // pred_check
      _
    $region123: #{simple_extractor_forward.1} parent=1 // pred_check_branch
      %13200 = sbr.rel (0) target = $region125
    $region124: #{simple_extractor_forward.1} parent=1 // pred_region
      _
    $region125: #{simple_extractor_forward.1} parent=1 // pred_fallthru
      _
    // Predicated region
    $region126: #{simple_extractor_forward.1} parent=1 // pred_check
      _
    $region127: #{simple_extractor_forward.1} parent=1 // pred_check_branch
      %13202 = sbr.rel (0) target = $region129
    $region128: #{simple_extractor_forward.1} parent=1 // pred_region
      _
    $region129: #{simple_extractor_forward.1} parent=1 // pred_fallthru
      _
    %13203 = vsyncpa [#allocation3], 1
    %13204 = vsyncpa [#allocation5], 1
    %13205 = vsyncpa [#allocation8], 1
    %13206 = vsyncpa [#allocation11], 1
    %13207 = vsyncpa [#allocation14], 1
    %13208 = vsyncpa [#allocation17], 1
    %13209 = vsyncpa [#allocation20], 1
    %13210 = vsyncpa [#allocation23], 1

</llo_original>
